<compile_context>
chip_gen: v7x
topology: tpu7x:2x2x1
jax: 0.10.0
libtpu: 0.0.40
codegen_flags: <defaults>
</compile_context>

<pallas_src>
import functools

import jax
import jax.numpy as jnp
from jax.experimental import pallas as pl
from jax.experimental.pallas import tpu as pltpu


# ----------------------------------------------------------------------------
# Pallas kernel 1: single long-K matmul + bias (conv-transpose hot path)
# ----------------------------------------------------------------------------
def _matmul_bias_kernel(cols_ref, w_ref, b_ref, out_ref):
    # cols_ref: (tm, K) bf16   w_ref: (K, Cout) bf16   b_ref: (1, Cout) f32
    acc = jnp.dot(cols_ref[...], w_ref[...], preferred_element_type=jnp.float32)
    out_ref[...] = (acc + b_ref[...]).astype(out_ref.dtype)


def _matmul_bias_pallas(cols, wmat, bias_row, tm=512):
    """cols: (M, K) bf16, wmat: (K, Cout) bf16, bias_row: (1, Cout) f32."""
    M, K = cols.shape
    Cout = wmat.shape[1]
    Mp = ((M + tm - 1) // tm) * tm
    cols = jnp.pad(cols, ((0, Mp - M), (0, 0)))

    out = pl.pallas_call(
        _matmul_bias_kernel,
        out_shape=jax.ShapeDtypeStruct((Mp, Cout), jnp.float32),
        grid_spec=pltpu.PrefetchScalarGridSpec(
            num_scalar_prefetch=0,
            grid=(Mp // tm,),
            in_specs=[
                pl.BlockSpec((tm, K), lambda i: (i, 0)),
                pl.BlockSpec((K, Cout), lambda i: (0, 0)),
                pl.BlockSpec((1, Cout), lambda i: (0, 0)),
            ],
            out_specs=pl.BlockSpec((tm, Cout), lambda i: (i, 0)),
        ),
        compiler_params=pltpu.CompilerParams(
            dimension_semantics=("parallel",)),   # shards across TCs on v7x
    )(cols, wmat, bias_row)
    return out[:M]


# ----------------------------------------------------------------------------
# ConvTranspose2d via output-phase decomposition (no structural zeros)
# ----------------------------------------------------------------------------
def conv_transpose_pallas(x, w, b, stride, padding, output_padding, tm=512):
    """x: (N,H,W,Cin) NHWC.  w: (Cin,Cout,KH,KW) torch ConvTranspose2d layout."""
    N, H, W, Cin = x.shape
    _, Cout, KH, KW = w.shape
    sh, sw = stride
    ph, pw = padding
    oph, opw = output_padding

    Ho = (H - 1) * sh - 2 * ph + KH + oph
    Wo = (W - 1) * sw - 2 * pw + KW + opw

    # flipped correlation taps: wf[kh, kw] is (Cin, Cout)
    wf = jnp.transpose(w[:, :, ::-1, ::-1], (2, 3, 0, 1))
    bias_row = (jnp.zeros((1, Cout), jnp.float32) if b is None
                else b.reshape(1, Cout).astype(jnp.float32))

    out = jnp.zeros((N, Ho, Wo, Cout), jnp.float32)
    # Output phase (a, c): only taps hitting real input samples contribute.
    for a in range(sh):
        for c in range(sw):
            Hp = (Ho - a + sh - 1) // sh
            Wp = (Wo - c + sw - 1) // sw
            khs = [kh for kh in range(KH) if (a + kh - (KH - 1 - ph)) % sh == 0]
            kws = [kw for kw in range(KW) if (c + kw - (KW - 1 - pw)) % sw == 0]
            if Hp <= 0 or Wp <= 0 or not khs or not kws:
                continue
            dhs = [(a + kh - (KH - 1 - ph)) // sh for kh in khs]
            dws = [(c + kw - (KW - 1 - pw)) // sw for kw in kws]
            pt = max(0, -min(dhs))
            pb = max(0, (Hp - 1) + max(dhs) - (H - 1))
            pL = max(0, -min(dws))
            pR = max(0, (Wp - 1) + max(dws) - (W - 1))
            xp = jnp.pad(x, ((0, 0), (pt, pb), (pL, pR), (0, 0)))

            slabs, wrows = [], []
            for kh, dh in zip(khs, dhs):
                for kw, dw in zip(kws, dws):
                    r0, c0 = dh + pt, dw + pL
                    slabs.append(xp[:, r0:r0 + Hp, c0:c0 + Wp, :])
                    wrows.append(wf[kh, kw])

            M = N * Hp * Wp
            cols = jnp.concatenate(slabs, axis=-1).reshape(M, len(slabs) * Cin)
            wmat = jnp.concatenate(wrows, axis=0)            # (T*Cin, Cout)

            phase = _matmul_bias_pallas(cols.astype(jnp.bfloat16),
                                        wmat.astype(jnp.bfloat16),
                                        bias_row, tm=tm)
            out = out.at[:, a::sh, c::sw, :].set(phase.reshape(N, Hp, Wp, Cout))
    return out


# ----------------------------------------------------------------------------
# Pallas kernel 2: fused single-pass BatchNorm2d (training batch stats)
#                  + LeakyReLU (skipped when slope == 1.0, as in LeakyReLU(True))
# ----------------------------------------------------------------------------
def _bn_act_kernel(x_ref, g_ref, b_ref, out_ref, *, eps, negative_slope):
    x = x_ref[...]                                 # (M, C) f32
    n = x.shape[0]
    s1 = jnp.sum(x, axis=0, keepdims=True)
    s2 = jnp.sum(x * x, axis=0, keepdims=True)
    mean = s1 * (1.0 / n)
    var = s2 * (1.0 / n) - mean * mean             # biased, torch training BN
    scale = g_ref[...] * jax.lax.rsqrt(var + eps)
    shift = b_ref[...] - mean * scale
    y = x * scale + shift
    if negative_slope != 1.0:                      # LeakyReLU(True) -> identity
        y = jnp.where(y >= 0, y, y * negative_slope)
    out_ref[...] = y


def bn_lrelu_pallas(x, gamma, beta, eps=1e-5, negative_slope=1.0):
    N, H, W, C = x.shape
    M = N * H * W
    out = pl.pallas_call(
        functools.partial(_bn_act_kernel, eps=eps, negative_slope=negative_slope),
        out_shape=jax.ShapeDtypeStruct((M, C), jnp.float32),
    )(x.reshape(M, C).astype(jnp.float32),
      gamma.reshape(1, C).astype(jnp.float32),
      beta.reshape(1, C).astype(jnp.float32))
    return out.reshape(N, H, W, C)


# ----------------------------------------------------------------------------
# DeConv_block forward (Pallas path)
# ----------------------------------------------------------------------------
def deconv_block_forward(x_nchw, params, stride=(2, 2), padding=(1, 1),
                         output_padding=(0, 0)):
    x = jnp.transpose(x_nchw, (0, 2, 3, 1))        # NCHW -> NHWC
    x = conv_transpose_pallas(x, params["w1"], params["b1"],
                              stride, padding, output_padding)
    x = bn_lrelu_pallas(x, params["g1"], params["be1"])   # LeakyReLU(True) == identity
    x = conv_transpose_pallas(x, params["w2"], params["b2"],
                              (1, 1), padding, (0, 0))
    x = bn_lrelu_pallas(x, params["g2"], params["be2"])
    return jnp.transpose(x, (0, 3, 1, 2))          # NHWC -> NCHW


# ----------------------------------------------------------------------------
# Pure-JAX reference (sanity check of the Pallas path)
# ----------------------------------------------------------------------------
def _conv_transpose_ref(x, w, b, stride, padding, output_padding):
    Cin, Cout, KH, KW = w.shape
    sh, sw = stride
    ph, pw = padding
    oph, opw = output_padding
    rhs = jnp.transpose(w[:, :, ::-1, ::-1], (2, 3, 0, 1))     # HWIO, flipped
    out = jax.lax.conv_general_dilated(
        x, rhs, window_strides=(1, 1),
        padding=((KH - 1 - ph, KH - 1 - ph + oph),
                 (KW - 1 - pw, KW - 1 - pw + opw)),
        lhs_dilation=(sh, sw),
        dimension_numbers=("NHWC", "HWIO", "NHWC"))
    if b is not None:
        out = out + b.reshape(1, 1, 1, -1)
    return out


def _bn_lrelu_ref(x, g, be, eps=1e-5, slope=1.0):
    mean = jnp.mean(x, axis=(0, 1, 2), keepdims=True)
    var = jnp.mean((x - mean) ** 2, axis=(0, 1, 2), keepdims=True)
    y = (x - mean) * jax.lax.rsqrt(var + eps) * g.reshape(1, 1, 1, -1) \
        + be.reshape(1, 1, 1, -1)
    return jnp.where(y >= 0, y, slope * y)


def deconv_block_forward_ref(x_nchw, params, stride=(2, 2), padding=(1, 1),
                             output_padding=(0, 0)):
    x = jnp.transpose(x_nchw, (0, 2, 3, 1))
    x = _conv_transpose_ref(x, params["w1"], params["b1"],
                            stride, padding, output_padding)
    x = _bn_lrelu_ref(x, params["g1"], params["be1"])
    x = _conv_transpose_ref(x, params["w2"], params["b2"], (1, 1), padding, (0, 0))
    x = _bn_lrelu_ref(x, params["g2"], params["be2"])
    return jnp.transpose(x, (0, 3, 1, 2))


# ----------------------------------------------------------------------------
# Deterministic parameter init (matches DeConv_block.__init__ shapes)
# ----------------------------------------------------------------------------
def init_params(key, cin, cout):
    ks = jax.random.split(key, 4)

    def xavier(k, ci, co, ksz=3):
        # torch xavier_normal_ on a (ci, co, k, k) ConvTranspose2d weight
        fan_in, fan_out = co * ksz * ksz, ci * ksz * ksz
        std = (2.0 / (fan_in + fan_out)) ** 0.5
        return (std * jax.random.normal(k, (ci, co, ksz, ksz))).astype(jnp.float32)

    return dict(
        w1=xavier(ks[0], cin, cout),
        b1=(0.05 * jax.random.normal(ks[1], (cout,))).astype(jnp.float32),
        g1=jnp.ones((cout,), jnp.float32), be1=jnp.zeros((cout,), jnp.float32),
        w2=xavier(ks[2], cout, cout),
        b2=(0.05 * jax.random.normal(ks[3], (cout,))).astype(jnp.float32),
        g2=jnp.ones((cout,), jnp.float32), be2=jnp.zeros((cout,), jnp.float32),
    )


if __name__ == "__main__":
    key = jax.random.PRNGKey(0)
    CIN, COUT = 64, 128     # Cout=128 keeps kernel output lane-dense
    params = init_params(key, CIN, COUT)

    x = jax.random.normal(jax.random.fold_in(key, 7), (2, CIN, 16, 16), jnp.float32)  # NCHW

    fwd = jax.jit(lambda xx: deconv_block_forward(xx, params))
    out = jax.block_until_ready(fwd(x))
    ref = jax.block_until_ready(deconv_block_forward_ref(x, params))

    assert out.shape == ref.shape == (2, COUT, 31, 31), out.shape
    rel_err = float(jnp.max(jnp.abs(out - ref)) / (jnp.max(jnp.abs(ref)) + 1e-6))
    assert rel_err < 5e-2, f"mismatch vs reference: rel_err={rel_err}"

    print("KERNEL_OK")
</pallas_src>

<mosaic_0001>
module attributes {stable_mosaic.version = 11 : i64} {
  func.func @_matmul_bias_kernel(%arg0: i32, %arg1: memref<512x64xbf16, #tpu.memory_space<vmem>>, %arg2: memref<64x128xbf16, #tpu.memory_space<vmem>>, %arg3: memref<1x128xf32, #tpu.memory_space<vmem>>, %arg4: memref<512x128xf32, #tpu.memory_space<vmem>>) attributes {dimension_semantics = [#tpu.dimension_semantics<parallel>], iteration_bounds = array<i64: 1>, scalar_prefetch = 0 : i64, scratch_operands = 0 : i64, tpu.core_type = #tpu.core_type<tc>, window_params = [{transform_indices = @transform_0, window_bounds = array<i64: 512, 64>}, {pipeline_mode = #tpu.pipeline_mode<synchronous>, transform_indices = @transform_1, window_bounds = array<i64: 64, 128>}, {pipeline_mode = #tpu.pipeline_mode<synchronous>, transform_indices = @transform_2, window_bounds = array<i64: 1, 128>}, {transform_indices = @transform_3, window_bounds = array<i64: 512, 128>}]} {
    %c0 = arith.constant 0 : index
    %c0_0 = arith.constant 0 : index
    %0 = vector.load %arg1[%c0, %c0_0] : memref<512x64xbf16, #tpu.memory_space<vmem>>, vector<512x64xbf16>
    %c0_1 = arith.constant 0 : index
    %c0_2 = arith.constant 0 : index
    %1 = vector.load %arg2[%c0_1, %c0_2] : memref<64x128xbf16, #tpu.memory_space<vmem>>, vector<64x128xbf16>
    %cst = arith.constant dense<0.000000e+00> : vector<512x128xf32>
    %2 = tpu.matmul %0, %1, %cst {dimension_numbers = #tpu.dot_dimension_numbers<[1], [0], [0], [1], [0, 0, 1, 1], [], []>} : vector<512x64xbf16>, vector<64x128xbf16>, vector<512x128xf32> -> vector<512x128xf32>
    %c0_3 = arith.constant 0 : index
    %c0_4 = arith.constant 0 : index
    %3 = vector.load %arg3[%c0_3, %c0_4] : memref<1x128xf32, #tpu.memory_space<vmem>>, vector<1x128xf32>
    %4 = vector.broadcast %3 : vector<1x128xf32> to vector<512x128xf32>
    %5 = arith.addf %2, %4 : vector<512x128xf32>
    %c0_5 = arith.constant 0 : index
    %c0_6 = arith.constant 0 : index
    %6 = vector.load %arg4[%c0_5, %c0_6] : memref<512x128xf32, #tpu.memory_space<vmem>>, vector<512x128xf32>
    tpu.vector_store %arg4[%c0_5, %c0_6], %5 {strides = array<i32>} : memref<512x128xf32, #tpu.memory_space<vmem>>, vector<512x128xf32>,
    return
  }
  func.func @transform_0(%arg0: i32) -> (i32, i32) {
    %c0_i32 = arith.constant 0 : i32
    %c0_i32_0 = arith.constant 0 : i32
    return %arg0, %c0_i32 : i32, i32
  }
  func.func @transform_1(%arg0: i32) -> (i32, i32) {
    %c0_i32 = arith.constant 0 : i32
    %c0_i32_0 = arith.constant 0 : i32
    %c0_i32_1 = arith.constant 0 : i32
    return %c0_i32, %c0_i32_0 : i32, i32
  }
  func.func @transform_2(%arg0: i32) -> (i32, i32) {
    %c0_i32 = arith.constant 0 : i32
    %c0_i32_0 = arith.constant 0 : i32
    %c0_i32_1 = arith.constant 0 : i32
    return %c0_i32, %c0_i32_0 : i32, i32
  }
  func.func @transform_3(%arg0: i32) -> (i32, i32) {
    %c0_i32 = arith.constant 0 : i32
    %c0_i32_0 = arith.constant 0 : i32
    return %arg0, %c0_i32 : i32, i32
  }
}

module attributes {stable_mosaic.version = 11 : i64} {
  func.func @_matmul_bias_kernel(%arg0: i32, %arg1: memref<512x128xbf16, #tpu.memory_space<vmem>>, %arg2: memref<128x128xbf16, #tpu.memory_space<vmem>>, %arg3: memref<1x128xf32, #tpu.memory_space<vmem>>, %arg4: memref<512x128xf32, #tpu.memory_space<vmem>>) attributes {dimension_semantics = [#tpu.dimension_semantics<parallel>], iteration_bounds = array<i64: 1>, scalar_prefetch = 0 : i64, scratch_operands = 0 : i64, tpu.core_type = #tpu.core_type<tc>, window_params = [{transform_indices = @transform_0, window_bounds = array<i64: 512, 128>}, {pipeline_mode = #tpu.pipeline_mode<synchronous>, transform_indices = @transform_1, window_bounds = array<i64: 128, 128>}, {pipeline_mode = #tpu.pipeline_mode<synchronous>, transform_indices = @transform_2, window_bounds = array<i64: 1, 128>}, {transform_indices = @transform_3, window_bounds = array<i64: 512, 128>}]} {
    %c0 = arith.constant 0 : index
    %c0_0 = arith.constant 0 : index
    %0 = vector.load %arg1[%c0, %c0_0] : memref<512x128xbf16, #tpu.memory_space<vmem>>, vector<512x128xbf16>
    %c0_1 = arith.constant 0 : index
    %c0_2 = arith.constant 0 : index
    %1 = vector.load %arg2[%c0_1, %c0_2] : memref<128x128xbf16, #tpu.memory_space<vmem>>, vector<128x128xbf16>
    %cst = arith.constant dense<0.000000e+00> : vector<512x128xf32>
    %2 = tpu.matmul %0, %1, %cst {dimension_numbers = #tpu.dot_dimension_numbers<[1], [0], [0], [1], [0, 0, 1, 1], [], []>} : vector<512x128xbf16>, vector<128x128xbf16>, vector<512x128xf32> -> vector<512x128xf32>
    %c0_3 = arith.constant 0 : index
    %c0_4 = arith.constant 0 : index
    %3 = vector.load %arg3[%c0_3, %c0_4] : memref<1x128xf32, #tpu.memory_space<vmem>>, vector<1x128xf32>
    %4 = vector.broadcast %3 : vector<1x128xf32> to vector<512x128xf32>
    %5 = arith.addf %2, %4 : vector<512x128xf32>
    %c0_5 = arith.constant 0 : index
    %c0_6 = arith.constant 0 : index
    %6 = vector.load %arg4[%c0_5, %c0_6] : memref<512x128xf32, #tpu.memory_space<vmem>>, vector<512x128xf32>
    tpu.vector_store %arg4[%c0_5, %c0_6], %5 {strides = array<i32>} : memref<512x128xf32, #tpu.memory_space<vmem>>, vector<512x128xf32>,
    return
  }
  func.func @transform_0(%arg0: i32) -> (i32, i32) {
    %c0_i32 = arith.constant 0 : i32
    %c0_i32_0 = arith.constant 0 : i32
    return %arg0, %c0_i32 : i32, i32
  }
  func.func @transform_1(%arg0: i32) -> (i32, i32) {
    %c0_i32 = arith.constant 0 : i32
    %c0_i32_0 = arith.constant 0 : i32
    %c0_i32_1 = arith.constant 0 : i32
    return %c0_i32, %c0_i32_0 : i32, i32
  }
  func.func @transform_2(%arg0: i32) -> (i32, i32) {
    %c0_i32 = arith.constant 0 : i32
    %c0_i32_0 = arith.constant 0 : i32
    %c0_i32_1 = arith.constant 0 : i32
    return %c0_i32, %c0_i32_0 : i32, i32
  }
  func.func @transform_3(%arg0: i32) -> (i32, i32) {
    %c0_i32 = arith.constant 0 : i32
    %c0_i32_0 = arith.constant 0 : i32
    return %arg0, %c0_i32 : i32, i32
  }
}

module attributes {stable_mosaic.version = 11 : i64} {
  func.func @_matmul_bias_kernel(%arg0: i32, %arg1: memref<512x128xbf16, #tpu.memory_space<vmem>>, %arg2: memref<128x128xbf16, #tpu.memory_space<vmem>>, %arg3: memref<1x128xf32, #tpu.memory_space<vmem>>, %arg4: memref<512x128xf32, #tpu.memory_space<vmem>>) attributes {dimension_semantics = [#tpu.dimension_semantics<parallel>], iteration_bounds = array<i64: 1>, scalar_prefetch = 0 : i64, scratch_operands = 0 : i64, tpu.core_type = #tpu.core_type<tc>, window_params = [{transform_indices = @transform_0, window_bounds = array<i64: 512, 128>}, {pipeline_mode = #tpu.pipeline_mode<synchronous>, transform_indices = @transform_1, window_bounds = array<i64: 128, 128>}, {pipeline_mode = #tpu.pipeline_mode<synchronous>, transform_indices = @transform_2, window_bounds = array<i64: 1, 128>}, {transform_indices = @transform_3, window_bounds = array<i64: 512, 128>}]} {
    %c0 = arith.constant 0 : index
    %c0_0 = arith.constant 0 : index
    %0 = vector.load %arg1[%c0, %c0_0] : memref<512x128xbf16, #tpu.memory_space<vmem>>, vector<512x128xbf16>
    %c0_1 = arith.constant 0 : index
    %c0_2 = arith.constant 0 : index
    %1 = vector.load %arg2[%c0_1, %c0_2] : memref<128x128xbf16, #tpu.memory_space<vmem>>, vector<128x128xbf16>
    %cst = arith.constant dense<0.000000e+00> : vector<512x128xf32>
    %2 = tpu.matmul %0, %1, %cst {dimension_numbers = #tpu.dot_dimension_numbers<[1], [0], [0], [1], [0, 0, 1, 1], [], []>} : vector<512x128xbf16>, vector<128x128xbf16>, vector<512x128xf32> -> vector<512x128xf32>
    %c0_3 = arith.constant 0 : index
    %c0_4 = arith.constant 0 : index
    %3 = vector.load %arg3[%c0_3, %c0_4] : memref<1x128xf32, #tpu.memory_space<vmem>>, vector<1x128xf32>
    %4 = vector.broadcast %3 : vector<1x128xf32> to vector<512x128xf32>
    %5 = arith.addf %2, %4 : vector<512x128xf32>
    %c0_5 = arith.constant 0 : index
    %c0_6 = arith.constant 0 : index
    %6 = vector.load %arg4[%c0_5, %c0_6] : memref<512x128xf32, #tpu.memory_space<vmem>>, vector<512x128xf32>
    tpu.vector_store %arg4[%c0_5, %c0_6], %5 {strides = array<i32>} : memref<512x128xf32, #tpu.memory_space<vmem>>, vector<512x128xf32>,
    return
  }
  func.func @transform_0(%arg0: i32) -> (i32, i32) {
    %c0_i32 = arith.constant 0 : i32
    %c0_i32_0 = arith.constant 0 : i32
    return %arg0, %c0_i32 : i32, i32
  }
  func.func @transform_1(%arg0: i32) -> (i32, i32) {
    %c0_i32 = arith.constant 0 : i32
    %c0_i32_0 = arith.constant 0 : i32
    %c0_i32_1 = arith.constant 0 : i32
    return %c0_i32, %c0_i32_0 : i32, i32
  }
  func.func @transform_2(%arg0: i32) -> (i32, i32) {
    %c0_i32 = arith.constant 0 : i32
    %c0_i32_0 = arith.constant 0 : i32
    %c0_i32_1 = arith.constant 0 : i32
    return %c0_i32, %c0_i32_0 : i32, i32
  }
  func.func @transform_3(%arg0: i32) -> (i32, i32) {
    %c0_i32 = arith.constant 0 : i32
    %c0_i32_0 = arith.constant 0 : i32
    return %arg0, %c0_i32 : i32, i32
  }
}

module attributes {stable_mosaic.version = 11 : i64} {
  func.func @_matmul_bias_kernel(%arg0: i32, %arg1: memref<512x256xbf16, #tpu.memory_space<vmem>>, %arg2: memref<256x128xbf16, #tpu.memory_space<vmem>>, %arg3: memref<1x128xf32, #tpu.memory_space<vmem>>, %arg4: memref<512x128xf32, #tpu.memory_space<vmem>>) attributes {dimension_semantics = [#tpu.dimension_semantics<parallel>], iteration_bounds = array<i64: 1>, scalar_prefetch = 0 : i64, scratch_operands = 0 : i64, tpu.core_type = #tpu.core_type<tc>, window_params = [{transform_indices = @transform_0, window_bounds = array<i64: 512, 256>}, {pipeline_mode = #tpu.pipeline_mode<synchronous>, transform_indices = @transform_1, window_bounds = array<i64: 256, 128>}, {pipeline_mode = #tpu.pipeline_mode<synchronous>, transform_indices = @transform_2, window_bounds = array<i64: 1, 128>}, {transform_indices = @transform_3, window_bounds = array<i64: 512, 128>}]} {
    %c0 = arith.constant 0 : index
    %c0_0 = arith.constant 0 : index
    %0 = vector.load %arg1[%c0, %c0_0] : memref<512x256xbf16, #tpu.memory_space<vmem>>, vector<512x256xbf16>
    %c0_1 = arith.constant 0 : index
    %c0_2 = arith.constant 0 : index
    %1 = vector.load %arg2[%c0_1, %c0_2] : memref<256x128xbf16, #tpu.memory_space<vmem>>, vector<256x128xbf16>
    %cst = arith.constant dense<0.000000e+00> : vector<512x128xf32>
    %2 = tpu.matmul %0, %1, %cst {dimension_numbers = #tpu.dot_dimension_numbers<[1], [0], [0], [1], [0, 0, 1, 1], [], []>} : vector<512x256xbf16>, vector<256x128xbf16>, vector<512x128xf32> -> vector<512x128xf32>
    %c0_3 = arith.constant 0 : index
    %c0_4 = arith.constant 0 : index
    %3 = vector.load %arg3[%c0_3, %c0_4] : memref<1x128xf32, #tpu.memory_space<vmem>>, vector<1x128xf32>
    %4 = vector.broadcast %3 : vector<1x128xf32> to vector<512x128xf32>
    %5 = arith.addf %2, %4 : vector<512x128xf32>
    %c0_5 = arith.constant 0 : index
    %c0_6 = arith.constant 0 : index
    %6 = vector.load %arg4[%c0_5, %c0_6] : memref<512x128xf32, #tpu.memory_space<vmem>>, vector<512x128xf32>
    tpu.vector_store %arg4[%c0_5, %c0_6], %5 {strides = array<i32>} : memref<512x128xf32, #tpu.memory_space<vmem>>, vector<512x128xf32>,
    return
  }
  func.func @transform_0(%arg0: i32) -> (i32, i32) {
    %c0_i32 = arith.constant 0 : i32
    %c0_i32_0 = arith.constant 0 : i32
    return %arg0, %c0_i32 : i32, i32
  }
  func.func @transform_1(%arg0: i32) -> (i32, i32) {
    %c0_i32 = arith.constant 0 : i32
    %c0_i32_0 = arith.constant 0 : i32
    %c0_i32_1 = arith.constant 0 : i32
    return %c0_i32, %c0_i32_0 : i32, i32
  }
  func.func @transform_2(%arg0: i32) -> (i32, i32) {
    %c0_i32 = arith.constant 0 : i32
    %c0_i32_0 = arith.constant 0 : i32
    %c0_i32_1 = arith.constant 0 : i32
    return %c0_i32, %c0_i32_0 : i32, i32
  }
  func.func @transform_3(%arg0: i32) -> (i32, i32) {
    %c0_i32 = arith.constant 0 : i32
    %c0_i32_0 = arith.constant 0 : i32
    return %arg0, %c0_i32 : i32, i32
  }
}

module attributes {stable_mosaic.version = 11 : i64} {
  func.func @_bn_act_kernel(%arg0: memref<1922x128xf32, #tpu.memory_space<vmem>>, %arg1: memref<1x128xf32, #tpu.memory_space<vmem>>, %arg2: memref<1x128xf32, #tpu.memory_space<vmem>>, %arg3: memref<1922x128xf32, #tpu.memory_space<vmem>>) attributes {dimension_semantics = [], scalar_prefetch = 0 : i64, scratch_operands = 0 : i64, tpu.core_type = #tpu.core_type<tc>} {
    %c0 = arith.constant 0 : index
    %c0_0 = arith.constant 0 : index
    %0 = vector.load %arg0[%c0, %c0_0] : memref<1922x128xf32, #tpu.memory_space<vmem>>, vector<1922x128xf32>
    %cst = arith.constant dense<0.000000e+00> : vector<128xf32>
    %1 = vector.multi_reduction <add>, %0, %cst [0] : vector<1922x128xf32> to vector<128xf32>
    %2 = vector.shape_cast %1 : vector<128xf32> to vector<1x128xf32>
    %3 = arith.mulf %0, %0 : vector<1922x128xf32>
    %cst_1 = arith.constant dense<0.000000e+00> : vector<128xf32>
    %4 = vector.multi_reduction <add>, %3, %cst_1 [0] : vector<1922x128xf32> to vector<128xf32>
    %5 = vector.shape_cast %4 : vector<128xf32> to vector<1x128xf32>
    %cst_2 = arith.constant 5.20291389E-4 : f32
    %6 = vector.broadcast %cst_2 : f32 to vector<1x128xf32>
    %7 = arith.mulf %2, %6 : vector<1x128xf32>
    %cst_3 = arith.constant 5.20291389E-4 : f32
    %8 = vector.broadcast %cst_3 : f32 to vector<1x128xf32>
    %9 = arith.mulf %5, %8 : vector<1x128xf32>
    %10 = arith.mulf %7, %7 : vector<1x128xf32>
    %11 = arith.subf %9, %10 : vector<1x128xf32>
    %c0_4 = arith.constant 0 : index
    %c0_5 = arith.constant 0 : index
    %12 = vector.load %arg1[%c0_4, %c0_5] : memref<1x128xf32, #tpu.memory_space<vmem>>, vector<1x128xf32>
    %cst_6 = arith.constant 9.99999974E-6 : f32
    %13 = vector.broadcast %cst_6 : f32 to vector<1x128xf32>
    %14 = arith.addf %11, %13 : vector<1x128xf32>
    %15 = math.rsqrt %14 : vector<1x128xf32>
    %16 = arith.mulf %12, %15 : vector<1x128xf32>
    %c0_7 = arith.constant 0 : index
    %c0_8 = arith.constant 0 : index
    %17 = vector.load %arg2[%c0_7, %c0_8] : memref<1x128xf32, #tpu.memory_space<vmem>>, vector<1x128xf32>
    %18 = arith.mulf %7, %16 : vector<1x128xf32>
    %19 = arith.subf %17, %18 : vector<1x128xf32>
    %20 = vector.broadcast %16 : vector<1x128xf32> to vector<1922x128xf32>
    %21 = arith.mulf %0, %20 : vector<1922x128xf32>
    %22 = vector.broadcast %19 : vector<1x128xf32> to vector<1922x128xf32>
    %23 = arith.addf %21, %22 : vector<1922x128xf32>
    %c0_9 = arith.constant 0 : index
    %c0_10 = arith.constant 0 : index
    %24 = vector.load %arg3[%c0_9, %c0_10] : memref<1922x128xf32, #tpu.memory_space<vmem>>, vector<1922x128xf32>
    tpu.vector_store %arg3[%c0_9, %c0_10], %23 {strides = array<i32>} : memref<1922x128xf32, #tpu.memory_space<vmem>>, vector<1922x128xf32>,
    return
  }
}

module attributes {stable_mosaic.version = 11 : i64} {
  func.func @_matmul_bias_kernel(%arg0: i32, %arg1: memref<512x1152xbf16, #tpu.memory_space<vmem>>, %arg2: memref<1152x128xbf16, #tpu.memory_space<vmem>>, %arg3: memref<1x128xf32, #tpu.memory_space<vmem>>, %arg4: memref<512x128xf32, #tpu.memory_space<vmem>>) attributes {dimension_semantics = [#tpu.dimension_semantics<parallel>], iteration_bounds = array<i64: 4>, scalar_prefetch = 0 : i64, scratch_operands = 0 : i64, tpu.core_type = #tpu.core_type<tc>, window_params = [{transform_indices = @transform_0, window_bounds = array<i64: 512, 1152>}, {pipeline_mode = #tpu.pipeline_mode<synchronous>, transform_indices = @transform_1, window_bounds = array<i64: 1152, 128>}, {pipeline_mode = #tpu.pipeline_mode<synchronous>, transform_indices = @transform_2, window_bounds = array<i64: 1, 128>}, {transform_indices = @transform_3, window_bounds = array<i64: 512, 128>}]} {
    %c0 = arith.constant 0 : index
    %c0_0 = arith.constant 0 : index
    %0 = vector.load %arg1[%c0, %c0_0] : memref<512x1152xbf16, #tpu.memory_space<vmem>>, vector<512x1152xbf16>
    %c0_1 = arith.constant 0 : index
    %c0_2 = arith.constant 0 : index
    %1 = vector.load %arg2[%c0_1, %c0_2] : memref<1152x128xbf16, #tpu.memory_space<vmem>>, vector<1152x128xbf16>
    %cst = arith.constant dense<0.000000e+00> : vector<512x128xf32>
    %2 = tpu.matmul %0, %1, %cst {dimension_numbers = #tpu.dot_dimension_numbers<[1], [0], [0], [1], [0, 0, 1, 1], [], []>} : vector<512x1152xbf16>, vector<1152x128xbf16>, vector<512x128xf32> -> vector<512x128xf32>
    %c0_3 = arith.constant 0 : index
    %c0_4 = arith.constant 0 : index
    %3 = vector.load %arg3[%c0_3, %c0_4] : memref<1x128xf32, #tpu.memory_space<vmem>>, vector<1x128xf32>
    %4 = vector.broadcast %3 : vector<1x128xf32> to vector<512x128xf32>
    %5 = arith.addf %2, %4 : vector<512x128xf32>
    %c0_5 = arith.constant 0 : index
    %c0_6 = arith.constant 0 : index
    %6 = vector.load %arg4[%c0_5, %c0_6] : memref<512x128xf32, #tpu.memory_space<vmem>>, vector<512x128xf32>
    tpu.vector_store %arg4[%c0_5, %c0_6], %5 {strides = array<i32>} : memref<512x128xf32, #tpu.memory_space<vmem>>, vector<512x128xf32>,
    return
  }
  func.func @transform_0(%arg0: i32) -> (i32, i32) {
    %c0_i32 = arith.constant 0 : i32
    %c0_i32_0 = arith.constant 0 : i32
    return %arg0, %c0_i32 : i32, i32
  }
  func.func @transform_1(%arg0: i32) -> (i32, i32) {
    %c0_i32 = arith.constant 0 : i32
    %c0_i32_0 = arith.constant 0 : i32
    %c0_i32_1 = arith.constant 0 : i32
    return %c0_i32, %c0_i32_0 : i32, i32
  }
  func.func @transform_2(%arg0: i32) -> (i32, i32) {
    %c0_i32 = arith.constant 0 : i32
    %c0_i32_0 = arith.constant 0 : i32
    %c0_i32_1 = arith.constant 0 : i32
    return %c0_i32, %c0_i32_0 : i32, i32
  }
  func.func @transform_3(%arg0: i32) -> (i32, i32) {
    %c0_i32 = arith.constant 0 : i32
    %c0_i32_0 = arith.constant 0 : i32
    return %arg0, %c0_i32 : i32, i32
  }
}

</mosaic_0001>

<llo_original>
// kernel: _lambda_.9
$region0: #{_lambda_.9}
  #allocation0 [shape = 'u32[]', space=smem, size = 0x4, offset = 0x4, fixed_abs, tag = 'smem constant byte address 0x4 - core index']
  #allocation1 [shape = 'u32[144,128]{1,0:T(1,128)}', space=vmem, size = 0x12000, scoped, tag = 'internal scratch']
  %s0 = inlined_call_operand.vmem [shape: bf16[512,128], index: 0, kind: input, shape index: {}]
  %s1 = inlined_call_operand.hbm [shape: bf16[128,128], index: 1, kind: input, shape index: {}]
  %s2 = inlined_call_operand.hbm [shape: f32[1,128], index: 2, kind: input, shape index: {}]
  %s3 = inlined_call_operand.vmem [shape: f32[512,128], index: 3, kind: output, shape index: {}]
  %s4 = sld [smem:[#allocation0]]
  $region30: #{_lambda_.9} parent=0
    _
  %s6 = ssub.s32 1, %s4
  %s7 = scalar_select 0, %s6, %s4
  $region1: #{_lambda_.9} parent=0
    #allocation2 [shape = 'u8[32768]{0}', space=vmem, size = 0x8000, scoped, tag = 'input window, operand 1, single buffered']
    #allocation3 [shape = 's32[1]{0}', space=sflag, size = 0x4, scoped, tag = 'scoped memory for _lambda_.9']
    #allocation4 [shape = 'u8[512]{0}', space=vmem, size = 0x400, scoped, tag = 'input window, operand 2, single buffered']
    #allocation5 [shape = 's32[1]{0}', space=sflag, size = 0x4, scoped, tag = 'scoped memory for _lambda_.9']
    %8 = vsyncpa [#allocation3], 0
    %9 = vsyncpa [#allocation5], 0
    // Predicated region
    $region2: #{_lambda_.9} parent=1 // pred_check
      _
    $region3: #{_lambda_.9} parent=1 // pred_check_branch
      %11 = sbr.rel (0) target = $region5
    $region4: #{_lambda_.9} parent=1 // pred_region
      _
    $region5: #{_lambda_.9} parent=1 // pred_fallthru
      _
    // Predicated region
    $region6: #{_lambda_.9} parent=1 // pred_check
      _
    $region7: #{_lambda_.9} parent=1 // pred_check_branch
      %13 = sbr.rel (0) target = $region9
    $region8: #{_lambda_.9} parent=1 // pred_region
      %s15 = ssub.s32 1024, 1024
      %16 = vsyncadd [#allocation3], %s15
      %s17 = sshll.u32 [#allocation2], 4
      %s18 = int_to_ptr.vmem [resolvable:$true] %s17
      %23 = dma.hbm_to_vmem [thread:$0]  %s1, 1024, %s18, [#allocation3], 64, 64, 4
    $region9: #{_lambda_.9} parent=1 // pred_fallthru
      _
    // Predicated region
    $region10: #{_lambda_.9} parent=1 // pred_check
      _
    $region11: #{_lambda_.9} parent=1 // pred_check_branch
      %25 = sbr.rel (0) target = $region13
    $region12: #{_lambda_.9} parent=1 // pred_region
      %s27 = ssub.s32 16, 16
      %28 = vsyncadd [#allocation5], %s27
      %s30 = sshll.u32 [#allocation4], 4
      %s31 = int_to_ptr.vmem [resolvable:$true] %s30
      %33 = dma.hbm_to_vmem [thread:$0]  %s2, 16, %s31, [#allocation5]
    $region13: #{_lambda_.9} parent=1 // pred_fallthru
      _
    // Predicated region
    $region14: #{_lambda_.9} parent=1 // pred_check
      _
    $region15: #{_lambda_.9} parent=1 // pred_check_branch
      %35 = sbr.rel (0) target = $region17
    $region16: #{_lambda_.9} parent=1 // pred_region
      %36 = dma.done [#allocation3], 1024
    $region17: #{_lambda_.9} parent=1 // pred_fallthru
      _
    // Predicated region
    $region18: #{_lambda_.9} parent=1 // pred_check
      _
    $region19: #{_lambda_.9} parent=1 // pred_check_branch
      %38 = sbr.rel (0) target = $region21
    $region20: #{_lambda_.9} parent=1 // pred_region
      %39 = dma.done [#allocation5], 16
    $region21: #{_lambda_.9} parent=1 // pred_fallthru
      _
    %v41 = vld [vmem:[%s0] sm:$0xf]
    %v42 = vld [vmem:[%s0 + $0x4] sm:$0xf]
    %v43 = vld [vmem:[%s0 + $0x8] sm:$0xf]
    %v44 = vld [vmem:[%s0 + $0xc] sm:$0xf]
    %v45 = vld [vmem:[%s0 + $0x10] sm:$0xf]
    %v46 = vld [vmem:[%s0 + $0x14] sm:$0xf]
    %v47 = vld [vmem:[%s0 + $0x18] sm:$0xf]
    %v48 = vld [vmem:[%s0 + $0x1c] sm:$0xf]
    %v49 = vld [vmem:[%s0 + $0x20] sm:$0xf]
    %v50 = vld [vmem:[%s0 + $0x24] sm:$0xf]
    %v51 = vld [vmem:[%s0 + $0x28] sm:$0xf]
    %v52 = vld [vmem:[%s0 + $0x2c] sm:$0xf]
    %v53 = vld [vmem:[%s0 + $0x30] sm:$0xf]
    %v54 = vld [vmem:[%s0 + $0x34] sm:$0xf]
    %v55 = vld [vmem:[%s0 + $0x38] sm:$0xf]
    %v56 = vld [vmem:[%s0 + $0x3c] sm:$0xf]
    %v57 = vld [vmem:[%s0 + $0x40] sm:$0xf]
    %v58 = vld [vmem:[%s0 + $0x44] sm:$0xf]
    %v59 = vld [vmem:[%s0 + $0x48] sm:$0xf]
    %v60 = vld [vmem:[%s0 + $0x4c] sm:$0xf]
    %v61 = vld [vmem:[%s0 + $0x50] sm:$0xf]
    %v62 = vld [vmem:[%s0 + $0x54] sm:$0xf]
    %v63 = vld [vmem:[%s0 + $0x58] sm:$0xf]
    %v64 = vld [vmem:[%s0 + $0x5c] sm:$0xf]
    %v65 = vld [vmem:[%s0 + $0x60] sm:$0xf]
    %v66 = vld [vmem:[%s0 + $0x64] sm:$0xf]
    %v67 = vld [vmem:[%s0 + $0x68] sm:$0xf]
    %v68 = vld [vmem:[%s0 + $0x6c] sm:$0xf]
    %v69 = vld [vmem:[%s0 + $0x70] sm:$0xf]
    %v70 = vld [vmem:[%s0 + $0x74] sm:$0xf]
    %v71 = vld [vmem:[%s0 + $0x78] sm:$0xf]
    %v72 = vld [vmem:[%s0 + $0x7c] sm:$0xf]
    %v73 = vld [vmem:[%s0 + $0x80] sm:$0xf]
    %v74 = vld [vmem:[%s0 + $0x84] sm:$0xf]
    %v75 = vld [vmem:[%s0 + $0x88] sm:$0xf]
    %v76 = vld [vmem:[%s0 + $0x8c] sm:$0xf]
    %v77 = vld [vmem:[%s0 + $0x90] sm:$0xf]
    %v78 = vld [vmem:[%s0 + $0x94] sm:$0xf]
    %v79 = vld [vmem:[%s0 + $0x98] sm:$0xf]
    %v80 = vld [vmem:[%s0 + $0x9c] sm:$0xf]
    %v81 = vld [vmem:[%s0 + $0xa0] sm:$0xf]
    %v82 = vld [vmem:[%s0 + $0xa4] sm:$0xf]
    %v83 = vld [vmem:[%s0 + $0xa8] sm:$0xf]
    %v84 = vld [vmem:[%s0 + $0xac] sm:$0xf]
    %v85 = vld [vmem:[%s0 + $0xb0] sm:$0xf]
    %v86 = vld [vmem:[%s0 + $0xb4] sm:$0xf]
    %v87 = vld [vmem:[%s0 + $0xb8] sm:$0xf]
    %v88 = vld [vmem:[%s0 + $0xbc] sm:$0xf]
    %v89 = vld [vmem:[%s0 + $0xc0] sm:$0xf]
    %v90 = vld [vmem:[%s0 + $0xc4] sm:$0xf]
    %v91 = vld [vmem:[%s0 + $0xc8] sm:$0xf]
    %v92 = vld [vmem:[%s0 + $0xcc] sm:$0xf]
    %v93 = vld [vmem:[%s0 + $0xd0] sm:$0xf]
    %v94 = vld [vmem:[%s0 + $0xd4] sm:$0xf]
    %v95 = vld [vmem:[%s0 + $0xd8] sm:$0xf]
    %v96 = vld [vmem:[%s0 + $0xdc] sm:$0xf]
    %v97 = vld [vmem:[%s0 + $0xe0] sm:$0xf]
    %v98 = vld [vmem:[%s0 + $0xe4] sm:$0xf]
    %v99 = vld [vmem:[%s0 + $0xe8] sm:$0xf]
    %v100 = vld [vmem:[%s0 + $0xec] sm:$0xf]
    %v101 = vld [vmem:[%s0 + $0xf0] sm:$0xf]
    %v102 = vld [vmem:[%s0 + $0xf4] sm:$0xf]
    %v103 = vld [vmem:[%s0 + $0xf8] sm:$0xf]
    %v104 = vld [vmem:[%s0 + $0xfc] sm:$0xf]
    %v105 = vld [vmem:[#allocation2] sm:$0xf]
    %v106 = vld [vmem:[#allocation2 + $0x4] sm:$0xf]
    %v107 = vld [vmem:[#allocation2 + $0x8] sm:$0xf]
    %v108 = vld [vmem:[#allocation2 + $0xc] sm:$0xf]
    %v109 = vld [vmem:[#allocation2 + $0x10] sm:$0xf]
    %v110 = vld [vmem:[#allocation2 + $0x14] sm:$0xf]
    %v111 = vld [vmem:[#allocation2 + $0x18] sm:$0xf]
    %v112 = vld [vmem:[#allocation2 + $0x1c] sm:$0xf]
    %v113 = vld [vmem:[#allocation2 + $0x20] sm:$0xf]
    %v114 = vld [vmem:[#allocation2 + $0x24] sm:$0xf]
    %v115 = vld [vmem:[#allocation2 + $0x28] sm:$0xf]
    %v116 = vld [vmem:[#allocation2 + $0x2c] sm:$0xf]
    %v117 = vld [vmem:[#allocation2 + $0x30] sm:$0xf]
    %v118 = vld [vmem:[#allocation2 + $0x34] sm:$0xf]
    %v119 = vld [vmem:[#allocation2 + $0x38] sm:$0xf]
    %v120 = vld [vmem:[#allocation2 + $0x3c] sm:$0xf]
    %v121 = vld [vmem:[#allocation4] sm:$0x1]
    %v123 = vlaneseq
    %v124 = vshrl.u32 %v123, 7
    %v125 = vsub.s32 0, %v124
    %v126 = vrot.slane %v121, %v125
    %v192 = vunpack.c.l.b16 %v41
    %v193 = vunpack.c.l.b16 %v42
    %v194 = vunpack.c.l.b16 %v43
    %v195 = vunpack.c.l.b16 %v44
    %v196 = vunpack.c.l.b16 %v45
    %v197 = vunpack.c.l.b16 %v46
    %v198 = vunpack.c.l.b16 %v47
    %v199 = vunpack.c.l.b16 %v48
    %v200 = vunpack.c.l.b16 %v49
    %v201 = vunpack.c.l.b16 %v50
    %v202 = vunpack.c.l.b16 %v51
    %v203 = vunpack.c.l.b16 %v52
    %v204 = vunpack.c.l.b16 %v53
    %v205 = vunpack.c.l.b16 %v54
    %v206 = vunpack.c.l.b16 %v55
    %v207 = vunpack.c.l.b16 %v56
    %v208 = vunpack.c.l.b16 %v57
    %v209 = vunpack.c.l.b16 %v58
    %v210 = vunpack.c.l.b16 %v59
    %v211 = vunpack.c.l.b16 %v60
    %v212 = vunpack.c.l.b16 %v61
    %v213 = vunpack.c.l.b16 %v62
    %v214 = vunpack.c.l.b16 %v63
    %v215 = vunpack.c.l.b16 %v64
    %v216 = vunpack.c.l.b16 %v65
    %v217 = vunpack.c.l.b16 %v66
    %v218 = vunpack.c.l.b16 %v67
    %v219 = vunpack.c.l.b16 %v68
    %v220 = vunpack.c.l.b16 %v69
    %v221 = vunpack.c.l.b16 %v70
    %v222 = vunpack.c.l.b16 %v71
    %v223 = vunpack.c.l.b16 %v72
    %v224 = vunpack.c.l.b16 %v73
    %v225 = vunpack.c.l.b16 %v74
    %v226 = vunpack.c.l.b16 %v75
    %v227 = vunpack.c.l.b16 %v76
    %v228 = vunpack.c.l.b16 %v77
    %v229 = vunpack.c.l.b16 %v78
    %v230 = vunpack.c.l.b16 %v79
    %v231 = vunpack.c.l.b16 %v80
    %v232 = vunpack.c.l.b16 %v81
    %v233 = vunpack.c.l.b16 %v82
    %v234 = vunpack.c.l.b16 %v83
    %v235 = vunpack.c.l.b16 %v84
    %v236 = vunpack.c.l.b16 %v85
    %v237 = vunpack.c.l.b16 %v86
    %v238 = vunpack.c.l.b16 %v87
    %v239 = vunpack.c.l.b16 %v88
    %v240 = vunpack.c.l.b16 %v89
    %v241 = vunpack.c.l.b16 %v90
    %v242 = vunpack.c.l.b16 %v91
    %v243 = vunpack.c.l.b16 %v92
    %v244 = vunpack.c.l.b16 %v93
    %v245 = vunpack.c.l.b16 %v94
    %v246 = vunpack.c.l.b16 %v95
    %v247 = vunpack.c.l.b16 %v96
    %v248 = vunpack.c.l.b16 %v97
    %v249 = vunpack.c.l.b16 %v98
    %v250 = vunpack.c.l.b16 %v99
    %v251 = vunpack.c.l.b16 %v100
    %v252 = vunpack.c.l.b16 %v101
    %v253 = vunpack.c.l.b16 %v102
    %v254 = vunpack.c.l.b16 %v103
    %v255 = vunpack.c.l.b16 %v104
    %v256 = vpack.c.b16 %v193, %v192
    %v257 = vpack.c.b16 %v195, %v194
    %v258 = vpack.c.b16 %v197, %v196
    %v259 = vpack.c.b16 %v199, %v198
    %v260 = vpack.c.b16 %v201, %v200
    %v261 = vpack.c.b16 %v203, %v202
    %v262 = vpack.c.b16 %v205, %v204
    %v263 = vpack.c.b16 %v207, %v206
    %v264 = vpack.c.b16 %v209, %v208
    %v265 = vpack.c.b16 %v211, %v210
    %v266 = vpack.c.b16 %v213, %v212
    %v267 = vpack.c.b16 %v215, %v214
    %v268 = vpack.c.b16 %v217, %v216
    %v269 = vpack.c.b16 %v219, %v218
    %v270 = vpack.c.b16 %v221, %v220
    %v271 = vpack.c.b16 %v223, %v222
    %v272 = vpack.c.b16 %v225, %v224
    %v273 = vpack.c.b16 %v227, %v226
    %v274 = vpack.c.b16 %v229, %v228
    %v275 = vpack.c.b16 %v231, %v230
    %v276 = vpack.c.b16 %v233, %v232
    %v277 = vpack.c.b16 %v235, %v234
    %v278 = vpack.c.b16 %v237, %v236
    %v279 = vpack.c.b16 %v239, %v238
    %v280 = vpack.c.b16 %v241, %v240
    %v281 = vpack.c.b16 %v243, %v242
    %v282 = vpack.c.b16 %v245, %v244
    %v283 = vpack.c.b16 %v247, %v246
    %v284 = vpack.c.b16 %v249, %v248
    %v285 = vpack.c.b16 %v251, %v250
    %v286 = vpack.c.b16 %v253, %v252
    %v287 = vpack.c.b16 %v255, %v254
    %v336 = vunpack.c.l.b16 %v105
    %v337 = vunpack.c.l.b16 %v106
    %v338 = vunpack.c.l.b16 %v107
    %v339 = vunpack.c.l.b16 %v108
    %v340 = vunpack.c.l.b16 %v109
    %v341 = vunpack.c.l.b16 %v110
    %v342 = vunpack.c.l.b16 %v111
    %v343 = vunpack.c.l.b16 %v112
    %v344 = vunpack.c.l.b16 %v113
    %v345 = vunpack.c.l.b16 %v114
    %v346 = vunpack.c.l.b16 %v115
    %v347 = vunpack.c.l.b16 %v116
    %v348 = vunpack.c.l.b16 %v117
    %v349 = vunpack.c.l.b16 %v118
    %v350 = vunpack.c.l.b16 %v119
    %v351 = vunpack.c.l.b16 %v120
    %v352 = vpack.c.b16 %v337, %v336
    %v353 = vpack.c.b16 %v339, %v338
    %v354 = vpack.c.b16 %v341, %v340
    %v355 = vpack.c.b16 %v343, %v342
    %v356 = vpack.c.b16 %v345, %v344
    %v357 = vpack.c.b16 %v347, %v346
    %v358 = vpack.c.b16 %v349, %v348
    %v359 = vpack.c.b16 %v351, %v350
    %368 = vmatprep.subr.bf16.mxu0 0
    %369 = vmatpush1.bf16.msra.mxu0 %v352
    %370 = vmatprep.subr.bf16.mxu0 0
    %371 = vmatpush1.bf16.msra.mxu0 %v353
    %372 = vmatprep.subr.bf16.mxu0 0
    %373 = vmatpush1.bf16.msra.mxu0 %v354
    %374 = vmatprep.subr.bf16.mxu0 0
    %375 = vmatpush1.bf16.msra.mxu0 %v355
    %376 = vmatprep.subr.bf16.mxu0 0
    %377 = vmatpush1.bf16.msra.mxu0 %v356
    %378 = vmatprep.subr.bf16.mxu0 0
    %379 = vmatpush1.bf16.msra.mxu0 %v357
    %380 = vmatprep.subr.bf16.mxu0 0
    %381 = vmatpush1.bf16.msra.mxu0 %v358
    %382 = vmatprep.subr.bf16.mxu0 0
    %383 = vmatpush1.bf16.msra.mxu0 %v359
    %384 = vmatprep.subr.bf16.mxu0 0
    %385 = vmatpush1.bf16.msra.mxu0 0
    %386 = vmatprep.subr.bf16.mxu0 0
    %387 = vmatpush1.bf16.msra.mxu0 0
    %388 = vmatprep.subr.bf16.mxu0 0
    %389 = vmatpush1.bf16.msra.mxu0 0
    %390 = vmatprep.subr.bf16.mxu0 0
    %391 = vmatpush1.bf16.msra.mxu0 0
    %392 = vmatprep.subr.bf16.mxu0 0
    %393 = vmatpush1.bf16.msra.mxu0 0
    %394 = vmatprep.subr.bf16.mxu0 0
    %395 = vmatpush1.bf16.msra.mxu0 0
    %396 = vmatprep.subr.bf16.mxu0 0
    %397 = vmatpush1.bf16.msra.mxu0 0
    %398 = vmatprep.subr.bf16.mxu0 0
    %399 = vmatpush1.bf16.msra.mxu0 0
    %400 = vmatprep.mubr.bf16.mxu0 0
    %401 = vmatmul.mubr.bf16.gmra.mrb[0].mxu0 %v256
    %v402 = vpop.f32.mrb[0].mxu0
    %v403 = vadd.f32 %v126, %v402
    %v404 = vpop.f32.mrb[0].mxu0
    %v405 = vpop.f32.mrb[0].mxu0
    %v406 = vadd.f32 %v126, %v405
    %v407 = vpop.f32.mrb[0].mxu0
    %408 = vmatprep.mubr.bf16.mxu0 0
    %409 = vmatmul.mubr.bf16.gmra.mrb[0].mxu0 %v257
    %v410 = vpop.f32.mrb[0].mxu0
    %v411 = vadd.f32 %v126, %v410
    %v412 = vpop.f32.mrb[0].mxu0
    %v413 = vpop.f32.mrb[0].mxu0
    %v414 = vadd.f32 %v126, %v413
    %v415 = vpop.f32.mrb[0].mxu0
    %416 = vmatprep.mubr.bf16.mxu0 0
    %417 = vmatmul.mubr.bf16.gmra.mrb[0].mxu0 %v258
    %v418 = vpop.f32.mrb[0].mxu0
    %v419 = vadd.f32 %v126, %v418
    %v420 = vpop.f32.mrb[0].mxu0
    %v421 = vpop.f32.mrb[0].mxu0
    %v422 = vadd.f32 %v126, %v421
    %v423 = vpop.f32.mrb[0].mxu0
    %424 = vmatprep.mubr.bf16.mxu0 0
    %425 = vmatmul.mubr.bf16.gmra.mrb[0].mxu0 %v259
    %v426 = vpop.f32.mrb[0].mxu0
    %v427 = vadd.f32 %v126, %v426
    %v428 = vpop.f32.mrb[0].mxu0
    %v429 = vpop.f32.mrb[0].mxu0
    %v430 = vadd.f32 %v126, %v429
    %v431 = vpop.f32.mrb[0].mxu0
    %432 = vmatprep.mubr.bf16.mxu0 0
    %433 = vmatmul.mubr.bf16.gmra.mrb[0].mxu0 %v260
    %v434 = vpop.f32.mrb[0].mxu0
    %v435 = vadd.f32 %v126, %v434
    %v436 = vpop.f32.mrb[0].mxu0
    %v437 = vpop.f32.mrb[0].mxu0
    %v438 = vadd.f32 %v126, %v437
    %v439 = vpop.f32.mrb[0].mxu0
    %440 = vmatprep.mubr.bf16.mxu0 0
    %441 = vmatmul.mubr.bf16.gmra.mrb[0].mxu0 %v261
    %v442 = vpop.f32.mrb[0].mxu0
    %v443 = vadd.f32 %v126, %v442
    %v444 = vpop.f32.mrb[0].mxu0
    %v445 = vpop.f32.mrb[0].mxu0
    %v446 = vadd.f32 %v126, %v445
    %v447 = vpop.f32.mrb[0].mxu0
    %448 = vmatprep.mubr.bf16.mxu0 0
    %449 = vmatmul.mubr.bf16.gmra.mrb[0].mxu0 %v262
    %v450 = vpop.f32.mrb[0].mxu0
    %v451 = vadd.f32 %v126, %v450
    %v452 = vpop.f32.mrb[0].mxu0
    %v453 = vpop.f32.mrb[0].mxu0
    %v454 = vadd.f32 %v126, %v453
    %v455 = vpop.f32.mrb[0].mxu0
    %456 = vmatprep.mubr.bf16.mxu0 0
    %457 = vmatmul.mubr.bf16.gmra.mrb[0].mxu0 %v263
    %v458 = vpop.f32.mrb[0].mxu0
    %v459 = vadd.f32 %v126, %v458
    %v460 = vpop.f32.mrb[0].mxu0
    %v461 = vpop.f32.mrb[0].mxu0
    %v462 = vadd.f32 %v126, %v461
    %v463 = vpop.f32.mrb[0].mxu0
    %464 = vmatprep.mubr.bf16.mxu0 0
    %465 = vmatmul.mubr.bf16.gmra.mrb[0].mxu0 %v264
    %v466 = vpop.f32.mrb[0].mxu0
    %v467 = vadd.f32 %v126, %v466
    %v468 = vpop.f32.mrb[0].mxu0
    %v469 = vpop.f32.mrb[0].mxu0
    %v470 = vadd.f32 %v126, %v469
    %v471 = vpop.f32.mrb[0].mxu0
    %472 = vmatprep.mubr.bf16.mxu0 0
    %473 = vmatmul.mubr.bf16.gmra.mrb[0].mxu0 %v265
    %v474 = vpop.f32.mrb[0].mxu0
    %v475 = vadd.f32 %v126, %v474
    %v476 = vpop.f32.mrb[0].mxu0
    %v477 = vpop.f32.mrb[0].mxu0
    %v478 = vadd.f32 %v126, %v477
    %v479 = vpop.f32.mrb[0].mxu0
    %480 = vmatprep.mubr.bf16.mxu0 0
    %481 = vmatmul.mubr.bf16.gmra.mrb[0].mxu0 %v266
    %v482 = vpop.f32.mrb[0].mxu0
    %v483 = vadd.f32 %v126, %v482
    %v484 = vpop.f32.mrb[0].mxu0
    %v485 = vpop.f32.mrb[0].mxu0
    %v486 = vadd.f32 %v126, %v485
    %v487 = vpop.f32.mrb[0].mxu0
    %488 = vmatprep.mubr.bf16.mxu0 0
    %489 = vmatmul.mubr.bf16.gmra.mrb[0].mxu0 %v267
    %v490 = vpop.f32.mrb[0].mxu0
    %v491 = vadd.f32 %v126, %v490
    %v492 = vpop.f32.mrb[0].mxu0
    %v493 = vpop.f32.mrb[0].mxu0
    %v494 = vadd.f32 %v126, %v493
    %v495 = vpop.f32.mrb[0].mxu0
    %496 = vmatprep.mubr.bf16.mxu0 0
    %497 = vmatmul.mubr.bf16.gmra.mrb[0].mxu0 %v268
    %v498 = vpop.f32.mrb[0].mxu0
    %v499 = vadd.f32 %v126, %v498
    %v500 = vpop.f32.mrb[0].mxu0
    %v501 = vpop.f32.mrb[0].mxu0
    %v502 = vadd.f32 %v126, %v501
    %v503 = vpop.f32.mrb[0].mxu0
    %504 = vmatprep.mubr.bf16.mxu0 0
    %505 = vmatmul.mubr.bf16.gmra.mrb[0].mxu0 %v269
    %v506 = vpop.f32.mrb[0].mxu0
    %v507 = vadd.f32 %v126, %v506
    %v508 = vpop.f32.mrb[0].mxu0
    %v509 = vpop.f32.mrb[0].mxu0
    %v510 = vadd.f32 %v126, %v509
    %v511 = vpop.f32.mrb[0].mxu0
    %512 = vmatprep.mubr.bf16.mxu0 0
    %513 = vmatmul.mubr.bf16.gmra.mrb[0].mxu0 %v270
    %v514 = vpop.f32.mrb[0].mxu0
    %v515 = vadd.f32 %v126, %v514
    %v516 = vpop.f32.mrb[0].mxu0
    %v517 = vpop.f32.mrb[0].mxu0
    %v518 = vadd.f32 %v126, %v517
    %v519 = vpop.f32.mrb[0].mxu0
    %520 = vmatprep.mubr.bf16.mxu0 0
    %521 = vmatmul.mubr.bf16.gmra.mrb[0].mxu0 %v271
    %v522 = vpop.f32.mrb[0].mxu0
    %v523 = vadd.f32 %v126, %v522
    %v524 = vpop.f32.mrb[0].mxu0
    %v525 = vpop.f32.mrb[0].mxu0
    %v526 = vadd.f32 %v126, %v525
    %v527 = vpop.f32.mrb[0].mxu0
    %528 = vmatprep.mubr.bf16.mxu0 0
    %529 = vmatmul.mubr.bf16.gmra.mrb[0].mxu0 %v272
    %v530 = vpop.f32.mrb[0].mxu0
    %v531 = vadd.f32 %v126, %v530
    %v532 = vpop.f32.mrb[0].mxu0
    %v533 = vpop.f32.mrb[0].mxu0
    %v534 = vadd.f32 %v126, %v533
    %v535 = vpop.f32.mrb[0].mxu0
    %536 = vmatprep.mubr.bf16.mxu0 0
    %537 = vmatmul.mubr.bf16.gmra.mrb[0].mxu0 %v273
    %v538 = vpop.f32.mrb[0].mxu0
    %v539 = vadd.f32 %v126, %v538
    %v540 = vpop.f32.mrb[0].mxu0
    %v541 = vpop.f32.mrb[0].mxu0
    %v542 = vadd.f32 %v126, %v541
    %v543 = vpop.f32.mrb[0].mxu0
    %544 = vmatprep.mubr.bf16.mxu0 0
    %545 = vmatmul.mubr.bf16.gmra.mrb[0].mxu0 %v274
    %v546 = vpop.f32.mrb[0].mxu0
    %v547 = vadd.f32 %v126, %v546
    %v548 = vpop.f32.mrb[0].mxu0
    %v549 = vpop.f32.mrb[0].mxu0
    %v550 = vadd.f32 %v126, %v549
    %v551 = vpop.f32.mrb[0].mxu0
    %552 = vmatprep.mubr.bf16.mxu0 0
    %553 = vmatmul.mubr.bf16.gmra.mrb[0].mxu0 %v275
    %v554 = vpop.f32.mrb[0].mxu0
    %v555 = vadd.f32 %v126, %v554
    %v556 = vpop.f32.mrb[0].mxu0
    %v557 = vpop.f32.mrb[0].mxu0
    %v558 = vadd.f32 %v126, %v557
    %v559 = vpop.f32.mrb[0].mxu0
    %560 = vmatprep.mubr.bf16.mxu0 0
    %561 = vmatmul.mubr.bf16.gmra.mrb[0].mxu0 %v276
    %v562 = vpop.f32.mrb[0].mxu0
    %v563 = vadd.f32 %v126, %v562
    %v564 = vpop.f32.mrb[0].mxu0
    %v565 = vpop.f32.mrb[0].mxu0
    %v566 = vadd.f32 %v126, %v565
    %v567 = vpop.f32.mrb[0].mxu0
    %568 = vmatprep.mubr.bf16.mxu0 0
    %569 = vmatmul.mubr.bf16.gmra.mrb[0].mxu0 %v277
    %v570 = vpop.f32.mrb[0].mxu0
    %v571 = vadd.f32 %v126, %v570
    %v572 = vpop.f32.mrb[0].mxu0
    %v573 = vpop.f32.mrb[0].mxu0
    %v574 = vadd.f32 %v126, %v573
    %v575 = vpop.f32.mrb[0].mxu0
    %576 = vmatprep.mubr.bf16.mxu0 0
    %577 = vmatmul.mubr.bf16.gmra.mrb[0].mxu0 %v278
    %v578 = vpop.f32.mrb[0].mxu0
    %v579 = vadd.f32 %v126, %v578
    %v580 = vpop.f32.mrb[0].mxu0
    %v581 = vpop.f32.mrb[0].mxu0
    %v582 = vadd.f32 %v126, %v581
    %v583 = vpop.f32.mrb[0].mxu0
    %584 = vmatprep.mubr.bf16.mxu0 0
    %585 = vmatmul.mubr.bf16.gmra.mrb[0].mxu0 %v279
    %v586 = vpop.f32.mrb[0].mxu0
    %v587 = vadd.f32 %v126, %v586
    %v588 = vpop.f32.mrb[0].mxu0
    %v589 = vpop.f32.mrb[0].mxu0
    %v590 = vadd.f32 %v126, %v589
    %v591 = vpop.f32.mrb[0].mxu0
    %592 = vmatprep.mubr.bf16.mxu0 0
    %593 = vmatmul.mubr.bf16.gmra.mrb[0].mxu0 %v280
    %v594 = vpop.f32.mrb[0].mxu0
    %v595 = vadd.f32 %v126, %v594
    %v596 = vpop.f32.mrb[0].mxu0
    %v597 = vpop.f32.mrb[0].mxu0
    %v598 = vadd.f32 %v126, %v597
    %v599 = vpop.f32.mrb[0].mxu0
    %600 = vmatprep.mubr.bf16.mxu0 0
    %601 = vmatmul.mubr.bf16.gmra.mrb[0].mxu0 %v281
    %v602 = vpop.f32.mrb[0].mxu0
    %v603 = vadd.f32 %v126, %v602
    %v604 = vpop.f32.mrb[0].mxu0
    %v605 = vpop.f32.mrb[0].mxu0
    %v606 = vadd.f32 %v126, %v605
    %v607 = vpop.f32.mrb[0].mxu0
    %608 = vmatprep.mubr.bf16.mxu0 0
    %609 = vmatmul.mubr.bf16.gmra.mrb[0].mxu0 %v282
    %v610 = vpop.f32.mrb[0].mxu0
    %v611 = vadd.f32 %v126, %v610
    %v612 = vpop.f32.mrb[0].mxu0
    %v613 = vpop.f32.mrb[0].mxu0
    %v614 = vadd.f32 %v126, %v613
    %v615 = vpop.f32.mrb[0].mxu0
    %616 = vmatprep.mubr.bf16.mxu0 0
    %617 = vmatmul.mubr.bf16.gmra.mrb[0].mxu0 %v283
    %v618 = vpop.f32.mrb[0].mxu0
    %v619 = vadd.f32 %v126, %v618
    %v620 = vpop.f32.mrb[0].mxu0
    %v621 = vpop.f32.mrb[0].mxu0
    %v622 = vadd.f32 %v126, %v621
    %v623 = vpop.f32.mrb[0].mxu0
    %624 = vmatprep.mubr.bf16.mxu0 0
    %625 = vmatmul.mubr.bf16.gmra.mrb[0].mxu0 %v284
    %v626 = vpop.f32.mrb[0].mxu0
    %v627 = vadd.f32 %v126, %v626
    %v628 = vpop.f32.mrb[0].mxu0
    %v629 = vpop.f32.mrb[0].mxu0
    %v630 = vadd.f32 %v126, %v629
    %v631 = vpop.f32.mrb[0].mxu0
    %632 = vmatprep.mubr.bf16.mxu0 0
    %633 = vmatmul.mubr.bf16.gmra.mrb[0].mxu0 %v285
    %v634 = vpop.f32.mrb[0].mxu0
    %v635 = vadd.f32 %v126, %v634
    %v636 = vpop.f32.mrb[0].mxu0
    %v637 = vpop.f32.mrb[0].mxu0
    %v638 = vadd.f32 %v126, %v637
    %v639 = vpop.f32.mrb[0].mxu0
    %640 = vmatprep.mubr.bf16.mxu0 0
    %641 = vmatmul.mubr.bf16.gmra.mrb[0].mxu0 %v286
    %v642 = vpop.f32.mrb[0].mxu0
    %v643 = vadd.f32 %v126, %v642
    %v644 = vpop.f32.mrb[0].mxu0
    %v645 = vpop.f32.mrb[0].mxu0
    %v646 = vadd.f32 %v126, %v645
    %v647 = vpop.f32.mrb[0].mxu0
    %648 = vmatprep.mubr.bf16.mxu0 0
    %649 = vmatmul.mubr.bf16.gmra.mrb[0].mxu0 %v287
    %v650 = vpop.f32.mrb[0].mxu0
    %v651 = vadd.f32 %v126, %v650
    %v652 = vpop.f32.mrb[0].mxu0
    %v653 = vpop.f32.mrb[0].mxu0
    %v654 = vadd.f32 %v126, %v653
    %v655 = vpop.f32.mrb[0].mxu0
    %656 = vdwg.mxu0
    %657 = vst [vmem:[%s3] sm:$0xff] %v403
    %658 = vst [vmem:[%s3 + $0x8] sm:$0xff] %v406
    %659 = vst [vmem:[%s3 + $0x10] sm:$0xff] %v411
    %660 = vst [vmem:[%s3 + $0x18] sm:$0xff] %v414
    %661 = vst [vmem:[%s3 + $0x20] sm:$0xff] %v419
    %662 = vst [vmem:[%s3 + $0x28] sm:$0xff] %v422
    %663 = vst [vmem:[%s3 + $0x30] sm:$0xff] %v427
    %664 = vst [vmem:[%s3 + $0x38] sm:$0xff] %v430
    %665 = vst [vmem:[%s3 + $0x40] sm:$0xff] %v435
    %666 = vst [vmem:[%s3 + $0x48] sm:$0xff] %v438
    %667 = vst [vmem:[%s3 + $0x50] sm:$0xff] %v443
    %668 = vst [vmem:[%s3 + $0x58] sm:$0xff] %v446
    %669 = vst [vmem:[%s3 + $0x60] sm:$0xff] %v451
    %670 = vst [vmem:[%s3 + $0x68] sm:$0xff] %v454
    %671 = vst [vmem:[%s3 + $0x70] sm:$0xff] %v459
    %672 = vst [vmem:[%s3 + $0x78] sm:$0xff] %v462
    %673 = vst [vmem:[%s3 + $0x80] sm:$0xff] %v467
    %674 = vst [vmem:[%s3 + $0x88] sm:$0xff] %v470
    %675 = vst [vmem:[%s3 + $0x90] sm:$0xff] %v475
    %676 = vst [vmem:[%s3 + $0x98] sm:$0xff] %v478
    %677 = vst [vmem:[%s3 + $0xa0] sm:$0xff] %v483
    %678 = vst [vmem:[%s3 + $0xa8] sm:$0xff] %v486
    %679 = vst [vmem:[%s3 + $0xb0] sm:$0xff] %v491
    %680 = vst [vmem:[%s3 + $0xb8] sm:$0xff] %v494
    %681 = vst [vmem:[%s3 + $0xc0] sm:$0xff] %v499
    %682 = vst [vmem:[%s3 + $0xc8] sm:$0xff] %v502
    %683 = vst [vmem:[%s3 + $0xd0] sm:$0xff] %v507
    %684 = vst [vmem:[%s3 + $0xd8] sm:$0xff] %v510
    %685 = vst [vmem:[%s3 + $0xe0] sm:$0xff] %v515
    %686 = vst [vmem:[%s3 + $0xe8] sm:$0xff] %v518
    %687 = vst [vmem:[%s3 + $0xf0] sm:$0xff] %v523
    %688 = vst [vmem:[%s3 + $0xf8] sm:$0xff] %v526
    %689 = vst [vmem:[%s3 + $0x100] sm:$0xff] %v531
    %690 = vst [vmem:[%s3 + $0x108] sm:$0xff] %v534
    %691 = vst [vmem:[%s3 + $0x110] sm:$0xff] %v539
    %692 = vst [vmem:[%s3 + $0x118] sm:$0xff] %v542
    %693 = vst [vmem:[%s3 + $0x120] sm:$0xff] %v547
    %694 = vst [vmem:[%s3 + $0x128] sm:$0xff] %v550
    %695 = vst [vmem:[%s3 + $0x130] sm:$0xff] %v555
    %696 = vst [vmem:[%s3 + $0x138] sm:$0xff] %v558
    %697 = vst [vmem:[%s3 + $0x140] sm:$0xff] %v563
    %698 = vst [vmem:[%s3 + $0x148] sm:$0xff] %v566
    %699 = vst [vmem:[%s3 + $0x150] sm:$0xff] %v571
    %700 = vst [vmem:[%s3 + $0x158] sm:$0xff] %v574
    %701 = vst [vmem:[%s3 + $0x160] sm:$0xff] %v579
    %702 = vst [vmem:[%s3 + $0x168] sm:$0xff] %v582
    %703 = vst [vmem:[%s3 + $0x170] sm:$0xff] %v587
    %704 = vst [vmem:[%s3 + $0x178] sm:$0xff] %v590
    %705 = vst [vmem:[%s3 + $0x180] sm:$0xff] %v595
    %706 = vst [vmem:[%s3 + $0x188] sm:$0xff] %v598
    %707 = vst [vmem:[%s3 + $0x190] sm:$0xff] %v603
    %708 = vst [vmem:[%s3 + $0x198] sm:$0xff] %v606
    %709 = vst [vmem:[%s3 + $0x1a0] sm:$0xff] %v611
    %710 = vst [vmem:[%s3 + $0x1a8] sm:$0xff] %v614
    %711 = vst [vmem:[%s3 + $0x1b0] sm:$0xff] %v619
    %712 = vst [vmem:[%s3 + $0x1b8] sm:$0xff] %v622
    %713 = vst [vmem:[%s3 + $0x1c0] sm:$0xff] %v627
    %714 = vst [vmem:[%s3 + $0x1c8] sm:$0xff] %v630
    %715 = vst [vmem:[%s3 + $0x1d0] sm:$0xff] %v635
    %716 = vst [vmem:[%s3 + $0x1d8] sm:$0xff] %v638
    %717 = vst [vmem:[%s3 + $0x1e0] sm:$0xff] %v643
    %718 = vst [vmem:[%s3 + $0x1e8] sm:$0xff] %v646
    %719 = vst [vmem:[%s3 + $0x1f0] sm:$0xff] %v651
    %720 = vst [vmem:[%s3 + $0x1f8] sm:$0xff] %v654
    // Predicated region
    $region22: #{_lambda_.9} parent=1 // pred_check
      _
    $region23: #{_lambda_.9} parent=1 // pred_check_branch
      %722 = sbr.rel (0) target = $region25
    $region24: #{_lambda_.9} parent=1 // pred_region
      _
    $region25: #{_lambda_.9} parent=1 // pred_fallthru
      _
    // Predicated region
    $region26: #{_lambda_.9} parent=1 // pred_check
      _
    $region27: #{_lambda_.9} parent=1 // pred_check_branch
      %724 = sbr.rel (0) target = $region29
    $region28: #{_lambda_.9} parent=1 // pred_region
      _
    $region29: #{_lambda_.9} parent=1 // pred_fallthru
      _
    %725 = vsyncpa [#allocation3], 1
    %726 = vsyncpa [#allocation5], 1

// kernel: _lambda_.7
$region0: #{_lambda_.7}
  #allocation0 [shape = 'u32[]', space=smem, size = 0x4, offset = 0x4, fixed_abs, tag = 'smem constant byte address 0x4 - core index']
  #allocation1 [shape = 'u32[144,128]{1,0:T(1,128)}', space=vmem, size = 0x12000, scoped, tag = 'internal scratch']
  %s0 = inlined_call_operand.vmem [shape: bf16[512,64], index: 0, kind: input, shape index: {}]
  %s1 = inlined_call_operand.hbm [shape: bf16[64,128], index: 1, kind: input, shape index: {}]
  %s2 = inlined_call_operand.hbm [shape: f32[1,128], index: 2, kind: input, shape index: {}]
  %s3 = inlined_call_operand.vmem [shape: f32[512,128], index: 3, kind: output, shape index: {}]
  %s4 = sld [smem:[#allocation0]]
  $region30: #{_lambda_.7} parent=0
    _
  %s6 = ssub.s32 1, %s4
  %s7 = scalar_select 0, %s6, %s4
  $region1: #{_lambda_.7} parent=0
    #allocation2 [shape = 'u8[16384]{0}', space=vmem, size = 0x4000, scoped, tag = 'input window, operand 1, single buffered']
    #allocation3 [shape = 's32[1]{0}', space=sflag, size = 0x4, scoped, tag = 'scoped memory for _lambda_.7']
    #allocation4 [shape = 'u8[512]{0}', space=vmem, size = 0x400, scoped, tag = 'input window, operand 2, single buffered']
    #allocation5 [shape = 's32[1]{0}', space=sflag, size = 0x4, scoped, tag = 'scoped memory for _lambda_.7']
    %8 = vsyncpa [#allocation3], 0
    %9 = vsyncpa [#allocation5], 0
    // Predicated region
    $region2: #{_lambda_.7} parent=1 // pred_check
      _
    $region3: #{_lambda_.7} parent=1 // pred_check_branch
      %11 = sbr.rel (0) target = $region5
    $region4: #{_lambda_.7} parent=1 // pred_region
      _
    $region5: #{_lambda_.7} parent=1 // pred_fallthru
      _
    // Predicated region
    $region6: #{_lambda_.7} parent=1 // pred_check
      _
    $region7: #{_lambda_.7} parent=1 // pred_check_branch
      %13 = sbr.rel (0) target = $region9
    $region8: #{_lambda_.7} parent=1 // pred_region
      %s15 = ssub.s32 512, 512
      %16 = vsyncadd [#allocation3], %s15
      %s17 = sshll.u32 [#allocation2], 4
      %s18 = int_to_ptr.vmem [resolvable:$true] %s17
      %23 = dma.hbm_to_vmem [thread:$0]  %s1, 512, %s18, [#allocation3], 64, 64, 4
    $region9: #{_lambda_.7} parent=1 // pred_fallthru
      _
    // Predicated region
    $region10: #{_lambda_.7} parent=1 // pred_check
      _
    $region11: #{_lambda_.7} parent=1 // pred_check_branch
      %25 = sbr.rel (0) target = $region13
    $region12: #{_lambda_.7} parent=1 // pred_region
      %s27 = ssub.s32 16, 16
      %28 = vsyncadd [#allocation5], %s27
      %s30 = sshll.u32 [#allocation4], 4
      %s31 = int_to_ptr.vmem [resolvable:$true] %s30
      %33 = dma.hbm_to_vmem [thread:$0]  %s2, 16, %s31, [#allocation5]
    $region13: #{_lambda_.7} parent=1 // pred_fallthru
      _
    // Predicated region
    $region14: #{_lambda_.7} parent=1 // pred_check
      _
    $region15: #{_lambda_.7} parent=1 // pred_check_branch
      %35 = sbr.rel (0) target = $region17
    $region16: #{_lambda_.7} parent=1 // pred_region
      %36 = dma.done [#allocation3], 512
    $region17: #{_lambda_.7} parent=1 // pred_fallthru
      _
    // Predicated region
    $region18: #{_lambda_.7} parent=1 // pred_check
      _
    $region19: #{_lambda_.7} parent=1 // pred_check_branch
      %38 = sbr.rel (0) target = $region21
    $region20: #{_lambda_.7} parent=1 // pred_region
      %39 = dma.done [#allocation5], 16
    $region21: #{_lambda_.7} parent=1 // pred_fallthru
      _
    %v41 = vld [vmem:[%s0] sm:$0xf]
    %v42 = vld [vmem:[%s0 + $0x4] sm:$0xf]
    %v43 = vld [vmem:[%s0 + $0x8] sm:$0xf]
    %v44 = vld [vmem:[%s0 + $0xc] sm:$0xf]
    %v45 = vld [vmem:[%s0 + $0x10] sm:$0xf]
    %v46 = vld [vmem:[%s0 + $0x14] sm:$0xf]
    %v47 = vld [vmem:[%s0 + $0x18] sm:$0xf]
    %v48 = vld [vmem:[%s0 + $0x1c] sm:$0xf]
    %v49 = vld [vmem:[%s0 + $0x20] sm:$0xf]
    %v50 = vld [vmem:[%s0 + $0x24] sm:$0xf]
    %v51 = vld [vmem:[%s0 + $0x28] sm:$0xf]
    %v52 = vld [vmem:[%s0 + $0x2c] sm:$0xf]
    %v53 = vld [vmem:[%s0 + $0x30] sm:$0xf]
    %v54 = vld [vmem:[%s0 + $0x34] sm:$0xf]
    %v55 = vld [vmem:[%s0 + $0x38] sm:$0xf]
    %v56 = vld [vmem:[%s0 + $0x3c] sm:$0xf]
    %v57 = vld [vmem:[%s0 + $0x40] sm:$0xf]
    %v58 = vld [vmem:[%s0 + $0x44] sm:$0xf]
    %v59 = vld [vmem:[%s0 + $0x48] sm:$0xf]
    %v60 = vld [vmem:[%s0 + $0x4c] sm:$0xf]
    %v61 = vld [vmem:[%s0 + $0x50] sm:$0xf]
    %v62 = vld [vmem:[%s0 + $0x54] sm:$0xf]
    %v63 = vld [vmem:[%s0 + $0x58] sm:$0xf]
    %v64 = vld [vmem:[%s0 + $0x5c] sm:$0xf]
    %v65 = vld [vmem:[%s0 + $0x60] sm:$0xf]
    %v66 = vld [vmem:[%s0 + $0x64] sm:$0xf]
    %v67 = vld [vmem:[%s0 + $0x68] sm:$0xf]
    %v68 = vld [vmem:[%s0 + $0x6c] sm:$0xf]
    %v69 = vld [vmem:[%s0 + $0x70] sm:$0xf]
    %v70 = vld [vmem:[%s0 + $0x74] sm:$0xf]
    %v71 = vld [vmem:[%s0 + $0x78] sm:$0xf]
    %v72 = vld [vmem:[%s0 + $0x7c] sm:$0xf]
    %v73 = vld [vmem:[%s0 + $0x80] sm:$0xf]
    %v74 = vld [vmem:[%s0 + $0x84] sm:$0xf]
    %v75 = vld [vmem:[%s0 + $0x88] sm:$0xf]
    %v76 = vld [vmem:[%s0 + $0x8c] sm:$0xf]
    %v77 = vld [vmem:[%s0 + $0x90] sm:$0xf]
    %v78 = vld [vmem:[%s0 + $0x94] sm:$0xf]
    %v79 = vld [vmem:[%s0 + $0x98] sm:$0xf]
    %v80 = vld [vmem:[%s0 + $0x9c] sm:$0xf]
    %v81 = vld [vmem:[%s0 + $0xa0] sm:$0xf]
    %v82 = vld [vmem:[%s0 + $0xa4] sm:$0xf]
    %v83 = vld [vmem:[%s0 + $0xa8] sm:$0xf]
    %v84 = vld [vmem:[%s0 + $0xac] sm:$0xf]
    %v85 = vld [vmem:[%s0 + $0xb0] sm:$0xf]
    %v86 = vld [vmem:[%s0 + $0xb4] sm:$0xf]
    %v87 = vld [vmem:[%s0 + $0xb8] sm:$0xf]
    %v88 = vld [vmem:[%s0 + $0xbc] sm:$0xf]
    %v89 = vld [vmem:[%s0 + $0xc0] sm:$0xf]
    %v90 = vld [vmem:[%s0 + $0xc4] sm:$0xf]
    %v91 = vld [vmem:[%s0 + $0xc8] sm:$0xf]
    %v92 = vld [vmem:[%s0 + $0xcc] sm:$0xf]
    %v93 = vld [vmem:[%s0 + $0xd0] sm:$0xf]
    %v94 = vld [vmem:[%s0 + $0xd4] sm:$0xf]
    %v95 = vld [vmem:[%s0 + $0xd8] sm:$0xf]
    %v96 = vld [vmem:[%s0 + $0xdc] sm:$0xf]
    %v97 = vld [vmem:[%s0 + $0xe0] sm:$0xf]
    %v98 = vld [vmem:[%s0 + $0xe4] sm:$0xf]
    %v99 = vld [vmem:[%s0 + $0xe8] sm:$0xf]
    %v100 = vld [vmem:[%s0 + $0xec] sm:$0xf]
    %v101 = vld [vmem:[%s0 + $0xf0] sm:$0xf]
    %v102 = vld [vmem:[%s0 + $0xf4] sm:$0xf]
    %v103 = vld [vmem:[%s0 + $0xf8] sm:$0xf]
    %v104 = vld [vmem:[%s0 + $0xfc] sm:$0xf]
    %v105 = vld [vmem:[#allocation2] sm:$0xf]
    %v106 = vld [vmem:[#allocation2 + $0x4] sm:$0xf]
    %v107 = vld [vmem:[#allocation2 + $0x8] sm:$0xf]
    %v108 = vld [vmem:[#allocation2 + $0xc] sm:$0xf]
    %v109 = vld [vmem:[#allocation2 + $0x10] sm:$0xf]
    %v110 = vld [vmem:[#allocation2 + $0x14] sm:$0xf]
    %v111 = vld [vmem:[#allocation2 + $0x18] sm:$0xf]
    %v112 = vld [vmem:[#allocation2 + $0x1c] sm:$0xf]
    %v113 = vld [vmem:[#allocation4] sm:$0x1]
    %v115 = vlaneseq
    %v116 = vshrl.u32 %v115, 7
    %v117 = vsub.s32 0, %v116
    %v118 = vrot.slane %v113, %v117
    %v184 = vunpack.c.l.b16 %v41
    %v185 = vunpack.c.l.b16 %v42
    %v186 = vunpack.c.l.b16 %v43
    %v187 = vunpack.c.l.b16 %v44
    %v188 = vunpack.c.l.b16 %v45
    %v189 = vunpack.c.l.b16 %v46
    %v190 = vunpack.c.l.b16 %v47
    %v191 = vunpack.c.l.b16 %v48
    %v192 = vunpack.c.l.b16 %v49
    %v193 = vunpack.c.l.b16 %v50
    %v194 = vunpack.c.l.b16 %v51
    %v195 = vunpack.c.l.b16 %v52
    %v196 = vunpack.c.l.b16 %v53
    %v197 = vunpack.c.l.b16 %v54
    %v198 = vunpack.c.l.b16 %v55
    %v199 = vunpack.c.l.b16 %v56
    %v200 = vunpack.c.l.b16 %v57
    %v201 = vunpack.c.l.b16 %v58
    %v202 = vunpack.c.l.b16 %v59
    %v203 = vunpack.c.l.b16 %v60
    %v204 = vunpack.c.l.b16 %v61
    %v205 = vunpack.c.l.b16 %v62
    %v206 = vunpack.c.l.b16 %v63
    %v207 = vunpack.c.l.b16 %v64
    %v208 = vunpack.c.l.b16 %v65
    %v209 = vunpack.c.l.b16 %v66
    %v210 = vunpack.c.l.b16 %v67
    %v211 = vunpack.c.l.b16 %v68
    %v212 = vunpack.c.l.b16 %v69
    %v213 = vunpack.c.l.b16 %v70
    %v214 = vunpack.c.l.b16 %v71
    %v215 = vunpack.c.l.b16 %v72
    %v216 = vunpack.c.l.b16 %v73
    %v217 = vunpack.c.l.b16 %v74
    %v218 = vunpack.c.l.b16 %v75
    %v219 = vunpack.c.l.b16 %v76
    %v220 = vunpack.c.l.b16 %v77
    %v221 = vunpack.c.l.b16 %v78
    %v222 = vunpack.c.l.b16 %v79
    %v223 = vunpack.c.l.b16 %v80
    %v224 = vunpack.c.l.b16 %v81
    %v225 = vunpack.c.l.b16 %v82
    %v226 = vunpack.c.l.b16 %v83
    %v227 = vunpack.c.l.b16 %v84
    %v228 = vunpack.c.l.b16 %v85
    %v229 = vunpack.c.l.b16 %v86
    %v230 = vunpack.c.l.b16 %v87
    %v231 = vunpack.c.l.b16 %v88
    %v232 = vunpack.c.l.b16 %v89
    %v233 = vunpack.c.l.b16 %v90
    %v234 = vunpack.c.l.b16 %v91
    %v235 = vunpack.c.l.b16 %v92
    %v236 = vunpack.c.l.b16 %v93
    %v237 = vunpack.c.l.b16 %v94
    %v238 = vunpack.c.l.b16 %v95
    %v239 = vunpack.c.l.b16 %v96
    %v240 = vunpack.c.l.b16 %v97
    %v241 = vunpack.c.l.b16 %v98
    %v242 = vunpack.c.l.b16 %v99
    %v243 = vunpack.c.l.b16 %v100
    %v244 = vunpack.c.l.b16 %v101
    %v245 = vunpack.c.l.b16 %v102
    %v246 = vunpack.c.l.b16 %v103
    %v247 = vunpack.c.l.b16 %v104
    %v248 = vpack.c.b16 %v185, %v184
    %v249 = vpack.c.b16 %v187, %v186
    %v250 = vpack.c.b16 %v189, %v188
    %v251 = vpack.c.b16 %v191, %v190
    %v252 = vpack.c.b16 %v193, %v192
    %v253 = vpack.c.b16 %v195, %v194
    %v254 = vpack.c.b16 %v197, %v196
    %v255 = vpack.c.b16 %v199, %v198
    %v256 = vpack.c.b16 %v201, %v200
    %v257 = vpack.c.b16 %v203, %v202
    %v258 = vpack.c.b16 %v205, %v204
    %v259 = vpack.c.b16 %v207, %v206
    %v260 = vpack.c.b16 %v209, %v208
    %v261 = vpack.c.b16 %v211, %v210
    %v262 = vpack.c.b16 %v213, %v212
    %v263 = vpack.c.b16 %v215, %v214
    %v264 = vpack.c.b16 %v217, %v216
    %v265 = vpack.c.b16 %v219, %v218
    %v266 = vpack.c.b16 %v221, %v220
    %v267 = vpack.c.b16 %v223, %v222
    %v268 = vpack.c.b16 %v225, %v224
    %v269 = vpack.c.b16 %v227, %v226
    %v270 = vpack.c.b16 %v229, %v228
    %v271 = vpack.c.b16 %v231, %v230
    %v272 = vpack.c.b16 %v233, %v232
    %v273 = vpack.c.b16 %v235, %v234
    %v274 = vpack.c.b16 %v237, %v236
    %v275 = vpack.c.b16 %v239, %v238
    %v276 = vpack.c.b16 %v241, %v240
    %v277 = vpack.c.b16 %v243, %v242
    %v278 = vpack.c.b16 %v245, %v244
    %v279 = vpack.c.b16 %v247, %v246
    %v288 = vunpack.c.l.b16 %v105
    %v289 = vunpack.c.l.b16 %v106
    %v290 = vunpack.c.l.b16 %v107
    %v291 = vunpack.c.l.b16 %v108
    %v292 = vunpack.c.l.b16 %v109
    %v293 = vunpack.c.l.b16 %v110
    %v294 = vunpack.c.l.b16 %v111
    %v295 = vunpack.c.l.b16 %v112
    %v296 = vpack.c.b16 %v289, %v288
    %v297 = vpack.c.b16 %v291, %v290
    %v298 = vpack.c.b16 %v293, %v292
    %v299 = vpack.c.b16 %v295, %v294
    %vm304 = vcmask 523264
    %v306 = vsel %vm304, %v248, 0
    %v309 = vsel %vm304, %v249, 0
    %v312 = vsel %vm304, %v250, 0
    %v315 = vsel %vm304, %v251, 0
    %v318 = vsel %vm304, %v252, 0
    %v321 = vsel %vm304, %v253, 0
    %v324 = vsel %vm304, %v254, 0
    %v327 = vsel %vm304, %v255, 0
    %v330 = vsel %vm304, %v256, 0
    %v333 = vsel %vm304, %v257, 0
    %v336 = vsel %vm304, %v258, 0
    %v339 = vsel %vm304, %v259, 0
    %v342 = vsel %vm304, %v260, 0
    %v345 = vsel %vm304, %v261, 0
    %v348 = vsel %vm304, %v262, 0
    %v351 = vsel %vm304, %v263, 0
    %v354 = vsel %vm304, %v264, 0
    %v357 = vsel %vm304, %v265, 0
    %v360 = vsel %vm304, %v266, 0
    %v363 = vsel %vm304, %v267, 0
    %v366 = vsel %vm304, %v268, 0
    %v369 = vsel %vm304, %v269, 0
    %v372 = vsel %vm304, %v270, 0
    %v375 = vsel %vm304, %v271, 0
    %v378 = vsel %vm304, %v272, 0
    %v381 = vsel %vm304, %v273, 0
    %v384 = vsel %vm304, %v274, 0
    %v387 = vsel %vm304, %v275, 0
    %v390 = vsel %vm304, %v276, 0
    %v393 = vsel %vm304, %v277, 0
    %v396 = vsel %vm304, %v278, 0
    %v399 = vsel %vm304, %v279, 0
    %401 = vmatprep.subr.bf16.mxu0 0
    %402 = vmatpush1.bf16.msra.mxu0 %v296
    %403 = vmatprep.subr.bf16.mxu0 0
    %404 = vmatpush1.bf16.msra.mxu0 %v297
    %405 = vmatprep.subr.bf16.mxu0 0
    %406 = vmatpush1.bf16.msra.mxu0 %v298
    %407 = vmatprep.subr.bf16.mxu0 0
    %408 = vmatpush1.bf16.msra.mxu0 %v299
    %409 = vmatprep.subr.bf16.mxu0 0
    %410 = vmatpush1.bf16.msra.mxu0 0
    %411 = vmatprep.subr.bf16.mxu0 0
    %412 = vmatpush1.bf16.msra.mxu0 0
    %413 = vmatprep.subr.bf16.mxu0 0
    %414 = vmatpush1.bf16.msra.mxu0 0
    %415 = vmatprep.subr.bf16.mxu0 0
    %416 = vmatpush1.bf16.msra.mxu0 0
    %417 = vmatprep.subr.bf16.mxu0 0
    %418 = vmatpush1.bf16.msra.mxu0 0
    %419 = vmatprep.subr.bf16.mxu0 0
    %420 = vmatpush1.bf16.msra.mxu0 0
    %421 = vmatprep.subr.bf16.mxu0 0
    %422 = vmatpush1.bf16.msra.mxu0 0
    %423 = vmatprep.subr.bf16.mxu0 0
    %424 = vmatpush1.bf16.msra.mxu0 0
    %425 = vmatprep.subr.bf16.mxu0 0
    %426 = vmatpush1.bf16.msra.mxu0 0
    %427 = vmatprep.subr.bf16.mxu0 0
    %428 = vmatpush1.bf16.msra.mxu0 0
    %429 = vmatprep.subr.bf16.mxu0 0
    %430 = vmatpush1.bf16.msra.mxu0 0
    %431 = vmatprep.subr.bf16.mxu0 0
    %432 = vmatpush1.bf16.msra.mxu0 0
    %433 = vmatprep.mubr.bf16.mxu0 0
    %434 = vmatmul.mubr.bf16.gmra.mrb[0].mxu0 %v306
    %v435 = vpop.f32.mrb[0].mxu0
    %v436 = vadd.f32 %v118, %v435
    %v437 = vpop.f32.mrb[0].mxu0
    %v438 = vpop.f32.mrb[0].mxu0
    %v439 = vadd.f32 %v118, %v438
    %v440 = vpop.f32.mrb[0].mxu0
    %441 = vmatprep.mubr.bf16.mxu0 0
    %442 = vmatmul.mubr.bf16.gmra.mrb[0].mxu0 %v309
    %v443 = vpop.f32.mrb[0].mxu0
    %v444 = vadd.f32 %v118, %v443
    %v445 = vpop.f32.mrb[0].mxu0
    %v446 = vpop.f32.mrb[0].mxu0
    %v447 = vadd.f32 %v118, %v446
    %v448 = vpop.f32.mrb[0].mxu0
    %449 = vmatprep.mubr.bf16.mxu0 0
    %450 = vmatmul.mubr.bf16.gmra.mrb[0].mxu0 %v312
    %v451 = vpop.f32.mrb[0].mxu0
    %v452 = vadd.f32 %v118, %v451
    %v453 = vpop.f32.mrb[0].mxu0
    %v454 = vpop.f32.mrb[0].mxu0
    %v455 = vadd.f32 %v118, %v454
    %v456 = vpop.f32.mrb[0].mxu0
    %457 = vmatprep.mubr.bf16.mxu0 0
    %458 = vmatmul.mubr.bf16.gmra.mrb[0].mxu0 %v315
    %v459 = vpop.f32.mrb[0].mxu0
    %v460 = vadd.f32 %v118, %v459
    %v461 = vpop.f32.mrb[0].mxu0
    %v462 = vpop.f32.mrb[0].mxu0
    %v463 = vadd.f32 %v118, %v462
    %v464 = vpop.f32.mrb[0].mxu0
    %465 = vmatprep.mubr.bf16.mxu0 0
    %466 = vmatmul.mubr.bf16.gmra.mrb[0].mxu0 %v318
    %v467 = vpop.f32.mrb[0].mxu0
    %v468 = vadd.f32 %v118, %v467
    %v469 = vpop.f32.mrb[0].mxu0
    %v470 = vpop.f32.mrb[0].mxu0
    %v471 = vadd.f32 %v118, %v470
    %v472 = vpop.f32.mrb[0].mxu0
    %473 = vmatprep.mubr.bf16.mxu0 0
    %474 = vmatmul.mubr.bf16.gmra.mrb[0].mxu0 %v321
    %v475 = vpop.f32.mrb[0].mxu0
    %v476 = vadd.f32 %v118, %v475
    %v477 = vpop.f32.mrb[0].mxu0
    %v478 = vpop.f32.mrb[0].mxu0
    %v479 = vadd.f32 %v118, %v478
    %v480 = vpop.f32.mrb[0].mxu0
    %481 = vmatprep.mubr.bf16.mxu0 0
    %482 = vmatmul.mubr.bf16.gmra.mrb[0].mxu0 %v324
    %v483 = vpop.f32.mrb[0].mxu0
    %v484 = vadd.f32 %v118, %v483
    %v485 = vpop.f32.mrb[0].mxu0
    %v486 = vpop.f32.mrb[0].mxu0
    %v487 = vadd.f32 %v118, %v486
    %v488 = vpop.f32.mrb[0].mxu0
    %489 = vmatprep.mubr.bf16.mxu0 0
    %490 = vmatmul.mubr.bf16.gmra.mrb[0].mxu0 %v327
    %v491 = vpop.f32.mrb[0].mxu0
    %v492 = vadd.f32 %v118, %v491
    %v493 = vpop.f32.mrb[0].mxu0
    %v494 = vpop.f32.mrb[0].mxu0
    %v495 = vadd.f32 %v118, %v494
    %v496 = vpop.f32.mrb[0].mxu0
    %497 = vmatprep.mubr.bf16.mxu0 0
    %498 = vmatmul.mubr.bf16.gmra.mrb[0].mxu0 %v330
    %v499 = vpop.f32.mrb[0].mxu0
    %v500 = vadd.f32 %v118, %v499
    %v501 = vpop.f32.mrb[0].mxu0
    %v502 = vpop.f32.mrb[0].mxu0
    %v503 = vadd.f32 %v118, %v502
    %v504 = vpop.f32.mrb[0].mxu0
    %505 = vmatprep.mubr.bf16.mxu0 0
    %506 = vmatmul.mubr.bf16.gmra.mrb[0].mxu0 %v333
    %v507 = vpop.f32.mrb[0].mxu0
    %v508 = vadd.f32 %v118, %v507
    %v509 = vpop.f32.mrb[0].mxu0
    %v510 = vpop.f32.mrb[0].mxu0
    %v511 = vadd.f32 %v118, %v510
    %v512 = vpop.f32.mrb[0].mxu0
    %513 = vmatprep.mubr.bf16.mxu0 0
    %514 = vmatmul.mubr.bf16.gmra.mrb[0].mxu0 %v336
    %v515 = vpop.f32.mrb[0].mxu0
    %v516 = vadd.f32 %v118, %v515
    %v517 = vpop.f32.mrb[0].mxu0
    %v518 = vpop.f32.mrb[0].mxu0
    %v519 = vadd.f32 %v118, %v518
    %v520 = vpop.f32.mrb[0].mxu0
    %521 = vmatprep.mubr.bf16.mxu0 0
    %522 = vmatmul.mubr.bf16.gmra.mrb[0].mxu0 %v339
    %v523 = vpop.f32.mrb[0].mxu0
    %v524 = vadd.f32 %v118, %v523
    %v525 = vpop.f32.mrb[0].mxu0
    %v526 = vpop.f32.mrb[0].mxu0
    %v527 = vadd.f32 %v118, %v526
    %v528 = vpop.f32.mrb[0].mxu0
    %529 = vmatprep.mubr.bf16.mxu0 0
    %530 = vmatmul.mubr.bf16.gmra.mrb[0].mxu0 %v342
    %v531 = vpop.f32.mrb[0].mxu0
    %v532 = vadd.f32 %v118, %v531
    %v533 = vpop.f32.mrb[0].mxu0
    %v534 = vpop.f32.mrb[0].mxu0
    %v535 = vadd.f32 %v118, %v534
    %v536 = vpop.f32.mrb[0].mxu0
    %537 = vmatprep.mubr.bf16.mxu0 0
    %538 = vmatmul.mubr.bf16.gmra.mrb[0].mxu0 %v345
    %v539 = vpop.f32.mrb[0].mxu0
    %v540 = vadd.f32 %v118, %v539
    %v541 = vpop.f32.mrb[0].mxu0
    %v542 = vpop.f32.mrb[0].mxu0
    %v543 = vadd.f32 %v118, %v542
    %v544 = vpop.f32.mrb[0].mxu0
    %545 = vmatprep.mubr.bf16.mxu0 0
    %546 = vmatmul.mubr.bf16.gmra.mrb[0].mxu0 %v348
    %v547 = vpop.f32.mrb[0].mxu0
    %v548 = vadd.f32 %v118, %v547
    %v549 = vpop.f32.mrb[0].mxu0
    %v550 = vpop.f32.mrb[0].mxu0
    %v551 = vadd.f32 %v118, %v550
    %v552 = vpop.f32.mrb[0].mxu0
    %553 = vmatprep.mubr.bf16.mxu0 0
    %554 = vmatmul.mubr.bf16.gmra.mrb[0].mxu0 %v351
    %v555 = vpop.f32.mrb[0].mxu0
    %v556 = vadd.f32 %v118, %v555
    %v557 = vpop.f32.mrb[0].mxu0
    %v558 = vpop.f32.mrb[0].mxu0
    %v559 = vadd.f32 %v118, %v558
    %v560 = vpop.f32.mrb[0].mxu0
    %561 = vmatprep.mubr.bf16.mxu0 0
    %562 = vmatmul.mubr.bf16.gmra.mrb[0].mxu0 %v354
    %v563 = vpop.f32.mrb[0].mxu0
    %v564 = vadd.f32 %v118, %v563
    %v565 = vpop.f32.mrb[0].mxu0
    %v566 = vpop.f32.mrb[0].mxu0
    %v567 = vadd.f32 %v118, %v566
    %v568 = vpop.f32.mrb[0].mxu0
    %569 = vmatprep.mubr.bf16.mxu0 0
    %570 = vmatmul.mubr.bf16.gmra.mrb[0].mxu0 %v357
    %v571 = vpop.f32.mrb[0].mxu0
    %v572 = vadd.f32 %v118, %v571
    %v573 = vpop.f32.mrb[0].mxu0
    %v574 = vpop.f32.mrb[0].mxu0
    %v575 = vadd.f32 %v118, %v574
    %v576 = vpop.f32.mrb[0].mxu0
    %577 = vmatprep.mubr.bf16.mxu0 0
    %578 = vmatmul.mubr.bf16.gmra.mrb[0].mxu0 %v360
    %v579 = vpop.f32.mrb[0].mxu0
    %v580 = vadd.f32 %v118, %v579
    %v581 = vpop.f32.mrb[0].mxu0
    %v582 = vpop.f32.mrb[0].mxu0
    %v583 = vadd.f32 %v118, %v582
    %v584 = vpop.f32.mrb[0].mxu0
    %585 = vmatprep.mubr.bf16.mxu0 0
    %586 = vmatmul.mubr.bf16.gmra.mrb[0].mxu0 %v363
    %v587 = vpop.f32.mrb[0].mxu0
    %v588 = vadd.f32 %v118, %v587
    %v589 = vpop.f32.mrb[0].mxu0
    %v590 = vpop.f32.mrb[0].mxu0
    %v591 = vadd.f32 %v118, %v590
    %v592 = vpop.f32.mrb[0].mxu0
    %593 = vmatprep.mubr.bf16.mxu0 0
    %594 = vmatmul.mubr.bf16.gmra.mrb[0].mxu0 %v366
    %v595 = vpop.f32.mrb[0].mxu0
    %v596 = vadd.f32 %v118, %v595
    %v597 = vpop.f32.mrb[0].mxu0
    %v598 = vpop.f32.mrb[0].mxu0
    %v599 = vadd.f32 %v118, %v598
    %v600 = vpop.f32.mrb[0].mxu0
    %601 = vmatprep.mubr.bf16.mxu0 0
    %602 = vmatmul.mubr.bf16.gmra.mrb[0].mxu0 %v369
    %v603 = vpop.f32.mrb[0].mxu0
    %v604 = vadd.f32 %v118, %v603
    %v605 = vpop.f32.mrb[0].mxu0
    %v606 = vpop.f32.mrb[0].mxu0
    %v607 = vadd.f32 %v118, %v606
    %v608 = vpop.f32.mrb[0].mxu0
    %609 = vmatprep.mubr.bf16.mxu0 0
    %610 = vmatmul.mubr.bf16.gmra.mrb[0].mxu0 %v372
    %v611 = vpop.f32.mrb[0].mxu0
    %v612 = vadd.f32 %v118, %v611
    %v613 = vpop.f32.mrb[0].mxu0
    %v614 = vpop.f32.mrb[0].mxu0
    %v615 = vadd.f32 %v118, %v614
    %v616 = vpop.f32.mrb[0].mxu0
    %617 = vmatprep.mubr.bf16.mxu0 0
    %618 = vmatmul.mubr.bf16.gmra.mrb[0].mxu0 %v375
    %v619 = vpop.f32.mrb[0].mxu0
    %v620 = vadd.f32 %v118, %v619
    %v621 = vpop.f32.mrb[0].mxu0
    %v622 = vpop.f32.mrb[0].mxu0
    %v623 = vadd.f32 %v118, %v622
    %v624 = vpop.f32.mrb[0].mxu0
    %625 = vmatprep.mubr.bf16.mxu0 0
    %626 = vmatmul.mubr.bf16.gmra.mrb[0].mxu0 %v378
    %v627 = vpop.f32.mrb[0].mxu0
    %v628 = vadd.f32 %v118, %v627
    %v629 = vpop.f32.mrb[0].mxu0
    %v630 = vpop.f32.mrb[0].mxu0
    %v631 = vadd.f32 %v118, %v630
    %v632 = vpop.f32.mrb[0].mxu0
    %633 = vmatprep.mubr.bf16.mxu0 0
    %634 = vmatmul.mubr.bf16.gmra.mrb[0].mxu0 %v381
    %v635 = vpop.f32.mrb[0].mxu0
    %v636 = vadd.f32 %v118, %v635
    %v637 = vpop.f32.mrb[0].mxu0
    %v638 = vpop.f32.mrb[0].mxu0
    %v639 = vadd.f32 %v118, %v638
    %v640 = vpop.f32.mrb[0].mxu0
    %641 = vmatprep.mubr.bf16.mxu0 0
    %642 = vmatmul.mubr.bf16.gmra.mrb[0].mxu0 %v384
    %v643 = vpop.f32.mrb[0].mxu0
    %v644 = vadd.f32 %v118, %v643
    %v645 = vpop.f32.mrb[0].mxu0
    %v646 = vpop.f32.mrb[0].mxu0
    %v647 = vadd.f32 %v118, %v646
    %v648 = vpop.f32.mrb[0].mxu0
    %649 = vmatprep.mubr.bf16.mxu0 0
    %650 = vmatmul.mubr.bf16.gmra.mrb[0].mxu0 %v387
    %v651 = vpop.f32.mrb[0].mxu0
    %v652 = vadd.f32 %v118, %v651
    %v653 = vpop.f32.mrb[0].mxu0
    %v654 = vpop.f32.mrb[0].mxu0
    %v655 = vadd.f32 %v118, %v654
    %v656 = vpop.f32.mrb[0].mxu0
    %657 = vmatprep.mubr.bf16.mxu0 0
    %658 = vmatmul.mubr.bf16.gmra.mrb[0].mxu0 %v390
    %v659 = vpop.f32.mrb[0].mxu0
    %v660 = vadd.f32 %v118, %v659
    %v661 = vpop.f32.mrb[0].mxu0
    %v662 = vpop.f32.mrb[0].mxu0
    %v663 = vadd.f32 %v118, %v662
    %v664 = vpop.f32.mrb[0].mxu0
    %665 = vmatprep.mubr.bf16.mxu0 0
    %666 = vmatmul.mubr.bf16.gmra.mrb[0].mxu0 %v393
    %v667 = vpop.f32.mrb[0].mxu0
    %v668 = vadd.f32 %v118, %v667
    %v669 = vpop.f32.mrb[0].mxu0
    %v670 = vpop.f32.mrb[0].mxu0
    %v671 = vadd.f32 %v118, %v670
    %v672 = vpop.f32.mrb[0].mxu0
    %673 = vmatprep.mubr.bf16.mxu0 0
    %674 = vmatmul.mubr.bf16.gmra.mrb[0].mxu0 %v396
    %v675 = vpop.f32.mrb[0].mxu0
    %v676 = vadd.f32 %v118, %v675
    %v677 = vpop.f32.mrb[0].mxu0
    %v678 = vpop.f32.mrb[0].mxu0
    %v679 = vadd.f32 %v118, %v678
    %v680 = vpop.f32.mrb[0].mxu0
    %681 = vmatprep.mubr.bf16.mxu0 0
    %682 = vmatmul.mubr.bf16.gmra.mrb[0].mxu0 %v399
    %v683 = vpop.f32.mrb[0].mxu0
    %v684 = vadd.f32 %v118, %v683
    %v685 = vpop.f32.mrb[0].mxu0
    %v686 = vpop.f32.mrb[0].mxu0
    %v687 = vadd.f32 %v118, %v686
    %v688 = vpop.f32.mrb[0].mxu0
    %689 = vdwg.mxu0
    %690 = vst [vmem:[%s3] sm:$0xff] %v436
    %691 = vst [vmem:[%s3 + $0x8] sm:$0xff] %v439
    %692 = vst [vmem:[%s3 + $0x10] sm:$0xff] %v444
    %693 = vst [vmem:[%s3 + $0x18] sm:$0xff] %v447
    %694 = vst [vmem:[%s3 + $0x20] sm:$0xff] %v452
    %695 = vst [vmem:[%s3 + $0x28] sm:$0xff] %v455
    %696 = vst [vmem:[%s3 + $0x30] sm:$0xff] %v460
    %697 = vst [vmem:[%s3 + $0x38] sm:$0xff] %v463
    %698 = vst [vmem:[%s3 + $0x40] sm:$0xff] %v468
    %699 = vst [vmem:[%s3 + $0x48] sm:$0xff] %v471
    %700 = vst [vmem:[%s3 + $0x50] sm:$0xff] %v476
    %701 = vst [vmem:[%s3 + $0x58] sm:$0xff] %v479
    %702 = vst [vmem:[%s3 + $0x60] sm:$0xff] %v484
    %703 = vst [vmem:[%s3 + $0x68] sm:$0xff] %v487
    %704 = vst [vmem:[%s3 + $0x70] sm:$0xff] %v492
    %705 = vst [vmem:[%s3 + $0x78] sm:$0xff] %v495
    %706 = vst [vmem:[%s3 + $0x80] sm:$0xff] %v500
    %707 = vst [vmem:[%s3 + $0x88] sm:$0xff] %v503
    %708 = vst [vmem:[%s3 + $0x90] sm:$0xff] %v508
    %709 = vst [vmem:[%s3 + $0x98] sm:$0xff] %v511
    %710 = vst [vmem:[%s3 + $0xa0] sm:$0xff] %v516
    %711 = vst [vmem:[%s3 + $0xa8] sm:$0xff] %v519
    %712 = vst [vmem:[%s3 + $0xb0] sm:$0xff] %v524
    %713 = vst [vmem:[%s3 + $0xb8] sm:$0xff] %v527
    %714 = vst [vmem:[%s3 + $0xc0] sm:$0xff] %v532
    %715 = vst [vmem:[%s3 + $0xc8] sm:$0xff] %v535
    %716 = vst [vmem:[%s3 + $0xd0] sm:$0xff] %v540
    %717 = vst [vmem:[%s3 + $0xd8] sm:$0xff] %v543
    %718 = vst [vmem:[%s3 + $0xe0] sm:$0xff] %v548
    %719 = vst [vmem:[%s3 + $0xe8] sm:$0xff] %v551
    %720 = vst [vmem:[%s3 + $0xf0] sm:$0xff] %v556
    %721 = vst [vmem:[%s3 + $0xf8] sm:$0xff] %v559
    %722 = vst [vmem:[%s3 + $0x100] sm:$0xff] %v564
    %723 = vst [vmem:[%s3 + $0x108] sm:$0xff] %v567
    %724 = vst [vmem:[%s3 + $0x110] sm:$0xff] %v572
    %725 = vst [vmem:[%s3 + $0x118] sm:$0xff] %v575
    %726 = vst [vmem:[%s3 + $0x120] sm:$0xff] %v580
    %727 = vst [vmem:[%s3 + $0x128] sm:$0xff] %v583
    %728 = vst [vmem:[%s3 + $0x130] sm:$0xff] %v588
    %729 = vst [vmem:[%s3 + $0x138] sm:$0xff] %v591
    %730 = vst [vmem:[%s3 + $0x140] sm:$0xff] %v596
    %731 = vst [vmem:[%s3 + $0x148] sm:$0xff] %v599
    %732 = vst [vmem:[%s3 + $0x150] sm:$0xff] %v604
    %733 = vst [vmem:[%s3 + $0x158] sm:$0xff] %v607
    %734 = vst [vmem:[%s3 + $0x160] sm:$0xff] %v612
    %735 = vst [vmem:[%s3 + $0x168] sm:$0xff] %v615
    %736 = vst [vmem:[%s3 + $0x170] sm:$0xff] %v620
    %737 = vst [vmem:[%s3 + $0x178] sm:$0xff] %v623
    %738 = vst [vmem:[%s3 + $0x180] sm:$0xff] %v628
    %739 = vst [vmem:[%s3 + $0x188] sm:$0xff] %v631
    %740 = vst [vmem:[%s3 + $0x190] sm:$0xff] %v636
    %741 = vst [vmem:[%s3 + $0x198] sm:$0xff] %v639
    %742 = vst [vmem:[%s3 + $0x1a0] sm:$0xff] %v644
    %743 = vst [vmem:[%s3 + $0x1a8] sm:$0xff] %v647
    %744 = vst [vmem:[%s3 + $0x1b0] sm:$0xff] %v652
    %745 = vst [vmem:[%s3 + $0x1b8] sm:$0xff] %v655
    %746 = vst [vmem:[%s3 + $0x1c0] sm:$0xff] %v660
    %747 = vst [vmem:[%s3 + $0x1c8] sm:$0xff] %v663
    %748 = vst [vmem:[%s3 + $0x1d0] sm:$0xff] %v668
    %749 = vst [vmem:[%s3 + $0x1d8] sm:$0xff] %v671
    %750 = vst [vmem:[%s3 + $0x1e0] sm:$0xff] %v676
    %751 = vst [vmem:[%s3 + $0x1e8] sm:$0xff] %v679
    %752 = vst [vmem:[%s3 + $0x1f0] sm:$0xff] %v684
    %753 = vst [vmem:[%s3 + $0x1f8] sm:$0xff] %v687
    // Predicated region
    $region22: #{_lambda_.7} parent=1 // pred_check
      _
    $region23: #{_lambda_.7} parent=1 // pred_check_branch
      %755 = sbr.rel (0) target = $region25
    $region24: #{_lambda_.7} parent=1 // pred_region
      _
    $region25: #{_lambda_.7} parent=1 // pred_fallthru
      _
    // Predicated region
    $region26: #{_lambda_.7} parent=1 // pred_check
      _
    $region27: #{_lambda_.7} parent=1 // pred_check_branch
      %757 = sbr.rel (0) target = $region29
    $region28: #{_lambda_.7} parent=1 // pred_region
      _
    $region29: #{_lambda_.7} parent=1 // pred_fallthru
      _
    %758 = vsyncpa [#allocation3], 1
    %759 = vsyncpa [#allocation5], 1

// kernel: _lambda_.8
$region0: #{_lambda_.8}
  #allocation0 [shape = 'u32[]', space=smem, size = 0x4, offset = 0x4, fixed_abs, tag = 'smem constant byte address 0x4 - core index']
  #allocation1 [shape = 'u32[144,128]{1,0:T(1,128)}', space=vmem, size = 0x12000, scoped, tag = 'internal scratch']
  %s0 = inlined_call_operand.vmem [shape: bf16[512,128], index: 0, kind: input, shape index: {}]
  %s1 = inlined_call_operand.vmem [shape: bf16[128,128], index: 1, kind: input, shape index: {}]
  %s2 = inlined_call_operand.vmem [shape: f32[1,128], index: 2, kind: input, shape index: {}]
  %s3 = inlined_call_operand.vmem [shape: f32[512,128], index: 3, kind: output, shape index: {}]
  %s4 = sld [smem:[#allocation0]]
  $region22: #{_lambda_.8} parent=0
    _
  %s6 = ssub.s32 1, %s4
  %s7 = scalar_select 0, %s6, %s4
  // Predicated region
  $region2: #{_lambda_.8} parent=0 // pred_check
    _
  $region3: #{_lambda_.8} parent=0 // pred_check_branch
    %9 = sbr.rel (0) target = $region5
  $region4: #{_lambda_.8} parent=0 // pred_region
    _
  $region5: #{_lambda_.8} parent=0 // pred_fallthru
    _
  // Predicated region
  $region6: #{_lambda_.8} parent=0 // pred_check
    _
  $region7: #{_lambda_.8} parent=0 // pred_check_branch
    %11 = sbr.rel (0) target = $region9
  $region8: #{_lambda_.8} parent=0 // pred_region
    _
  $region9: #{_lambda_.8} parent=0 // pred_fallthru
    _
  // Predicated region
  $region10: #{_lambda_.8} parent=0 // pred_check
    _
  $region11: #{_lambda_.8} parent=0 // pred_check_branch
    %13 = sbr.rel (0) target = $region13
  $region12: #{_lambda_.8} parent=0 // pred_region
    _
  $region13: #{_lambda_.8} parent=0 // pred_fallthru
    _
  %v15 = vld [vmem:[%s0] sm:$0xf]
  %v16 = vld [vmem:[%s0 + $0x4] sm:$0xf]
  %v17 = vld [vmem:[%s0 + $0x8] sm:$0xf]
  %v18 = vld [vmem:[%s0 + $0xc] sm:$0xf]
  %v19 = vld [vmem:[%s0 + $0x10] sm:$0xf]
  %v20 = vld [vmem:[%s0 + $0x14] sm:$0xf]
  %v21 = vld [vmem:[%s0 + $0x18] sm:$0xf]
  %v22 = vld [vmem:[%s0 + $0x1c] sm:$0xf]
  %v23 = vld [vmem:[%s0 + $0x20] sm:$0xf]
  %v24 = vld [vmem:[%s0 + $0x24] sm:$0xf]
  %v25 = vld [vmem:[%s0 + $0x28] sm:$0xf]
  %v26 = vld [vmem:[%s0 + $0x2c] sm:$0xf]
  %v27 = vld [vmem:[%s0 + $0x30] sm:$0xf]
  %v28 = vld [vmem:[%s0 + $0x34] sm:$0xf]
  %v29 = vld [vmem:[%s0 + $0x38] sm:$0xf]
  %v30 = vld [vmem:[%s0 + $0x3c] sm:$0xf]
  %v31 = vld [vmem:[%s0 + $0x40] sm:$0xf]
  %v32 = vld [vmem:[%s0 + $0x44] sm:$0xf]
  %v33 = vld [vmem:[%s0 + $0x48] sm:$0xf]
  %v34 = vld [vmem:[%s0 + $0x4c] sm:$0xf]
  %v35 = vld [vmem:[%s0 + $0x50] sm:$0xf]
  %v36 = vld [vmem:[%s0 + $0x54] sm:$0xf]
  %v37 = vld [vmem:[%s0 + $0x58] sm:$0xf]
  %v38 = vld [vmem:[%s0 + $0x5c] sm:$0xf]
  %v39 = vld [vmem:[%s0 + $0x60] sm:$0xf]
  %v40 = vld [vmem:[%s0 + $0x64] sm:$0xf]
  %v41 = vld [vmem:[%s0 + $0x68] sm:$0xf]
  %v42 = vld [vmem:[%s0 + $0x6c] sm:$0xf]
  %v43 = vld [vmem:[%s0 + $0x70] sm:$0xf]
  %v44 = vld [vmem:[%s0 + $0x74] sm:$0xf]
  %v45 = vld [vmem:[%s0 + $0x78] sm:$0xf]
  %v46 = vld [vmem:[%s0 + $0x7c] sm:$0xf]
  %v47 = vld [vmem:[%s0 + $0x80] sm:$0xf]
  %v48 = vld [vmem:[%s0 + $0x84] sm:$0xf]
  %v49 = vld [vmem:[%s0 + $0x88] sm:$0xf]
  %v50 = vld [vmem:[%s0 + $0x8c] sm:$0xf]
  %v51 = vld [vmem:[%s0 + $0x90] sm:$0xf]
  %v52 = vld [vmem:[%s0 + $0x94] sm:$0xf]
  %v53 = vld [vmem:[%s0 + $0x98] sm:$0xf]
  %v54 = vld [vmem:[%s0 + $0x9c] sm:$0xf]
  %v55 = vld [vmem:[%s0 + $0xa0] sm:$0xf]
  %v56 = vld [vmem:[%s0 + $0xa4] sm:$0xf]
  %v57 = vld [vmem:[%s0 + $0xa8] sm:$0xf]
  %v58 = vld [vmem:[%s0 + $0xac] sm:$0xf]
  %v59 = vld [vmem:[%s0 + $0xb0] sm:$0xf]
  %v60 = vld [vmem:[%s0 + $0xb4] sm:$0xf]
  %v61 = vld [vmem:[%s0 + $0xb8] sm:$0xf]
  %v62 = vld [vmem:[%s0 + $0xbc] sm:$0xf]
  %v63 = vld [vmem:[%s0 + $0xc0] sm:$0xf]
  %v64 = vld [vmem:[%s0 + $0xc4] sm:$0xf]
  %v65 = vld [vmem:[%s0 + $0xc8] sm:$0xf]
  %v66 = vld [vmem:[%s0 + $0xcc] sm:$0xf]
  %v67 = vld [vmem:[%s0 + $0xd0] sm:$0xf]
  %v68 = vld [vmem:[%s0 + $0xd4] sm:$0xf]
  %v69 = vld [vmem:[%s0 + $0xd8] sm:$0xf]
  %v70 = vld [vmem:[%s0 + $0xdc] sm:$0xf]
  %v71 = vld [vmem:[%s0 + $0xe0] sm:$0xf]
  %v72 = vld [vmem:[%s0 + $0xe4] sm:$0xf]
  %v73 = vld [vmem:[%s0 + $0xe8] sm:$0xf]
  %v74 = vld [vmem:[%s0 + $0xec] sm:$0xf]
  %v75 = vld [vmem:[%s0 + $0xf0] sm:$0xf]
  %v76 = vld [vmem:[%s0 + $0xf4] sm:$0xf]
  %v77 = vld [vmem:[%s0 + $0xf8] sm:$0xf]
  %v78 = vld [vmem:[%s0 + $0xfc] sm:$0xf]
  %v79 = vld [vmem:[%s1] sm:$0xf]
  %v80 = vld [vmem:[%s1 + $0x4] sm:$0xf]
  %v81 = vld [vmem:[%s1 + $0x8] sm:$0xf]
  %v82 = vld [vmem:[%s1 + $0xc] sm:$0xf]
  %v83 = vld [vmem:[%s1 + $0x10] sm:$0xf]
  %v84 = vld [vmem:[%s1 + $0x14] sm:$0xf]
  %v85 = vld [vmem:[%s1 + $0x18] sm:$0xf]
  %v86 = vld [vmem:[%s1 + $0x1c] sm:$0xf]
  %v87 = vld [vmem:[%s1 + $0x20] sm:$0xf]
  %v88 = vld [vmem:[%s1 + $0x24] sm:$0xf]
  %v89 = vld [vmem:[%s1 + $0x28] sm:$0xf]
  %v90 = vld [vmem:[%s1 + $0x2c] sm:$0xf]
  %v91 = vld [vmem:[%s1 + $0x30] sm:$0xf]
  %v92 = vld [vmem:[%s1 + $0x34] sm:$0xf]
  %v93 = vld [vmem:[%s1 + $0x38] sm:$0xf]
  %v94 = vld [vmem:[%s1 + $0x3c] sm:$0xf]
  %v95 = vld [vmem:[%s2] sm:$0x1]
  %v97 = vlaneseq
  %v98 = vshrl.u32 %v97, 7
  %v99 = vsub.s32 0, %v98
  %v100 = vrot.slane %v95, %v99
  %v166 = vunpack.c.l.b16 %v15
  %v167 = vunpack.c.l.b16 %v16
  %v168 = vunpack.c.l.b16 %v17
  %v169 = vunpack.c.l.b16 %v18
  %v170 = vunpack.c.l.b16 %v19
  %v171 = vunpack.c.l.b16 %v20
  %v172 = vunpack.c.l.b16 %v21
  %v173 = vunpack.c.l.b16 %v22
  %v174 = vunpack.c.l.b16 %v23
  %v175 = vunpack.c.l.b16 %v24
  %v176 = vunpack.c.l.b16 %v25
  %v177 = vunpack.c.l.b16 %v26
  %v178 = vunpack.c.l.b16 %v27
  %v179 = vunpack.c.l.b16 %v28
  %v180 = vunpack.c.l.b16 %v29
  %v181 = vunpack.c.l.b16 %v30
  %v182 = vunpack.c.l.b16 %v31
  %v183 = vunpack.c.l.b16 %v32
  %v184 = vunpack.c.l.b16 %v33
  %v185 = vunpack.c.l.b16 %v34
  %v186 = vunpack.c.l.b16 %v35
  %v187 = vunpack.c.l.b16 %v36
  %v188 = vunpack.c.l.b16 %v37
  %v189 = vunpack.c.l.b16 %v38
  %v190 = vunpack.c.l.b16 %v39
  %v191 = vunpack.c.l.b16 %v40
  %v192 = vunpack.c.l.b16 %v41
  %v193 = vunpack.c.l.b16 %v42
  %v194 = vunpack.c.l.b16 %v43
  %v195 = vunpack.c.l.b16 %v44
  %v196 = vunpack.c.l.b16 %v45
  %v197 = vunpack.c.l.b16 %v46
  %v198 = vunpack.c.l.b16 %v47
  %v199 = vunpack.c.l.b16 %v48
  %v200 = vunpack.c.l.b16 %v49
  %v201 = vunpack.c.l.b16 %v50
  %v202 = vunpack.c.l.b16 %v51
  %v203 = vunpack.c.l.b16 %v52
  %v204 = vunpack.c.l.b16 %v53
  %v205 = vunpack.c.l.b16 %v54
  %v206 = vunpack.c.l.b16 %v55
  %v207 = vunpack.c.l.b16 %v56
  %v208 = vunpack.c.l.b16 %v57
  %v209 = vunpack.c.l.b16 %v58
  %v210 = vunpack.c.l.b16 %v59
  %v211 = vunpack.c.l.b16 %v60
  %v212 = vunpack.c.l.b16 %v61
  %v213 = vunpack.c.l.b16 %v62
  %v214 = vunpack.c.l.b16 %v63
  %v215 = vunpack.c.l.b16 %v64
  %v216 = vunpack.c.l.b16 %v65
  %v217 = vunpack.c.l.b16 %v66
  %v218 = vunpack.c.l.b16 %v67
  %v219 = vunpack.c.l.b16 %v68
  %v220 = vunpack.c.l.b16 %v69
  %v221 = vunpack.c.l.b16 %v70
  %v222 = vunpack.c.l.b16 %v71
  %v223 = vunpack.c.l.b16 %v72
  %v224 = vunpack.c.l.b16 %v73
  %v225 = vunpack.c.l.b16 %v74
  %v226 = vunpack.c.l.b16 %v75
  %v227 = vunpack.c.l.b16 %v76
  %v228 = vunpack.c.l.b16 %v77
  %v229 = vunpack.c.l.b16 %v78
  %v230 = vpack.c.b16 %v167, %v166
  %v231 = vpack.c.b16 %v169, %v168
  %v232 = vpack.c.b16 %v171, %v170
  %v233 = vpack.c.b16 %v173, %v172
  %v234 = vpack.c.b16 %v175, %v174
  %v235 = vpack.c.b16 %v177, %v176
  %v236 = vpack.c.b16 %v179, %v178
  %v237 = vpack.c.b16 %v181, %v180
  %v238 = vpack.c.b16 %v183, %v182
  %v239 = vpack.c.b16 %v185, %v184
  %v240 = vpack.c.b16 %v187, %v186
  %v241 = vpack.c.b16 %v189, %v188
  %v242 = vpack.c.b16 %v191, %v190
  %v243 = vpack.c.b16 %v193, %v192
  %v244 = vpack.c.b16 %v195, %v194
  %v245 = vpack.c.b16 %v197, %v196
  %v246 = vpack.c.b16 %v199, %v198
  %v247 = vpack.c.b16 %v201, %v200
  %v248 = vpack.c.b16 %v203, %v202
  %v249 = vpack.c.b16 %v205, %v204
  %v250 = vpack.c.b16 %v207, %v206
  %v251 = vpack.c.b16 %v209, %v208
  %v252 = vpack.c.b16 %v211, %v210
  %v253 = vpack.c.b16 %v213, %v212
  %v254 = vpack.c.b16 %v215, %v214
  %v255 = vpack.c.b16 %v217, %v216
  %v256 = vpack.c.b16 %v219, %v218
  %v257 = vpack.c.b16 %v221, %v220
  %v258 = vpack.c.b16 %v223, %v222
  %v259 = vpack.c.b16 %v225, %v224
  %v260 = vpack.c.b16 %v227, %v226
  %v261 = vpack.c.b16 %v229, %v228
  %v310 = vunpack.c.l.b16 %v79
  %v311 = vunpack.c.l.b16 %v80
  %v312 = vunpack.c.l.b16 %v81
  %v313 = vunpack.c.l.b16 %v82
  %v314 = vunpack.c.l.b16 %v83
  %v315 = vunpack.c.l.b16 %v84
  %v316 = vunpack.c.l.b16 %v85
  %v317 = vunpack.c.l.b16 %v86
  %v318 = vunpack.c.l.b16 %v87
  %v319 = vunpack.c.l.b16 %v88
  %v320 = vunpack.c.l.b16 %v89
  %v321 = vunpack.c.l.b16 %v90
  %v322 = vunpack.c.l.b16 %v91
  %v323 = vunpack.c.l.b16 %v92
  %v324 = vunpack.c.l.b16 %v93
  %v325 = vunpack.c.l.b16 %v94
  %v326 = vpack.c.b16 %v311, %v310
  %v327 = vpack.c.b16 %v313, %v312
  %v328 = vpack.c.b16 %v315, %v314
  %v329 = vpack.c.b16 %v317, %v316
  %v330 = vpack.c.b16 %v319, %v318
  %v331 = vpack.c.b16 %v321, %v320
  %v332 = vpack.c.b16 %v323, %v322
  %v333 = vpack.c.b16 %v325, %v324
  %342 = vmatprep.subr.bf16.mxu0 0
  %343 = vmatpush1.bf16.msra.mxu0 %v326
  %344 = vmatprep.subr.bf16.mxu0 0
  %345 = vmatpush1.bf16.msra.mxu0 %v327
  %346 = vmatprep.subr.bf16.mxu0 0
  %347 = vmatpush1.bf16.msra.mxu0 %v328
  %348 = vmatprep.subr.bf16.mxu0 0
  %349 = vmatpush1.bf16.msra.mxu0 %v329
  %350 = vmatprep.subr.bf16.mxu0 0
  %351 = vmatpush1.bf16.msra.mxu0 %v330
  %352 = vmatprep.subr.bf16.mxu0 0
  %353 = vmatpush1.bf16.msra.mxu0 %v331
  %354 = vmatprep.subr.bf16.mxu0 0
  %355 = vmatpush1.bf16.msra.mxu0 %v332
  %356 = vmatprep.subr.bf16.mxu0 0
  %357 = vmatpush1.bf16.msra.mxu0 %v333
  %358 = vmatprep.subr.bf16.mxu0 0
  %359 = vmatpush1.bf16.msra.mxu0 0
  %360 = vmatprep.subr.bf16.mxu0 0
  %361 = vmatpush1.bf16.msra.mxu0 0
  %362 = vmatprep.subr.bf16.mxu0 0
  %363 = vmatpush1.bf16.msra.mxu0 0
  %364 = vmatprep.subr.bf16.mxu0 0
  %365 = vmatpush1.bf16.msra.mxu0 0
  %366 = vmatprep.subr.bf16.mxu0 0
  %367 = vmatpush1.bf16.msra.mxu0 0
  %368 = vmatprep.subr.bf16.mxu0 0
  %369 = vmatpush1.bf16.msra.mxu0 0
  %370 = vmatprep.subr.bf16.mxu0 0
  %371 = vmatpush1.bf16.msra.mxu0 0
  %372 = vmatprep.subr.bf16.mxu0 0
  %373 = vmatpush1.bf16.msra.mxu0 0
  %374 = vmatprep.mubr.bf16.mxu0 0
  %375 = vmatmul.mubr.bf16.gmra.mrb[0].mxu0 %v230
  %v376 = vpop.f32.mrb[0].mxu0
  %v377 = vadd.f32 %v100, %v376
  %v378 = vpop.f32.mrb[0].mxu0
  %v379 = vpop.f32.mrb[0].mxu0
  %v380 = vadd.f32 %v100, %v379
  %v381 = vpop.f32.mrb[0].mxu0
  %382 = vmatprep.mubr.bf16.mxu0 0
  %383 = vmatmul.mubr.bf16.gmra.mrb[0].mxu0 %v231
  %v384 = vpop.f32.mrb[0].mxu0
  %v385 = vadd.f32 %v100, %v384
  %v386 = vpop.f32.mrb[0].mxu0
  %v387 = vpop.f32.mrb[0].mxu0
  %v388 = vadd.f32 %v100, %v387
  %v389 = vpop.f32.mrb[0].mxu0
  %390 = vmatprep.mubr.bf16.mxu0 0
  %391 = vmatmul.mubr.bf16.gmra.mrb[0].mxu0 %v232
  %v392 = vpop.f32.mrb[0].mxu0
  %v393 = vadd.f32 %v100, %v392
  %v394 = vpop.f32.mrb[0].mxu0
  %v395 = vpop.f32.mrb[0].mxu0
  %v396 = vadd.f32 %v100, %v395
  %v397 = vpop.f32.mrb[0].mxu0
  %398 = vmatprep.mubr.bf16.mxu0 0
  %399 = vmatmul.mubr.bf16.gmra.mrb[0].mxu0 %v233
  %v400 = vpop.f32.mrb[0].mxu0
  %v401 = vadd.f32 %v100, %v400
  %v402 = vpop.f32.mrb[0].mxu0
  %v403 = vpop.f32.mrb[0].mxu0
  %v404 = vadd.f32 %v100, %v403
  %v405 = vpop.f32.mrb[0].mxu0
  %406 = vmatprep.mubr.bf16.mxu0 0
  %407 = vmatmul.mubr.bf16.gmra.mrb[0].mxu0 %v234
  %v408 = vpop.f32.mrb[0].mxu0
  %v409 = vadd.f32 %v100, %v408
  %v410 = vpop.f32.mrb[0].mxu0
  %v411 = vpop.f32.mrb[0].mxu0
  %v412 = vadd.f32 %v100, %v411
  %v413 = vpop.f32.mrb[0].mxu0
  %414 = vmatprep.mubr.bf16.mxu0 0
  %415 = vmatmul.mubr.bf16.gmra.mrb[0].mxu0 %v235
  %v416 = vpop.f32.mrb[0].mxu0
  %v417 = vadd.f32 %v100, %v416
  %v418 = vpop.f32.mrb[0].mxu0
  %v419 = vpop.f32.mrb[0].mxu0
  %v420 = vadd.f32 %v100, %v419
  %v421 = vpop.f32.mrb[0].mxu0
  %422 = vmatprep.mubr.bf16.mxu0 0
  %423 = vmatmul.mubr.bf16.gmra.mrb[0].mxu0 %v236
  %v424 = vpop.f32.mrb[0].mxu0
  %v425 = vadd.f32 %v100, %v424
  %v426 = vpop.f32.mrb[0].mxu0
  %v427 = vpop.f32.mrb[0].mxu0
  %v428 = vadd.f32 %v100, %v427
  %v429 = vpop.f32.mrb[0].mxu0
  %430 = vmatprep.mubr.bf16.mxu0 0
  %431 = vmatmul.mubr.bf16.gmra.mrb[0].mxu0 %v237
  %v432 = vpop.f32.mrb[0].mxu0
  %v433 = vadd.f32 %v100, %v432
  %v434 = vpop.f32.mrb[0].mxu0
  %v435 = vpop.f32.mrb[0].mxu0
  %v436 = vadd.f32 %v100, %v435
  %v437 = vpop.f32.mrb[0].mxu0
  %438 = vmatprep.mubr.bf16.mxu0 0
  %439 = vmatmul.mubr.bf16.gmra.mrb[0].mxu0 %v238
  %v440 = vpop.f32.mrb[0].mxu0
  %v441 = vadd.f32 %v100, %v440
  %v442 = vpop.f32.mrb[0].mxu0
  %v443 = vpop.f32.mrb[0].mxu0
  %v444 = vadd.f32 %v100, %v443
  %v445 = vpop.f32.mrb[0].mxu0
  %446 = vmatprep.mubr.bf16.mxu0 0
  %447 = vmatmul.mubr.bf16.gmra.mrb[0].mxu0 %v239
  %v448 = vpop.f32.mrb[0].mxu0
  %v449 = vadd.f32 %v100, %v448
  %v450 = vpop.f32.mrb[0].mxu0
  %v451 = vpop.f32.mrb[0].mxu0
  %v452 = vadd.f32 %v100, %v451
  %v453 = vpop.f32.mrb[0].mxu0
  %454 = vmatprep.mubr.bf16.mxu0 0
  %455 = vmatmul.mubr.bf16.gmra.mrb[0].mxu0 %v240
  %v456 = vpop.f32.mrb[0].mxu0
  %v457 = vadd.f32 %v100, %v456
  %v458 = vpop.f32.mrb[0].mxu0
  %v459 = vpop.f32.mrb[0].mxu0
  %v460 = vadd.f32 %v100, %v459
  %v461 = vpop.f32.mrb[0].mxu0
  %462 = vmatprep.mubr.bf16.mxu0 0
  %463 = vmatmul.mubr.bf16.gmra.mrb[0].mxu0 %v241
  %v464 = vpop.f32.mrb[0].mxu0
  %v465 = vadd.f32 %v100, %v464
  %v466 = vpop.f32.mrb[0].mxu0
  %v467 = vpop.f32.mrb[0].mxu0
  %v468 = vadd.f32 %v100, %v467
  %v469 = vpop.f32.mrb[0].mxu0
  %470 = vmatprep.mubr.bf16.mxu0 0
  %471 = vmatmul.mubr.bf16.gmra.mrb[0].mxu0 %v242
  %v472 = vpop.f32.mrb[0].mxu0
  %v473 = vadd.f32 %v100, %v472
  %v474 = vpop.f32.mrb[0].mxu0
  %v475 = vpop.f32.mrb[0].mxu0
  %v476 = vadd.f32 %v100, %v475
  %v477 = vpop.f32.mrb[0].mxu0
  %478 = vmatprep.mubr.bf16.mxu0 0
  %479 = vmatmul.mubr.bf16.gmra.mrb[0].mxu0 %v243
  %v480 = vpop.f32.mrb[0].mxu0
  %v481 = vadd.f32 %v100, %v480
  %v482 = vpop.f32.mrb[0].mxu0
  %v483 = vpop.f32.mrb[0].mxu0
  %v484 = vadd.f32 %v100, %v483
  %v485 = vpop.f32.mrb[0].mxu0
  %486 = vmatprep.mubr.bf16.mxu0 0
  %487 = vmatmul.mubr.bf16.gmra.mrb[0].mxu0 %v244
  %v488 = vpop.f32.mrb[0].mxu0
  %v489 = vadd.f32 %v100, %v488
  %v490 = vpop.f32.mrb[0].mxu0
  %v491 = vpop.f32.mrb[0].mxu0
  %v492 = vadd.f32 %v100, %v491
  %v493 = vpop.f32.mrb[0].mxu0
  %494 = vmatprep.mubr.bf16.mxu0 0
  %495 = vmatmul.mubr.bf16.gmra.mrb[0].mxu0 %v245
  %v496 = vpop.f32.mrb[0].mxu0
  %v497 = vadd.f32 %v100, %v496
  %v498 = vpop.f32.mrb[0].mxu0
  %v499 = vpop.f32.mrb[0].mxu0
  %v500 = vadd.f32 %v100, %v499
  %v501 = vpop.f32.mrb[0].mxu0
  %502 = vmatprep.mubr.bf16.mxu0 0
  %503 = vmatmul.mubr.bf16.gmra.mrb[0].mxu0 %v246
  %v504 = vpop.f32.mrb[0].mxu0
  %v505 = vadd.f32 %v100, %v504
  %v506 = vpop.f32.mrb[0].mxu0
  %v507 = vpop.f32.mrb[0].mxu0
  %v508 = vadd.f32 %v100, %v507
  %v509 = vpop.f32.mrb[0].mxu0
  %510 = vmatprep.mubr.bf16.mxu0 0
  %511 = vmatmul.mubr.bf16.gmra.mrb[0].mxu0 %v247
  %v512 = vpop.f32.mrb[0].mxu0
  %v513 = vadd.f32 %v100, %v512
  %v514 = vpop.f32.mrb[0].mxu0
  %v515 = vpop.f32.mrb[0].mxu0
  %v516 = vadd.f32 %v100, %v515
  %v517 = vpop.f32.mrb[0].mxu0
  %518 = vmatprep.mubr.bf16.mxu0 0
  %519 = vmatmul.mubr.bf16.gmra.mrb[0].mxu0 %v248
  %v520 = vpop.f32.mrb[0].mxu0
  %v521 = vadd.f32 %v100, %v520
  %v522 = vpop.f32.mrb[0].mxu0
  %v523 = vpop.f32.mrb[0].mxu0
  %v524 = vadd.f32 %v100, %v523
  %v525 = vpop.f32.mrb[0].mxu0
  %526 = vmatprep.mubr.bf16.mxu0 0
  %527 = vmatmul.mubr.bf16.gmra.mrb[0].mxu0 %v249
  %v528 = vpop.f32.mrb[0].mxu0
  %v529 = vadd.f32 %v100, %v528
  %v530 = vpop.f32.mrb[0].mxu0
  %v531 = vpop.f32.mrb[0].mxu0
  %v532 = vadd.f32 %v100, %v531
  %v533 = vpop.f32.mrb[0].mxu0
  %534 = vmatprep.mubr.bf16.mxu0 0
  %535 = vmatmul.mubr.bf16.gmra.mrb[0].mxu0 %v250
  %v536 = vpop.f32.mrb[0].mxu0
  %v537 = vadd.f32 %v100, %v536
  %v538 = vpop.f32.mrb[0].mxu0
  %v539 = vpop.f32.mrb[0].mxu0
  %v540 = vadd.f32 %v100, %v539
  %v541 = vpop.f32.mrb[0].mxu0
  %542 = vmatprep.mubr.bf16.mxu0 0
  %543 = vmatmul.mubr.bf16.gmra.mrb[0].mxu0 %v251
  %v544 = vpop.f32.mrb[0].mxu0
  %v545 = vadd.f32 %v100, %v544
  %v546 = vpop.f32.mrb[0].mxu0
  %v547 = vpop.f32.mrb[0].mxu0
  %v548 = vadd.f32 %v100, %v547
  %v549 = vpop.f32.mrb[0].mxu0
  %550 = vmatprep.mubr.bf16.mxu0 0
  %551 = vmatmul.mubr.bf16.gmra.mrb[0].mxu0 %v252
  %v552 = vpop.f32.mrb[0].mxu0
  %v553 = vadd.f32 %v100, %v552
  %v554 = vpop.f32.mrb[0].mxu0
  %v555 = vpop.f32.mrb[0].mxu0
  %v556 = vadd.f32 %v100, %v555
  %v557 = vpop.f32.mrb[0].mxu0
  %558 = vmatprep.mubr.bf16.mxu0 0
  %559 = vmatmul.mubr.bf16.gmra.mrb[0].mxu0 %v253
  %v560 = vpop.f32.mrb[0].mxu0
  %v561 = vadd.f32 %v100, %v560
  %v562 = vpop.f32.mrb[0].mxu0
  %v563 = vpop.f32.mrb[0].mxu0
  %v564 = vadd.f32 %v100, %v563
  %v565 = vpop.f32.mrb[0].mxu0
  %566 = vmatprep.mubr.bf16.mxu0 0
  %567 = vmatmul.mubr.bf16.gmra.mrb[0].mxu0 %v254
  %v568 = vpop.f32.mrb[0].mxu0
  %v569 = vadd.f32 %v100, %v568
  %v570 = vpop.f32.mrb[0].mxu0
  %v571 = vpop.f32.mrb[0].mxu0
  %v572 = vadd.f32 %v100, %v571
  %v573 = vpop.f32.mrb[0].mxu0
  %574 = vmatprep.mubr.bf16.mxu0 0
  %575 = vmatmul.mubr.bf16.gmra.mrb[0].mxu0 %v255
  %v576 = vpop.f32.mrb[0].mxu0
  %v577 = vadd.f32 %v100, %v576
  %v578 = vpop.f32.mrb[0].mxu0
  %v579 = vpop.f32.mrb[0].mxu0
  %v580 = vadd.f32 %v100, %v579
  %v581 = vpop.f32.mrb[0].mxu0
  %582 = vmatprep.mubr.bf16.mxu0 0
  %583 = vmatmul.mubr.bf16.gmra.mrb[0].mxu0 %v256
  %v584 = vpop.f32.mrb[0].mxu0
  %v585 = vadd.f32 %v100, %v584
  %v586 = vpop.f32.mrb[0].mxu0
  %v587 = vpop.f32.mrb[0].mxu0
  %v588 = vadd.f32 %v100, %v587
  %v589 = vpop.f32.mrb[0].mxu0
  %590 = vmatprep.mubr.bf16.mxu0 0
  %591 = vmatmul.mubr.bf16.gmra.mrb[0].mxu0 %v257
  %v592 = vpop.f32.mrb[0].mxu0
  %v593 = vadd.f32 %v100, %v592
  %v594 = vpop.f32.mrb[0].mxu0
  %v595 = vpop.f32.mrb[0].mxu0
  %v596 = vadd.f32 %v100, %v595
  %v597 = vpop.f32.mrb[0].mxu0
  %598 = vmatprep.mubr.bf16.mxu0 0
  %599 = vmatmul.mubr.bf16.gmra.mrb[0].mxu0 %v258
  %v600 = vpop.f32.mrb[0].mxu0
  %v601 = vadd.f32 %v100, %v600
  %v602 = vpop.f32.mrb[0].mxu0
  %v603 = vpop.f32.mrb[0].mxu0
  %v604 = vadd.f32 %v100, %v603
  %v605 = vpop.f32.mrb[0].mxu0
  %606 = vmatprep.mubr.bf16.mxu0 0
  %607 = vmatmul.mubr.bf16.gmra.mrb[0].mxu0 %v259
  %v608 = vpop.f32.mrb[0].mxu0
  %v609 = vadd.f32 %v100, %v608
  %v610 = vpop.f32.mrb[0].mxu0
  %v611 = vpop.f32.mrb[0].mxu0
  %v612 = vadd.f32 %v100, %v611
  %v613 = vpop.f32.mrb[0].mxu0
  %614 = vmatprep.mubr.bf16.mxu0 0
  %615 = vmatmul.mubr.bf16.gmra.mrb[0].mxu0 %v260
  %v616 = vpop.f32.mrb[0].mxu0
  %v617 = vadd.f32 %v100, %v616
  %v618 = vpop.f32.mrb[0].mxu0
  %v619 = vpop.f32.mrb[0].mxu0
  %v620 = vadd.f32 %v100, %v619
  %v621 = vpop.f32.mrb[0].mxu0
  %622 = vmatprep.mubr.bf16.mxu0 0
  %623 = vmatmul.mubr.bf16.gmra.mrb[0].mxu0 %v261
  %v624 = vpop.f32.mrb[0].mxu0
  %v625 = vadd.f32 %v100, %v624
  %v626 = vpop.f32.mrb[0].mxu0
  %v627 = vpop.f32.mrb[0].mxu0
  %v628 = vadd.f32 %v100, %v627
  %v629 = vpop.f32.mrb[0].mxu0
  %630 = vdwg.mxu0
  %631 = vst [vmem:[%s3] sm:$0xff] %v377
  %632 = vst [vmem:[%s3 + $0x8] sm:$0xff] %v380
  %633 = vst [vmem:[%s3 + $0x10] sm:$0xff] %v385
  %634 = vst [vmem:[%s3 + $0x18] sm:$0xff] %v388
  %635 = vst [vmem:[%s3 + $0x20] sm:$0xff] %v393
  %636 = vst [vmem:[%s3 + $0x28] sm:$0xff] %v396
  %637 = vst [vmem:[%s3 + $0x30] sm:$0xff] %v401
  %638 = vst [vmem:[%s3 + $0x38] sm:$0xff] %v404
  %639 = vst [vmem:[%s3 + $0x40] sm:$0xff] %v409
  %640 = vst [vmem:[%s3 + $0x48] sm:$0xff] %v412
  %641 = vst [vmem:[%s3 + $0x50] sm:$0xff] %v417
  %642 = vst [vmem:[%s3 + $0x58] sm:$0xff] %v420
  %643 = vst [vmem:[%s3 + $0x60] sm:$0xff] %v425
  %644 = vst [vmem:[%s3 + $0x68] sm:$0xff] %v428
  %645 = vst [vmem:[%s3 + $0x70] sm:$0xff] %v433
  %646 = vst [vmem:[%s3 + $0x78] sm:$0xff] %v436
  %647 = vst [vmem:[%s3 + $0x80] sm:$0xff] %v441
  %648 = vst [vmem:[%s3 + $0x88] sm:$0xff] %v444
  %649 = vst [vmem:[%s3 + $0x90] sm:$0xff] %v449
  %650 = vst [vmem:[%s3 + $0x98] sm:$0xff] %v452
  %651 = vst [vmem:[%s3 + $0xa0] sm:$0xff] %v457
  %652 = vst [vmem:[%s3 + $0xa8] sm:$0xff] %v460
  %653 = vst [vmem:[%s3 + $0xb0] sm:$0xff] %v465
  %654 = vst [vmem:[%s3 + $0xb8] sm:$0xff] %v468
  %655 = vst [vmem:[%s3 + $0xc0] sm:$0xff] %v473
  %656 = vst [vmem:[%s3 + $0xc8] sm:$0xff] %v476
  %657 = vst [vmem:[%s3 + $0xd0] sm:$0xff] %v481
  %658 = vst [vmem:[%s3 + $0xd8] sm:$0xff] %v484
  %659 = vst [vmem:[%s3 + $0xe0] sm:$0xff] %v489
  %660 = vst [vmem:[%s3 + $0xe8] sm:$0xff] %v492
  %661 = vst [vmem:[%s3 + $0xf0] sm:$0xff] %v497
  %662 = vst [vmem:[%s3 + $0xf8] sm:$0xff] %v500
  %663 = vst [vmem:[%s3 + $0x100] sm:$0xff] %v505
  %664 = vst [vmem:[%s3 + $0x108] sm:$0xff] %v508
  %665 = vst [vmem:[%s3 + $0x110] sm:$0xff] %v513
  %666 = vst [vmem:[%s3 + $0x118] sm:$0xff] %v516
  %667 = vst [vmem:[%s3 + $0x120] sm:$0xff] %v521
  %668 = vst [vmem:[%s3 + $0x128] sm:$0xff] %v524
  %669 = vst [vmem:[%s3 + $0x130] sm:$0xff] %v529
  %670 = vst [vmem:[%s3 + $0x138] sm:$0xff] %v532
  %671 = vst [vmem:[%s3 + $0x140] sm:$0xff] %v537
  %672 = vst [vmem:[%s3 + $0x148] sm:$0xff] %v540
  %673 = vst [vmem:[%s3 + $0x150] sm:$0xff] %v545
  %674 = vst [vmem:[%s3 + $0x158] sm:$0xff] %v548
  %675 = vst [vmem:[%s3 + $0x160] sm:$0xff] %v553
  %676 = vst [vmem:[%s3 + $0x168] sm:$0xff] %v556
  %677 = vst [vmem:[%s3 + $0x170] sm:$0xff] %v561
  %678 = vst [vmem:[%s3 + $0x178] sm:$0xff] %v564
  %679 = vst [vmem:[%s3 + $0x180] sm:$0xff] %v569
  %680 = vst [vmem:[%s3 + $0x188] sm:$0xff] %v572
  %681 = vst [vmem:[%s3 + $0x190] sm:$0xff] %v577
  %682 = vst [vmem:[%s3 + $0x198] sm:$0xff] %v580
  %683 = vst [vmem:[%s3 + $0x1a0] sm:$0xff] %v585
  %684 = vst [vmem:[%s3 + $0x1a8] sm:$0xff] %v588
  %685 = vst [vmem:[%s3 + $0x1b0] sm:$0xff] %v593
  %686 = vst [vmem:[%s3 + $0x1b8] sm:$0xff] %v596
  %687 = vst [vmem:[%s3 + $0x1c0] sm:$0xff] %v601
  %688 = vst [vmem:[%s3 + $0x1c8] sm:$0xff] %v604
  %689 = vst [vmem:[%s3 + $0x1d0] sm:$0xff] %v609
  %690 = vst [vmem:[%s3 + $0x1d8] sm:$0xff] %v612
  %691 = vst [vmem:[%s3 + $0x1e0] sm:$0xff] %v617
  %692 = vst [vmem:[%s3 + $0x1e8] sm:$0xff] %v620
  %693 = vst [vmem:[%s3 + $0x1f0] sm:$0xff] %v625
  %694 = vst [vmem:[%s3 + $0x1f8] sm:$0xff] %v628
  // Predicated region
  $region14: #{_lambda_.8} parent=0 // pred_check
    _
  $region15: #{_lambda_.8} parent=0 // pred_check_branch
    %696 = sbr.rel (0) target = $region17
  $region16: #{_lambda_.8} parent=0 // pred_region
    _
  $region17: #{_lambda_.8} parent=0 // pred_fallthru
    _
  // Predicated region
  $region18: #{_lambda_.8} parent=0 // pred_check
    _
  $region19: #{_lambda_.8} parent=0 // pred_check_branch
    %698 = sbr.rel (0) target = $region21
  $region20: #{_lambda_.8} parent=0 // pred_region
    _
  $region21: #{_lambda_.8} parent=0 // pred_fallthru
    _

// kernel: _lambda_.10
$region0: #{_lambda_.10}
  #allocation0 [shape = 'u32[]', space=smem, size = 0x4, offset = 0x4, fixed_abs, tag = 'smem constant byte address 0x4 - core index']
  #allocation1 [shape = 'u32[144,128]{1,0:T(1,128)}', space=vmem, size = 0x12000, scoped, tag = 'internal scratch']
  %s0 = inlined_call_operand.vmem [shape: bf16[512,256], index: 0, kind: input, shape index: {}]
  %s1 = inlined_call_operand.vmem [shape: bf16[256,128], index: 1, kind: input, shape index: {}]
  %s2 = inlined_call_operand.vmem [shape: f32[1,128], index: 2, kind: input, shape index: {}]
  %s3 = inlined_call_operand.vmem [shape: f32[512,128], index: 3, kind: output, shape index: {}]
  %s4 = sld [smem:[#allocation0]]
  $region22: #{_lambda_.10} parent=0
    _
  %s6 = ssub.s32 1, %s4
  %s7 = scalar_select 0, %s6, %s4
  // Predicated region
  $region2: #{_lambda_.10} parent=0 // pred_check
    _
  $region3: #{_lambda_.10} parent=0 // pred_check_branch
    %9 = sbr.rel (0) target = $region5
  $region4: #{_lambda_.10} parent=0 // pred_region
    _
  $region5: #{_lambda_.10} parent=0 // pred_fallthru
    _
  // Predicated region
  $region6: #{_lambda_.10} parent=0 // pred_check
    _
  $region7: #{_lambda_.10} parent=0 // pred_check_branch
    %11 = sbr.rel (0) target = $region9
  $region8: #{_lambda_.10} parent=0 // pred_region
    _
  $region9: #{_lambda_.10} parent=0 // pred_fallthru
    _
  // Predicated region
  $region10: #{_lambda_.10} parent=0 // pred_check
    _
  $region11: #{_lambda_.10} parent=0 // pred_check_branch
    %13 = sbr.rel (0) target = $region13
  $region12: #{_lambda_.10} parent=0 // pred_region
    _
  $region13: #{_lambda_.10} parent=0 // pred_fallthru
    _
  %v15 = vld [vmem:[%s0] sm:$0xff]
  %v16 = vld [vmem:[%s0 + $0x8] sm:$0xff]
  %v17 = vld [vmem:[%s0 + $0x10] sm:$0xff]
  %v18 = vld [vmem:[%s0 + $0x18] sm:$0xff]
  %v19 = vld [vmem:[%s0 + $0x20] sm:$0xff]
  %v20 = vld [vmem:[%s0 + $0x28] sm:$0xff]
  %v21 = vld [vmem:[%s0 + $0x30] sm:$0xff]
  %v22 = vld [vmem:[%s0 + $0x38] sm:$0xff]
  %v23 = vld [vmem:[%s0 + $0x40] sm:$0xff]
  %v24 = vld [vmem:[%s0 + $0x48] sm:$0xff]
  %v25 = vld [vmem:[%s0 + $0x50] sm:$0xff]
  %v26 = vld [vmem:[%s0 + $0x58] sm:$0xff]
  %v27 = vld [vmem:[%s0 + $0x60] sm:$0xff]
  %v28 = vld [vmem:[%s0 + $0x68] sm:$0xff]
  %v29 = vld [vmem:[%s0 + $0x70] sm:$0xff]
  %v30 = vld [vmem:[%s0 + $0x78] sm:$0xff]
  %v31 = vld [vmem:[%s0 + $0x80] sm:$0xff]
  %v32 = vld [vmem:[%s0 + $0x88] sm:$0xff]
  %v33 = vld [vmem:[%s0 + $0x90] sm:$0xff]
  %v34 = vld [vmem:[%s0 + $0x98] sm:$0xff]
  %v35 = vld [vmem:[%s0 + $0xa0] sm:$0xff]
  %v36 = vld [vmem:[%s0 + $0xa8] sm:$0xff]
  %v37 = vld [vmem:[%s0 + $0xb0] sm:$0xff]
  %v38 = vld [vmem:[%s0 + $0xb8] sm:$0xff]
  %v39 = vld [vmem:[%s0 + $0xc0] sm:$0xff]
  %v40 = vld [vmem:[%s0 + $0xc8] sm:$0xff]
  %v41 = vld [vmem:[%s0 + $0xd0] sm:$0xff]
  %v42 = vld [vmem:[%s0 + $0xd8] sm:$0xff]
  %v43 = vld [vmem:[%s0 + $0xe0] sm:$0xff]
  %v44 = vld [vmem:[%s0 + $0xe8] sm:$0xff]
  %v45 = vld [vmem:[%s0 + $0xf0] sm:$0xff]
  %v46 = vld [vmem:[%s0 + $0xf8] sm:$0xff]
  %v47 = vld [vmem:[%s0 + $0x100] sm:$0xff]
  %v48 = vld [vmem:[%s0 + $0x108] sm:$0xff]
  %v49 = vld [vmem:[%s0 + $0x110] sm:$0xff]
  %v50 = vld [vmem:[%s0 + $0x118] sm:$0xff]
  %v51 = vld [vmem:[%s0 + $0x120] sm:$0xff]
  %v52 = vld [vmem:[%s0 + $0x128] sm:$0xff]
  %v53 = vld [vmem:[%s0 + $0x130] sm:$0xff]
  %v54 = vld [vmem:[%s0 + $0x138] sm:$0xff]
  %v55 = vld [vmem:[%s0 + $0x140] sm:$0xff]
  %v56 = vld [vmem:[%s0 + $0x148] sm:$0xff]
  %v57 = vld [vmem:[%s0 + $0x150] sm:$0xff]
  %v58 = vld [vmem:[%s0 + $0x158] sm:$0xff]
  %v59 = vld [vmem:[%s0 + $0x160] sm:$0xff]
  %v60 = vld [vmem:[%s0 + $0x168] sm:$0xff]
  %v61 = vld [vmem:[%s0 + $0x170] sm:$0xff]
  %v62 = vld [vmem:[%s0 + $0x178] sm:$0xff]
  %v63 = vld [vmem:[%s0 + $0x180] sm:$0xff]
  %v64 = vld [vmem:[%s0 + $0x188] sm:$0xff]
  %v65 = vld [vmem:[%s0 + $0x190] sm:$0xff]
  %v66 = vld [vmem:[%s0 + $0x198] sm:$0xff]
  %v67 = vld [vmem:[%s0 + $0x1a0] sm:$0xff]
  %v68 = vld [vmem:[%s0 + $0x1a8] sm:$0xff]
  %v69 = vld [vmem:[%s0 + $0x1b0] sm:$0xff]
  %v70 = vld [vmem:[%s0 + $0x1b8] sm:$0xff]
  %v71 = vld [vmem:[%s0 + $0x1c0] sm:$0xff]
  %v72 = vld [vmem:[%s0 + $0x1c8] sm:$0xff]
  %v73 = vld [vmem:[%s0 + $0x1d0] sm:$0xff]
  %v74 = vld [vmem:[%s0 + $0x1d8] sm:$0xff]
  %v75 = vld [vmem:[%s0 + $0x1e0] sm:$0xff]
  %v76 = vld [vmem:[%s0 + $0x1e8] sm:$0xff]
  %v77 = vld [vmem:[%s0 + $0x1f0] sm:$0xff]
  %v78 = vld [vmem:[%s0 + $0x1f8] sm:$0xff]
  %v79 = vld [vmem:[%s1] sm:$0xf]
  %v80 = vld [vmem:[%s1 + $0x4] sm:$0xf]
  %v81 = vld [vmem:[%s1 + $0x8] sm:$0xf]
  %v82 = vld [vmem:[%s1 + $0xc] sm:$0xf]
  %v83 = vld [vmem:[%s1 + $0x10] sm:$0xf]
  %v84 = vld [vmem:[%s1 + $0x14] sm:$0xf]
  %v85 = vld [vmem:[%s1 + $0x18] sm:$0xf]
  %v86 = vld [vmem:[%s1 + $0x1c] sm:$0xf]
  %v87 = vld [vmem:[%s1 + $0x20] sm:$0xf]
  %v88 = vld [vmem:[%s1 + $0x24] sm:$0xf]
  %v89 = vld [vmem:[%s1 + $0x28] sm:$0xf]
  %v90 = vld [vmem:[%s1 + $0x2c] sm:$0xf]
  %v91 = vld [vmem:[%s1 + $0x30] sm:$0xf]
  %v92 = vld [vmem:[%s1 + $0x34] sm:$0xf]
  %v93 = vld [vmem:[%s1 + $0x38] sm:$0xf]
  %v94 = vld [vmem:[%s1 + $0x3c] sm:$0xf]
  %v95 = vld [vmem:[%s1 + $0x40] sm:$0xf]
  %v96 = vld [vmem:[%s1 + $0x44] sm:$0xf]
  %v97 = vld [vmem:[%s1 + $0x48] sm:$0xf]
  %v98 = vld [vmem:[%s1 + $0x4c] sm:$0xf]
  %v99 = vld [vmem:[%s1 + $0x50] sm:$0xf]
  %v100 = vld [vmem:[%s1 + $0x54] sm:$0xf]
  %v101 = vld [vmem:[%s1 + $0x58] sm:$0xf]
  %v102 = vld [vmem:[%s1 + $0x5c] sm:$0xf]
  %v103 = vld [vmem:[%s1 + $0x60] sm:$0xf]
  %v104 = vld [vmem:[%s1 + $0x64] sm:$0xf]
  %v105 = vld [vmem:[%s1 + $0x68] sm:$0xf]
  %v106 = vld [vmem:[%s1 + $0x6c] sm:$0xf]
  %v107 = vld [vmem:[%s1 + $0x70] sm:$0xf]
  %v108 = vld [vmem:[%s1 + $0x74] sm:$0xf]
  %v109 = vld [vmem:[%s1 + $0x78] sm:$0xf]
  %v110 = vld [vmem:[%s1 + $0x7c] sm:$0xf]
  %v111 = vld [vmem:[%s2] sm:$0x1]
  %v113 = vlaneseq
  %v114 = vshrl.u32 %v113, 7
  %v115 = vsub.s32 0, %v114
  %v116 = vrot.slane %v111, %v115
  %v182 = vunpack.c.l.b16 %v15
  %v183 = vunpack.c.h.b16 %v15
  %v184 = vunpack.c.l.b16 %v16
  %v185 = vunpack.c.h.b16 %v16
  %v186 = vunpack.c.l.b16 %v17
  %v187 = vunpack.c.h.b16 %v17
  %v188 = vunpack.c.l.b16 %v18
  %v189 = vunpack.c.h.b16 %v18
  %v190 = vunpack.c.l.b16 %v19
  %v191 = vunpack.c.h.b16 %v19
  %v192 = vunpack.c.l.b16 %v20
  %v193 = vunpack.c.h.b16 %v20
  %v194 = vunpack.c.l.b16 %v21
  %v195 = vunpack.c.h.b16 %v21
  %v196 = vunpack.c.l.b16 %v22
  %v197 = vunpack.c.h.b16 %v22
  %v198 = vunpack.c.l.b16 %v23
  %v199 = vunpack.c.h.b16 %v23
  %v200 = vunpack.c.l.b16 %v24
  %v201 = vunpack.c.h.b16 %v24
  %v202 = vunpack.c.l.b16 %v25
  %v203 = vunpack.c.h.b16 %v25
  %v204 = vunpack.c.l.b16 %v26
  %v205 = vunpack.c.h.b16 %v26
  %v206 = vunpack.c.l.b16 %v27
  %v207 = vunpack.c.h.b16 %v27
  %v208 = vunpack.c.l.b16 %v28
  %v209 = vunpack.c.h.b16 %v28
  %v210 = vunpack.c.l.b16 %v29
  %v211 = vunpack.c.h.b16 %v29
  %v212 = vunpack.c.l.b16 %v30
  %v213 = vunpack.c.h.b16 %v30
  %v214 = vunpack.c.l.b16 %v31
  %v215 = vunpack.c.h.b16 %v31
  %v216 = vunpack.c.l.b16 %v32
  %v217 = vunpack.c.h.b16 %v32
  %v218 = vunpack.c.l.b16 %v33
  %v219 = vunpack.c.h.b16 %v33
  %v220 = vunpack.c.l.b16 %v34
  %v221 = vunpack.c.h.b16 %v34
  %v222 = vunpack.c.l.b16 %v35
  %v223 = vunpack.c.h.b16 %v35
  %v224 = vunpack.c.l.b16 %v36
  %v225 = vunpack.c.h.b16 %v36
  %v226 = vunpack.c.l.b16 %v37
  %v227 = vunpack.c.h.b16 %v37
  %v228 = vunpack.c.l.b16 %v38
  %v229 = vunpack.c.h.b16 %v38
  %v230 = vunpack.c.l.b16 %v39
  %v231 = vunpack.c.h.b16 %v39
  %v232 = vunpack.c.l.b16 %v40
  %v233 = vunpack.c.h.b16 %v40
  %v234 = vunpack.c.l.b16 %v41
  %v235 = vunpack.c.h.b16 %v41
  %v236 = vunpack.c.l.b16 %v42
  %v237 = vunpack.c.h.b16 %v42
  %v238 = vunpack.c.l.b16 %v43
  %v239 = vunpack.c.h.b16 %v43
  %v240 = vunpack.c.l.b16 %v44
  %v241 = vunpack.c.h.b16 %v44
  %v242 = vunpack.c.l.b16 %v45
  %v243 = vunpack.c.h.b16 %v45
  %v244 = vunpack.c.l.b16 %v46
  %v245 = vunpack.c.h.b16 %v46
  %v246 = vunpack.c.l.b16 %v47
  %v247 = vunpack.c.h.b16 %v47
  %v248 = vunpack.c.l.b16 %v48
  %v249 = vunpack.c.h.b16 %v48
  %v250 = vunpack.c.l.b16 %v49
  %v251 = vunpack.c.h.b16 %v49
  %v252 = vunpack.c.l.b16 %v50
  %v253 = vunpack.c.h.b16 %v50
  %v254 = vunpack.c.l.b16 %v51
  %v255 = vunpack.c.h.b16 %v51
  %v256 = vunpack.c.l.b16 %v52
  %v257 = vunpack.c.h.b16 %v52
  %v258 = vunpack.c.l.b16 %v53
  %v259 = vunpack.c.h.b16 %v53
  %v260 = vunpack.c.l.b16 %v54
  %v261 = vunpack.c.h.b16 %v54
  %v262 = vunpack.c.l.b16 %v55
  %v263 = vunpack.c.h.b16 %v55
  %v264 = vunpack.c.l.b16 %v56
  %v265 = vunpack.c.h.b16 %v56
  %v266 = vunpack.c.l.b16 %v57
  %v267 = vunpack.c.h.b16 %v57
  %v268 = vunpack.c.l.b16 %v58
  %v269 = vunpack.c.h.b16 %v58
  %v270 = vunpack.c.l.b16 %v59
  %v271 = vunpack.c.h.b16 %v59
  %v272 = vunpack.c.l.b16 %v60
  %v273 = vunpack.c.h.b16 %v60
  %v274 = vunpack.c.l.b16 %v61
  %v275 = vunpack.c.h.b16 %v61
  %v276 = vunpack.c.l.b16 %v62
  %v277 = vunpack.c.h.b16 %v62
  %v278 = vunpack.c.l.b16 %v63
  %v279 = vunpack.c.h.b16 %v63
  %v280 = vunpack.c.l.b16 %v64
  %v281 = vunpack.c.h.b16 %v64
  %v282 = vunpack.c.l.b16 %v65
  %v283 = vunpack.c.h.b16 %v65
  %v284 = vunpack.c.l.b16 %v66
  %v285 = vunpack.c.h.b16 %v66
  %v286 = vunpack.c.l.b16 %v67
  %v287 = vunpack.c.h.b16 %v67
  %v288 = vunpack.c.l.b16 %v68
  %v289 = vunpack.c.h.b16 %v68
  %v290 = vunpack.c.l.b16 %v69
  %v291 = vunpack.c.h.b16 %v69
  %v292 = vunpack.c.l.b16 %v70
  %v293 = vunpack.c.h.b16 %v70
  %v294 = vunpack.c.l.b16 %v71
  %v295 = vunpack.c.h.b16 %v71
  %v296 = vunpack.c.l.b16 %v72
  %v297 = vunpack.c.h.b16 %v72
  %v298 = vunpack.c.l.b16 %v73
  %v299 = vunpack.c.h.b16 %v73
  %v300 = vunpack.c.l.b16 %v74
  %v301 = vunpack.c.h.b16 %v74
  %v302 = vunpack.c.l.b16 %v75
  %v303 = vunpack.c.h.b16 %v75
  %v304 = vunpack.c.l.b16 %v76
  %v305 = vunpack.c.h.b16 %v76
  %v306 = vunpack.c.l.b16 %v77
  %v307 = vunpack.c.h.b16 %v77
  %v308 = vunpack.c.l.b16 %v78
  %v309 = vunpack.c.h.b16 %v78
  %v310 = vpack.c.b16 %v184, %v182
  %v311 = vpack.c.b16 %v185, %v183
  %v312 = vpack.c.b16 %v188, %v186
  %v313 = vpack.c.b16 %v189, %v187
  %v314 = vpack.c.b16 %v192, %v190
  %v315 = vpack.c.b16 %v193, %v191
  %v316 = vpack.c.b16 %v196, %v194
  %v317 = vpack.c.b16 %v197, %v195
  %v318 = vpack.c.b16 %v200, %v198
  %v319 = vpack.c.b16 %v201, %v199
  %v320 = vpack.c.b16 %v204, %v202
  %v321 = vpack.c.b16 %v205, %v203
  %v322 = vpack.c.b16 %v208, %v206
  %v323 = vpack.c.b16 %v209, %v207
  %v324 = vpack.c.b16 %v212, %v210
  %v325 = vpack.c.b16 %v213, %v211
  %v326 = vpack.c.b16 %v216, %v214
  %v327 = vpack.c.b16 %v217, %v215
  %v328 = vpack.c.b16 %v220, %v218
  %v329 = vpack.c.b16 %v221, %v219
  %v330 = vpack.c.b16 %v224, %v222
  %v331 = vpack.c.b16 %v225, %v223
  %v332 = vpack.c.b16 %v228, %v226
  %v333 = vpack.c.b16 %v229, %v227
  %v334 = vpack.c.b16 %v232, %v230
  %v335 = vpack.c.b16 %v233, %v231
  %v336 = vpack.c.b16 %v236, %v234
  %v337 = vpack.c.b16 %v237, %v235
  %v338 = vpack.c.b16 %v240, %v238
  %v339 = vpack.c.b16 %v241, %v239
  %v340 = vpack.c.b16 %v244, %v242
  %v341 = vpack.c.b16 %v245, %v243
  %v342 = vpack.c.b16 %v248, %v246
  %v343 = vpack.c.b16 %v249, %v247
  %v344 = vpack.c.b16 %v252, %v250
  %v345 = vpack.c.b16 %v253, %v251
  %v346 = vpack.c.b16 %v256, %v254
  %v347 = vpack.c.b16 %v257, %v255
  %v348 = vpack.c.b16 %v260, %v258
  %v349 = vpack.c.b16 %v261, %v259
  %v350 = vpack.c.b16 %v264, %v262
  %v351 = vpack.c.b16 %v265, %v263
  %v352 = vpack.c.b16 %v268, %v266
  %v353 = vpack.c.b16 %v269, %v267
  %v354 = vpack.c.b16 %v272, %v270
  %v355 = vpack.c.b16 %v273, %v271
  %v356 = vpack.c.b16 %v276, %v274
  %v357 = vpack.c.b16 %v277, %v275
  %v358 = vpack.c.b16 %v280, %v278
  %v359 = vpack.c.b16 %v281, %v279
  %v360 = vpack.c.b16 %v284, %v282
  %v361 = vpack.c.b16 %v285, %v283
  %v362 = vpack.c.b16 %v288, %v286
  %v363 = vpack.c.b16 %v289, %v287
  %v364 = vpack.c.b16 %v292, %v290
  %v365 = vpack.c.b16 %v293, %v291
  %v366 = vpack.c.b16 %v296, %v294
  %v367 = vpack.c.b16 %v297, %v295
  %v368 = vpack.c.b16 %v300, %v298
  %v369 = vpack.c.b16 %v301, %v299
  %v370 = vpack.c.b16 %v304, %v302
  %v371 = vpack.c.b16 %v305, %v303
  %v372 = vpack.c.b16 %v308, %v306
  %v373 = vpack.c.b16 %v309, %v307
  %v470 = vunpack.c.l.b16 %v79
  %v471 = vunpack.c.l.b16 %v80
  %v472 = vunpack.c.l.b16 %v81
  %v473 = vunpack.c.l.b16 %v82
  %v474 = vunpack.c.l.b16 %v83
  %v475 = vunpack.c.l.b16 %v84
  %v476 = vunpack.c.l.b16 %v85
  %v477 = vunpack.c.l.b16 %v86
  %v478 = vunpack.c.l.b16 %v87
  %v479 = vunpack.c.l.b16 %v88
  %v480 = vunpack.c.l.b16 %v89
  %v481 = vunpack.c.l.b16 %v90
  %v482 = vunpack.c.l.b16 %v91
  %v483 = vunpack.c.l.b16 %v92
  %v484 = vunpack.c.l.b16 %v93
  %v485 = vunpack.c.l.b16 %v94
  %v486 = vunpack.c.l.b16 %v95
  %v487 = vunpack.c.l.b16 %v96
  %v488 = vunpack.c.l.b16 %v97
  %v489 = vunpack.c.l.b16 %v98
  %v490 = vunpack.c.l.b16 %v99
  %v491 = vunpack.c.l.b16 %v100
  %v492 = vunpack.c.l.b16 %v101
  %v493 = vunpack.c.l.b16 %v102
  %v494 = vunpack.c.l.b16 %v103
  %v495 = vunpack.c.l.b16 %v104
  %v496 = vunpack.c.l.b16 %v105
  %v497 = vunpack.c.l.b16 %v106
  %v498 = vunpack.c.l.b16 %v107
  %v499 = vunpack.c.l.b16 %v108
  %v500 = vunpack.c.l.b16 %v109
  %v501 = vunpack.c.l.b16 %v110
  %v502 = vpack.c.b16 %v471, %v470
  %v503 = vpack.c.b16 %v473, %v472
  %v504 = vpack.c.b16 %v475, %v474
  %v505 = vpack.c.b16 %v477, %v476
  %v506 = vpack.c.b16 %v479, %v478
  %v507 = vpack.c.b16 %v481, %v480
  %v508 = vpack.c.b16 %v483, %v482
  %v509 = vpack.c.b16 %v485, %v484
  %v510 = vpack.c.b16 %v487, %v486
  %v511 = vpack.c.b16 %v489, %v488
  %v512 = vpack.c.b16 %v491, %v490
  %v513 = vpack.c.b16 %v493, %v492
  %v514 = vpack.c.b16 %v495, %v494
  %v515 = vpack.c.b16 %v497, %v496
  %v516 = vpack.c.b16 %v499, %v498
  %v517 = vpack.c.b16 %v501, %v500
  %534 = vmatprep.subr.bf16.mxu0 0
  %535 = vmatpush1.bf16.msra.mxu0 %v502
  %536 = vmatprep.subr.bf16.mxu0 0
  %537 = vmatpush1.bf16.msra.mxu0 %v503
  %538 = vmatprep.subr.bf16.mxu0 0
  %539 = vmatpush1.bf16.msra.mxu0 %v504
  %540 = vmatprep.subr.bf16.mxu0 0
  %541 = vmatpush1.bf16.msra.mxu0 %v505
  %542 = vmatprep.subr.bf16.mxu0 0
  %543 = vmatpush1.bf16.msra.mxu0 %v506
  %544 = vmatprep.subr.bf16.mxu0 0
  %545 = vmatpush1.bf16.msra.mxu0 %v507
  %546 = vmatprep.subr.bf16.mxu0 0
  %547 = vmatpush1.bf16.msra.mxu0 %v508
  %548 = vmatprep.subr.bf16.mxu0 0
  %549 = vmatpush1.bf16.msra.mxu0 %v509
  %550 = vmatprep.subr.bf16.mxu0 0
  %551 = vmatpush1.bf16.msra.mxu0 %v510
  %552 = vmatprep.subr.bf16.mxu0 0
  %553 = vmatpush1.bf16.msra.mxu0 %v511
  %554 = vmatprep.subr.bf16.mxu0 0
  %555 = vmatpush1.bf16.msra.mxu0 %v512
  %556 = vmatprep.subr.bf16.mxu0 0
  %557 = vmatpush1.bf16.msra.mxu0 %v513
  %558 = vmatprep.subr.bf16.mxu0 0
  %559 = vmatpush1.bf16.msra.mxu0 %v514
  %560 = vmatprep.subr.bf16.mxu0 0
  %561 = vmatpush1.bf16.msra.mxu0 %v515
  %562 = vmatprep.subr.bf16.mxu0 0
  %563 = vmatpush1.bf16.msra.mxu0 %v516
  %564 = vmatprep.subr.bf16.mxu0 0
  %565 = vmatpush1.bf16.msra.mxu0 %v517
  %566 = vmatprep.mubr.bf16.mxu0 %v311
  %567 = vmatmul.mubr.bf16.gmra.mrb[0].mxu0 %v310
  %v568 = vpop.f32.mrb[0].mxu0
  %v569 = vadd.f32 %v116, %v568
  %v570 = vpop.f32.mrb[0].mxu0
  %v571 = vpop.f32.mrb[0].mxu0
  %v572 = vadd.f32 %v116, %v571
  %v573 = vpop.f32.mrb[0].mxu0
  %574 = vmatprep.mubr.bf16.mxu0 %v313
  %575 = vmatmul.mubr.bf16.gmra.mrb[0].mxu0 %v312
  %v576 = vpop.f32.mrb[0].mxu0
  %v577 = vadd.f32 %v116, %v576
  %v578 = vpop.f32.mrb[0].mxu0
  %v579 = vpop.f32.mrb[0].mxu0
  %v580 = vadd.f32 %v116, %v579
  %v581 = vpop.f32.mrb[0].mxu0
  %582 = vmatprep.mubr.bf16.mxu0 %v315
  %583 = vmatmul.mubr.bf16.gmra.mrb[0].mxu0 %v314
  %v584 = vpop.f32.mrb[0].mxu0
  %v585 = vadd.f32 %v116, %v584
  %v586 = vpop.f32.mrb[0].mxu0
  %v587 = vpop.f32.mrb[0].mxu0
  %v588 = vadd.f32 %v116, %v587
  %v589 = vpop.f32.mrb[0].mxu0
  %590 = vmatprep.mubr.bf16.mxu0 %v317
  %591 = vmatmul.mubr.bf16.gmra.mrb[0].mxu0 %v316
  %v592 = vpop.f32.mrb[0].mxu0
  %v593 = vadd.f32 %v116, %v592
  %v594 = vpop.f32.mrb[0].mxu0
  %v595 = vpop.f32.mrb[0].mxu0
  %v596 = vadd.f32 %v116, %v595
  %v597 = vpop.f32.mrb[0].mxu0
  %598 = vmatprep.mubr.bf16.mxu0 %v319
  %599 = vmatmul.mubr.bf16.gmra.mrb[0].mxu0 %v318
  %v600 = vpop.f32.mrb[0].mxu0
  %v601 = vadd.f32 %v116, %v600
  %v602 = vpop.f32.mrb[0].mxu0
  %v603 = vpop.f32.mrb[0].mxu0
  %v604 = vadd.f32 %v116, %v603
  %v605 = vpop.f32.mrb[0].mxu0
  %606 = vmatprep.mubr.bf16.mxu0 %v321
  %607 = vmatmul.mubr.bf16.gmra.mrb[0].mxu0 %v320
  %v608 = vpop.f32.mrb[0].mxu0
  %v609 = vadd.f32 %v116, %v608
  %v610 = vpop.f32.mrb[0].mxu0
  %v611 = vpop.f32.mrb[0].mxu0
  %v612 = vadd.f32 %v116, %v611
  %v613 = vpop.f32.mrb[0].mxu0
  %614 = vmatprep.mubr.bf16.mxu0 %v323
  %615 = vmatmul.mubr.bf16.gmra.mrb[0].mxu0 %v322
  %v616 = vpop.f32.mrb[0].mxu0
  %v617 = vadd.f32 %v116, %v616
  %v618 = vpop.f32.mrb[0].mxu0
  %v619 = vpop.f32.mrb[0].mxu0
  %v620 = vadd.f32 %v116, %v619
  %v621 = vpop.f32.mrb[0].mxu0
  %622 = vmatprep.mubr.bf16.mxu0 %v325
  %623 = vmatmul.mubr.bf16.gmra.mrb[0].mxu0 %v324
  %v624 = vpop.f32.mrb[0].mxu0
  %v625 = vadd.f32 %v116, %v624
  %v626 = vpop.f32.mrb[0].mxu0
  %v627 = vpop.f32.mrb[0].mxu0
  %v628 = vadd.f32 %v116, %v627
  %v629 = vpop.f32.mrb[0].mxu0
  %630 = vmatprep.mubr.bf16.mxu0 %v327
  %631 = vmatmul.mubr.bf16.gmra.mrb[0].mxu0 %v326
  %v632 = vpop.f32.mrb[0].mxu0
  %v633 = vadd.f32 %v116, %v632
  %v634 = vpop.f32.mrb[0].mxu0
  %v635 = vpop.f32.mrb[0].mxu0
  %v636 = vadd.f32 %v116, %v635
  %v637 = vpop.f32.mrb[0].mxu0
  %638 = vmatprep.mubr.bf16.mxu0 %v329
  %639 = vmatmul.mubr.bf16.gmra.mrb[0].mxu0 %v328
  %v640 = vpop.f32.mrb[0].mxu0
  %v641 = vadd.f32 %v116, %v640
  %v642 = vpop.f32.mrb[0].mxu0
  %v643 = vpop.f32.mrb[0].mxu0
  %v644 = vadd.f32 %v116, %v643
  %v645 = vpop.f32.mrb[0].mxu0
  %646 = vmatprep.mubr.bf16.mxu0 %v331
  %647 = vmatmul.mubr.bf16.gmra.mrb[0].mxu0 %v330
  %v648 = vpop.f32.mrb[0].mxu0
  %v649 = vadd.f32 %v116, %v648
  %v650 = vpop.f32.mrb[0].mxu0
  %v651 = vpop.f32.mrb[0].mxu0
  %v652 = vadd.f32 %v116, %v651
  %v653 = vpop.f32.mrb[0].mxu0
  %654 = vmatprep.mubr.bf16.mxu0 %v333
  %655 = vmatmul.mubr.bf16.gmra.mrb[0].mxu0 %v332
  %v656 = vpop.f32.mrb[0].mxu0
  %v657 = vadd.f32 %v116, %v656
  %v658 = vpop.f32.mrb[0].mxu0
  %v659 = vpop.f32.mrb[0].mxu0
  %v660 = vadd.f32 %v116, %v659
  %v661 = vpop.f32.mrb[0].mxu0
  %662 = vmatprep.mubr.bf16.mxu0 %v335
  %663 = vmatmul.mubr.bf16.gmra.mrb[0].mxu0 %v334
  %v664 = vpop.f32.mrb[0].mxu0
  %v665 = vadd.f32 %v116, %v664
  %v666 = vpop.f32.mrb[0].mxu0
  %v667 = vpop.f32.mrb[0].mxu0
  %v668 = vadd.f32 %v116, %v667
  %v669 = vpop.f32.mrb[0].mxu0
  %670 = vmatprep.mubr.bf16.mxu0 %v337
  %671 = vmatmul.mubr.bf16.gmra.mrb[0].mxu0 %v336
  %v672 = vpop.f32.mrb[0].mxu0
  %v673 = vadd.f32 %v116, %v672
  %v674 = vpop.f32.mrb[0].mxu0
  %v675 = vpop.f32.mrb[0].mxu0
  %v676 = vadd.f32 %v116, %v675
  %v677 = vpop.f32.mrb[0].mxu0
  %678 = vmatprep.mubr.bf16.mxu0 %v339
  %679 = vmatmul.mubr.bf16.gmra.mrb[0].mxu0 %v338
  %v680 = vpop.f32.mrb[0].mxu0
  %v681 = vadd.f32 %v116, %v680
  %v682 = vpop.f32.mrb[0].mxu0
  %v683 = vpop.f32.mrb[0].mxu0
  %v684 = vadd.f32 %v116, %v683
  %v685 = vpop.f32.mrb[0].mxu0
  %686 = vmatprep.mubr.bf16.mxu0 %v341
  %687 = vmatmul.mubr.bf16.gmra.mrb[0].mxu0 %v340
  %v688 = vpop.f32.mrb[0].mxu0
  %v689 = vadd.f32 %v116, %v688
  %v690 = vpop.f32.mrb[0].mxu0
  %v691 = vpop.f32.mrb[0].mxu0
  %v692 = vadd.f32 %v116, %v691
  %v693 = vpop.f32.mrb[0].mxu0
  %694 = vmatprep.mubr.bf16.mxu0 %v343
  %695 = vmatmul.mubr.bf16.gmra.mrb[0].mxu0 %v342
  %v696 = vpop.f32.mrb[0].mxu0
  %v697 = vadd.f32 %v116, %v696
  %v698 = vpop.f32.mrb[0].mxu0
  %v699 = vpop.f32.mrb[0].mxu0
  %v700 = vadd.f32 %v116, %v699
  %v701 = vpop.f32.mrb[0].mxu0
  %702 = vmatprep.mubr.bf16.mxu0 %v345
  %703 = vmatmul.mubr.bf16.gmra.mrb[0].mxu0 %v344
  %v704 = vpop.f32.mrb[0].mxu0
  %v705 = vadd.f32 %v116, %v704
  %v706 = vpop.f32.mrb[0].mxu0
  %v707 = vpop.f32.mrb[0].mxu0
  %v708 = vadd.f32 %v116, %v707
  %v709 = vpop.f32.mrb[0].mxu0
  %710 = vmatprep.mubr.bf16.mxu0 %v347
  %711 = vmatmul.mubr.bf16.gmra.mrb[0].mxu0 %v346
  %v712 = vpop.f32.mrb[0].mxu0
  %v713 = vadd.f32 %v116, %v712
  %v714 = vpop.f32.mrb[0].mxu0
  %v715 = vpop.f32.mrb[0].mxu0
  %v716 = vadd.f32 %v116, %v715
  %v717 = vpop.f32.mrb[0].mxu0
  %718 = vmatprep.mubr.bf16.mxu0 %v349
  %719 = vmatmul.mubr.bf16.gmra.mrb[0].mxu0 %v348
  %v720 = vpop.f32.mrb[0].mxu0
  %v721 = vadd.f32 %v116, %v720
  %v722 = vpop.f32.mrb[0].mxu0
  %v723 = vpop.f32.mrb[0].mxu0
  %v724 = vadd.f32 %v116, %v723
  %v725 = vpop.f32.mrb[0].mxu0
  %726 = vmatprep.mubr.bf16.mxu0 %v351
  %727 = vmatmul.mubr.bf16.gmra.mrb[0].mxu0 %v350
  %v728 = vpop.f32.mrb[0].mxu0
  %v729 = vadd.f32 %v116, %v728
  %v730 = vpop.f32.mrb[0].mxu0
  %v731 = vpop.f32.mrb[0].mxu0
  %v732 = vadd.f32 %v116, %v731
  %v733 = vpop.f32.mrb[0].mxu0
  %734 = vmatprep.mubr.bf16.mxu0 %v353
  %735 = vmatmul.mubr.bf16.gmra.mrb[0].mxu0 %v352
  %v736 = vpop.f32.mrb[0].mxu0
  %v737 = vadd.f32 %v116, %v736
  %v738 = vpop.f32.mrb[0].mxu0
  %v739 = vpop.f32.mrb[0].mxu0
  %v740 = vadd.f32 %v116, %v739
  %v741 = vpop.f32.mrb[0].mxu0
  %742 = vmatprep.mubr.bf16.mxu0 %v355
  %743 = vmatmul.mubr.bf16.gmra.mrb[0].mxu0 %v354
  %v744 = vpop.f32.mrb[0].mxu0
  %v745 = vadd.f32 %v116, %v744
  %v746 = vpop.f32.mrb[0].mxu0
  %v747 = vpop.f32.mrb[0].mxu0
  %v748 = vadd.f32 %v116, %v747
  %v749 = vpop.f32.mrb[0].mxu0
  %750 = vmatprep.mubr.bf16.mxu0 %v357
  %751 = vmatmul.mubr.bf16.gmra.mrb[0].mxu0 %v356
  %v752 = vpop.f32.mrb[0].mxu0
  %v753 = vadd.f32 %v116, %v752
  %v754 = vpop.f32.mrb[0].mxu0
  %v755 = vpop.f32.mrb[0].mxu0
  %v756 = vadd.f32 %v116, %v755
  %v757 = vpop.f32.mrb[0].mxu0
  %758 = vmatprep.mubr.bf16.mxu0 %v359
  %759 = vmatmul.mubr.bf16.gmra.mrb[0].mxu0 %v358
  %v760 = vpop.f32.mrb[0].mxu0
  %v761 = vadd.f32 %v116, %v760
  %v762 = vpop.f32.mrb[0].mxu0
  %v763 = vpop.f32.mrb[0].mxu0
  %v764 = vadd.f32 %v116, %v763
  %v765 = vpop.f32.mrb[0].mxu0
  %766 = vmatprep.mubr.bf16.mxu0 %v361
  %767 = vmatmul.mubr.bf16.gmra.mrb[0].mxu0 %v360
  %v768 = vpop.f32.mrb[0].mxu0
  %v769 = vadd.f32 %v116, %v768
  %v770 = vpop.f32.mrb[0].mxu0
  %v771 = vpop.f32.mrb[0].mxu0
  %v772 = vadd.f32 %v116, %v771
  %v773 = vpop.f32.mrb[0].mxu0
  %774 = vmatprep.mubr.bf16.mxu0 %v363
  %775 = vmatmul.mubr.bf16.gmra.mrb[0].mxu0 %v362
  %v776 = vpop.f32.mrb[0].mxu0
  %v777 = vadd.f32 %v116, %v776
  %v778 = vpop.f32.mrb[0].mxu0
  %v779 = vpop.f32.mrb[0].mxu0
  %v780 = vadd.f32 %v116, %v779
  %v781 = vpop.f32.mrb[0].mxu0
  %782 = vmatprep.mubr.bf16.mxu0 %v365
  %783 = vmatmul.mubr.bf16.gmra.mrb[0].mxu0 %v364
  %v784 = vpop.f32.mrb[0].mxu0
  %v785 = vadd.f32 %v116, %v784
  %v786 = vpop.f32.mrb[0].mxu0
  %v787 = vpop.f32.mrb[0].mxu0
  %v788 = vadd.f32 %v116, %v787
  %v789 = vpop.f32.mrb[0].mxu0
  %790 = vmatprep.mubr.bf16.mxu0 %v367
  %791 = vmatmul.mubr.bf16.gmra.mrb[0].mxu0 %v366
  %v792 = vpop.f32.mrb[0].mxu0
  %v793 = vadd.f32 %v116, %v792
  %v794 = vpop.f32.mrb[0].mxu0
  %v795 = vpop.f32.mrb[0].mxu0
  %v796 = vadd.f32 %v116, %v795
  %v797 = vpop.f32.mrb[0].mxu0
  %798 = vmatprep.mubr.bf16.mxu0 %v369
  %799 = vmatmul.mubr.bf16.gmra.mrb[0].mxu0 %v368
  %v800 = vpop.f32.mrb[0].mxu0
  %v801 = vadd.f32 %v116, %v800
  %v802 = vpop.f32.mrb[0].mxu0
  %v803 = vpop.f32.mrb[0].mxu0
  %v804 = vadd.f32 %v116, %v803
  %v805 = vpop.f32.mrb[0].mxu0
  %806 = vmatprep.mubr.bf16.mxu0 %v371
  %807 = vmatmul.mubr.bf16.gmra.mrb[0].mxu0 %v370
  %v808 = vpop.f32.mrb[0].mxu0
  %v809 = vadd.f32 %v116, %v808
  %v810 = vpop.f32.mrb[0].mxu0
  %v811 = vpop.f32.mrb[0].mxu0
  %v812 = vadd.f32 %v116, %v811
  %v813 = vpop.f32.mrb[0].mxu0
  %814 = vmatprep.mubr.bf16.mxu0 %v373
  %815 = vmatmul.mubr.bf16.gmra.mrb[0].mxu0 %v372
  %v816 = vpop.f32.mrb[0].mxu0
  %v817 = vadd.f32 %v116, %v816
  %v818 = vpop.f32.mrb[0].mxu0
  %v819 = vpop.f32.mrb[0].mxu0
  %v820 = vadd.f32 %v116, %v819
  %v821 = vpop.f32.mrb[0].mxu0
  %822 = vdwg.mxu0
  %823 = vst [vmem:[%s3] sm:$0xff] %v569
  %824 = vst [vmem:[%s3 + $0x8] sm:$0xff] %v572
  %825 = vst [vmem:[%s3 + $0x10] sm:$0xff] %v577
  %826 = vst [vmem:[%s3 + $0x18] sm:$0xff] %v580
  %827 = vst [vmem:[%s3 + $0x20] sm:$0xff] %v585
  %828 = vst [vmem:[%s3 + $0x28] sm:$0xff] %v588
  %829 = vst [vmem:[%s3 + $0x30] sm:$0xff] %v593
  %830 = vst [vmem:[%s3 + $0x38] sm:$0xff] %v596
  %831 = vst [vmem:[%s3 + $0x40] sm:$0xff] %v601
  %832 = vst [vmem:[%s3 + $0x48] sm:$0xff] %v604
  %833 = vst [vmem:[%s3 + $0x50] sm:$0xff] %v609
  %834 = vst [vmem:[%s3 + $0x58] sm:$0xff] %v612
  %835 = vst [vmem:[%s3 + $0x60] sm:$0xff] %v617
  %836 = vst [vmem:[%s3 + $0x68] sm:$0xff] %v620
  %837 = vst [vmem:[%s3 + $0x70] sm:$0xff] %v625
  %838 = vst [vmem:[%s3 + $0x78] sm:$0xff] %v628
  %839 = vst [vmem:[%s3 + $0x80] sm:$0xff] %v633
  %840 = vst [vmem:[%s3 + $0x88] sm:$0xff] %v636
  %841 = vst [vmem:[%s3 + $0x90] sm:$0xff] %v641
  %842 = vst [vmem:[%s3 + $0x98] sm:$0xff] %v644
  %843 = vst [vmem:[%s3 + $0xa0] sm:$0xff] %v649
  %844 = vst [vmem:[%s3 + $0xa8] sm:$0xff] %v652
  %845 = vst [vmem:[%s3 + $0xb0] sm:$0xff] %v657
  %846 = vst [vmem:[%s3 + $0xb8] sm:$0xff] %v660
  %847 = vst [vmem:[%s3 + $0xc0] sm:$0xff] %v665
  %848 = vst [vmem:[%s3 + $0xc8] sm:$0xff] %v668
  %849 = vst [vmem:[%s3 + $0xd0] sm:$0xff] %v673
  %850 = vst [vmem:[%s3 + $0xd8] sm:$0xff] %v676
  %851 = vst [vmem:[%s3 + $0xe0] sm:$0xff] %v681
  %852 = vst [vmem:[%s3 + $0xe8] sm:$0xff] %v684
  %853 = vst [vmem:[%s3 + $0xf0] sm:$0xff] %v689
  %854 = vst [vmem:[%s3 + $0xf8] sm:$0xff] %v692
  %855 = vst [vmem:[%s3 + $0x100] sm:$0xff] %v697
  %856 = vst [vmem:[%s3 + $0x108] sm:$0xff] %v700
  %857 = vst [vmem:[%s3 + $0x110] sm:$0xff] %v705
  %858 = vst [vmem:[%s3 + $0x118] sm:$0xff] %v708
  %859 = vst [vmem:[%s3 + $0x120] sm:$0xff] %v713
  %860 = vst [vmem:[%s3 + $0x128] sm:$0xff] %v716
  %861 = vst [vmem:[%s3 + $0x130] sm:$0xff] %v721
  %862 = vst [vmem:[%s3 + $0x138] sm:$0xff] %v724
  %863 = vst [vmem:[%s3 + $0x140] sm:$0xff] %v729
  %864 = vst [vmem:[%s3 + $0x148] sm:$0xff] %v732
  %865 = vst [vmem:[%s3 + $0x150] sm:$0xff] %v737
  %866 = vst [vmem:[%s3 + $0x158] sm:$0xff] %v740
  %867 = vst [vmem:[%s3 + $0x160] sm:$0xff] %v745
  %868 = vst [vmem:[%s3 + $0x168] sm:$0xff] %v748
  %869 = vst [vmem:[%s3 + $0x170] sm:$0xff] %v753
  %870 = vst [vmem:[%s3 + $0x178] sm:$0xff] %v756
  %871 = vst [vmem:[%s3 + $0x180] sm:$0xff] %v761
  %872 = vst [vmem:[%s3 + $0x188] sm:$0xff] %v764
  %873 = vst [vmem:[%s3 + $0x190] sm:$0xff] %v769
  %874 = vst [vmem:[%s3 + $0x198] sm:$0xff] %v772
  %875 = vst [vmem:[%s3 + $0x1a0] sm:$0xff] %v777
  %876 = vst [vmem:[%s3 + $0x1a8] sm:$0xff] %v780
  %877 = vst [vmem:[%s3 + $0x1b0] sm:$0xff] %v785
  %878 = vst [vmem:[%s3 + $0x1b8] sm:$0xff] %v788
  %879 = vst [vmem:[%s3 + $0x1c0] sm:$0xff] %v793
  %880 = vst [vmem:[%s3 + $0x1c8] sm:$0xff] %v796
  %881 = vst [vmem:[%s3 + $0x1d0] sm:$0xff] %v801
  %882 = vst [vmem:[%s3 + $0x1d8] sm:$0xff] %v804
  %883 = vst [vmem:[%s3 + $0x1e0] sm:$0xff] %v809
  %884 = vst [vmem:[%s3 + $0x1e8] sm:$0xff] %v812
  %885 = vst [vmem:[%s3 + $0x1f0] sm:$0xff] %v817
  %886 = vst [vmem:[%s3 + $0x1f8] sm:$0xff] %v820
  // Predicated region
  $region14: #{_lambda_.10} parent=0 // pred_check
    _
  $region15: #{_lambda_.10} parent=0 // pred_check_branch
    %888 = sbr.rel (0) target = $region17
  $region16: #{_lambda_.10} parent=0 // pred_region
    _
  $region17: #{_lambda_.10} parent=0 // pred_fallthru
    _
  // Predicated region
  $region18: #{_lambda_.10} parent=0 // pred_check
    _
  $region19: #{_lambda_.10} parent=0 // pred_check_branch
    %890 = sbr.rel (0) target = $region21
  $region20: #{_lambda_.10} parent=0 // pred_region
    _
  $region21: #{_lambda_.10} parent=0 // pred_fallthru
    _

// kernel: _lambda_.11
$region0: #{_lambda_.11}
  #allocation0 [shape = 'u32[]', space=smem, size = 0x4, offset = 0x4, fixed_abs, tag = 'smem constant byte address 0x4 - core index']
  #allocation1 [shape = 'u32[144,128]{1,0:T(1,128)}', space=vmem, size = 0x12000, scoped, tag = 'internal scratch']
  %s0 = inlined_call_operand.vmem [shape: f32[1922,128], index: 0, kind: input, shape index: {}]
  %s1 = inlined_call_operand.vmem [shape: f32[1,128], index: 1, kind: input, shape index: {}]
  %s2 = inlined_call_operand.vmem [shape: f32[1,128], index: 2, kind: input, shape index: {}]
  %s3 = inlined_call_operand.vmem [shape: f32[1922,128], index: 3, kind: output, shape index: {}]
  %s4 = sld [smem:[#allocation0]]
  $region22: #{_lambda_.11} parent=0
    _
  %s6 = ssub.s32 1, %s4
  %s7 = scalar_select 0, %s6, %s4
  // Predicated region
  $region2: #{_lambda_.11} parent=0 // pred_check
    _
  $region3: #{_lambda_.11} parent=0 // pred_check_branch
    %9 = sbr.rel (0) target = $region5
  $region4: #{_lambda_.11} parent=0 // pred_region
    _
  $region5: #{_lambda_.11} parent=0 // pred_fallthru
    _
  // Predicated region
  $region6: #{_lambda_.11} parent=0 // pred_check
    _
  $region7: #{_lambda_.11} parent=0 // pred_check_branch
    %11 = sbr.rel (0) target = $region9
  $region8: #{_lambda_.11} parent=0 // pred_region
    _
  $region9: #{_lambda_.11} parent=0 // pred_fallthru
    _
  // Predicated region
  $region10: #{_lambda_.11} parent=0 // pred_check
    _
  $region11: #{_lambda_.11} parent=0 // pred_check_branch
    %13 = sbr.rel (0) target = $region13
  $region12: #{_lambda_.11} parent=0 // pred_region
    _
  $region13: #{_lambda_.11} parent=0 // pred_fallthru
    _
  %v14 = vld [vmem:[%s0] sm:$0xff]
  %v15 = vld [vmem:[%s0 + $0x8] sm:$0xff]
  %v16 = vld [vmem:[%s0 + $0x10] sm:$0xff]
  %v17 = vld [vmem:[%s0 + $0x18] sm:$0xff]
  %v18 = vld [vmem:[%s0 + $0x20] sm:$0xff]
  %v19 = vld [vmem:[%s0 + $0x28] sm:$0xff]
  %v20 = vld [vmem:[%s0 + $0x30] sm:$0xff]
  %v21 = vld [vmem:[%s0 + $0x38] sm:$0xff]
  %v22 = vld [vmem:[%s0 + $0x40] sm:$0xff]
  %v23 = vld [vmem:[%s0 + $0x48] sm:$0xff]
  %v24 = vld [vmem:[%s0 + $0x50] sm:$0xff]
  %v25 = vld [vmem:[%s0 + $0x58] sm:$0xff]
  %v26 = vld [vmem:[%s0 + $0x60] sm:$0xff]
  %v27 = vld [vmem:[%s0 + $0x68] sm:$0xff]
  %v28 = vld [vmem:[%s0 + $0x70] sm:$0xff]
  %v29 = vld [vmem:[%s0 + $0x78] sm:$0xff]
  %v30 = vld [vmem:[%s0 + $0x80] sm:$0xff]
  %v31 = vld [vmem:[%s0 + $0x88] sm:$0xff]
  %v32 = vld [vmem:[%s0 + $0x90] sm:$0xff]
  %v33 = vld [vmem:[%s0 + $0x98] sm:$0xff]
  %v34 = vld [vmem:[%s0 + $0xa0] sm:$0xff]
  %v35 = vld [vmem:[%s0 + $0xa8] sm:$0xff]
  %v36 = vld [vmem:[%s0 + $0xb0] sm:$0xff]
  %v37 = vld [vmem:[%s0 + $0xb8] sm:$0xff]
  %v38 = vld [vmem:[%s0 + $0xc0] sm:$0xff]
  %v39 = vld [vmem:[%s0 + $0xc8] sm:$0xff]
  %v40 = vld [vmem:[%s0 + $0xd0] sm:$0xff]
  %v41 = vld [vmem:[%s0 + $0xd8] sm:$0xff]
  %v42 = vld [vmem:[%s0 + $0xe0] sm:$0xff]
  %v43 = vld [vmem:[%s0 + $0xe8] sm:$0xff]
  %v44 = vld [vmem:[%s0 + $0xf0] sm:$0xff]
  %v45 = vld [vmem:[%s0 + $0xf8] sm:$0xff]
  %v46 = vld [vmem:[%s0 + $0x100] sm:$0xff]
  %v47 = vld [vmem:[%s0 + $0x108] sm:$0xff]
  %v48 = vld [vmem:[%s0 + $0x110] sm:$0xff]
  %v49 = vld [vmem:[%s0 + $0x118] sm:$0xff]
  %v50 = vld [vmem:[%s0 + $0x120] sm:$0xff]
  %v51 = vld [vmem:[%s0 + $0x128] sm:$0xff]
  %v52 = vld [vmem:[%s0 + $0x130] sm:$0xff]
  %v53 = vld [vmem:[%s0 + $0x138] sm:$0xff]
  %v54 = vld [vmem:[%s0 + $0x140] sm:$0xff]
  %v55 = vld [vmem:[%s0 + $0x148] sm:$0xff]
  %v56 = vld [vmem:[%s0 + $0x150] sm:$0xff]
  %v57 = vld [vmem:[%s0 + $0x158] sm:$0xff]
  %v58 = vld [vmem:[%s0 + $0x160] sm:$0xff]
  %v59 = vld [vmem:[%s0 + $0x168] sm:$0xff]
  %v60 = vld [vmem:[%s0 + $0x170] sm:$0xff]
  %v61 = vld [vmem:[%s0 + $0x178] sm:$0xff]
  %v62 = vld [vmem:[%s0 + $0x180] sm:$0xff]
  %v63 = vld [vmem:[%s0 + $0x188] sm:$0xff]
  %v64 = vld [vmem:[%s0 + $0x190] sm:$0xff]
  %v65 = vld [vmem:[%s0 + $0x198] sm:$0xff]
  %v66 = vld [vmem:[%s0 + $0x1a0] sm:$0xff]
  %v67 = vld [vmem:[%s0 + $0x1a8] sm:$0xff]
  %v68 = vld [vmem:[%s0 + $0x1b0] sm:$0xff]
  %v69 = vld [vmem:[%s0 + $0x1b8] sm:$0xff]
  %v70 = vld [vmem:[%s0 + $0x1c0] sm:$0xff]
  %v71 = vld [vmem:[%s0 + $0x1c8] sm:$0xff]
  %v72 = vld [vmem:[%s0 + $0x1d0] sm:$0xff]
  %v73 = vld [vmem:[%s0 + $0x1d8] sm:$0xff]
  %v74 = vld [vmem:[%s0 + $0x1e0] sm:$0xff]
  %v75 = vld [vmem:[%s0 + $0x1e8] sm:$0xff]
  %v76 = vld [vmem:[%s0 + $0x1f0] sm:$0xff]
  %v77 = vld [vmem:[%s0 + $0x1f8] sm:$0xff]
  %v78 = vld [vmem:[%s0 + $0x200] sm:$0xff]
  %v79 = vld [vmem:[%s0 + $0x208] sm:$0xff]
  %v80 = vld [vmem:[%s0 + $0x210] sm:$0xff]
  %v81 = vld [vmem:[%s0 + $0x218] sm:$0xff]
  %v82 = vld [vmem:[%s0 + $0x220] sm:$0xff]
  %v83 = vld [vmem:[%s0 + $0x228] sm:$0xff]
  %v84 = vld [vmem:[%s0 + $0x230] sm:$0xff]
  %v85 = vld [vmem:[%s0 + $0x238] sm:$0xff]
  %v86 = vld [vmem:[%s0 + $0x240] sm:$0xff]
  %v87 = vld [vmem:[%s0 + $0x248] sm:$0xff]
  %v88 = vld [vmem:[%s0 + $0x250] sm:$0xff]
  %v89 = vld [vmem:[%s0 + $0x258] sm:$0xff]
  %v90 = vld [vmem:[%s0 + $0x260] sm:$0xff]
  %v91 = vld [vmem:[%s0 + $0x268] sm:$0xff]
  %v92 = vld [vmem:[%s0 + $0x270] sm:$0xff]
  %v93 = vld [vmem:[%s0 + $0x278] sm:$0xff]
  %v94 = vld [vmem:[%s0 + $0x280] sm:$0xff]
  %v95 = vld [vmem:[%s0 + $0x288] sm:$0xff]
  %v96 = vld [vmem:[%s0 + $0x290] sm:$0xff]
  %v97 = vld [vmem:[%s0 + $0x298] sm:$0xff]
  %v98 = vld [vmem:[%s0 + $0x2a0] sm:$0xff]
  %v99 = vld [vmem:[%s0 + $0x2a8] sm:$0xff]
  %v100 = vld [vmem:[%s0 + $0x2b0] sm:$0xff]
  %v101 = vld [vmem:[%s0 + $0x2b8] sm:$0xff]
  %v102 = vld [vmem:[%s0 + $0x2c0] sm:$0xff]
  %v103 = vld [vmem:[%s0 + $0x2c8] sm:$0xff]
  %v104 = vld [vmem:[%s0 + $0x2d0] sm:$0xff]
  %v105 = vld [vmem:[%s0 + $0x2d8] sm:$0xff]
  %v106 = vld [vmem:[%s0 + $0x2e0] sm:$0xff]
  %v107 = vld [vmem:[%s0 + $0x2e8] sm:$0xff]
  %v108 = vld [vmem:[%s0 + $0x2f0] sm:$0xff]
  %v109 = vld [vmem:[%s0 + $0x2f8] sm:$0xff]
  %v110 = vld [vmem:[%s0 + $0x300] sm:$0xff]
  %v111 = vld [vmem:[%s0 + $0x308] sm:$0xff]
  %v112 = vld [vmem:[%s0 + $0x310] sm:$0xff]
  %v113 = vld [vmem:[%s0 + $0x318] sm:$0xff]
  %v114 = vld [vmem:[%s0 + $0x320] sm:$0xff]
  %v115 = vld [vmem:[%s0 + $0x328] sm:$0xff]
  %v116 = vld [vmem:[%s0 + $0x330] sm:$0xff]
  %v117 = vld [vmem:[%s0 + $0x338] sm:$0xff]
  %v118 = vld [vmem:[%s0 + $0x340] sm:$0xff]
  %v119 = vld [vmem:[%s0 + $0x348] sm:$0xff]
  %v120 = vld [vmem:[%s0 + $0x350] sm:$0xff]
  %v121 = vld [vmem:[%s0 + $0x358] sm:$0xff]
  %v122 = vld [vmem:[%s0 + $0x360] sm:$0xff]
  %v123 = vld [vmem:[%s0 + $0x368] sm:$0xff]
  %v124 = vld [vmem:[%s0 + $0x370] sm:$0xff]
  %v125 = vld [vmem:[%s0 + $0x378] sm:$0xff]
  %v126 = vld [vmem:[%s0 + $0x380] sm:$0xff]
  %v127 = vld [vmem:[%s0 + $0x388] sm:$0xff]
  %v128 = vld [vmem:[%s0 + $0x390] sm:$0xff]
  %v129 = vld [vmem:[%s0 + $0x398] sm:$0xff]
  %v130 = vld [vmem:[%s0 + $0x3a0] sm:$0xff]
  %v131 = vld [vmem:[%s0 + $0x3a8] sm:$0xff]
  %v132 = vld [vmem:[%s0 + $0x3b0] sm:$0xff]
  %v133 = vld [vmem:[%s0 + $0x3b8] sm:$0xff]
  %v134 = vld [vmem:[%s0 + $0x3c0] sm:$0xff]
  %v135 = vld [vmem:[%s0 + $0x3c8] sm:$0xff]
  %v136 = vld [vmem:[%s0 + $0x3d0] sm:$0xff]
  %v137 = vld [vmem:[%s0 + $0x3d8] sm:$0xff]
  %v138 = vld [vmem:[%s0 + $0x3e0] sm:$0xff]
  %v139 = vld [vmem:[%s0 + $0x3e8] sm:$0xff]
  %v140 = vld [vmem:[%s0 + $0x3f0] sm:$0xff]
  %v141 = vld [vmem:[%s0 + $0x3f8] sm:$0xff]
  %v142 = vld [vmem:[%s0 + $0x400] sm:$0xff]
  %v143 = vld [vmem:[%s0 + $0x408] sm:$0xff]
  %v144 = vld [vmem:[%s0 + $0x410] sm:$0xff]
  %v145 = vld [vmem:[%s0 + $0x418] sm:$0xff]
  %v146 = vld [vmem:[%s0 + $0x420] sm:$0xff]
  %v147 = vld [vmem:[%s0 + $0x428] sm:$0xff]
  %v148 = vld [vmem:[%s0 + $0x430] sm:$0xff]
  %v149 = vld [vmem:[%s0 + $0x438] sm:$0xff]
  %v150 = vld [vmem:[%s0 + $0x440] sm:$0xff]
  %v151 = vld [vmem:[%s0 + $0x448] sm:$0xff]
  %v152 = vld [vmem:[%s0 + $0x450] sm:$0xff]
  %v153 = vld [vmem:[%s0 + $0x458] sm:$0xff]
  %v154 = vld [vmem:[%s0 + $0x460] sm:$0xff]
  %v155 = vld [vmem:[%s0 + $0x468] sm:$0xff]
  %v156 = vld [vmem:[%s0 + $0x470] sm:$0xff]
  %v157 = vld [vmem:[%s0 + $0x478] sm:$0xff]
  %v158 = vld [vmem:[%s0 + $0x480] sm:$0xff]
  %v159 = vld [vmem:[%s0 + $0x488] sm:$0xff]
  %v160 = vld [vmem:[%s0 + $0x490] sm:$0xff]
  %v161 = vld [vmem:[%s0 + $0x498] sm:$0xff]
  %v162 = vld [vmem:[%s0 + $0x4a0] sm:$0xff]
  %v163 = vld [vmem:[%s0 + $0x4a8] sm:$0xff]
  %v164 = vld [vmem:[%s0 + $0x4b0] sm:$0xff]
  %v165 = vld [vmem:[%s0 + $0x4b8] sm:$0xff]
  %v166 = vld [vmem:[%s0 + $0x4c0] sm:$0xff]
  %v167 = vld [vmem:[%s0 + $0x4c8] sm:$0xff]
  %v168 = vld [vmem:[%s0 + $0x4d0] sm:$0xff]
  %v169 = vld [vmem:[%s0 + $0x4d8] sm:$0xff]
  %v170 = vld [vmem:[%s0 + $0x4e0] sm:$0xff]
  %v171 = vld [vmem:[%s0 + $0x4e8] sm:$0xff]
  %v172 = vld [vmem:[%s0 + $0x4f0] sm:$0xff]
  %v173 = vld [vmem:[%s0 + $0x4f8] sm:$0xff]
  %v174 = vld [vmem:[%s0 + $0x500] sm:$0xff]
  %v175 = vld [vmem:[%s0 + $0x508] sm:$0xff]
  %v176 = vld [vmem:[%s0 + $0x510] sm:$0xff]
  %v177 = vld [vmem:[%s0 + $0x518] sm:$0xff]
  %v178 = vld [vmem:[%s0 + $0x520] sm:$0xff]
  %v179 = vld [vmem:[%s0 + $0x528] sm:$0xff]
  %v180 = vld [vmem:[%s0 + $0x530] sm:$0xff]
  %v181 = vld [vmem:[%s0 + $0x538] sm:$0xff]
  %v182 = vld [vmem:[%s0 + $0x540] sm:$0xff]
  %v183 = vld [vmem:[%s0 + $0x548] sm:$0xff]
  %v184 = vld [vmem:[%s0 + $0x550] sm:$0xff]
  %v185 = vld [vmem:[%s0 + $0x558] sm:$0xff]
  %v186 = vld [vmem:[%s0 + $0x560] sm:$0xff]
  %v187 = vld [vmem:[%s0 + $0x568] sm:$0xff]
  %v188 = vld [vmem:[%s0 + $0x570] sm:$0xff]
  %v189 = vld [vmem:[%s0 + $0x578] sm:$0xff]
  %v190 = vld [vmem:[%s0 + $0x580] sm:$0xff]
  %v191 = vld [vmem:[%s0 + $0x588] sm:$0xff]
  %v192 = vld [vmem:[%s0 + $0x590] sm:$0xff]
  %v193 = vld [vmem:[%s0 + $0x598] sm:$0xff]
  %v194 = vld [vmem:[%s0 + $0x5a0] sm:$0xff]
  %v195 = vld [vmem:[%s0 + $0x5a8] sm:$0xff]
  %v196 = vld [vmem:[%s0 + $0x5b0] sm:$0xff]
  %v197 = vld [vmem:[%s0 + $0x5b8] sm:$0xff]
  %v198 = vld [vmem:[%s0 + $0x5c0] sm:$0xff]
  %v199 = vld [vmem:[%s0 + $0x5c8] sm:$0xff]
  %v200 = vld [vmem:[%s0 + $0x5d0] sm:$0xff]
  %v201 = vld [vmem:[%s0 + $0x5d8] sm:$0xff]
  %v202 = vld [vmem:[%s0 + $0x5e0] sm:$0xff]
  %v203 = vld [vmem:[%s0 + $0x5e8] sm:$0xff]
  %v204 = vld [vmem:[%s0 + $0x5f0] sm:$0xff]
  %v205 = vld [vmem:[%s0 + $0x5f8] sm:$0xff]
  %v206 = vld [vmem:[%s0 + $0x600] sm:$0xff]
  %v207 = vld [vmem:[%s0 + $0x608] sm:$0xff]
  %v208 = vld [vmem:[%s0 + $0x610] sm:$0xff]
  %v209 = vld [vmem:[%s0 + $0x618] sm:$0xff]
  %v210 = vld [vmem:[%s0 + $0x620] sm:$0xff]
  %v211 = vld [vmem:[%s0 + $0x628] sm:$0xff]
  %v212 = vld [vmem:[%s0 + $0x630] sm:$0xff]
  %v213 = vld [vmem:[%s0 + $0x638] sm:$0xff]
  %v214 = vld [vmem:[%s0 + $0x640] sm:$0xff]
  %v215 = vld [vmem:[%s0 + $0x648] sm:$0xff]
  %v216 = vld [vmem:[%s0 + $0x650] sm:$0xff]
  %v217 = vld [vmem:[%s0 + $0x658] sm:$0xff]
  %v218 = vld [vmem:[%s0 + $0x660] sm:$0xff]
  %v219 = vld [vmem:[%s0 + $0x668] sm:$0xff]
  %v220 = vld [vmem:[%s0 + $0x670] sm:$0xff]
  %v221 = vld [vmem:[%s0 + $0x678] sm:$0xff]
  %v222 = vld [vmem:[%s0 + $0x680] sm:$0xff]
  %v223 = vld [vmem:[%s0 + $0x688] sm:$0xff]
  %v224 = vld [vmem:[%s0 + $0x690] sm:$0xff]
  %v225 = vld [vmem:[%s0 + $0x698] sm:$0xff]
  %v226 = vld [vmem:[%s0 + $0x6a0] sm:$0xff]
  %v227 = vld [vmem:[%s0 + $0x6a8] sm:$0xff]
  %v228 = vld [vmem:[%s0 + $0x6b0] sm:$0xff]
  %v229 = vld [vmem:[%s0 + $0x6b8] sm:$0xff]
  %v230 = vld [vmem:[%s0 + $0x6c0] sm:$0xff]
  %v231 = vld [vmem:[%s0 + $0x6c8] sm:$0xff]
  %v232 = vld [vmem:[%s0 + $0x6d0] sm:$0xff]
  %v233 = vld [vmem:[%s0 + $0x6d8] sm:$0xff]
  %v234 = vld [vmem:[%s0 + $0x6e0] sm:$0xff]
  %v235 = vld [vmem:[%s0 + $0x6e8] sm:$0xff]
  %v236 = vld [vmem:[%s0 + $0x6f0] sm:$0xff]
  %v237 = vld [vmem:[%s0 + $0x6f8] sm:$0xff]
  %v238 = vld [vmem:[%s0 + $0x700] sm:$0xff]
  %v239 = vld [vmem:[%s0 + $0x708] sm:$0xff]
  %v240 = vld [vmem:[%s0 + $0x710] sm:$0xff]
  %v241 = vld [vmem:[%s0 + $0x718] sm:$0xff]
  %v242 = vld [vmem:[%s0 + $0x720] sm:$0xff]
  %v243 = vld [vmem:[%s0 + $0x728] sm:$0xff]
  %v244 = vld [vmem:[%s0 + $0x730] sm:$0xff]
  %v245 = vld [vmem:[%s0 + $0x738] sm:$0xff]
  %v246 = vld [vmem:[%s0 + $0x740] sm:$0xff]
  %v247 = vld [vmem:[%s0 + $0x748] sm:$0xff]
  %v248 = vld [vmem:[%s0 + $0x750] sm:$0xff]
  %v249 = vld [vmem:[%s0 + $0x758] sm:$0xff]
  %v250 = vld [vmem:[%s0 + $0x760] sm:$0xff]
  %v251 = vld [vmem:[%s0 + $0x768] sm:$0xff]
  %v252 = vld [vmem:[%s0 + $0x770] sm:$0xff]
  %v253 = vld [vmem:[%s0 + $0x778] sm:$0xff]
  %v254 = vld [vmem:[%s0 + $0x780] sm:$0x3]
  %v255 = vadd.f32 %v14, %v15
  %v256 = vadd.f32 %v255, %v16
  %v257 = vadd.f32 %v256, %v17
  %v258 = vadd.f32 %v257, %v18
  %v259 = vadd.f32 %v258, %v19
  %v260 = vadd.f32 %v259, %v20
  %v261 = vadd.f32 %v260, %v21
  %v262 = vadd.f32 %v261, %v22
  %v263 = vadd.f32 %v262, %v23
  %v264 = vadd.f32 %v263, %v24
  %v265 = vadd.f32 %v264, %v25
  %v266 = vadd.f32 %v265, %v26
  %v267 = vadd.f32 %v266, %v27
  %v268 = vadd.f32 %v267, %v28
  %v269 = vadd.f32 %v268, %v29
  %v270 = vadd.f32 %v269, %v30
  %v271 = vadd.f32 %v270, %v31
  %v272 = vadd.f32 %v271, %v32
  %v273 = vadd.f32 %v272, %v33
  %v274 = vadd.f32 %v273, %v34
  %v275 = vadd.f32 %v274, %v35
  %v276 = vadd.f32 %v275, %v36
  %v277 = vadd.f32 %v276, %v37
  %v278 = vadd.f32 %v277, %v38
  %v279 = vadd.f32 %v278, %v39
  %v280 = vadd.f32 %v279, %v40
  %v281 = vadd.f32 %v280, %v41
  %v282 = vadd.f32 %v281, %v42
  %v283 = vadd.f32 %v282, %v43
  %v284 = vadd.f32 %v283, %v44
  %v285 = vadd.f32 %v284, %v45
  %v286 = vadd.f32 %v285, %v46
  %v287 = vadd.f32 %v286, %v47
  %v288 = vadd.f32 %v287, %v48
  %v289 = vadd.f32 %v288, %v49
  %v290 = vadd.f32 %v289, %v50
  %v291 = vadd.f32 %v290, %v51
  %v292 = vadd.f32 %v291, %v52
  %v293 = vadd.f32 %v292, %v53
  %v294 = vadd.f32 %v293, %v54
  %v295 = vadd.f32 %v294, %v55
  %v296 = vadd.f32 %v295, %v56
  %v297 = vadd.f32 %v296, %v57
  %v298 = vadd.f32 %v297, %v58
  %v299 = vadd.f32 %v298, %v59
  %v300 = vadd.f32 %v299, %v60
  %v301 = vadd.f32 %v300, %v61
  %v302 = vadd.f32 %v301, %v62
  %v303 = vadd.f32 %v302, %v63
  %v304 = vadd.f32 %v303, %v64
  %v305 = vadd.f32 %v304, %v65
  %v306 = vadd.f32 %v305, %v66
  %v307 = vadd.f32 %v306, %v67
  %v308 = vadd.f32 %v307, %v68
  %v309 = vadd.f32 %v308, %v69
  %v310 = vadd.f32 %v309, %v70
  %v311 = vadd.f32 %v310, %v71
  %v312 = vadd.f32 %v311, %v72
  %v313 = vadd.f32 %v312, %v73
  %v314 = vadd.f32 %v313, %v74
  %v315 = vadd.f32 %v314, %v75
  %v316 = vadd.f32 %v315, %v76
  %v317 = vadd.f32 %v316, %v77
  %v318 = vadd.f32 %v317, %v78
  %v319 = vadd.f32 %v318, %v79
  %v320 = vadd.f32 %v319, %v80
  %v321 = vadd.f32 %v320, %v81
  %v322 = vadd.f32 %v321, %v82
  %v323 = vadd.f32 %v322, %v83
  %v324 = vadd.f32 %v323, %v84
  %v325 = vadd.f32 %v324, %v85
  %v326 = vadd.f32 %v325, %v86
  %v327 = vadd.f32 %v326, %v87
  %v328 = vadd.f32 %v327, %v88
  %v329 = vadd.f32 %v328, %v89
  %v330 = vadd.f32 %v329, %v90
  %v331 = vadd.f32 %v330, %v91
  %v332 = vadd.f32 %v331, %v92
  %v333 = vadd.f32 %v332, %v93
  %v334 = vadd.f32 %v333, %v94
  %v335 = vadd.f32 %v334, %v95
  %v336 = vadd.f32 %v335, %v96
  %v337 = vadd.f32 %v336, %v97
  %v338 = vadd.f32 %v337, %v98
  %v339 = vadd.f32 %v338, %v99
  %v340 = vadd.f32 %v339, %v100
  %v341 = vadd.f32 %v340, %v101
  %v342 = vadd.f32 %v341, %v102
  %v343 = vadd.f32 %v342, %v103
  %v344 = vadd.f32 %v343, %v104
  %v345 = vadd.f32 %v344, %v105
  %v346 = vadd.f32 %v345, %v106
  %v347 = vadd.f32 %v346, %v107
  %v348 = vadd.f32 %v347, %v108
  %v349 = vadd.f32 %v348, %v109
  %v350 = vadd.f32 %v349, %v110
  %v351 = vadd.f32 %v350, %v111
  %v352 = vadd.f32 %v351, %v112
  %v353 = vadd.f32 %v352, %v113
  %v354 = vadd.f32 %v353, %v114
  %v355 = vadd.f32 %v354, %v115
  %v356 = vadd.f32 %v355, %v116
  %v357 = vadd.f32 %v356, %v117
  %v358 = vadd.f32 %v357, %v118
  %v359 = vadd.f32 %v358, %v119
  %v360 = vadd.f32 %v359, %v120
  %v361 = vadd.f32 %v360, %v121
  %v362 = vadd.f32 %v361, %v122
  %v363 = vadd.f32 %v362, %v123
  %v364 = vadd.f32 %v363, %v124
  %v365 = vadd.f32 %v364, %v125
  %v366 = vadd.f32 %v365, %v126
  %v367 = vadd.f32 %v366, %v127
  %v368 = vadd.f32 %v367, %v128
  %v369 = vadd.f32 %v368, %v129
  %v370 = vadd.f32 %v369, %v130
  %v371 = vadd.f32 %v370, %v131
  %v372 = vadd.f32 %v371, %v132
  %v373 = vadd.f32 %v372, %v133
  %v374 = vadd.f32 %v373, %v134
  %v375 = vadd.f32 %v374, %v135
  %v376 = vadd.f32 %v375, %v136
  %v377 = vadd.f32 %v376, %v137
  %v378 = vadd.f32 %v377, %v138
  %v379 = vadd.f32 %v378, %v139
  %v380 = vadd.f32 %v379, %v140
  %v381 = vadd.f32 %v380, %v141
  %v382 = vadd.f32 %v381, %v142
  %v383 = vadd.f32 %v382, %v143
  %v384 = vadd.f32 %v383, %v144
  %v385 = vadd.f32 %v384, %v145
  %v386 = vadd.f32 %v385, %v146
  %v387 = vadd.f32 %v386, %v147
  %v388 = vadd.f32 %v387, %v148
  %v389 = vadd.f32 %v388, %v149
  %v390 = vadd.f32 %v389, %v150
  %v391 = vadd.f32 %v390, %v151
  %v392 = vadd.f32 %v391, %v152
  %v393 = vadd.f32 %v392, %v153
  %v394 = vadd.f32 %v393, %v154
  %v395 = vadd.f32 %v394, %v155
  %v396 = vadd.f32 %v395, %v156
  %v397 = vadd.f32 %v396, %v157
  %v398 = vadd.f32 %v397, %v158
  %v399 = vadd.f32 %v398, %v159
  %v400 = vadd.f32 %v399, %v160
  %v401 = vadd.f32 %v400, %v161
  %v402 = vadd.f32 %v401, %v162
  %v403 = vadd.f32 %v402, %v163
  %v404 = vadd.f32 %v403, %v164
  %v405 = vadd.f32 %v404, %v165
  %v406 = vadd.f32 %v405, %v166
  %v407 = vadd.f32 %v406, %v167
  %v408 = vadd.f32 %v407, %v168
  %v409 = vadd.f32 %v408, %v169
  %v410 = vadd.f32 %v409, %v170
  %v411 = vadd.f32 %v410, %v171
  %v412 = vadd.f32 %v411, %v172
  %v413 = vadd.f32 %v412, %v173
  %v414 = vadd.f32 %v413, %v174
  %v415 = vadd.f32 %v414, %v175
  %v416 = vadd.f32 %v415, %v176
  %v417 = vadd.f32 %v416, %v177
  %v418 = vadd.f32 %v417, %v178
  %v419 = vadd.f32 %v418, %v179
  %v420 = vadd.f32 %v419, %v180
  %v421 = vadd.f32 %v420, %v181
  %v422 = vadd.f32 %v421, %v182
  %v423 = vadd.f32 %v422, %v183
  %v424 = vadd.f32 %v423, %v184
  %v425 = vadd.f32 %v424, %v185
  %v426 = vadd.f32 %v425, %v186
  %v427 = vadd.f32 %v426, %v187
  %v428 = vadd.f32 %v427, %v188
  %v429 = vadd.f32 %v428, %v189
  %v430 = vadd.f32 %v429, %v190
  %v431 = vadd.f32 %v430, %v191
  %v432 = vadd.f32 %v431, %v192
  %v433 = vadd.f32 %v432, %v193
  %v434 = vadd.f32 %v433, %v194
  %v435 = vadd.f32 %v434, %v195
  %v436 = vadd.f32 %v435, %v196
  %v437 = vadd.f32 %v436, %v197
  %v438 = vadd.f32 %v437, %v198
  %v439 = vadd.f32 %v438, %v199
  %v440 = vadd.f32 %v439, %v200
  %v441 = vadd.f32 %v440, %v201
  %v442 = vadd.f32 %v441, %v202
  %v443 = vadd.f32 %v442, %v203
  %v444 = vadd.f32 %v443, %v204
  %v445 = vadd.f32 %v444, %v205
  %v446 = vadd.f32 %v445, %v206
  %v447 = vadd.f32 %v446, %v207
  %v448 = vadd.f32 %v447, %v208
  %v449 = vadd.f32 %v448, %v209
  %v450 = vadd.f32 %v449, %v210
  %v451 = vadd.f32 %v450, %v211
  %v452 = vadd.f32 %v451, %v212
  %v453 = vadd.f32 %v452, %v213
  %v454 = vadd.f32 %v453, %v214
  %v455 = vadd.f32 %v454, %v215
  %v456 = vadd.f32 %v455, %v216
  %v457 = vadd.f32 %v456, %v217
  %v458 = vadd.f32 %v457, %v218
  %v459 = vadd.f32 %v458, %v219
  %v460 = vadd.f32 %v459, %v220
  %v461 = vadd.f32 %v460, %v221
  %v462 = vadd.f32 %v461, %v222
  %v463 = vadd.f32 %v462, %v223
  %v464 = vadd.f32 %v463, %v224
  %v465 = vadd.f32 %v464, %v225
  %v466 = vadd.f32 %v465, %v226
  %v467 = vadd.f32 %v466, %v227
  %v468 = vadd.f32 %v467, %v228
  %v469 = vadd.f32 %v468, %v229
  %v470 = vadd.f32 %v469, %v230
  %v471 = vadd.f32 %v470, %v231
  %v472 = vadd.f32 %v471, %v232
  %v473 = vadd.f32 %v472, %v233
  %v474 = vadd.f32 %v473, %v234
  %v475 = vadd.f32 %v474, %v235
  %v476 = vadd.f32 %v475, %v236
  %v477 = vadd.f32 %v476, %v237
  %v478 = vadd.f32 %v477, %v238
  %v479 = vadd.f32 %v478, %v239
  %v480 = vadd.f32 %v479, %v240
  %v481 = vadd.f32 %v480, %v241
  %v482 = vadd.f32 %v481, %v242
  %v483 = vadd.f32 %v482, %v243
  %v484 = vadd.f32 %v483, %v244
  %v485 = vadd.f32 %v484, %v245
  %v486 = vadd.f32 %v485, %v246
  %v487 = vadd.f32 %v486, %v247
  %v488 = vadd.f32 %v487, %v248
  %v489 = vadd.f32 %v488, %v249
  %v490 = vadd.f32 %v489, %v250
  %v491 = vadd.f32 %v490, %v251
  %v492 = vadd.f32 %v491, %v252
  %v493 = vadd.f32 %v492, %v253
  %vm494 = vcmask 1041408
  %v495 = vsel %vm494, %v254, 0.0
  %v496 = vadd.f32 %v493, %v495
  %v497 = vrot.slane %v496, 4
  %v498 = vadd.f32 %v496, %v497
  %v499 = vrot.slane %v498, 2
  %v500 = vadd.f32 %v498, %v499
  %v501 = vrot.slane %v500, 1
  %v502 = vadd.f32 %v500, %v501
  %v503 = vmul.f32 %v14, %v14
  %v504 = vmul.f32 %v15, %v15
  %v505 = vmul.f32 %v16, %v16
  %v506 = vmul.f32 %v17, %v17
  %v507 = vmul.f32 %v18, %v18
  %v508 = vmul.f32 %v19, %v19
  %v509 = vmul.f32 %v20, %v20
  %v510 = vmul.f32 %v21, %v21
  %v511 = vmul.f32 %v22, %v22
  %v512 = vmul.f32 %v23, %v23
  %v513 = vmul.f32 %v24, %v24
  %v514 = vmul.f32 %v25, %v25
  %v515 = vmul.f32 %v26, %v26
  %v516 = vmul.f32 %v27, %v27
  %v517 = vmul.f32 %v28, %v28
  %v518 = vmul.f32 %v29, %v29
  %v519 = vmul.f32 %v30, %v30
  %v520 = vmul.f32 %v31, %v31
  %v521 = vmul.f32 %v32, %v32
  %v522 = vmul.f32 %v33, %v33
  %v523 = vmul.f32 %v34, %v34
  %v524 = vmul.f32 %v35, %v35
  %v525 = vmul.f32 %v36, %v36
  %v526 = vmul.f32 %v37, %v37
  %v527 = vmul.f32 %v38, %v38
  %v528 = vmul.f32 %v39, %v39
  %v529 = vmul.f32 %v40, %v40
  %v530 = vmul.f32 %v41, %v41
  %v531 = vmul.f32 %v42, %v42
  %v532 = vmul.f32 %v43, %v43
  %v533 = vmul.f32 %v44, %v44
  %v534 = vmul.f32 %v45, %v45
  %v535 = vmul.f32 %v46, %v46
  %v536 = vmul.f32 %v47, %v47
  %v537 = vmul.f32 %v48, %v48
  %v538 = vmul.f32 %v49, %v49
  %v539 = vmul.f32 %v50, %v50
  %v540 = vmul.f32 %v51, %v51
  %v541 = vmul.f32 %v52, %v52
  %v542 = vmul.f32 %v53, %v53
  %v543 = vmul.f32 %v54, %v54
  %v544 = vmul.f32 %v55, %v55
  %v545 = vmul.f32 %v56, %v56
  %v546 = vmul.f32 %v57, %v57
  %v547 = vmul.f32 %v58, %v58
  %v548 = vmul.f32 %v59, %v59
  %v549 = vmul.f32 %v60, %v60
  %v550 = vmul.f32 %v61, %v61
  %v551 = vmul.f32 %v62, %v62
  %v552 = vmul.f32 %v63, %v63
  %v553 = vmul.f32 %v64, %v64
  %v554 = vmul.f32 %v65, %v65
  %v555 = vmul.f32 %v66, %v66
  %v556 = vmul.f32 %v67, %v67
  %v557 = vmul.f32 %v68, %v68
  %v558 = vmul.f32 %v69, %v69
  %v559 = vmul.f32 %v70, %v70
  %v560 = vmul.f32 %v71, %v71
  %v561 = vmul.f32 %v72, %v72
  %v562 = vmul.f32 %v73, %v73
  %v563 = vmul.f32 %v74, %v74
  %v564 = vmul.f32 %v75, %v75
  %v565 = vmul.f32 %v76, %v76
  %v566 = vmul.f32 %v77, %v77
  %v567 = vmul.f32 %v78, %v78
  %v568 = vmul.f32 %v79, %v79
  %v569 = vmul.f32 %v80, %v80
  %v570 = vmul.f32 %v81, %v81
  %v571 = vmul.f32 %v82, %v82
  %v572 = vmul.f32 %v83, %v83
  %v573 = vmul.f32 %v84, %v84
  %v574 = vmul.f32 %v85, %v85
  %v575 = vmul.f32 %v86, %v86
  %v576 = vmul.f32 %v87, %v87
  %v577 = vmul.f32 %v88, %v88
  %v578 = vmul.f32 %v89, %v89
  %v579 = vmul.f32 %v90, %v90
  %v580 = vmul.f32 %v91, %v91
  %v581 = vmul.f32 %v92, %v92
  %v582 = vmul.f32 %v93, %v93
  %v583 = vmul.f32 %v94, %v94
  %v584 = vmul.f32 %v95, %v95
  %v585 = vmul.f32 %v96, %v96
  %v586 = vmul.f32 %v97, %v97
  %v587 = vmul.f32 %v98, %v98
  %v588 = vmul.f32 %v99, %v99
  %v589 = vmul.f32 %v100, %v100
  %v590 = vmul.f32 %v101, %v101
  %v591 = vmul.f32 %v102, %v102
  %v592 = vmul.f32 %v103, %v103
  %v593 = vmul.f32 %v104, %v104
  %v594 = vmul.f32 %v105, %v105
  %v595 = vmul.f32 %v106, %v106
  %v596 = vmul.f32 %v107, %v107
  %v597 = vmul.f32 %v108, %v108
  %v598 = vmul.f32 %v109, %v109
  %v599 = vmul.f32 %v110, %v110
  %v600 = vmul.f32 %v111, %v111
  %v601 = vmul.f32 %v112, %v112
  %v602 = vmul.f32 %v113, %v113
  %v603 = vmul.f32 %v114, %v114
  %v604 = vmul.f32 %v115, %v115
  %v605 = vmul.f32 %v116, %v116
  %v606 = vmul.f32 %v117, %v117
  %v607 = vmul.f32 %v118, %v118
  %v608 = vmul.f32 %v119, %v119
  %v609 = vmul.f32 %v120, %v120
  %v610 = vmul.f32 %v121, %v121
  %v611 = vmul.f32 %v122, %v122
  %v612 = vmul.f32 %v123, %v123
  %v613 = vmul.f32 %v124, %v124
  %v614 = vmul.f32 %v125, %v125
  %v615 = vmul.f32 %v126, %v126
  %v616 = vmul.f32 %v127, %v127
  %v617 = vmul.f32 %v128, %v128
  %v618 = vmul.f32 %v129, %v129
  %v619 = vmul.f32 %v130, %v130
  %v620 = vmul.f32 %v131, %v131
  %v621 = vmul.f32 %v132, %v132
  %v622 = vmul.f32 %v133, %v133
  %v623 = vmul.f32 %v134, %v134
  %v624 = vmul.f32 %v135, %v135
  %v625 = vmul.f32 %v136, %v136
  %v626 = vmul.f32 %v137, %v137
  %v627 = vmul.f32 %v138, %v138
  %v628 = vmul.f32 %v139, %v139
  %v629 = vmul.f32 %v140, %v140
  %v630 = vmul.f32 %v141, %v141
  %v631 = vmul.f32 %v142, %v142
  %v632 = vmul.f32 %v143, %v143
  %v633 = vmul.f32 %v144, %v144
  %v634 = vmul.f32 %v145, %v145
  %v635 = vmul.f32 %v146, %v146
  %v636 = vmul.f32 %v147, %v147
  %v637 = vmul.f32 %v148, %v148
  %v638 = vmul.f32 %v149, %v149
  %v639 = vmul.f32 %v150, %v150
  %v640 = vmul.f32 %v151, %v151
  %v641 = vmul.f32 %v152, %v152
  %v642 = vmul.f32 %v153, %v153
  %v643 = vmul.f32 %v154, %v154
  %v644 = vmul.f32 %v155, %v155
  %v645 = vmul.f32 %v156, %v156
  %v646 = vmul.f32 %v157, %v157
  %v647 = vmul.f32 %v158, %v158
  %v648 = vmul.f32 %v159, %v159
  %v649 = vmul.f32 %v160, %v160
  %v650 = vmul.f32 %v161, %v161
  %v651 = vmul.f32 %v162, %v162
  %v652 = vmul.f32 %v163, %v163
  %v653 = vmul.f32 %v164, %v164
  %v654 = vmul.f32 %v165, %v165
  %v655 = vmul.f32 %v166, %v166
  %v656 = vmul.f32 %v167, %v167
  %v657 = vmul.f32 %v168, %v168
  %v658 = vmul.f32 %v169, %v169
  %v659 = vmul.f32 %v170, %v170
  %v660 = vmul.f32 %v171, %v171
  %v661 = vmul.f32 %v172, %v172
  %v662 = vmul.f32 %v173, %v173
  %v663 = vmul.f32 %v174, %v174
  %v664 = vmul.f32 %v175, %v175
  %v665 = vmul.f32 %v176, %v176
  %v666 = vmul.f32 %v177, %v177
  %v667 = vmul.f32 %v178, %v178
  %v668 = vmul.f32 %v179, %v179
  %v669 = vmul.f32 %v180, %v180
  %v670 = vmul.f32 %v181, %v181
  %v671 = vmul.f32 %v182, %v182
  %v672 = vmul.f32 %v183, %v183
  %v673 = vmul.f32 %v184, %v184
  %v674 = vmul.f32 %v185, %v185
  %v675 = vmul.f32 %v186, %v186
  %v676 = vmul.f32 %v187, %v187
  %v677 = vmul.f32 %v188, %v188
  %v678 = vmul.f32 %v189, %v189
  %v679 = vmul.f32 %v190, %v190
  %v680 = vmul.f32 %v191, %v191
  %v681 = vmul.f32 %v192, %v192
  %v682 = vmul.f32 %v193, %v193
  %v683 = vmul.f32 %v194, %v194
  %v684 = vmul.f32 %v195, %v195
  %v685 = vmul.f32 %v196, %v196
  %v686 = vmul.f32 %v197, %v197
  %v687 = vmul.f32 %v198, %v198
  %v688 = vmul.f32 %v199, %v199
  %v689 = vmul.f32 %v200, %v200
  %v690 = vmul.f32 %v201, %v201
  %v691 = vmul.f32 %v202, %v202
  %v692 = vmul.f32 %v203, %v203
  %v693 = vmul.f32 %v204, %v204
  %v694 = vmul.f32 %v205, %v205
  %v695 = vmul.f32 %v206, %v206
  %v696 = vmul.f32 %v207, %v207
  %v697 = vmul.f32 %v208, %v208
  %v698 = vmul.f32 %v209, %v209
  %v699 = vmul.f32 %v210, %v210
  %v700 = vmul.f32 %v211, %v211
  %v701 = vmul.f32 %v212, %v212
  %v702 = vmul.f32 %v213, %v213
  %v703 = vmul.f32 %v214, %v214
  %v704 = vmul.f32 %v215, %v215
  %v705 = vmul.f32 %v216, %v216
  %v706 = vmul.f32 %v217, %v217
  %v707 = vmul.f32 %v218, %v218
  %v708 = vmul.f32 %v219, %v219
  %v709 = vmul.f32 %v220, %v220
  %v710 = vmul.f32 %v221, %v221
  %v711 = vmul.f32 %v222, %v222
  %v712 = vmul.f32 %v223, %v223
  %v713 = vmul.f32 %v224, %v224
  %v714 = vmul.f32 %v225, %v225
  %v715 = vmul.f32 %v226, %v226
  %v716 = vmul.f32 %v227, %v227
  %v717 = vmul.f32 %v228, %v228
  %v718 = vmul.f32 %v229, %v229
  %v719 = vmul.f32 %v230, %v230
  %v720 = vmul.f32 %v231, %v231
  %v721 = vmul.f32 %v232, %v232
  %v722 = vmul.f32 %v233, %v233
  %v723 = vmul.f32 %v234, %v234
  %v724 = vmul.f32 %v235, %v235
  %v725 = vmul.f32 %v236, %v236
  %v726 = vmul.f32 %v237, %v237
  %v727 = vmul.f32 %v238, %v238
  %v728 = vmul.f32 %v239, %v239
  %v729 = vmul.f32 %v240, %v240
  %v730 = vmul.f32 %v241, %v241
  %v731 = vmul.f32 %v242, %v242
  %v732 = vmul.f32 %v243, %v243
  %v733 = vmul.f32 %v244, %v244
  %v734 = vmul.f32 %v245, %v245
  %v735 = vmul.f32 %v246, %v246
  %v736 = vmul.f32 %v247, %v247
  %v737 = vmul.f32 %v248, %v248
  %v738 = vmul.f32 %v249, %v249
  %v739 = vmul.f32 %v250, %v250
  %v740 = vmul.f32 %v251, %v251
  %v741 = vmul.f32 %v252, %v252
  %v742 = vmul.f32 %v253, %v253
  %v743 = vmul.f32 %v254, %v254
  %v744 = vadd.f32 %v503, %v504
  %v745 = vadd.f32 %v744, %v505
  %v746 = vadd.f32 %v745, %v506
  %v747 = vadd.f32 %v746, %v507
  %v748 = vadd.f32 %v747, %v508
  %v749 = vadd.f32 %v748, %v509
  %v750 = vadd.f32 %v749, %v510
  %v751 = vadd.f32 %v750, %v511
  %v752 = vadd.f32 %v751, %v512
  %v753 = vadd.f32 %v752, %v513
  %v754 = vadd.f32 %v753, %v514
  %v755 = vadd.f32 %v754, %v515
  %v756 = vadd.f32 %v755, %v516
  %v757 = vadd.f32 %v756, %v517
  %v758 = vadd.f32 %v757, %v518
  %v759 = vadd.f32 %v758, %v519
  %v760 = vadd.f32 %v759, %v520
  %v761 = vadd.f32 %v760, %v521
  %v762 = vadd.f32 %v761, %v522
  %v763 = vadd.f32 %v762, %v523
  %v764 = vadd.f32 %v763, %v524
  %v765 = vadd.f32 %v764, %v525
  %v766 = vadd.f32 %v765, %v526
  %v767 = vadd.f32 %v766, %v527
  %v768 = vadd.f32 %v767, %v528
  %v769 = vadd.f32 %v768, %v529
  %v770 = vadd.f32 %v769, %v530
  %v771 = vadd.f32 %v770, %v531
  %v772 = vadd.f32 %v771, %v532
  %v773 = vadd.f32 %v772, %v533
  %v774 = vadd.f32 %v773, %v534
  %v775 = vadd.f32 %v774, %v535
  %v776 = vadd.f32 %v775, %v536
  %v777 = vadd.f32 %v776, %v537
  %v778 = vadd.f32 %v777, %v538
  %v779 = vadd.f32 %v778, %v539
  %v780 = vadd.f32 %v779, %v540
  %v781 = vadd.f32 %v780, %v541
  %v782 = vadd.f32 %v781, %v542
  %v783 = vadd.f32 %v782, %v543
  %v784 = vadd.f32 %v783, %v544
  %v785 = vadd.f32 %v784, %v545
  %v786 = vadd.f32 %v785, %v546
  %v787 = vadd.f32 %v786, %v547
  %v788 = vadd.f32 %v787, %v548
  %v789 = vadd.f32 %v788, %v549
  %v790 = vadd.f32 %v789, %v550
  %v791 = vadd.f32 %v790, %v551
  %v792 = vadd.f32 %v791, %v552
  %v793 = vadd.f32 %v792, %v553
  %v794 = vadd.f32 %v793, %v554
  %v795 = vadd.f32 %v794, %v555
  %v796 = vadd.f32 %v795, %v556
  %v797 = vadd.f32 %v796, %v557
  %v798 = vadd.f32 %v797, %v558
  %v799 = vadd.f32 %v798, %v559
  %v800 = vadd.f32 %v799, %v560
  %v801 = vadd.f32 %v800, %v561
  %v802 = vadd.f32 %v801, %v562
  %v803 = vadd.f32 %v802, %v563
  %v804 = vadd.f32 %v803, %v564
  %v805 = vadd.f32 %v804, %v565
  %v806 = vadd.f32 %v805, %v566
  %v807 = vadd.f32 %v806, %v567
  %v808 = vadd.f32 %v807, %v568
  %v809 = vadd.f32 %v808, %v569
  %v810 = vadd.f32 %v809, %v570
  %v811 = vadd.f32 %v810, %v571
  %v812 = vadd.f32 %v811, %v572
  %v813 = vadd.f32 %v812, %v573
  %v814 = vadd.f32 %v813, %v574
  %v815 = vadd.f32 %v814, %v575
  %v816 = vadd.f32 %v815, %v576
  %v817 = vadd.f32 %v816, %v577
  %v818 = vadd.f32 %v817, %v578
  %v819 = vadd.f32 %v818, %v579
  %v820 = vadd.f32 %v819, %v580
  %v821 = vadd.f32 %v820, %v581
  %v822 = vadd.f32 %v821, %v582
  %v823 = vadd.f32 %v822, %v583
  %v824 = vadd.f32 %v823, %v584
  %v825 = vadd.f32 %v824, %v585
  %v826 = vadd.f32 %v825, %v586
  %v827 = vadd.f32 %v826, %v587
  %v828 = vadd.f32 %v827, %v588
  %v829 = vadd.f32 %v828, %v589
  %v830 = vadd.f32 %v829, %v590
  %v831 = vadd.f32 %v830, %v591
  %v832 = vadd.f32 %v831, %v592
  %v833 = vadd.f32 %v832, %v593
  %v834 = vadd.f32 %v833, %v594
  %v835 = vadd.f32 %v834, %v595
  %v836 = vadd.f32 %v835, %v596
  %v837 = vadd.f32 %v836, %v597
  %v838 = vadd.f32 %v837, %v598
  %v839 = vadd.f32 %v838, %v599
  %v840 = vadd.f32 %v839, %v600
  %v841 = vadd.f32 %v840, %v601
  %v842 = vadd.f32 %v841, %v602
  %v843 = vadd.f32 %v842, %v603
  %v844 = vadd.f32 %v843, %v604
  %v845 = vadd.f32 %v844, %v605
  %v846 = vadd.f32 %v845, %v606
  %v847 = vadd.f32 %v846, %v607
  %v848 = vadd.f32 %v847, %v608
  %v849 = vadd.f32 %v848, %v609
  %v850 = vadd.f32 %v849, %v610
  %v851 = vadd.f32 %v850, %v611
  %v852 = vadd.f32 %v851, %v612
  %v853 = vadd.f32 %v852, %v613
  %v854 = vadd.f32 %v853, %v614
  %v855 = vadd.f32 %v854, %v615
  %v856 = vadd.f32 %v855, %v616
  %v857 = vadd.f32 %v856, %v617
  %v858 = vadd.f32 %v857, %v618
  %v859 = vadd.f32 %v858, %v619
  %v860 = vadd.f32 %v859, %v620
  %v861 = vadd.f32 %v860, %v621
  %v862 = vadd.f32 %v861, %v622
  %v863 = vadd.f32 %v862, %v623
  %v864 = vadd.f32 %v863, %v624
  %v865 = vadd.f32 %v864, %v625
  %v866 = vadd.f32 %v865, %v626
  %v867 = vadd.f32 %v866, %v627
  %v868 = vadd.f32 %v867, %v628
  %v869 = vadd.f32 %v868, %v629
  %v870 = vadd.f32 %v869, %v630
  %v871 = vadd.f32 %v870, %v631
  %v872 = vadd.f32 %v871, %v632
  %v873 = vadd.f32 %v872, %v633
  %v874 = vadd.f32 %v873, %v634
  %v875 = vadd.f32 %v874, %v635
  %v876 = vadd.f32 %v875, %v636
  %v877 = vadd.f32 %v876, %v637
  %v878 = vadd.f32 %v877, %v638
  %v879 = vadd.f32 %v878, %v639
  %v880 = vadd.f32 %v879, %v640
  %v881 = vadd.f32 %v880, %v641
  %v882 = vadd.f32 %v881, %v642
  %v883 = vadd.f32 %v882, %v643
  %v884 = vadd.f32 %v883, %v644
  %v885 = vadd.f32 %v884, %v645
  %v886 = vadd.f32 %v885, %v646
  %v887 = vadd.f32 %v886, %v647
  %v888 = vadd.f32 %v887, %v648
  %v889 = vadd.f32 %v888, %v649
  %v890 = vadd.f32 %v889, %v650
  %v891 = vadd.f32 %v890, %v651
  %v892 = vadd.f32 %v891, %v652
  %v893 = vadd.f32 %v892, %v653
  %v894 = vadd.f32 %v893, %v654
  %v895 = vadd.f32 %v894, %v655
  %v896 = vadd.f32 %v895, %v656
  %v897 = vadd.f32 %v896, %v657
  %v898 = vadd.f32 %v897, %v658
  %v899 = vadd.f32 %v898, %v659
  %v900 = vadd.f32 %v899, %v660
  %v901 = vadd.f32 %v900, %v661
  %v902 = vadd.f32 %v901, %v662
  %v903 = vadd.f32 %v902, %v663
  %v904 = vadd.f32 %v903, %v664
  %v905 = vadd.f32 %v904, %v665
  %v906 = vadd.f32 %v905, %v666
  %v907 = vadd.f32 %v906, %v667
  %v908 = vadd.f32 %v907, %v668
  %v909 = vadd.f32 %v908, %v669
  %v910 = vadd.f32 %v909, %v670
  %v911 = vadd.f32 %v910, %v671
  %v912 = vadd.f32 %v911, %v672
  %v913 = vadd.f32 %v912, %v673
  %v914 = vadd.f32 %v913, %v674
  %v915 = vadd.f32 %v914, %v675
  %v916 = vadd.f32 %v915, %v676
  %v917 = vadd.f32 %v916, %v677
  %v918 = vadd.f32 %v917, %v678
  %v919 = vadd.f32 %v918, %v679
  %v920 = vadd.f32 %v919, %v680
  %v921 = vadd.f32 %v920, %v681
  %v922 = vadd.f32 %v921, %v682
  %v923 = vadd.f32 %v922, %v683
  %v924 = vadd.f32 %v923, %v684
  %v925 = vadd.f32 %v924, %v685
  %v926 = vadd.f32 %v925, %v686
  %v927 = vadd.f32 %v926, %v687
  %v928 = vadd.f32 %v927, %v688
  %v929 = vadd.f32 %v928, %v689
  %v930 = vadd.f32 %v929, %v690
  %v931 = vadd.f32 %v930, %v691
  %v932 = vadd.f32 %v931, %v692
  %v933 = vadd.f32 %v932, %v693
  %v934 = vadd.f32 %v933, %v694
  %v935 = vadd.f32 %v934, %v695
  %v936 = vadd.f32 %v935, %v696
  %v937 = vadd.f32 %v936, %v697
  %v938 = vadd.f32 %v937, %v698
  %v939 = vadd.f32 %v938, %v699
  %v940 = vadd.f32 %v939, %v700
  %v941 = vadd.f32 %v940, %v701
  %v942 = vadd.f32 %v941, %v702
  %v943 = vadd.f32 %v942, %v703
  %v944 = vadd.f32 %v943, %v704
  %v945 = vadd.f32 %v944, %v705
  %v946 = vadd.f32 %v945, %v706
  %v947 = vadd.f32 %v946, %v707
  %v948 = vadd.f32 %v947, %v708
  %v949 = vadd.f32 %v948, %v709
  %v950 = vadd.f32 %v949, %v710
  %v951 = vadd.f32 %v950, %v711
  %v952 = vadd.f32 %v951, %v712
  %v953 = vadd.f32 %v952, %v713
  %v954 = vadd.f32 %v953, %v714
  %v955 = vadd.f32 %v954, %v715
  %v956 = vadd.f32 %v955, %v716
  %v957 = vadd.f32 %v956, %v717
  %v958 = vadd.f32 %v957, %v718
  %v959 = vadd.f32 %v958, %v719
  %v960 = vadd.f32 %v959, %v720
  %v961 = vadd.f32 %v960, %v721
  %v962 = vadd.f32 %v961, %v722
  %v963 = vadd.f32 %v962, %v723
  %v964 = vadd.f32 %v963, %v724
  %v965 = vadd.f32 %v964, %v725
  %v966 = vadd.f32 %v965, %v726
  %v967 = vadd.f32 %v966, %v727
  %v968 = vadd.f32 %v967, %v728
  %v969 = vadd.f32 %v968, %v729
  %v970 = vadd.f32 %v969, %v730
  %v971 = vadd.f32 %v970, %v731
  %v972 = vadd.f32 %v971, %v732
  %v973 = vadd.f32 %v972, %v733
  %v974 = vadd.f32 %v973, %v734
  %v975 = vadd.f32 %v974, %v735
  %v976 = vadd.f32 %v975, %v736
  %v977 = vadd.f32 %v976, %v737
  %v978 = vadd.f32 %v977, %v738
  %v979 = vadd.f32 %v978, %v739
  %v980 = vadd.f32 %v979, %v740
  %v981 = vadd.f32 %v980, %v741
  %v982 = vadd.f32 %v981, %v742
  %v983 = vsel %vm494, %v743, 0.0
  %v984 = vadd.f32 %v982, %v983
  %v985 = vrot.slane %v984, 4
  %v986 = vadd.f32 %v984, %v985
  %v987 = vrot.slane %v986, 2
  %v988 = vadd.f32 %v986, %v987
  %v989 = vrot.slane %v988, 1
  %v990 = vadd.f32 %v988, %v989
  %v991 = vmul.f32 %v502, 0.0005202914
  %v992 = vmul.f32 %v990, 0.0005202914
  %v993 = vmul.f32 %v991, %v991
  %v994 = vsub.f32 %v992, %v993
  %v995 = vld [vmem:[%s1] sm:$0x1]
  %v996 = vadd.f32 %v994, 1e-05
  %v997 = vrsqrt.pop %v996
  %v998 = vmul.f32 %v995, %v997
  %v999 = vld [vmem:[%s2] sm:$0x1]
  %v1000 = vmul.f32 %v991, %v998
  %v1001 = vsub.f32 %v999, %v1000
  %v1003 = vlaneseq
  %v1004 = vshrl.u32 %v1003, 7
  %v1005 = vsub.s32 0, %v1004
  %v1006 = vrot.slane %v998, %v1005
  %v1008 = vmul.f32 %v14, %v1006
  %v1009 = vmul.f32 %v15, %v1006
  %v1010 = vmul.f32 %v16, %v1006
  %v1011 = vmul.f32 %v17, %v1006
  %v1012 = vmul.f32 %v18, %v1006
  %v1013 = vmul.f32 %v19, %v1006
  %v1014 = vmul.f32 %v20, %v1006
  %v1015 = vmul.f32 %v21, %v1006
  %v1016 = vmul.f32 %v22, %v1006
  %v1017 = vmul.f32 %v23, %v1006
  %v1018 = vmul.f32 %v24, %v1006
  %v1019 = vmul.f32 %v25, %v1006
  %v1020 = vmul.f32 %v26, %v1006
  %v1021 = vmul.f32 %v27, %v1006
  %v1022 = vmul.f32 %v28, %v1006
  %v1023 = vmul.f32 %v29, %v1006
  %v1024 = vmul.f32 %v30, %v1006
  %v1025 = vmul.f32 %v31, %v1006
  %v1026 = vmul.f32 %v32, %v1006
  %v1027 = vmul.f32 %v33, %v1006
  %v1028 = vmul.f32 %v34, %v1006
  %v1029 = vmul.f32 %v35, %v1006
  %v1030 = vmul.f32 %v36, %v1006
  %v1031 = vmul.f32 %v37, %v1006
  %v1032 = vmul.f32 %v38, %v1006
  %v1033 = vmul.f32 %v39, %v1006
  %v1034 = vmul.f32 %v40, %v1006
  %v1035 = vmul.f32 %v41, %v1006
  %v1036 = vmul.f32 %v42, %v1006
  %v1037 = vmul.f32 %v43, %v1006
  %v1038 = vmul.f32 %v44, %v1006
  %v1039 = vmul.f32 %v45, %v1006
  %v1040 = vmul.f32 %v46, %v1006
  %v1041 = vmul.f32 %v47, %v1006
  %v1042 = vmul.f32 %v48, %v1006
  %v1043 = vmul.f32 %v49, %v1006
  %v1044 = vmul.f32 %v50, %v1006
  %v1045 = vmul.f32 %v51, %v1006
  %v1046 = vmul.f32 %v52, %v1006
  %v1047 = vmul.f32 %v53, %v1006
  %v1048 = vmul.f32 %v54, %v1006
  %v1049 = vmul.f32 %v55, %v1006
  %v1050 = vmul.f32 %v56, %v1006
  %v1051 = vmul.f32 %v57, %v1006
  %v1052 = vmul.f32 %v58, %v1006
  %v1053 = vmul.f32 %v59, %v1006
  %v1054 = vmul.f32 %v60, %v1006
  %v1055 = vmul.f32 %v61, %v1006
  %v1056 = vmul.f32 %v62, %v1006
  %v1057 = vmul.f32 %v63, %v1006
  %v1058 = vmul.f32 %v64, %v1006
  %v1059 = vmul.f32 %v65, %v1006
  %v1060 = vmul.f32 %v66, %v1006
  %v1061 = vmul.f32 %v67, %v1006
  %v1062 = vmul.f32 %v68, %v1006
  %v1063 = vmul.f32 %v69, %v1006
  %v1064 = vmul.f32 %v70, %v1006
  %v1065 = vmul.f32 %v71, %v1006
  %v1066 = vmul.f32 %v72, %v1006
  %v1067 = vmul.f32 %v73, %v1006
  %v1068 = vmul.f32 %v74, %v1006
  %v1069 = vmul.f32 %v75, %v1006
  %v1070 = vmul.f32 %v76, %v1006
  %v1071 = vmul.f32 %v77, %v1006
  %v1072 = vmul.f32 %v78, %v1006
  %v1073 = vmul.f32 %v79, %v1006
  %v1074 = vmul.f32 %v80, %v1006
  %v1075 = vmul.f32 %v81, %v1006
  %v1076 = vmul.f32 %v82, %v1006
  %v1077 = vmul.f32 %v83, %v1006
  %v1078 = vmul.f32 %v84, %v1006
  %v1079 = vmul.f32 %v85, %v1006
  %v1080 = vmul.f32 %v86, %v1006
  %v1081 = vmul.f32 %v87, %v1006
  %v1082 = vmul.f32 %v88, %v1006
  %v1083 = vmul.f32 %v89, %v1006
  %v1084 = vmul.f32 %v90, %v1006
  %v1085 = vmul.f32 %v91, %v1006
  %v1086 = vmul.f32 %v92, %v1006
  %v1087 = vmul.f32 %v93, %v1006
  %v1088 = vmul.f32 %v94, %v1006
  %v1089 = vmul.f32 %v95, %v1006
  %v1090 = vmul.f32 %v96, %v1006
  %v1091 = vmul.f32 %v97, %v1006
  %v1092 = vmul.f32 %v98, %v1006
  %v1093 = vmul.f32 %v99, %v1006
  %v1094 = vmul.f32 %v100, %v1006
  %v1095 = vmul.f32 %v101, %v1006
  %v1096 = vmul.f32 %v102, %v1006
  %v1097 = vmul.f32 %v103, %v1006
  %v1098 = vmul.f32 %v104, %v1006
  %v1099 = vmul.f32 %v105, %v1006
  %v1100 = vmul.f32 %v106, %v1006
  %v1101 = vmul.f32 %v107, %v1006
  %v1102 = vmul.f32 %v108, %v1006
  %v1103 = vmul.f32 %v109, %v1006
  %v1104 = vmul.f32 %v110, %v1006
  %v1105 = vmul.f32 %v111, %v1006
  %v1106 = vmul.f32 %v112, %v1006
  %v1107 = vmul.f32 %v113, %v1006
  %v1108 = vmul.f32 %v114, %v1006
  %v1109 = vmul.f32 %v115, %v1006
  %v1110 = vmul.f32 %v116, %v1006
  %v1111 = vmul.f32 %v117, %v1006
  %v1112 = vmul.f32 %v118, %v1006
  %v1113 = vmul.f32 %v119, %v1006
  %v1114 = vmul.f32 %v120, %v1006
  %v1115 = vmul.f32 %v121, %v1006
  %v1116 = vmul.f32 %v122, %v1006
  %v1117 = vmul.f32 %v123, %v1006
  %v1118 = vmul.f32 %v124, %v1006
  %v1119 = vmul.f32 %v125, %v1006
  %v1120 = vmul.f32 %v126, %v1006
  %v1121 = vmul.f32 %v127, %v1006
  %v1122 = vmul.f32 %v128, %v1006
  %v1123 = vmul.f32 %v129, %v1006
  %v1124 = vmul.f32 %v130, %v1006
  %v1125 = vmul.f32 %v131, %v1006
  %v1126 = vmul.f32 %v132, %v1006
  %v1127 = vmul.f32 %v133, %v1006
  %v1128 = vmul.f32 %v134, %v1006
  %v1129 = vmul.f32 %v135, %v1006
  %v1130 = vmul.f32 %v136, %v1006
  %v1131 = vmul.f32 %v137, %v1006
  %v1132 = vmul.f32 %v138, %v1006
  %v1133 = vmul.f32 %v139, %v1006
  %v1134 = vmul.f32 %v140, %v1006
  %v1135 = vmul.f32 %v141, %v1006
  %v1136 = vmul.f32 %v142, %v1006
  %v1137 = vmul.f32 %v143, %v1006
  %v1138 = vmul.f32 %v144, %v1006
  %v1139 = vmul.f32 %v145, %v1006
  %v1140 = vmul.f32 %v146, %v1006
  %v1141 = vmul.f32 %v147, %v1006
  %v1142 = vmul.f32 %v148, %v1006
  %v1143 = vmul.f32 %v149, %v1006
  %v1144 = vmul.f32 %v150, %v1006
  %v1145 = vmul.f32 %v151, %v1006
  %v1146 = vmul.f32 %v152, %v1006
  %v1147 = vmul.f32 %v153, %v1006
  %v1148 = vmul.f32 %v154, %v1006
  %v1149 = vmul.f32 %v155, %v1006
  %v1150 = vmul.f32 %v156, %v1006
  %v1151 = vmul.f32 %v157, %v1006
  %v1152 = vmul.f32 %v158, %v1006
  %v1153 = vmul.f32 %v159, %v1006
  %v1154 = vmul.f32 %v160, %v1006
  %v1155 = vmul.f32 %v161, %v1006
  %v1156 = vmul.f32 %v162, %v1006
  %v1157 = vmul.f32 %v163, %v1006
  %v1158 = vmul.f32 %v164, %v1006
  %v1159 = vmul.f32 %v165, %v1006
  %v1160 = vmul.f32 %v166, %v1006
  %v1161 = vmul.f32 %v167, %v1006
  %v1162 = vmul.f32 %v168, %v1006
  %v1163 = vmul.f32 %v169, %v1006
  %v1164 = vmul.f32 %v170, %v1006
  %v1165 = vmul.f32 %v171, %v1006
  %v1166 = vmul.f32 %v172, %v1006
  %v1167 = vmul.f32 %v173, %v1006
  %v1168 = vmul.f32 %v174, %v1006
  %v1169 = vmul.f32 %v175, %v1006
  %v1170 = vmul.f32 %v176, %v1006
  %v1171 = vmul.f32 %v177, %v1006
  %v1172 = vmul.f32 %v178, %v1006
  %v1173 = vmul.f32 %v179, %v1006
  %v1174 = vmul.f32 %v180, %v1006
  %v1175 = vmul.f32 %v181, %v1006
  %v1176 = vmul.f32 %v182, %v1006
  %v1177 = vmul.f32 %v183, %v1006
  %v1178 = vmul.f32 %v184, %v1006
  %v1179 = vmul.f32 %v185, %v1006
  %v1180 = vmul.f32 %v186, %v1006
  %v1181 = vmul.f32 %v187, %v1006
  %v1182 = vmul.f32 %v188, %v1006
  %v1183 = vmul.f32 %v189, %v1006
  %v1184 = vmul.f32 %v190, %v1006
  %v1185 = vmul.f32 %v191, %v1006
  %v1186 = vmul.f32 %v192, %v1006
  %v1187 = vmul.f32 %v193, %v1006
  %v1188 = vmul.f32 %v194, %v1006
  %v1189 = vmul.f32 %v195, %v1006
  %v1190 = vmul.f32 %v196, %v1006
  %v1191 = vmul.f32 %v197, %v1006
  %v1192 = vmul.f32 %v198, %v1006
  %v1193 = vmul.f32 %v199, %v1006
  %v1194 = vmul.f32 %v200, %v1006
  %v1195 = vmul.f32 %v201, %v1006
  %v1196 = vmul.f32 %v202, %v1006
  %v1197 = vmul.f32 %v203, %v1006
  %v1198 = vmul.f32 %v204, %v1006
  %v1199 = vmul.f32 %v205, %v1006
  %v1200 = vmul.f32 %v206, %v1006
  %v1201 = vmul.f32 %v207, %v1006
  %v1202 = vmul.f32 %v208, %v1006
  %v1203 = vmul.f32 %v209, %v1006
  %v1204 = vmul.f32 %v210, %v1006
  %v1205 = vmul.f32 %v211, %v1006
  %v1206 = vmul.f32 %v212, %v1006
  %v1207 = vmul.f32 %v213, %v1006
  %v1208 = vmul.f32 %v214, %v1006
  %v1209 = vmul.f32 %v215, %v1006
  %v1210 = vmul.f32 %v216, %v1006
  %v1211 = vmul.f32 %v217, %v1006
  %v1212 = vmul.f32 %v218, %v1006
  %v1213 = vmul.f32 %v219, %v1006
  %v1214 = vmul.f32 %v220, %v1006
  %v1215 = vmul.f32 %v221, %v1006
  %v1216 = vmul.f32 %v222, %v1006
  %v1217 = vmul.f32 %v223, %v1006
  %v1218 = vmul.f32 %v224, %v1006
  %v1219 = vmul.f32 %v225, %v1006
  %v1220 = vmul.f32 %v226, %v1006
  %v1221 = vmul.f32 %v227, %v1006
  %v1222 = vmul.f32 %v228, %v1006
  %v1223 = vmul.f32 %v229, %v1006
  %v1224 = vmul.f32 %v230, %v1006
  %v1225 = vmul.f32 %v231, %v1006
  %v1226 = vmul.f32 %v232, %v1006
  %v1227 = vmul.f32 %v233, %v1006
  %v1228 = vmul.f32 %v234, %v1006
  %v1229 = vmul.f32 %v235, %v1006
  %v1230 = vmul.f32 %v236, %v1006
  %v1231 = vmul.f32 %v237, %v1006
  %v1232 = vmul.f32 %v238, %v1006
  %v1233 = vmul.f32 %v239, %v1006
  %v1234 = vmul.f32 %v240, %v1006
  %v1235 = vmul.f32 %v241, %v1006
  %v1236 = vmul.f32 %v242, %v1006
  %v1237 = vmul.f32 %v243, %v1006
  %v1238 = vmul.f32 %v244, %v1006
  %v1239 = vmul.f32 %v245, %v1006
  %v1240 = vmul.f32 %v246, %v1006
  %v1241 = vmul.f32 %v247, %v1006
  %v1242 = vmul.f32 %v248, %v1006
  %v1243 = vmul.f32 %v249, %v1006
  %v1244 = vmul.f32 %v250, %v1006
  %v1245 = vmul.f32 %v251, %v1006
  %v1246 = vmul.f32 %v252, %v1006
  %v1247 = vmul.f32 %v253, %v1006
  %v1248 = vmul.f32 %v254, %v1006
  %v1250 = vlaneseq
  %v1251 = vshrl.u32 %v1250, 7
  %v1252 = vsub.s32 0, %v1251
  %v1253 = vrot.slane %v1001, %v1252
  %v1255 = vadd.f32 %v1008, %v1253
  %v1256 = vadd.f32 %v1009, %v1253
  %v1257 = vadd.f32 %v1010, %v1253
  %v1258 = vadd.f32 %v1011, %v1253
  %v1259 = vadd.f32 %v1012, %v1253
  %v1260 = vadd.f32 %v1013, %v1253
  %v1261 = vadd.f32 %v1014, %v1253
  %v1262 = vadd.f32 %v1015, %v1253
  %v1263 = vadd.f32 %v1016, %v1253
  %v1264 = vadd.f32 %v1017, %v1253
  %v1265 = vadd.f32 %v1018, %v1253
  %v1266 = vadd.f32 %v1019, %v1253
  %v1267 = vadd.f32 %v1020, %v1253
  %v1268 = vadd.f32 %v1021, %v1253
  %v1269 = vadd.f32 %v1022, %v1253
  %v1270 = vadd.f32 %v1023, %v1253
  %v1271 = vadd.f32 %v1024, %v1253
  %v1272 = vadd.f32 %v1025, %v1253
  %v1273 = vadd.f32 %v1026, %v1253
  %v1274 = vadd.f32 %v1027, %v1253
  %v1275 = vadd.f32 %v1028, %v1253
  %v1276 = vadd.f32 %v1029, %v1253
  %v1277 = vadd.f32 %v1030, %v1253
  %v1278 = vadd.f32 %v1031, %v1253
  %v1279 = vadd.f32 %v1032, %v1253
  %v1280 = vadd.f32 %v1033, %v1253
  %v1281 = vadd.f32 %v1034, %v1253
  %v1282 = vadd.f32 %v1035, %v1253
  %v1283 = vadd.f32 %v1036, %v1253
  %v1284 = vadd.f32 %v1037, %v1253
  %v1285 = vadd.f32 %v1038, %v1253
  %v1286 = vadd.f32 %v1039, %v1253
  %v1287 = vadd.f32 %v1040, %v1253
  %v1288 = vadd.f32 %v1041, %v1253
  %v1289 = vadd.f32 %v1042, %v1253
  %v1290 = vadd.f32 %v1043, %v1253
  %v1291 = vadd.f32 %v1044, %v1253
  %v1292 = vadd.f32 %v1045, %v1253
  %v1293 = vadd.f32 %v1046, %v1253
  %v1294 = vadd.f32 %v1047, %v1253
  %v1295 = vadd.f32 %v1048, %v1253
  %v1296 = vadd.f32 %v1049, %v1253
  %v1297 = vadd.f32 %v1050, %v1253
  %v1298 = vadd.f32 %v1051, %v1253
  %v1299 = vadd.f32 %v1052, %v1253
  %v1300 = vadd.f32 %v1053, %v1253
  %v1301 = vadd.f32 %v1054, %v1253
  %v1302 = vadd.f32 %v1055, %v1253
  %v1303 = vadd.f32 %v1056, %v1253
  %v1304 = vadd.f32 %v1057, %v1253
  %v1305 = vadd.f32 %v1058, %v1253
  %v1306 = vadd.f32 %v1059, %v1253
  %v1307 = vadd.f32 %v1060, %v1253
  %v1308 = vadd.f32 %v1061, %v1253
  %v1309 = vadd.f32 %v1062, %v1253
  %v1310 = vadd.f32 %v1063, %v1253
  %v1311 = vadd.f32 %v1064, %v1253
  %v1312 = vadd.f32 %v1065, %v1253
  %v1313 = vadd.f32 %v1066, %v1253
  %v1314 = vadd.f32 %v1067, %v1253
  %v1315 = vadd.f32 %v1068, %v1253
  %v1316 = vadd.f32 %v1069, %v1253
  %v1317 = vadd.f32 %v1070, %v1253
  %v1318 = vadd.f32 %v1071, %v1253
  %v1319 = vadd.f32 %v1072, %v1253
  %v1320 = vadd.f32 %v1073, %v1253
  %v1321 = vadd.f32 %v1074, %v1253
  %v1322 = vadd.f32 %v1075, %v1253
  %v1323 = vadd.f32 %v1076, %v1253
  %v1324 = vadd.f32 %v1077, %v1253
  %v1325 = vadd.f32 %v1078, %v1253
  %v1326 = vadd.f32 %v1079, %v1253
  %v1327 = vadd.f32 %v1080, %v1253
  %v1328 = vadd.f32 %v1081, %v1253
  %v1329 = vadd.f32 %v1082, %v1253
  %v1330 = vadd.f32 %v1083, %v1253
  %v1331 = vadd.f32 %v1084, %v1253
  %v1332 = vadd.f32 %v1085, %v1253
  %v1333 = vadd.f32 %v1086, %v1253
  %v1334 = vadd.f32 %v1087, %v1253
  %v1335 = vadd.f32 %v1088, %v1253
  %v1336 = vadd.f32 %v1089, %v1253
  %v1337 = vadd.f32 %v1090, %v1253
  %v1338 = vadd.f32 %v1091, %v1253
  %v1339 = vadd.f32 %v1092, %v1253
  %v1340 = vadd.f32 %v1093, %v1253
  %v1341 = vadd.f32 %v1094, %v1253
  %v1342 = vadd.f32 %v1095, %v1253
  %v1343 = vadd.f32 %v1096, %v1253
  %v1344 = vadd.f32 %v1097, %v1253
  %v1345 = vadd.f32 %v1098, %v1253
  %v1346 = vadd.f32 %v1099, %v1253
  %v1347 = vadd.f32 %v1100, %v1253
  %v1348 = vadd.f32 %v1101, %v1253
  %v1349 = vadd.f32 %v1102, %v1253
  %v1350 = vadd.f32 %v1103, %v1253
  %v1351 = vadd.f32 %v1104, %v1253
  %v1352 = vadd.f32 %v1105, %v1253
  %v1353 = vadd.f32 %v1106, %v1253
  %v1354 = vadd.f32 %v1107, %v1253
  %v1355 = vadd.f32 %v1108, %v1253
  %v1356 = vadd.f32 %v1109, %v1253
  %v1357 = vadd.f32 %v1110, %v1253
  %v1358 = vadd.f32 %v1111, %v1253
  %v1359 = vadd.f32 %v1112, %v1253
  %v1360 = vadd.f32 %v1113, %v1253
  %v1361 = vadd.f32 %v1114, %v1253
  %v1362 = vadd.f32 %v1115, %v1253
  %v1363 = vadd.f32 %v1116, %v1253
  %v1364 = vadd.f32 %v1117, %v1253
  %v1365 = vadd.f32 %v1118, %v1253
  %v1366 = vadd.f32 %v1119, %v1253
  %v1367 = vadd.f32 %v1120, %v1253
  %v1368 = vadd.f32 %v1121, %v1253
  %v1369 = vadd.f32 %v1122, %v1253
  %v1370 = vadd.f32 %v1123, %v1253
  %v1371 = vadd.f32 %v1124, %v1253
  %v1372 = vadd.f32 %v1125, %v1253
  %v1373 = vadd.f32 %v1126, %v1253
  %v1374 = vadd.f32 %v1127, %v1253
  %v1375 = vadd.f32 %v1128, %v1253
  %v1376 = vadd.f32 %v1129, %v1253
  %v1377 = vadd.f32 %v1130, %v1253
  %v1378 = vadd.f32 %v1131, %v1253
  %v1379 = vadd.f32 %v1132, %v1253
  %v1380 = vadd.f32 %v1133, %v1253
  %v1381 = vadd.f32 %v1134, %v1253
  %v1382 = vadd.f32 %v1135, %v1253
  %v1383 = vadd.f32 %v1136, %v1253
  %v1384 = vadd.f32 %v1137, %v1253
  %v1385 = vadd.f32 %v1138, %v1253
  %v1386 = vadd.f32 %v1139, %v1253
  %v1387 = vadd.f32 %v1140, %v1253
  %v1388 = vadd.f32 %v1141, %v1253
  %v1389 = vadd.f32 %v1142, %v1253
  %v1390 = vadd.f32 %v1143, %v1253
  %v1391 = vadd.f32 %v1144, %v1253
  %v1392 = vadd.f32 %v1145, %v1253
  %v1393 = vadd.f32 %v1146, %v1253
  %v1394 = vadd.f32 %v1147, %v1253
  %v1395 = vadd.f32 %v1148, %v1253
  %v1396 = vadd.f32 %v1149, %v1253
  %v1397 = vadd.f32 %v1150, %v1253
  %v1398 = vadd.f32 %v1151, %v1253
  %v1399 = vadd.f32 %v1152, %v1253
  %v1400 = vadd.f32 %v1153, %v1253
  %v1401 = vadd.f32 %v1154, %v1253
  %v1402 = vadd.f32 %v1155, %v1253
  %v1403 = vadd.f32 %v1156, %v1253
  %v1404 = vadd.f32 %v1157, %v1253
  %v1405 = vadd.f32 %v1158, %v1253
  %v1406 = vadd.f32 %v1159, %v1253
  %v1407 = vadd.f32 %v1160, %v1253
  %v1408 = vadd.f32 %v1161, %v1253
  %v1409 = vadd.f32 %v1162, %v1253
  %v1410 = vadd.f32 %v1163, %v1253
  %v1411 = vadd.f32 %v1164, %v1253
  %v1412 = vadd.f32 %v1165, %v1253
  %v1413 = vadd.f32 %v1166, %v1253
  %v1414 = vadd.f32 %v1167, %v1253
  %v1415 = vadd.f32 %v1168, %v1253
  %v1416 = vadd.f32 %v1169, %v1253
  %v1417 = vadd.f32 %v1170, %v1253
  %v1418 = vadd.f32 %v1171, %v1253
  %v1419 = vadd.f32 %v1172, %v1253
  %v1420 = vadd.f32 %v1173, %v1253
  %v1421 = vadd.f32 %v1174, %v1253
  %v1422 = vadd.f32 %v1175, %v1253
  %v1423 = vadd.f32 %v1176, %v1253
  %v1424 = vadd.f32 %v1177, %v1253
  %v1425 = vadd.f32 %v1178, %v1253
  %v1426 = vadd.f32 %v1179, %v1253
  %v1427 = vadd.f32 %v1180, %v1253
  %v1428 = vadd.f32 %v1181, %v1253
  %v1429 = vadd.f32 %v1182, %v1253
  %v1430 = vadd.f32 %v1183, %v1253
  %v1431 = vadd.f32 %v1184, %v1253
  %v1432 = vadd.f32 %v1185, %v1253
  %v1433 = vadd.f32 %v1186, %v1253
  %v1434 = vadd.f32 %v1187, %v1253
  %v1435 = vadd.f32 %v1188, %v1253
  %v1436 = vadd.f32 %v1189, %v1253
  %v1437 = vadd.f32 %v1190, %v1253
  %v1438 = vadd.f32 %v1191, %v1253
  %v1439 = vadd.f32 %v1192, %v1253
  %v1440 = vadd.f32 %v1193, %v1253
  %v1441 = vadd.f32 %v1194, %v1253
  %v1442 = vadd.f32 %v1195, %v1253
  %v1443 = vadd.f32 %v1196, %v1253
  %v1444 = vadd.f32 %v1197, %v1253
  %v1445 = vadd.f32 %v1198, %v1253
  %v1446 = vadd.f32 %v1199, %v1253
  %v1447 = vadd.f32 %v1200, %v1253
  %v1448 = vadd.f32 %v1201, %v1253
  %v1449 = vadd.f32 %v1202, %v1253
  %v1450 = vadd.f32 %v1203, %v1253
  %v1451 = vadd.f32 %v1204, %v1253
  %v1452 = vadd.f32 %v1205, %v1253
  %v1453 = vadd.f32 %v1206, %v1253
  %v1454 = vadd.f32 %v1207, %v1253
  %v1455 = vadd.f32 %v1208, %v1253
  %v1456 = vadd.f32 %v1209, %v1253
  %v1457 = vadd.f32 %v1210, %v1253
  %v1458 = vadd.f32 %v1211, %v1253
  %v1459 = vadd.f32 %v1212, %v1253
  %v1460 = vadd.f32 %v1213, %v1253
  %v1461 = vadd.f32 %v1214, %v1253
  %v1462 = vadd.f32 %v1215, %v1253
  %v1463 = vadd.f32 %v1216, %v1253
  %v1464 = vadd.f32 %v1217, %v1253
  %v1465 = vadd.f32 %v1218, %v1253
  %v1466 = vadd.f32 %v1219, %v1253
  %v1467 = vadd.f32 %v1220, %v1253
  %v1468 = vadd.f32 %v1221, %v1253
  %v1469 = vadd.f32 %v1222, %v1253
  %v1470 = vadd.f32 %v1223, %v1253
  %v1471 = vadd.f32 %v1224, %v1253
  %v1472 = vadd.f32 %v1225, %v1253
  %v1473 = vadd.f32 %v1226, %v1253
  %v1474 = vadd.f32 %v1227, %v1253
  %v1475 = vadd.f32 %v1228, %v1253
  %v1476 = vadd.f32 %v1229, %v1253
  %v1477 = vadd.f32 %v1230, %v1253
  %v1478 = vadd.f32 %v1231, %v1253
  %v1479 = vadd.f32 %v1232, %v1253
  %v1480 = vadd.f32 %v1233, %v1253
  %v1481 = vadd.f32 %v1234, %v1253
  %v1482 = vadd.f32 %v1235, %v1253
  %v1483 = vadd.f32 %v1236, %v1253
  %v1484 = vadd.f32 %v1237, %v1253
  %v1485 = vadd.f32 %v1238, %v1253
  %v1486 = vadd.f32 %v1239, %v1253
  %v1487 = vadd.f32 %v1240, %v1253
  %v1488 = vadd.f32 %v1241, %v1253
  %v1489 = vadd.f32 %v1242, %v1253
  %v1490 = vadd.f32 %v1243, %v1253
  %v1491 = vadd.f32 %v1244, %v1253
  %v1492 = vadd.f32 %v1245, %v1253
  %v1493 = vadd.f32 %v1246, %v1253
  %v1494 = vadd.f32 %v1247, %v1253
  %v1495 = vadd.f32 %v1248, %v1253
  %1496 = vst [vmem:[%s3] sm:$0xff] %v1255
  %1497 = vst [vmem:[%s3 + $0x8] sm:$0xff] %v1256
  %1498 = vst [vmem:[%s3 + $0x10] sm:$0xff] %v1257
  %1499 = vst [vmem:[%s3 + $0x18] sm:$0xff] %v1258
  %1500 = vst [vmem:[%s3 + $0x20] sm:$0xff] %v1259
  %1501 = vst [vmem:[%s3 + $0x28] sm:$0xff] %v1260
  %1502 = vst [vmem:[%s3 + $0x30] sm:$0xff] %v1261
  %1503 = vst [vmem:[%s3 + $0x38] sm:$0xff] %v1262
  %1504 = vst [vmem:[%s3 + $0x40] sm:$0xff] %v1263
  %1505 = vst [vmem:[%s3 + $0x48] sm:$0xff] %v1264
  %1506 = vst [vmem:[%s3 + $0x50] sm:$0xff] %v1265
  %1507 = vst [vmem:[%s3 + $0x58] sm:$0xff] %v1266
  %1508 = vst [vmem:[%s3 + $0x60] sm:$0xff] %v1267
  %1509 = vst [vmem:[%s3 + $0x68] sm:$0xff] %v1268
  %1510 = vst [vmem:[%s3 + $0x70] sm:$0xff] %v1269
  %1511 = vst [vmem:[%s3 + $0x78] sm:$0xff] %v1270
  %1512 = vst [vmem:[%s3 + $0x80] sm:$0xff] %v1271
  %1513 = vst [vmem:[%s3 + $0x88] sm:$0xff] %v1272
  %1514 = vst [vmem:[%s3 + $0x90] sm:$0xff] %v1273
  %1515 = vst [vmem:[%s3 + $0x98] sm:$0xff] %v1274
  %1516 = vst [vmem:[%s3 + $0xa0] sm:$0xff] %v1275
  %1517 = vst [vmem:[%s3 + $0xa8] sm:$0xff] %v1276
  %1518 = vst [vmem:[%s3 + $0xb0] sm:$0xff] %v1277
  %1519 = vst [vmem:[%s3 + $0xb8] sm:$0xff] %v1278
  %1520 = vst [vmem:[%s3 + $0xc0] sm:$0xff] %v1279
  %1521 = vst [vmem:[%s3 + $0xc8] sm:$0xff] %v1280
  %1522 = vst [vmem:[%s3 + $0xd0] sm:$0xff] %v1281
  %1523 = vst [vmem:[%s3 + $0xd8] sm:$0xff] %v1282
  %1524 = vst [vmem:[%s3 + $0xe0] sm:$0xff] %v1283
  %1525 = vst [vmem:[%s3 + $0xe8] sm:$0xff] %v1284
  %1526 = vst [vmem:[%s3 + $0xf0] sm:$0xff] %v1285
  %1527 = vst [vmem:[%s3 + $0xf8] sm:$0xff] %v1286
  %1528 = vst [vmem:[%s3 + $0x100] sm:$0xff] %v1287
  %1529 = vst [vmem:[%s3 + $0x108] sm:$0xff] %v1288
  %1530 = vst [vmem:[%s3 + $0x110] sm:$0xff] %v1289
  %1531 = vst [vmem:[%s3 + $0x118] sm:$0xff] %v1290
  %1532 = vst [vmem:[%s3 + $0x120] sm:$0xff] %v1291
  %1533 = vst [vmem:[%s3 + $0x128] sm:$0xff] %v1292
  %1534 = vst [vmem:[%s3 + $0x130] sm:$0xff] %v1293
  %1535 = vst [vmem:[%s3 + $0x138] sm:$0xff] %v1294
  %1536 = vst [vmem:[%s3 + $0x140] sm:$0xff] %v1295
  %1537 = vst [vmem:[%s3 + $0x148] sm:$0xff] %v1296
  %1538 = vst [vmem:[%s3 + $0x150] sm:$0xff] %v1297
  %1539 = vst [vmem:[%s3 + $0x158] sm:$0xff] %v1298
  %1540 = vst [vmem:[%s3 + $0x160] sm:$0xff] %v1299
  %1541 = vst [vmem:[%s3 + $0x168] sm:$0xff] %v1300
  %1542 = vst [vmem:[%s3 + $0x170] sm:$0xff] %v1301
  %1543 = vst [vmem:[%s3 + $0x178] sm:$0xff] %v1302
  %1544 = vst [vmem:[%s3 + $0x180] sm:$0xff] %v1303
  %1545 = vst [vmem:[%s3 + $0x188] sm:$0xff] %v1304
  %1546 = vst [vmem:[%s3 + $0x190] sm:$0xff] %v1305
  %1547 = vst [vmem:[%s3 + $0x198] sm:$0xff] %v1306
  %1548 = vst [vmem:[%s3 + $0x1a0] sm:$0xff] %v1307
  %1549 = vst [vmem:[%s3 + $0x1a8] sm:$0xff] %v1308
  %1550 = vst [vmem:[%s3 + $0x1b0] sm:$0xff] %v1309
  %1551 = vst [vmem:[%s3 + $0x1b8] sm:$0xff] %v1310
  %1552 = vst [vmem:[%s3 + $0x1c0] sm:$0xff] %v1311
  %1553 = vst [vmem:[%s3 + $0x1c8] sm:$0xff] %v1312
  %1554 = vst [vmem:[%s3 + $0x1d0] sm:$0xff] %v1313
  %1555 = vst [vmem:[%s3 + $0x1d8] sm:$0xff] %v1314
  %1556 = vst [vmem:[%s3 + $0x1e0] sm:$0xff] %v1315
  %1557 = vst [vmem:[%s3 + $0x1e8] sm:$0xff] %v1316
  %1558 = vst [vmem:[%s3 + $0x1f0] sm:$0xff] %v1317
  %1559 = vst [vmem:[%s3 + $0x1f8] sm:$0xff] %v1318
  %1560 = vst [vmem:[%s3 + $0x200] sm:$0xff] %v1319
  %1561 = vst [vmem:[%s3 + $0x208] sm:$0xff] %v1320
  %1562 = vst [vmem:[%s3 + $0x210] sm:$0xff] %v1321
  %1563 = vst [vmem:[%s3 + $0x218] sm:$0xff] %v1322
  %1564 = vst [vmem:[%s3 + $0x220] sm:$0xff] %v1323
  %1565 = vst [vmem:[%s3 + $0x228] sm:$0xff] %v1324
  %1566 = vst [vmem:[%s3 + $0x230] sm:$0xff] %v1325
  %1567 = vst [vmem:[%s3 + $0x238] sm:$0xff] %v1326
  %1568 = vst [vmem:[%s3 + $0x240] sm:$0xff] %v1327
  %1569 = vst [vmem:[%s3 + $0x248] sm:$0xff] %v1328
  %1570 = vst [vmem:[%s3 + $0x250] sm:$0xff] %v1329
  %1571 = vst [vmem:[%s3 + $0x258] sm:$0xff] %v1330
  %1572 = vst [vmem:[%s3 + $0x260] sm:$0xff] %v1331
  %1573 = vst [vmem:[%s3 + $0x268] sm:$0xff] %v1332
  %1574 = vst [vmem:[%s3 + $0x270] sm:$0xff] %v1333
  %1575 = vst [vmem:[%s3 + $0x278] sm:$0xff] %v1334
  %1576 = vst [vmem:[%s3 + $0x280] sm:$0xff] %v1335
  %1577 = vst [vmem:[%s3 + $0x288] sm:$0xff] %v1336
  %1578 = vst [vmem:[%s3 + $0x290] sm:$0xff] %v1337
  %1579 = vst [vmem:[%s3 + $0x298] sm:$0xff] %v1338
  %1580 = vst [vmem:[%s3 + $0x2a0] sm:$0xff] %v1339
  %1581 = vst [vmem:[%s3 + $0x2a8] sm:$0xff] %v1340
  %1582 = vst [vmem:[%s3 + $0x2b0] sm:$0xff] %v1341
  %1583 = vst [vmem:[%s3 + $0x2b8] sm:$0xff] %v1342
  %1584 = vst [vmem:[%s3 + $0x2c0] sm:$0xff] %v1343
  %1585 = vst [vmem:[%s3 + $0x2c8] sm:$0xff] %v1344
  %1586 = vst [vmem:[%s3 + $0x2d0] sm:$0xff] %v1345
  %1587 = vst [vmem:[%s3 + $0x2d8] sm:$0xff] %v1346
  %1588 = vst [vmem:[%s3 + $0x2e0] sm:$0xff] %v1347
  %1589 = vst [vmem:[%s3 + $0x2e8] sm:$0xff] %v1348
  %1590 = vst [vmem:[%s3 + $0x2f0] sm:$0xff] %v1349
  %1591 = vst [vmem:[%s3 + $0x2f8] sm:$0xff] %v1350
  %1592 = vst [vmem:[%s3 + $0x300] sm:$0xff] %v1351
  %1593 = vst [vmem:[%s3 + $0x308] sm:$0xff] %v1352
  %1594 = vst [vmem:[%s3 + $0x310] sm:$0xff] %v1353
  %1595 = vst [vmem:[%s3 + $0x318] sm:$0xff] %v1354
  %1596 = vst [vmem:[%s3 + $0x320] sm:$0xff] %v1355
  %1597 = vst [vmem:[%s3 + $0x328] sm:$0xff] %v1356
  %1598 = vst [vmem:[%s3 + $0x330] sm:$0xff] %v1357
  %1599 = vst [vmem:[%s3 + $0x338] sm:$0xff] %v1358
  %1600 = vst [vmem:[%s3 + $0x340] sm:$0xff] %v1359
  %1601 = vst [vmem:[%s3 + $0x348] sm:$0xff] %v1360
  %1602 = vst [vmem:[%s3 + $0x350] sm:$0xff] %v1361
  %1603 = vst [vmem:[%s3 + $0x358] sm:$0xff] %v1362
  %1604 = vst [vmem:[%s3 + $0x360] sm:$0xff] %v1363
  %1605 = vst [vmem:[%s3 + $0x368] sm:$0xff] %v1364
  %1606 = vst [vmem:[%s3 + $0x370] sm:$0xff] %v1365
  %1607 = vst [vmem:[%s3 + $0x378] sm:$0xff] %v1366
  %1608 = vst [vmem:[%s3 + $0x380] sm:$0xff] %v1367
  %1609 = vst [vmem:[%s3 + $0x388] sm:$0xff] %v1368
  %1610 = vst [vmem:[%s3 + $0x390] sm:$0xff] %v1369
  %1611 = vst [vmem:[%s3 + $0x398] sm:$0xff] %v1370
  %1612 = vst [vmem:[%s3 + $0x3a0] sm:$0xff] %v1371
  %1613 = vst [vmem:[%s3 + $0x3a8] sm:$0xff] %v1372
  %1614 = vst [vmem:[%s3 + $0x3b0] sm:$0xff] %v1373
  %1615 = vst [vmem:[%s3 + $0x3b8] sm:$0xff] %v1374
  %1616 = vst [vmem:[%s3 + $0x3c0] sm:$0xff] %v1375
  %1617 = vst [vmem:[%s3 + $0x3c8] sm:$0xff] %v1376
  %1618 = vst [vmem:[%s3 + $0x3d0] sm:$0xff] %v1377
  %1619 = vst [vmem:[%s3 + $0x3d8] sm:$0xff] %v1378
  %1620 = vst [vmem:[%s3 + $0x3e0] sm:$0xff] %v1379
  %1621 = vst [vmem:[%s3 + $0x3e8] sm:$0xff] %v1380
  %1622 = vst [vmem:[%s3 + $0x3f0] sm:$0xff] %v1381
  %1623 = vst [vmem:[%s3 + $0x3f8] sm:$0xff] %v1382
  %1624 = vst [vmem:[%s3 + $0x400] sm:$0xff] %v1383
  %1625 = vst [vmem:[%s3 + $0x408] sm:$0xff] %v1384
  %1626 = vst [vmem:[%s3 + $0x410] sm:$0xff] %v1385
  %1627 = vst [vmem:[%s3 + $0x418] sm:$0xff] %v1386
  %1628 = vst [vmem:[%s3 + $0x420] sm:$0xff] %v1387
  %1629 = vst [vmem:[%s3 + $0x428] sm:$0xff] %v1388
  %1630 = vst [vmem:[%s3 + $0x430] sm:$0xff] %v1389
  %1631 = vst [vmem:[%s3 + $0x438] sm:$0xff] %v1390
  %1632 = vst [vmem:[%s3 + $0x440] sm:$0xff] %v1391
  %1633 = vst [vmem:[%s3 + $0x448] sm:$0xff] %v1392
  %1634 = vst [vmem:[%s3 + $0x450] sm:$0xff] %v1393
  %1635 = vst [vmem:[%s3 + $0x458] sm:$0xff] %v1394
  %1636 = vst [vmem:[%s3 + $0x460] sm:$0xff] %v1395
  %1637 = vst [vmem:[%s3 + $0x468] sm:$0xff] %v1396
  %1638 = vst [vmem:[%s3 + $0x470] sm:$0xff] %v1397
  %1639 = vst [vmem:[%s3 + $0x478] sm:$0xff] %v1398
  %1640 = vst [vmem:[%s3 + $0x480] sm:$0xff] %v1399
  %1641 = vst [vmem:[%s3 + $0x488] sm:$0xff] %v1400
  %1642 = vst [vmem:[%s3 + $0x490] sm:$0xff] %v1401
  %1643 = vst [vmem:[%s3 + $0x498] sm:$0xff] %v1402
  %1644 = vst [vmem:[%s3 + $0x4a0] sm:$0xff] %v1403
  %1645 = vst [vmem:[%s3 + $0x4a8] sm:$0xff] %v1404
  %1646 = vst [vmem:[%s3 + $0x4b0] sm:$0xff] %v1405
  %1647 = vst [vmem:[%s3 + $0x4b8] sm:$0xff] %v1406
  %1648 = vst [vmem:[%s3 + $0x4c0] sm:$0xff] %v1407
  %1649 = vst [vmem:[%s3 + $0x4c8] sm:$0xff] %v1408
  %1650 = vst [vmem:[%s3 + $0x4d0] sm:$0xff] %v1409
  %1651 = vst [vmem:[%s3 + $0x4d8] sm:$0xff] %v1410
  %1652 = vst [vmem:[%s3 + $0x4e0] sm:$0xff] %v1411
  %1653 = vst [vmem:[%s3 + $0x4e8] sm:$0xff] %v1412
  %1654 = vst [vmem:[%s3 + $0x4f0] sm:$0xff] %v1413
  %1655 = vst [vmem:[%s3 + $0x4f8] sm:$0xff] %v1414
  %1656 = vst [vmem:[%s3 + $0x500] sm:$0xff] %v1415
  %1657 = vst [vmem:[%s3 + $0x508] sm:$0xff] %v1416
  %1658 = vst [vmem:[%s3 + $0x510] sm:$0xff] %v1417
  %1659 = vst [vmem:[%s3 + $0x518] sm:$0xff] %v1418
  %1660 = vst [vmem:[%s3 + $0x520] sm:$0xff] %v1419
  %1661 = vst [vmem:[%s3 + $0x528] sm:$0xff] %v1420
  %1662 = vst [vmem:[%s3 + $0x530] sm:$0xff] %v1421
  %1663 = vst [vmem:[%s3 + $0x538] sm:$0xff] %v1422
  %1664 = vst [vmem:[%s3 + $0x540] sm:$0xff] %v1423
  %1665 = vst [vmem:[%s3 + $0x548] sm:$0xff] %v1424
  %1666 = vst [vmem:[%s3 + $0x550] sm:$0xff] %v1425
  %1667 = vst [vmem:[%s3 + $0x558] sm:$0xff] %v1426
  %1668 = vst [vmem:[%s3 + $0x560] sm:$0xff] %v1427
  %1669 = vst [vmem:[%s3 + $0x568] sm:$0xff] %v1428
  %1670 = vst [vmem:[%s3 + $0x570] sm:$0xff] %v1429
  %1671 = vst [vmem:[%s3 + $0x578] sm:$0xff] %v1430
  %1672 = vst [vmem:[%s3 + $0x580] sm:$0xff] %v1431
  %1673 = vst [vmem:[%s3 + $0x588] sm:$0xff] %v1432
  %1674 = vst [vmem:[%s3 + $0x590] sm:$0xff] %v1433
  %1675 = vst [vmem:[%s3 + $0x598] sm:$0xff] %v1434
  %1676 = vst [vmem:[%s3 + $0x5a0] sm:$0xff] %v1435
  %1677 = vst [vmem:[%s3 + $0x5a8] sm:$0xff] %v1436
  %1678 = vst [vmem:[%s3 + $0x5b0] sm:$0xff] %v1437
  %1679 = vst [vmem:[%s3 + $0x5b8] sm:$0xff] %v1438
  %1680 = vst [vmem:[%s3 + $0x5c0] sm:$0xff] %v1439
  %1681 = vst [vmem:[%s3 + $0x5c8] sm:$0xff] %v1440
  %1682 = vst [vmem:[%s3 + $0x5d0] sm:$0xff] %v1441
  %1683 = vst [vmem:[%s3 + $0x5d8] sm:$0xff] %v1442
  %1684 = vst [vmem:[%s3 + $0x5e0] sm:$0xff] %v1443
  %1685 = vst [vmem:[%s3 + $0x5e8] sm:$0xff] %v1444
  %1686 = vst [vmem:[%s3 + $0x5f0] sm:$0xff] %v1445
  %1687 = vst [vmem:[%s3 + $0x5f8] sm:$0xff] %v1446
  %1688 = vst [vmem:[%s3 + $0x600] sm:$0xff] %v1447
  %1689 = vst [vmem:[%s3 + $0x608] sm:$0xff] %v1448
  %1690 = vst [vmem:[%s3 + $0x610] sm:$0xff] %v1449
  %1691 = vst [vmem:[%s3 + $0x618] sm:$0xff] %v1450
  %1692 = vst [vmem:[%s3 + $0x620] sm:$0xff] %v1451
  %1693 = vst [vmem:[%s3 + $0x628] sm:$0xff] %v1452
  %1694 = vst [vmem:[%s3 + $0x630] sm:$0xff] %v1453
  %1695 = vst [vmem:[%s3 + $0x638] sm:$0xff] %v1454
  %1696 = vst [vmem:[%s3 + $0x640] sm:$0xff] %v1455
  %1697 = vst [vmem:[%s3 + $0x648] sm:$0xff] %v1456
  %1698 = vst [vmem:[%s3 + $0x650] sm:$0xff] %v1457
  %1699 = vst [vmem:[%s3 + $0x658] sm:$0xff] %v1458
  %1700 = vst [vmem:[%s3 + $0x660] sm:$0xff] %v1459
  %1701 = vst [vmem:[%s3 + $0x668] sm:$0xff] %v1460
  %1702 = vst [vmem:[%s3 + $0x670] sm:$0xff] %v1461
  %1703 = vst [vmem:[%s3 + $0x678] sm:$0xff] %v1462
  %1704 = vst [vmem:[%s3 + $0x680] sm:$0xff] %v1463
  %1705 = vst [vmem:[%s3 + $0x688] sm:$0xff] %v1464
  %1706 = vst [vmem:[%s3 + $0x690] sm:$0xff] %v1465
  %1707 = vst [vmem:[%s3 + $0x698] sm:$0xff] %v1466
  %1708 = vst [vmem:[%s3 + $0x6a0] sm:$0xff] %v1467
  %1709 = vst [vmem:[%s3 + $0x6a8] sm:$0xff] %v1468
  %1710 = vst [vmem:[%s3 + $0x6b0] sm:$0xff] %v1469
  %1711 = vst [vmem:[%s3 + $0x6b8] sm:$0xff] %v1470
  %1712 = vst [vmem:[%s3 + $0x6c0] sm:$0xff] %v1471
  %1713 = vst [vmem:[%s3 + $0x6c8] sm:$0xff] %v1472
  %1714 = vst [vmem:[%s3 + $0x6d0] sm:$0xff] %v1473
  %1715 = vst [vmem:[%s3 + $0x6d8] sm:$0xff] %v1474
  %1716 = vst [vmem:[%s3 + $0x6e0] sm:$0xff] %v1475
  %1717 = vst [vmem:[%s3 + $0x6e8] sm:$0xff] %v1476
  %1718 = vst [vmem:[%s3 + $0x6f0] sm:$0xff] %v1477
  %1719 = vst [vmem:[%s3 + $0x6f8] sm:$0xff] %v1478
  %1720 = vst [vmem:[%s3 + $0x700] sm:$0xff] %v1479
  %1721 = vst [vmem:[%s3 + $0x708] sm:$0xff] %v1480
  %1722 = vst [vmem:[%s3 + $0x710] sm:$0xff] %v1481
  %1723 = vst [vmem:[%s3 + $0x718] sm:$0xff] %v1482
  %1724 = vst [vmem:[%s3 + $0x720] sm:$0xff] %v1483
  %1725 = vst [vmem:[%s3 + $0x728] sm:$0xff] %v1484
  %1726 = vst [vmem:[%s3 + $0x730] sm:$0xff] %v1485
  %1727 = vst [vmem:[%s3 + $0x738] sm:$0xff] %v1486
  %1728 = vst [vmem:[%s3 + $0x740] sm:$0xff] %v1487
  %1729 = vst [vmem:[%s3 + $0x748] sm:$0xff] %v1488
  %1730 = vst [vmem:[%s3 + $0x750] sm:$0xff] %v1489
  %1731 = vst [vmem:[%s3 + $0x758] sm:$0xff] %v1490
  %1732 = vst [vmem:[%s3 + $0x760] sm:$0xff] %v1491
  %1733 = vst [vmem:[%s3 + $0x768] sm:$0xff] %v1492
  %1734 = vst [vmem:[%s3 + $0x770] sm:$0xff] %v1493
  %1735 = vst [vmem:[%s3 + $0x778] sm:$0xff] %v1494
  %1736 = vst [vmem:[%s3 + $0x780] sm:$0x3] %v1495
  // Predicated region
  $region14: #{_lambda_.11} parent=0 // pred_check
    _
  $region15: #{_lambda_.11} parent=0 // pred_check_branch
    %1738 = sbr.rel (0) target = $region17
  $region16: #{_lambda_.11} parent=0 // pred_region
    _
  $region17: #{_lambda_.11} parent=0 // pred_fallthru
    _
  // Predicated region
  $region18: #{_lambda_.11} parent=0 // pred_check
    _
  $region19: #{_lambda_.11} parent=0 // pred_check_branch
    %1740 = sbr.rel (0) target = $region21
  $region20: #{_lambda_.11} parent=0 // pred_region
    _
  $region21: #{_lambda_.11} parent=0 // pred_fallthru
    _

// kernel: _lambda_.12
$region0: #{_lambda_.12}
  #allocation0 [shape = 'u32[]', space=smem, size = 0x4, offset = 0x4, fixed_abs, tag = 'smem constant byte address 0x4 - core index']
  #allocation1 [shape = 'u32[144,128]{1,0:T(1,128)}', space=vmem, size = 0x12000, scoped, tag = 'internal scratch']
  %s0 = inlined_call_operand.vmem [shape: bf16[2048,1152], index: 0, kind: input, shape index: {}]
  %s1 = inlined_call_operand.vmem [shape: bf16[1152,128], index: 1, kind: input, shape index: {}]
  %s2 = inlined_call_operand.vmem [shape: f32[1,128], index: 2, kind: input, shape index: {}]
  %s3 = inlined_call_operand.vmem [shape: f32[2048,128], index: 3, kind: output, shape index: {}]
  %s4 = sld [smem:[#allocation0]]
  $region45: #{_lambda_.12} parent=0
    _
  %s6 = ssub.s32 1, %s4
  %s7 = scalar_select 0, %s6, %s4
  loop: start=0, step=1, limit=6
  $region2: #{_lambda_.12} parent=0 // loop_pre_header
    _
  $region3: #{_lambda_.12} parent=0 // loop_header
    %s9 = sphi 0, %s13
    %p10 = scmp.ge.s32.totalorder %s9, 6
    %s19 = sphi 0, %s21
    %s22 = sphi 0, %s19
    %s23 = sphi 0, %s22
    %s39 = sphi 0, %s23
    %s43 = sphi 0, %s43
    %s45 = sphi 0, %s43
    %s46 = sphi 0, %s45
    %s60 = sphi 0, %s46
    %s64 = sphi 0, %s64
    %s66 = sphi 0, %s64
    %s67 = sphi 0, %s66
    %s81 = sphi 0, %s67
    %s87 = sphi 0, %s89
    %s90 = sphi 0, %s87
    %s91 = sphi 0, %s90
    %s107 = sphi 0, %s91
  $region4: #{_lambda_.12} parent=0 // loop_header_branch
    %12 = sbr.rel (%p10) target = $region8
  $region5: #{_lambda_.12} parent=0 // loop_body
    %s14 = ssub.s32 %s9, 1
    %s15 = ssub.s32 %s9, 2
    %s16 = sadd.s32 %s9, 1
    %s17 = ssub.s32 %s9, %s16
    %p18 = scmp.eq.s32.totalorder %s17, 0
    %s20 = sadd.s32 %s19, 1
    %s21 = scalar_select %p18, %s19, %s20
    %p24 = pneg %p18
    %p25 = scmp.eq.s32.totalorder %s9, 3
    %p26 = por %p24, %p25
    %p27 = scmp.ne.s32.totalorder %s19, %s22
    %p28 = scmp.eq.s32.totalorder %s9, 0
    %p29 = por %p27, %p28
    %p30 = scmp.ne.s32.totalorder %s19, %s22
    %p31 = scmp.eq.s32.totalorder %s14, 3
    %p32 = por %p30, %p31
    %p33 = scmp.ne.s32.totalorder %s22, %s23
    %p34 = scmp.eq.s32.totalorder %s14, 0
    %p35 = por %p33, %p34
    %p36 = scmp.ne.s32.totalorder %s22, %s23
    %p37 = scmp.eq.s32.totalorder %s15, 3
    %p38 = por %p36, %p37
    %p40 = scmp.ne.s32.totalorder %s23, %s39
    %p41 = scmp.eq.s32.totalorder %s15, 0
    %p42 = por %p40, %p41
    %s44 = sadd.s32 %s43, 1
    %p47 = scmp.eq.s32.totalorder %s9, 3
    %p48 = scmp.ne.s32.totalorder %s43, %s45
    %p49 = scmp.eq.s32.totalorder %s9, 0
    %p50 = por %p48, %p49
    %p51 = scmp.ne.s32.totalorder %s43, %s45
    %p52 = scmp.eq.s32.totalorder %s14, 3
    %p53 = por %p51, %p52
    %p54 = scmp.ne.s32.totalorder %s45, %s46
    %p55 = scmp.eq.s32.totalorder %s14, 0
    %p56 = por %p54, %p55
    %p57 = scmp.ne.s32.totalorder %s45, %s46
    %p58 = scmp.eq.s32.totalorder %s15, 3
    %p59 = por %p57, %p58
    %p61 = scmp.ne.s32.totalorder %s46, %s60
    %p62 = scmp.eq.s32.totalorder %s15, 0
    %p63 = por %p61, %p62
    %s65 = sadd.s32 %s64, 1
    %p68 = scmp.eq.s32.totalorder %s9, 3
    %p69 = scmp.ne.s32.totalorder %s64, %s66
    %p70 = scmp.eq.s32.totalorder %s9, 0
    %p71 = por %p69, %p70
    %p72 = scmp.ne.s32.totalorder %s64, %s66
    %p73 = scmp.eq.s32.totalorder %s14, 3
    %p74 = por %p72, %p73
    %p75 = scmp.ne.s32.totalorder %s66, %s67
    %p76 = scmp.eq.s32.totalorder %s14, 0
    %p77 = por %p75, %p76
    %p78 = scmp.ne.s32.totalorder %s66, %s67
    %p79 = scmp.eq.s32.totalorder %s15, 3
    %p80 = por %p78, %p79
    %p82 = scmp.ne.s32.totalorder %s67, %s81
    %p83 = scmp.eq.s32.totalorder %s15, 0
    %p84 = por %p82, %p83
    %s85 = ssub.s32 %s9, %s16
    %p86 = scmp.eq.s32.totalorder %s85, 0
    %s88 = sadd.s32 %s87, 1
    %s89 = scalar_select %p86, %s87, %s88
    %p92 = pneg %p86
    %p93 = scmp.eq.s32.totalorder %s9, 3
    %p94 = por %p92, %p93
    %p95 = scmp.ne.s32.totalorder %s87, %s90
    %p96 = scmp.eq.s32.totalorder %s9, 0
    %p97 = por %p95, %p96
    %p98 = scmp.ne.s32.totalorder %s87, %s90
    %p99 = scmp.eq.s32.totalorder %s14, 3
    %p100 = por %p98, %p99
    %p101 = scmp.ne.s32.totalorder %s90, %s91
    %p102 = scmp.eq.s32.totalorder %s14, 0
    %p103 = por %p101, %p102
    %p104 = scmp.ne.s32.totalorder %s90, %s91
    %p105 = scmp.eq.s32.totalorder %s15, 3
    %p106 = por %p104, %p105
    %p108 = scmp.ne.s32.totalorder %s91, %s107
    %p109 = scmp.eq.s32.totalorder %s15, 0
    %p110 = por %p108, %p109
    %p111 = scmp.le.s32.totalorder 1, %s9
    %p112 = scmp.lt.s32.totalorder %s9, 5
    %p113 = pnand %p111, %p112
    %p114 = pneg %p113
    // Predicated region
    $region9: #{_lambda_.12} parent=5 // pred_check
      _
    $region10: #{_lambda_.12} parent=5 // pred_check_branch
      %116 = sbr.rel (%p113) target = $region12
    $region11: #{_lambda_.12} parent=5 // pred_region
      %s117 = ssub.s32 %s9, 1
      // Predicated region
      $region13: #{_lambda_.12} parent=11 // pred_check
        %p118 = pneg %p56
      $region14: #{_lambda_.12} parent=11 // pred_check_branch
        %120 = sbr.rel (%p118) target = $region16
      $region15: #{_lambda_.12} parent=11 // pred_region
        _
      $region16: #{_lambda_.12} parent=11 // pred_fallthru
        _
      // Predicated region
      $region17: #{_lambda_.12} parent=11 // pred_check
        %p121 = pneg %p77
      $region18: #{_lambda_.12} parent=11 // pred_check_branch
        %123 = sbr.rel (%p121) target = $region20
      $region19: #{_lambda_.12} parent=11 // pred_region
        _
      $region20: #{_lambda_.12} parent=11 // pred_fallthru
        _
    $region12: #{_lambda_.12} parent=5 // pred_fallthru
      _
    %p124 = scmp.lt.s32.totalorder %s9, 4
    // Predicated region
    $region21: #{_lambda_.12} parent=5 // pred_check
      %p125 = pneg %p124
    $region22: #{_lambda_.12} parent=5 // pred_check_branch
      %127 = sbr.rel (%p125) target = $region24
    $region23: #{_lambda_.12} parent=5 // pred_region
      // Predicated region
      $region25: #{_lambda_.12} parent=23 // pred_check
        %p128 = pneg %p29
      $region26: #{_lambda_.12} parent=23 // pred_check_branch
        %130 = sbr.rel (%p128) target = $region28
      $region27: #{_lambda_.12} parent=23 // pred_region
        %s131 = smul.u32 64, %s9
        %p132 = scmp.lt.s32.totalorder %s131, 255
        %s133 = scalar_select %p132, %s131, 255
        %s134 = smul.addr %s133, 9
        %s135 = smul.addr %s134, 4
        %s136 = scalar_lea.vmem %s0, %s135
        %s137 = smul.u32 64, %s9
      $region28: #{_lambda_.12} parent=23 // pred_fallthru
        _
    $region24: #{_lambda_.12} parent=5 // pred_fallthru
      _
    %p138 = scmp.le.s32.totalorder 1, %s9
    %p139 = scmp.lt.s32.totalorder %s9, 5
    %p140 = pnand %p138, %p139
    %p141 = pneg %p140
    // Predicated region
    $region29: #{_lambda_.12} parent=5 // pred_check
      _
    $region30: #{_lambda_.12} parent=5 // pred_check_branch
      %143 = sbr.rel (%p140) target = $region32
    $region31: #{_lambda_.12} parent=5 // pred_region
      %s144 = ssub.s32 %s9, 1
      %s145 = smul.u32 64, %s14
      %p146 = scmp.lt.s32.totalorder %s145, 255
      %s147 = scalar_select %p146, %s145, 255
      %s148 = smul.addr %s147, 9
      %s149 = smul.addr %s148, 4
      %s150 = scalar_lea.vmem %s0, %s149
      %p151 = pneg %p35
      %p152 = pneg %p32
      %p153 = pneg %p56
      %p154 = pneg %p53
      %p155 = pneg %p77
      %p156 = pneg %p74
      %p157 = pneg %p103
      %p158 = pneg %p100
      %s159 = smul.u32 64, %s14
      %p160 = scmp.lt.s32.totalorder %s159, 255
      %s161 = scalar_select %p160, %s159, 255
      %s162 = smul.addr %s161, 8
      %s163 = scalar_lea.vmem %s3, %s162
      %s164 = smul.u32 64, %s14
      %p165 = scmp.lt.s32.totalorder %s164, 255
      %s166 = scalar_select %p165, %s164, 255
      %s167 = smul.addr %s166, 9
      %s168 = smul.addr %s167, 4
      %s169 = scalar_lea.vmem %s0, %s168
      %s170 = smul.u32 64, %s14
      %s171 = smul.u32 64, %s14
      %p172 = scmp.lt.s32.totalorder %s171, 255
      %s173 = scalar_select %p172, %s171, 255
      %s174 = smul.addr %s173, 8
      %s175 = scalar_lea.vmem %s3, %s174
      %s176 = smul.u32 64, %s14
      %v178 = vld [vmem:[%s169] sm:$0xff]
      %v179 = vld [vmem:[%s169 + $0x8] sm:$0xff]
      %v180 = vld [vmem:[%s169 + $0x10] sm:$0xff]
      %v181 = vld [vmem:[%s169 + $0x18] sm:$0xff]
      %v182 = vld [vmem:[%s169 + $0x20] sm:$0xf]
      %v183 = vld [vmem:[%s169 + $0x24] sm:$0xff]
      %v184 = vld [vmem:[%s169 + $0x2c] sm:$0xff]
      %v185 = vld [vmem:[%s169 + $0x34] sm:$0xff]
      %v186 = vld [vmem:[%s169 + $0x3c] sm:$0xff]
      %v187 = vld [vmem:[%s169 + $0x44] sm:$0xf]
      %v188 = vld [vmem:[%s169 + $0x48] sm:$0xff]
      %v189 = vld [vmem:[%s169 + $0x50] sm:$0xff]
      %v190 = vld [vmem:[%s169 + $0x58] sm:$0xff]
      %v191 = vld [vmem:[%s169 + $0x60] sm:$0xff]
      %v192 = vld [vmem:[%s169 + $0x68] sm:$0xf]
      %v193 = vld [vmem:[%s169 + $0x6c] sm:$0xff]
      %v194 = vld [vmem:[%s169 + $0x74] sm:$0xff]
      %v195 = vld [vmem:[%s169 + $0x7c] sm:$0xff]
      %v196 = vld [vmem:[%s169 + $0x84] sm:$0xff]
      %v197 = vld [vmem:[%s169 + $0x8c] sm:$0xf]
      %v198 = vld [vmem:[%s169 + $0x90] sm:$0xff]
      %v199 = vld [vmem:[%s169 + $0x98] sm:$0xff]
      %v200 = vld [vmem:[%s169 + $0xa0] sm:$0xff]
      %v201 = vld [vmem:[%s169 + $0xa8] sm:$0xff]
      %v202 = vld [vmem:[%s169 + $0xb0] sm:$0xf]
      %v203 = vld [vmem:[%s169 + $0xb4] sm:$0xff]
      %v204 = vld [vmem:[%s169 + $0xbc] sm:$0xff]
      %v205 = vld [vmem:[%s169 + $0xc4] sm:$0xff]
      %v206 = vld [vmem:[%s169 + $0xcc] sm:$0xff]
      %v207 = vld [vmem:[%s169 + $0xd4] sm:$0xf]
      %v208 = vld [vmem:[%s169 + $0xd8] sm:$0xff]
      %v209 = vld [vmem:[%s169 + $0xe0] sm:$0xff]
      %v210 = vld [vmem:[%s169 + $0xe8] sm:$0xff]
      %v211 = vld [vmem:[%s169 + $0xf0] sm:$0xff]
      %v212 = vld [vmem:[%s169 + $0xf8] sm:$0xf]
      %v213 = vld [vmem:[%s169 + $0xfc] sm:$0xff]
      %v214 = vld [vmem:[%s169 + $0x104] sm:$0xff]
      %v215 = vld [vmem:[%s169 + $0x10c] sm:$0xff]
      %v216 = vld [vmem:[%s169 + $0x114] sm:$0xff]
      %v217 = vld [vmem:[%s169 + $0x11c] sm:$0xf]
      %v218 = vld [vmem:[%s169 + $0x120] sm:$0xff]
      %v219 = vld [vmem:[%s169 + $0x128] sm:$0xff]
      %v220 = vld [vmem:[%s169 + $0x130] sm:$0xff]
      %v221 = vld [vmem:[%s169 + $0x138] sm:$0xff]
      %v222 = vld [vmem:[%s169 + $0x140] sm:$0xf]
      %v223 = vld [vmem:[%s169 + $0x144] sm:$0xff]
      %v224 = vld [vmem:[%s169 + $0x14c] sm:$0xff]
      %v225 = vld [vmem:[%s169 + $0x154] sm:$0xff]
      %v226 = vld [vmem:[%s169 + $0x15c] sm:$0xff]
      %v227 = vld [vmem:[%s169 + $0x164] sm:$0xf]
      %v228 = vld [vmem:[%s169 + $0x168] sm:$0xff]
      %v229 = vld [vmem:[%s169 + $0x170] sm:$0xff]
      %v230 = vld [vmem:[%s169 + $0x178] sm:$0xff]
      %v231 = vld [vmem:[%s169 + $0x180] sm:$0xff]
      %v232 = vld [vmem:[%s169 + $0x188] sm:$0xf]
      %v233 = vld [vmem:[%s169 + $0x18c] sm:$0xff]
      %v234 = vld [vmem:[%s169 + $0x194] sm:$0xff]
      %v235 = vld [vmem:[%s169 + $0x19c] sm:$0xff]
      %v236 = vld [vmem:[%s169 + $0x1a4] sm:$0xff]
      %v237 = vld [vmem:[%s169 + $0x1ac] sm:$0xf]
      %v238 = vld [vmem:[%s169 + $0x1b0] sm:$0xff]
      %v239 = vld [vmem:[%s169 + $0x1b8] sm:$0xff]
      %v240 = vld [vmem:[%s169 + $0x1c0] sm:$0xff]
      %v241 = vld [vmem:[%s169 + $0x1c8] sm:$0xff]
      %v242 = vld [vmem:[%s169 + $0x1d0] sm:$0xf]
      %v243 = vld [vmem:[%s169 + $0x1d4] sm:$0xff]
      %v244 = vld [vmem:[%s169 + $0x1dc] sm:$0xff]
      %v245 = vld [vmem:[%s169 + $0x1e4] sm:$0xff]
      %v246 = vld [vmem:[%s169 + $0x1ec] sm:$0xff]
      %v247 = vld [vmem:[%s169 + $0x1f4] sm:$0xf]
      %v248 = vld [vmem:[%s169 + $0x1f8] sm:$0xff]
      %v249 = vld [vmem:[%s169 + $0x200] sm:$0xff]
      %v250 = vld [vmem:[%s169 + $0x208] sm:$0xff]
      %v251 = vld [vmem:[%s169 + $0x210] sm:$0xff]
      %v252 = vld [vmem:[%s169 + $0x218] sm:$0xf]
      %v253 = vld [vmem:[%s169 + $0x21c] sm:$0xff]
      %v254 = vld [vmem:[%s169 + $0x224] sm:$0xff]
      %v255 = vld [vmem:[%s169 + $0x22c] sm:$0xff]
      %v256 = vld [vmem:[%s169 + $0x234] sm:$0xff]
      %v257 = vld [vmem:[%s169 + $0x23c] sm:$0xf]
      %v258 = vld [vmem:[%s169 + $0x240] sm:$0xff]
      %v259 = vld [vmem:[%s169 + $0x248] sm:$0xff]
      %v260 = vld [vmem:[%s169 + $0x250] sm:$0xff]
      %v261 = vld [vmem:[%s169 + $0x258] sm:$0xff]
      %v262 = vld [vmem:[%s169 + $0x260] sm:$0xf]
      %v263 = vld [vmem:[%s169 + $0x264] sm:$0xff]
      %v264 = vld [vmem:[%s169 + $0x26c] sm:$0xff]
      %v265 = vld [vmem:[%s169 + $0x274] sm:$0xff]
      %v266 = vld [vmem:[%s169 + $0x27c] sm:$0xff]
      %v267 = vld [vmem:[%s169 + $0x284] sm:$0xf]
      %v268 = vld [vmem:[%s169 + $0x288] sm:$0xff]
      %v269 = vld [vmem:[%s169 + $0x290] sm:$0xff]
      %v270 = vld [vmem:[%s169 + $0x298] sm:$0xff]
      %v271 = vld [vmem:[%s169 + $0x2a0] sm:$0xff]
      %v272 = vld [vmem:[%s169 + $0x2a8] sm:$0xf]
      %v273 = vld [vmem:[%s169 + $0x2ac] sm:$0xff]
      %v274 = vld [vmem:[%s169 + $0x2b4] sm:$0xff]
      %v275 = vld [vmem:[%s169 + $0x2bc] sm:$0xff]
      %v276 = vld [vmem:[%s169 + $0x2c4] sm:$0xff]
      %v277 = vld [vmem:[%s169 + $0x2cc] sm:$0xf]
      %v278 = vld [vmem:[%s169 + $0x2d0] sm:$0xff]
      %v279 = vld [vmem:[%s169 + $0x2d8] sm:$0xff]
      %v280 = vld [vmem:[%s169 + $0x2e0] sm:$0xff]
      %v281 = vld [vmem:[%s169 + $0x2e8] sm:$0xff]
      %v282 = vld [vmem:[%s169 + $0x2f0] sm:$0xf]
      %v283 = vld [vmem:[%s169 + $0x2f4] sm:$0xff]
      %v284 = vld [vmem:[%s169 + $0x2fc] sm:$0xff]
      %v285 = vld [vmem:[%s169 + $0x304] sm:$0xff]
      %v286 = vld [vmem:[%s169 + $0x30c] sm:$0xff]
      %v287 = vld [vmem:[%s169 + $0x314] sm:$0xf]
      %v288 = vld [vmem:[%s169 + $0x318] sm:$0xff]
      %v289 = vld [vmem:[%s169 + $0x320] sm:$0xff]
      %v290 = vld [vmem:[%s169 + $0x328] sm:$0xff]
      %v291 = vld [vmem:[%s169 + $0x330] sm:$0xff]
      %v292 = vld [vmem:[%s169 + $0x338] sm:$0xf]
      %v293 = vld [vmem:[%s169 + $0x33c] sm:$0xff]
      %v294 = vld [vmem:[%s169 + $0x344] sm:$0xff]
      %v295 = vld [vmem:[%s169 + $0x34c] sm:$0xff]
      %v296 = vld [vmem:[%s169 + $0x354] sm:$0xff]
      %v297 = vld [vmem:[%s169 + $0x35c] sm:$0xf]
      %v298 = vld [vmem:[%s169 + $0x360] sm:$0xff]
      %v299 = vld [vmem:[%s169 + $0x368] sm:$0xff]
      %v300 = vld [vmem:[%s169 + $0x370] sm:$0xff]
      %v301 = vld [vmem:[%s169 + $0x378] sm:$0xff]
      %v302 = vld [vmem:[%s169 + $0x380] sm:$0xf]
      %v303 = vld [vmem:[%s169 + $0x384] sm:$0xff]
      %v304 = vld [vmem:[%s169 + $0x38c] sm:$0xff]
      %v305 = vld [vmem:[%s169 + $0x394] sm:$0xff]
      %v306 = vld [vmem:[%s169 + $0x39c] sm:$0xff]
      %v307 = vld [vmem:[%s169 + $0x3a4] sm:$0xf]
      %v308 = vld [vmem:[%s169 + $0x3a8] sm:$0xff]
      %v309 = vld [vmem:[%s169 + $0x3b0] sm:$0xff]
      %v310 = vld [vmem:[%s169 + $0x3b8] sm:$0xff]
      %v311 = vld [vmem:[%s169 + $0x3c0] sm:$0xff]
      %v312 = vld [vmem:[%s169 + $0x3c8] sm:$0xf]
      %v313 = vld [vmem:[%s169 + $0x3cc] sm:$0xff]
      %v314 = vld [vmem:[%s169 + $0x3d4] sm:$0xff]
      %v315 = vld [vmem:[%s169 + $0x3dc] sm:$0xff]
      %v316 = vld [vmem:[%s169 + $0x3e4] sm:$0xff]
      %v317 = vld [vmem:[%s169 + $0x3ec] sm:$0xf]
      %v318 = vld [vmem:[%s169 + $0x3f0] sm:$0xff]
      %v319 = vld [vmem:[%s169 + $0x3f8] sm:$0xff]
      %v320 = vld [vmem:[%s169 + $0x400] sm:$0xff]
      %v321 = vld [vmem:[%s169 + $0x408] sm:$0xff]
      %v322 = vld [vmem:[%s169 + $0x410] sm:$0xf]
      %v323 = vld [vmem:[%s169 + $0x414] sm:$0xff]
      %v324 = vld [vmem:[%s169 + $0x41c] sm:$0xff]
      %v325 = vld [vmem:[%s169 + $0x424] sm:$0xff]
      %v326 = vld [vmem:[%s169 + $0x42c] sm:$0xff]
      %v327 = vld [vmem:[%s169 + $0x434] sm:$0xf]
      %v328 = vld [vmem:[%s169 + $0x438] sm:$0xff]
      %v329 = vld [vmem:[%s169 + $0x440] sm:$0xff]
      %v330 = vld [vmem:[%s169 + $0x448] sm:$0xff]
      %v331 = vld [vmem:[%s169 + $0x450] sm:$0xff]
      %v332 = vld [vmem:[%s169 + $0x458] sm:$0xf]
      %v333 = vld [vmem:[%s169 + $0x45c] sm:$0xff]
      %v334 = vld [vmem:[%s169 + $0x464] sm:$0xff]
      %v335 = vld [vmem:[%s169 + $0x46c] sm:$0xff]
      %v336 = vld [vmem:[%s169 + $0x474] sm:$0xff]
      %v337 = vld [vmem:[%s169 + $0x47c] sm:$0xf]
      %v338 = vld [vmem:[%s169 + $0x480] sm:$0xff]
      %v339 = vld [vmem:[%s169 + $0x488] sm:$0xff]
      %v340 = vld [vmem:[%s169 + $0x490] sm:$0xff]
      %v341 = vld [vmem:[%s169 + $0x498] sm:$0xff]
      %v342 = vld [vmem:[%s169 + $0x4a0] sm:$0xf]
      %v343 = vld [vmem:[%s169 + $0x4a4] sm:$0xff]
      %v344 = vld [vmem:[%s169 + $0x4ac] sm:$0xff]
      %v345 = vld [vmem:[%s169 + $0x4b4] sm:$0xff]
      %v346 = vld [vmem:[%s169 + $0x4bc] sm:$0xff]
      %v347 = vld [vmem:[%s169 + $0x4c4] sm:$0xf]
      %v348 = vld [vmem:[%s169 + $0x4c8] sm:$0xff]
      %v349 = vld [vmem:[%s169 + $0x4d0] sm:$0xff]
      %v350 = vld [vmem:[%s169 + $0x4d8] sm:$0xff]
      %v351 = vld [vmem:[%s169 + $0x4e0] sm:$0xff]
      %v352 = vld [vmem:[%s169 + $0x4e8] sm:$0xf]
      %v353 = vld [vmem:[%s169 + $0x4ec] sm:$0xff]
      %v354 = vld [vmem:[%s169 + $0x4f4] sm:$0xff]
      %v355 = vld [vmem:[%s169 + $0x4fc] sm:$0xff]
      %v356 = vld [vmem:[%s169 + $0x504] sm:$0xff]
      %v357 = vld [vmem:[%s169 + $0x50c] sm:$0xf]
      %v358 = vld [vmem:[%s169 + $0x510] sm:$0xff]
      %v359 = vld [vmem:[%s169 + $0x518] sm:$0xff]
      %v360 = vld [vmem:[%s169 + $0x520] sm:$0xff]
      %v361 = vld [vmem:[%s169 + $0x528] sm:$0xff]
      %v362 = vld [vmem:[%s169 + $0x530] sm:$0xf]
      %v363 = vld [vmem:[%s169 + $0x534] sm:$0xff]
      %v364 = vld [vmem:[%s169 + $0x53c] sm:$0xff]
      %v365 = vld [vmem:[%s169 + $0x544] sm:$0xff]
      %v366 = vld [vmem:[%s169 + $0x54c] sm:$0xff]
      %v367 = vld [vmem:[%s169 + $0x554] sm:$0xf]
      %v368 = vld [vmem:[%s169 + $0x558] sm:$0xff]
      %v369 = vld [vmem:[%s169 + $0x560] sm:$0xff]
      %v370 = vld [vmem:[%s169 + $0x568] sm:$0xff]
      %v371 = vld [vmem:[%s169 + $0x570] sm:$0xff]
      %v372 = vld [vmem:[%s169 + $0x578] sm:$0xf]
      %v373 = vld [vmem:[%s169 + $0x57c] sm:$0xff]
      %v374 = vld [vmem:[%s169 + $0x584] sm:$0xff]
      %v375 = vld [vmem:[%s169 + $0x58c] sm:$0xff]
      %v376 = vld [vmem:[%s169 + $0x594] sm:$0xff]
      %v377 = vld [vmem:[%s169 + $0x59c] sm:$0xf]
      %v378 = vld [vmem:[%s169 + $0x5a0] sm:$0xff]
      %v379 = vld [vmem:[%s169 + $0x5a8] sm:$0xff]
      %v380 = vld [vmem:[%s169 + $0x5b0] sm:$0xff]
      %v381 = vld [vmem:[%s169 + $0x5b8] sm:$0xff]
      %v382 = vld [vmem:[%s169 + $0x5c0] sm:$0xf]
      %v383 = vld [vmem:[%s169 + $0x5c4] sm:$0xff]
      %v384 = vld [vmem:[%s169 + $0x5cc] sm:$0xff]
      %v385 = vld [vmem:[%s169 + $0x5d4] sm:$0xff]
      %v386 = vld [vmem:[%s169 + $0x5dc] sm:$0xff]
      %v387 = vld [vmem:[%s169 + $0x5e4] sm:$0xf]
      %v388 = vld [vmem:[%s169 + $0x5e8] sm:$0xff]
      %v389 = vld [vmem:[%s169 + $0x5f0] sm:$0xff]
      %v390 = vld [vmem:[%s169 + $0x5f8] sm:$0xff]
      %v391 = vld [vmem:[%s169 + $0x600] sm:$0xff]
      %v392 = vld [vmem:[%s169 + $0x608] sm:$0xf]
      %v393 = vld [vmem:[%s169 + $0x60c] sm:$0xff]
      %v394 = vld [vmem:[%s169 + $0x614] sm:$0xff]
      %v395 = vld [vmem:[%s169 + $0x61c] sm:$0xff]
      %v396 = vld [vmem:[%s169 + $0x624] sm:$0xff]
      %v397 = vld [vmem:[%s169 + $0x62c] sm:$0xf]
      %v398 = vld [vmem:[%s169 + $0x630] sm:$0xff]
      %v399 = vld [vmem:[%s169 + $0x638] sm:$0xff]
      %v400 = vld [vmem:[%s169 + $0x640] sm:$0xff]
      %v401 = vld [vmem:[%s169 + $0x648] sm:$0xff]
      %v402 = vld [vmem:[%s169 + $0x650] sm:$0xf]
      %v403 = vld [vmem:[%s169 + $0x654] sm:$0xff]
      %v404 = vld [vmem:[%s169 + $0x65c] sm:$0xff]
      %v405 = vld [vmem:[%s169 + $0x664] sm:$0xff]
      %v406 = vld [vmem:[%s169 + $0x66c] sm:$0xff]
      %v407 = vld [vmem:[%s169 + $0x674] sm:$0xf]
      %v408 = vld [vmem:[%s169 + $0x678] sm:$0xff]
      %v409 = vld [vmem:[%s169 + $0x680] sm:$0xff]
      %v410 = vld [vmem:[%s169 + $0x688] sm:$0xff]
      %v411 = vld [vmem:[%s169 + $0x690] sm:$0xff]
      %v412 = vld [vmem:[%s169 + $0x698] sm:$0xf]
      %v413 = vld [vmem:[%s169 + $0x69c] sm:$0xff]
      %v414 = vld [vmem:[%s169 + $0x6a4] sm:$0xff]
      %v415 = vld [vmem:[%s169 + $0x6ac] sm:$0xff]
      %v416 = vld [vmem:[%s169 + $0x6b4] sm:$0xff]
      %v417 = vld [vmem:[%s169 + $0x6bc] sm:$0xf]
      %v418 = vld [vmem:[%s169 + $0x6c0] sm:$0xff]
      %v419 = vld [vmem:[%s169 + $0x6c8] sm:$0xff]
      %v420 = vld [vmem:[%s169 + $0x6d0] sm:$0xff]
      %v421 = vld [vmem:[%s169 + $0x6d8] sm:$0xff]
      %v422 = vld [vmem:[%s169 + $0x6e0] sm:$0xf]
      %v423 = vld [vmem:[%s169 + $0x6e4] sm:$0xff]
      %v424 = vld [vmem:[%s169 + $0x6ec] sm:$0xff]
      %v425 = vld [vmem:[%s169 + $0x6f4] sm:$0xff]
      %v426 = vld [vmem:[%s169 + $0x6fc] sm:$0xff]
      %v427 = vld [vmem:[%s169 + $0x704] sm:$0xf]
      %v428 = vld [vmem:[%s169 + $0x708] sm:$0xff]
      %v429 = vld [vmem:[%s169 + $0x710] sm:$0xff]
      %v430 = vld [vmem:[%s169 + $0x718] sm:$0xff]
      %v431 = vld [vmem:[%s169 + $0x720] sm:$0xff]
      %v432 = vld [vmem:[%s169 + $0x728] sm:$0xf]
      %v433 = vld [vmem:[%s169 + $0x72c] sm:$0xff]
      %v434 = vld [vmem:[%s169 + $0x734] sm:$0xff]
      %v435 = vld [vmem:[%s169 + $0x73c] sm:$0xff]
      %v436 = vld [vmem:[%s169 + $0x744] sm:$0xff]
      %v437 = vld [vmem:[%s169 + $0x74c] sm:$0xf]
      %v438 = vld [vmem:[%s169 + $0x750] sm:$0xff]
      %v439 = vld [vmem:[%s169 + $0x758] sm:$0xff]
      %v440 = vld [vmem:[%s169 + $0x760] sm:$0xff]
      %v441 = vld [vmem:[%s169 + $0x768] sm:$0xff]
      %v442 = vld [vmem:[%s169 + $0x770] sm:$0xf]
      %v443 = vld [vmem:[%s169 + $0x774] sm:$0xff]
      %v444 = vld [vmem:[%s169 + $0x77c] sm:$0xff]
      %v445 = vld [vmem:[%s169 + $0x784] sm:$0xff]
      %v446 = vld [vmem:[%s169 + $0x78c] sm:$0xff]
      %v447 = vld [vmem:[%s169 + $0x794] sm:$0xf]
      %v448 = vld [vmem:[%s169 + $0x798] sm:$0xff]
      %v449 = vld [vmem:[%s169 + $0x7a0] sm:$0xff]
      %v450 = vld [vmem:[%s169 + $0x7a8] sm:$0xff]
      %v451 = vld [vmem:[%s169 + $0x7b0] sm:$0xff]
      %v452 = vld [vmem:[%s169 + $0x7b8] sm:$0xf]
      %v453 = vld [vmem:[%s169 + $0x7bc] sm:$0xff]
      %v454 = vld [vmem:[%s169 + $0x7c4] sm:$0xff]
      %v455 = vld [vmem:[%s169 + $0x7cc] sm:$0xff]
      %v456 = vld [vmem:[%s169 + $0x7d4] sm:$0xff]
      %v457 = vld [vmem:[%s169 + $0x7dc] sm:$0xf]
      %v458 = vld [vmem:[%s169 + $0x7e0] sm:$0xff]
      %v459 = vld [vmem:[%s169 + $0x7e8] sm:$0xff]
      %v460 = vld [vmem:[%s169 + $0x7f0] sm:$0xff]
      %v461 = vld [vmem:[%s169 + $0x7f8] sm:$0xff]
      %v462 = vld [vmem:[%s169 + $0x800] sm:$0xf]
      %v463 = vld [vmem:[%s169 + $0x804] sm:$0xff]
      %v464 = vld [vmem:[%s169 + $0x80c] sm:$0xff]
      %v465 = vld [vmem:[%s169 + $0x814] sm:$0xff]
      %v466 = vld [vmem:[%s169 + $0x81c] sm:$0xff]
      %v467 = vld [vmem:[%s169 + $0x824] sm:$0xf]
      %v468 = vld [vmem:[%s169 + $0x828] sm:$0xff]
      %v469 = vld [vmem:[%s169 + $0x830] sm:$0xff]
      %v470 = vld [vmem:[%s169 + $0x838] sm:$0xff]
      %v471 = vld [vmem:[%s169 + $0x840] sm:$0xff]
      %v472 = vld [vmem:[%s169 + $0x848] sm:$0xf]
      %v473 = vld [vmem:[%s169 + $0x84c] sm:$0xff]
      %v474 = vld [vmem:[%s169 + $0x854] sm:$0xff]
      %v475 = vld [vmem:[%s169 + $0x85c] sm:$0xff]
      %v476 = vld [vmem:[%s169 + $0x864] sm:$0xff]
      %v477 = vld [vmem:[%s169 + $0x86c] sm:$0xf]
      %v478 = vld [vmem:[%s169 + $0x870] sm:$0xff]
      %v479 = vld [vmem:[%s169 + $0x878] sm:$0xff]
      %v480 = vld [vmem:[%s169 + $0x880] sm:$0xff]
      %v481 = vld [vmem:[%s169 + $0x888] sm:$0xff]
      %v482 = vld [vmem:[%s169 + $0x890] sm:$0xf]
      %v483 = vld [vmem:[%s169 + $0x894] sm:$0xff]
      %v484 = vld [vmem:[%s169 + $0x89c] sm:$0xff]
      %v485 = vld [vmem:[%s169 + $0x8a4] sm:$0xff]
      %v486 = vld [vmem:[%s169 + $0x8ac] sm:$0xff]
      %v487 = vld [vmem:[%s169 + $0x8b4] sm:$0xf]
      %v488 = vld [vmem:[%s169 + $0x8b8] sm:$0xff]
      %v489 = vld [vmem:[%s169 + $0x8c0] sm:$0xff]
      %v490 = vld [vmem:[%s169 + $0x8c8] sm:$0xff]
      %v491 = vld [vmem:[%s169 + $0x8d0] sm:$0xff]
      %v492 = vld [vmem:[%s169 + $0x8d8] sm:$0xf]
      %v493 = vld [vmem:[%s169 + $0x8dc] sm:$0xff]
      %v494 = vld [vmem:[%s169 + $0x8e4] sm:$0xff]
      %v495 = vld [vmem:[%s169 + $0x8ec] sm:$0xff]
      %v496 = vld [vmem:[%s169 + $0x8f4] sm:$0xff]
      %v497 = vld [vmem:[%s169 + $0x8fc] sm:$0xf]
      %v498 = vld [vmem:[%s1] sm:$0xf]
      %v499 = vld [vmem:[%s1 + $0x4] sm:$0xf]
      %v500 = vld [vmem:[%s1 + $0x8] sm:$0xf]
      %v501 = vld [vmem:[%s1 + $0xc] sm:$0xf]
      %v502 = vld [vmem:[%s1 + $0x10] sm:$0xf]
      %v503 = vld [vmem:[%s1 + $0x14] sm:$0xf]
      %v504 = vld [vmem:[%s1 + $0x18] sm:$0xf]
      %v505 = vld [vmem:[%s1 + $0x1c] sm:$0xf]
      %v506 = vld [vmem:[%s1 + $0x20] sm:$0xf]
      %v507 = vld [vmem:[%s1 + $0x24] sm:$0xf]
      %v508 = vld [vmem:[%s1 + $0x28] sm:$0xf]
      %v509 = vld [vmem:[%s1 + $0x2c] sm:$0xf]
      %v510 = vld [vmem:[%s1 + $0x30] sm:$0xf]
      %v511 = vld [vmem:[%s1 + $0x34] sm:$0xf]
      %v512 = vld [vmem:[%s1 + $0x38] sm:$0xf]
      %v513 = vld [vmem:[%s1 + $0x3c] sm:$0xf]
      %v514 = vld [vmem:[%s1 + $0x40] sm:$0xf]
      %v515 = vld [vmem:[%s1 + $0x44] sm:$0xf]
      %v516 = vld [vmem:[%s1 + $0x48] sm:$0xf]
      %v517 = vld [vmem:[%s1 + $0x4c] sm:$0xf]
      %v518 = vld [vmem:[%s1 + $0x50] sm:$0xf]
      %v519 = vld [vmem:[%s1 + $0x54] sm:$0xf]
      %v520 = vld [vmem:[%s1 + $0x58] sm:$0xf]
      %v521 = vld [vmem:[%s1 + $0x5c] sm:$0xf]
      %v522 = vld [vmem:[%s1 + $0x60] sm:$0xf]
      %v523 = vld [vmem:[%s1 + $0x64] sm:$0xf]
      %v524 = vld [vmem:[%s1 + $0x68] sm:$0xf]
      %v525 = vld [vmem:[%s1 + $0x6c] sm:$0xf]
      %v526 = vld [vmem:[%s1 + $0x70] sm:$0xf]
      %v527 = vld [vmem:[%s1 + $0x74] sm:$0xf]
      %v528 = vld [vmem:[%s1 + $0x78] sm:$0xf]
      %v529 = vld [vmem:[%s1 + $0x7c] sm:$0xf]
      %v530 = vld [vmem:[%s1 + $0x80] sm:$0xf]
      %v531 = vld [vmem:[%s1 + $0x84] sm:$0xf]
      %v532 = vld [vmem:[%s1 + $0x88] sm:$0xf]
      %v533 = vld [vmem:[%s1 + $0x8c] sm:$0xf]
      %v534 = vld [vmem:[%s1 + $0x90] sm:$0xf]
      %v535 = vld [vmem:[%s1 + $0x94] sm:$0xf]
      %v536 = vld [vmem:[%s1 + $0x98] sm:$0xf]
      %v537 = vld [vmem:[%s1 + $0x9c] sm:$0xf]
      %v538 = vld [vmem:[%s1 + $0xa0] sm:$0xf]
      %v539 = vld [vmem:[%s1 + $0xa4] sm:$0xf]
      %v540 = vld [vmem:[%s1 + $0xa8] sm:$0xf]
      %v541 = vld [vmem:[%s1 + $0xac] sm:$0xf]
      %v542 = vld [vmem:[%s1 + $0xb0] sm:$0xf]
      %v543 = vld [vmem:[%s1 + $0xb4] sm:$0xf]
      %v544 = vld [vmem:[%s1 + $0xb8] sm:$0xf]
      %v545 = vld [vmem:[%s1 + $0xbc] sm:$0xf]
      %v546 = vld [vmem:[%s1 + $0xc0] sm:$0xf]
      %v547 = vld [vmem:[%s1 + $0xc4] sm:$0xf]
      %v548 = vld [vmem:[%s1 + $0xc8] sm:$0xf]
      %v549 = vld [vmem:[%s1 + $0xcc] sm:$0xf]
      %v550 = vld [vmem:[%s1 + $0xd0] sm:$0xf]
      %v551 = vld [vmem:[%s1 + $0xd4] sm:$0xf]
      %v552 = vld [vmem:[%s1 + $0xd8] sm:$0xf]
      %v553 = vld [vmem:[%s1 + $0xdc] sm:$0xf]
      %v554 = vld [vmem:[%s1 + $0xe0] sm:$0xf]
      %v555 = vld [vmem:[%s1 + $0xe4] sm:$0xf]
      %v556 = vld [vmem:[%s1 + $0xe8] sm:$0xf]
      %v557 = vld [vmem:[%s1 + $0xec] sm:$0xf]
      %v558 = vld [vmem:[%s1 + $0xf0] sm:$0xf]
      %v559 = vld [vmem:[%s1 + $0xf4] sm:$0xf]
      %v560 = vld [vmem:[%s1 + $0xf8] sm:$0xf]
      %v561 = vld [vmem:[%s1 + $0xfc] sm:$0xf]
      %v562 = vld [vmem:[%s1 + $0x100] sm:$0xf]
      %v563 = vld [vmem:[%s1 + $0x104] sm:$0xf]
      %v564 = vld [vmem:[%s1 + $0x108] sm:$0xf]
      %v565 = vld [vmem:[%s1 + $0x10c] sm:$0xf]
      %v566 = vld [vmem:[%s1 + $0x110] sm:$0xf]
      %v567 = vld [vmem:[%s1 + $0x114] sm:$0xf]
      %v568 = vld [vmem:[%s1 + $0x118] sm:$0xf]
      %v569 = vld [vmem:[%s1 + $0x11c] sm:$0xf]
      %v570 = vld [vmem:[%s1 + $0x120] sm:$0xf]
      %v571 = vld [vmem:[%s1 + $0x124] sm:$0xf]
      %v572 = vld [vmem:[%s1 + $0x128] sm:$0xf]
      %v573 = vld [vmem:[%s1 + $0x12c] sm:$0xf]
      %v574 = vld [vmem:[%s1 + $0x130] sm:$0xf]
      %v575 = vld [vmem:[%s1 + $0x134] sm:$0xf]
      %v576 = vld [vmem:[%s1 + $0x138] sm:$0xf]
      %v577 = vld [vmem:[%s1 + $0x13c] sm:$0xf]
      %v578 = vld [vmem:[%s1 + $0x140] sm:$0xf]
      %v579 = vld [vmem:[%s1 + $0x144] sm:$0xf]
      %v580 = vld [vmem:[%s1 + $0x148] sm:$0xf]
      %v581 = vld [vmem:[%s1 + $0x14c] sm:$0xf]
      %v582 = vld [vmem:[%s1 + $0x150] sm:$0xf]
      %v583 = vld [vmem:[%s1 + $0x154] sm:$0xf]
      %v584 = vld [vmem:[%s1 + $0x158] sm:$0xf]
      %v585 = vld [vmem:[%s1 + $0x15c] sm:$0xf]
      %v586 = vld [vmem:[%s1 + $0x160] sm:$0xf]
      %v587 = vld [vmem:[%s1 + $0x164] sm:$0xf]
      %v588 = vld [vmem:[%s1 + $0x168] sm:$0xf]
      %v589 = vld [vmem:[%s1 + $0x16c] sm:$0xf]
      %v590 = vld [vmem:[%s1 + $0x170] sm:$0xf]
      %v591 = vld [vmem:[%s1 + $0x174] sm:$0xf]
      %v592 = vld [vmem:[%s1 + $0x178] sm:$0xf]
      %v593 = vld [vmem:[%s1 + $0x17c] sm:$0xf]
      %v594 = vld [vmem:[%s1 + $0x180] sm:$0xf]
      %v595 = vld [vmem:[%s1 + $0x184] sm:$0xf]
      %v596 = vld [vmem:[%s1 + $0x188] sm:$0xf]
      %v597 = vld [vmem:[%s1 + $0x18c] sm:$0xf]
      %v598 = vld [vmem:[%s1 + $0x190] sm:$0xf]
      %v599 = vld [vmem:[%s1 + $0x194] sm:$0xf]
      %v600 = vld [vmem:[%s1 + $0x198] sm:$0xf]
      %v601 = vld [vmem:[%s1 + $0x19c] sm:$0xf]
      %v602 = vld [vmem:[%s1 + $0x1a0] sm:$0xf]
      %v603 = vld [vmem:[%s1 + $0x1a4] sm:$0xf]
      %v604 = vld [vmem:[%s1 + $0x1a8] sm:$0xf]
      %v605 = vld [vmem:[%s1 + $0x1ac] sm:$0xf]
      %v606 = vld [vmem:[%s1 + $0x1b0] sm:$0xf]
      %v607 = vld [vmem:[%s1 + $0x1b4] sm:$0xf]
      %v608 = vld [vmem:[%s1 + $0x1b8] sm:$0xf]
      %v609 = vld [vmem:[%s1 + $0x1bc] sm:$0xf]
      %v610 = vld [vmem:[%s1 + $0x1c0] sm:$0xf]
      %v611 = vld [vmem:[%s1 + $0x1c4] sm:$0xf]
      %v612 = vld [vmem:[%s1 + $0x1c8] sm:$0xf]
      %v613 = vld [vmem:[%s1 + $0x1cc] sm:$0xf]
      %v614 = vld [vmem:[%s1 + $0x1d0] sm:$0xf]
      %v615 = vld [vmem:[%s1 + $0x1d4] sm:$0xf]
      %v616 = vld [vmem:[%s1 + $0x1d8] sm:$0xf]
      %v617 = vld [vmem:[%s1 + $0x1dc] sm:$0xf]
      %v618 = vld [vmem:[%s1 + $0x1e0] sm:$0xf]
      %v619 = vld [vmem:[%s1 + $0x1e4] sm:$0xf]
      %v620 = vld [vmem:[%s1 + $0x1e8] sm:$0xf]
      %v621 = vld [vmem:[%s1 + $0x1ec] sm:$0xf]
      %v622 = vld [vmem:[%s1 + $0x1f0] sm:$0xf]
      %v623 = vld [vmem:[%s1 + $0x1f4] sm:$0xf]
      %v624 = vld [vmem:[%s1 + $0x1f8] sm:$0xf]
      %v625 = vld [vmem:[%s1 + $0x1fc] sm:$0xf]
      %v626 = vld [vmem:[%s1 + $0x200] sm:$0xf]
      %v627 = vld [vmem:[%s1 + $0x204] sm:$0xf]
      %v628 = vld [vmem:[%s1 + $0x208] sm:$0xf]
      %v629 = vld [vmem:[%s1 + $0x20c] sm:$0xf]
      %v630 = vld [vmem:[%s1 + $0x210] sm:$0xf]
      %v631 = vld [vmem:[%s1 + $0x214] sm:$0xf]
      %v632 = vld [vmem:[%s1 + $0x218] sm:$0xf]
      %v633 = vld [vmem:[%s1 + $0x21c] sm:$0xf]
      %v634 = vld [vmem:[%s1 + $0x220] sm:$0xf]
      %v635 = vld [vmem:[%s1 + $0x224] sm:$0xf]
      %v636 = vld [vmem:[%s1 + $0x228] sm:$0xf]
      %v637 = vld [vmem:[%s1 + $0x22c] sm:$0xf]
      %v638 = vld [vmem:[%s1 + $0x230] sm:$0xf]
      %v639 = vld [vmem:[%s1 + $0x234] sm:$0xf]
      %v640 = vld [vmem:[%s1 + $0x238] sm:$0xf]
      %v641 = vld [vmem:[%s1 + $0x23c] sm:$0xf]
      %v642 = vld [vmem:[%s2] sm:$0x1]
      %v644 = vlaneseq
      %v645 = vshrl.u32 %v644, 7
      %v646 = vsub.s32 0, %v645
      %v647 = vrot.slane %v642, %v646
      %v969 = vunpack.c.l.b16 %v178
      %v970 = vunpack.c.h.b16 %v178
      %v971 = vunpack.c.l.b16 %v179
      %v972 = vunpack.c.h.b16 %v179
      %v973 = vunpack.c.l.b16 %v180
      %v974 = vunpack.c.h.b16 %v180
      %v975 = vunpack.c.l.b16 %v181
      %v976 = vunpack.c.h.b16 %v181
      %v977 = vunpack.c.l.b16 %v182
      %v978 = vunpack.c.l.b16 %v183
      %v979 = vunpack.c.h.b16 %v183
      %v980 = vunpack.c.l.b16 %v184
      %v981 = vunpack.c.h.b16 %v184
      %v982 = vunpack.c.l.b16 %v185
      %v983 = vunpack.c.h.b16 %v185
      %v984 = vunpack.c.l.b16 %v186
      %v985 = vunpack.c.h.b16 %v186
      %v986 = vunpack.c.l.b16 %v187
      %v987 = vunpack.c.l.b16 %v188
      %v988 = vunpack.c.h.b16 %v188
      %v989 = vunpack.c.l.b16 %v189
      %v990 = vunpack.c.h.b16 %v189
      %v991 = vunpack.c.l.b16 %v190
      %v992 = vunpack.c.h.b16 %v190
      %v993 = vunpack.c.l.b16 %v191
      %v994 = vunpack.c.h.b16 %v191
      %v995 = vunpack.c.l.b16 %v192
      %v996 = vunpack.c.l.b16 %v193
      %v997 = vunpack.c.h.b16 %v193
      %v998 = vunpack.c.l.b16 %v194
      %v999 = vunpack.c.h.b16 %v194
      %v1000 = vunpack.c.l.b16 %v195
      %v1001 = vunpack.c.h.b16 %v195
      %v1002 = vunpack.c.l.b16 %v196
      %v1003 = vunpack.c.h.b16 %v196
      %v1004 = vunpack.c.l.b16 %v197
      %v1005 = vunpack.c.l.b16 %v198
      %v1006 = vunpack.c.h.b16 %v198
      %v1007 = vunpack.c.l.b16 %v199
      %v1008 = vunpack.c.h.b16 %v199
      %v1009 = vunpack.c.l.b16 %v200
      %v1010 = vunpack.c.h.b16 %v200
      %v1011 = vunpack.c.l.b16 %v201
      %v1012 = vunpack.c.h.b16 %v201
      %v1013 = vunpack.c.l.b16 %v202
      %v1014 = vunpack.c.l.b16 %v203
      %v1015 = vunpack.c.h.b16 %v203
      %v1016 = vunpack.c.l.b16 %v204
      %v1017 = vunpack.c.h.b16 %v204
      %v1018 = vunpack.c.l.b16 %v205
      %v1019 = vunpack.c.h.b16 %v205
      %v1020 = vunpack.c.l.b16 %v206
      %v1021 = vunpack.c.h.b16 %v206
      %v1022 = vunpack.c.l.b16 %v207
      %v1023 = vunpack.c.l.b16 %v208
      %v1024 = vunpack.c.h.b16 %v208
      %v1025 = vunpack.c.l.b16 %v209
      %v1026 = vunpack.c.h.b16 %v209
      %v1027 = vunpack.c.l.b16 %v210
      %v1028 = vunpack.c.h.b16 %v210
      %v1029 = vunpack.c.l.b16 %v211
      %v1030 = vunpack.c.h.b16 %v211
      %v1031 = vunpack.c.l.b16 %v212
      %v1032 = vunpack.c.l.b16 %v213
      %v1033 = vunpack.c.h.b16 %v213
      %v1034 = vunpack.c.l.b16 %v214
      %v1035 = vunpack.c.h.b16 %v214
      %v1036 = vunpack.c.l.b16 %v215
      %v1037 = vunpack.c.h.b16 %v215
      %v1038 = vunpack.c.l.b16 %v216
      %v1039 = vunpack.c.h.b16 %v216
      %v1040 = vunpack.c.l.b16 %v217
      %v1041 = vunpack.c.l.b16 %v218
      %v1042 = vunpack.c.h.b16 %v218
      %v1043 = vunpack.c.l.b16 %v219
      %v1044 = vunpack.c.h.b16 %v219
      %v1045 = vunpack.c.l.b16 %v220
      %v1046 = vunpack.c.h.b16 %v220
      %v1047 = vunpack.c.l.b16 %v221
      %v1048 = vunpack.c.h.b16 %v221
      %v1049 = vunpack.c.l.b16 %v222
      %v1050 = vunpack.c.l.b16 %v223
      %v1051 = vunpack.c.h.b16 %v223
      %v1052 = vunpack.c.l.b16 %v224
      %v1053 = vunpack.c.h.b16 %v224
      %v1054 = vunpack.c.l.b16 %v225
      %v1055 = vunpack.c.h.b16 %v225
      %v1056 = vunpack.c.l.b16 %v226
      %v1057 = vunpack.c.h.b16 %v226
      %v1058 = vunpack.c.l.b16 %v227
      %v1059 = vunpack.c.l.b16 %v228
      %v1060 = vunpack.c.h.b16 %v228
      %v1061 = vunpack.c.l.b16 %v229
      %v1062 = vunpack.c.h.b16 %v229
      %v1063 = vunpack.c.l.b16 %v230
      %v1064 = vunpack.c.h.b16 %v230
      %v1065 = vunpack.c.l.b16 %v231
      %v1066 = vunpack.c.h.b16 %v231
      %v1067 = vunpack.c.l.b16 %v232
      %v1068 = vunpack.c.l.b16 %v233
      %v1069 = vunpack.c.h.b16 %v233
      %v1070 = vunpack.c.l.b16 %v234
      %v1071 = vunpack.c.h.b16 %v234
      %v1072 = vunpack.c.l.b16 %v235
      %v1073 = vunpack.c.h.b16 %v235
      %v1074 = vunpack.c.l.b16 %v236
      %v1075 = vunpack.c.h.b16 %v236
      %v1076 = vunpack.c.l.b16 %v237
      %v1077 = vunpack.c.l.b16 %v238
      %v1078 = vunpack.c.h.b16 %v238
      %v1079 = vunpack.c.l.b16 %v239
      %v1080 = vunpack.c.h.b16 %v239
      %v1081 = vunpack.c.l.b16 %v240
      %v1082 = vunpack.c.h.b16 %v240
      %v1083 = vunpack.c.l.b16 %v241
      %v1084 = vunpack.c.h.b16 %v241
      %v1085 = vunpack.c.l.b16 %v242
      %v1086 = vunpack.c.l.b16 %v243
      %v1087 = vunpack.c.h.b16 %v243
      %v1088 = vunpack.c.l.b16 %v244
      %v1089 = vunpack.c.h.b16 %v244
      %v1090 = vunpack.c.l.b16 %v245
      %v1091 = vunpack.c.h.b16 %v245
      %v1092 = vunpack.c.l.b16 %v246
      %v1093 = vunpack.c.h.b16 %v246
      %v1094 = vunpack.c.l.b16 %v247
      %v1095 = vunpack.c.l.b16 %v248
      %v1096 = vunpack.c.h.b16 %v248
      %v1097 = vunpack.c.l.b16 %v249
      %v1098 = vunpack.c.h.b16 %v249
      %v1099 = vunpack.c.l.b16 %v250
      %v1100 = vunpack.c.h.b16 %v250
      %v1101 = vunpack.c.l.b16 %v251
      %v1102 = vunpack.c.h.b16 %v251
      %v1103 = vunpack.c.l.b16 %v252
      %v1104 = vunpack.c.l.b16 %v253
      %v1105 = vunpack.c.h.b16 %v253
      %v1106 = vunpack.c.l.b16 %v254
      %v1107 = vunpack.c.h.b16 %v254
      %v1108 = vunpack.c.l.b16 %v255
      %v1109 = vunpack.c.h.b16 %v255
      %v1110 = vunpack.c.l.b16 %v256
      %v1111 = vunpack.c.h.b16 %v256
      %v1112 = vunpack.c.l.b16 %v257
      %v1113 = vunpack.c.l.b16 %v258
      %v1114 = vunpack.c.h.b16 %v258
      %v1115 = vunpack.c.l.b16 %v259
      %v1116 = vunpack.c.h.b16 %v259
      %v1117 = vunpack.c.l.b16 %v260
      %v1118 = vunpack.c.h.b16 %v260
      %v1119 = vunpack.c.l.b16 %v261
      %v1120 = vunpack.c.h.b16 %v261
      %v1121 = vunpack.c.l.b16 %v262
      %v1122 = vunpack.c.l.b16 %v263
      %v1123 = vunpack.c.h.b16 %v263
      %v1124 = vunpack.c.l.b16 %v264
      %v1125 = vunpack.c.h.b16 %v264
      %v1126 = vunpack.c.l.b16 %v265
      %v1127 = vunpack.c.h.b16 %v265
      %v1128 = vunpack.c.l.b16 %v266
      %v1129 = vunpack.c.h.b16 %v266
      %v1130 = vunpack.c.l.b16 %v267
      %v1131 = vunpack.c.l.b16 %v268
      %v1132 = vunpack.c.h.b16 %v268
      %v1133 = vunpack.c.l.b16 %v269
      %v1134 = vunpack.c.h.b16 %v269
      %v1135 = vunpack.c.l.b16 %v270
      %v1136 = vunpack.c.h.b16 %v270
      %v1137 = vunpack.c.l.b16 %v271
      %v1138 = vunpack.c.h.b16 %v271
      %v1139 = vunpack.c.l.b16 %v272
      %v1140 = vunpack.c.l.b16 %v273
      %v1141 = vunpack.c.h.b16 %v273
      %v1142 = vunpack.c.l.b16 %v274
      %v1143 = vunpack.c.h.b16 %v274
      %v1144 = vunpack.c.l.b16 %v275
      %v1145 = vunpack.c.h.b16 %v275
      %v1146 = vunpack.c.l.b16 %v276
      %v1147 = vunpack.c.h.b16 %v276
      %v1148 = vunpack.c.l.b16 %v277
      %v1149 = vunpack.c.l.b16 %v278
      %v1150 = vunpack.c.h.b16 %v278
      %v1151 = vunpack.c.l.b16 %v279
      %v1152 = vunpack.c.h.b16 %v279
      %v1153 = vunpack.c.l.b16 %v280
      %v1154 = vunpack.c.h.b16 %v280
      %v1155 = vunpack.c.l.b16 %v281
      %v1156 = vunpack.c.h.b16 %v281
      %v1157 = vunpack.c.l.b16 %v282
      %v1158 = vunpack.c.l.b16 %v283
      %v1159 = vunpack.c.h.b16 %v283
      %v1160 = vunpack.c.l.b16 %v284
      %v1161 = vunpack.c.h.b16 %v284
      %v1162 = vunpack.c.l.b16 %v285
      %v1163 = vunpack.c.h.b16 %v285
      %v1164 = vunpack.c.l.b16 %v286
      %v1165 = vunpack.c.h.b16 %v286
      %v1166 = vunpack.c.l.b16 %v287
      %v1167 = vunpack.c.l.b16 %v288
      %v1168 = vunpack.c.h.b16 %v288
      %v1169 = vunpack.c.l.b16 %v289
      %v1170 = vunpack.c.h.b16 %v289
      %v1171 = vunpack.c.l.b16 %v290
      %v1172 = vunpack.c.h.b16 %v290
      %v1173 = vunpack.c.l.b16 %v291
      %v1174 = vunpack.c.h.b16 %v291
      %v1175 = vunpack.c.l.b16 %v292
      %v1176 = vunpack.c.l.b16 %v293
      %v1177 = vunpack.c.h.b16 %v293
      %v1178 = vunpack.c.l.b16 %v294
      %v1179 = vunpack.c.h.b16 %v294
      %v1180 = vunpack.c.l.b16 %v295
      %v1181 = vunpack.c.h.b16 %v295
      %v1182 = vunpack.c.l.b16 %v296
      %v1183 = vunpack.c.h.b16 %v296
      %v1184 = vunpack.c.l.b16 %v297
      %v1185 = vunpack.c.l.b16 %v298
      %v1186 = vunpack.c.h.b16 %v298
      %v1187 = vunpack.c.l.b16 %v299
      %v1188 = vunpack.c.h.b16 %v299
      %v1189 = vunpack.c.l.b16 %v300
      %v1190 = vunpack.c.h.b16 %v300
      %v1191 = vunpack.c.l.b16 %v301
      %v1192 = vunpack.c.h.b16 %v301
      %v1193 = vunpack.c.l.b16 %v302
      %v1194 = vunpack.c.l.b16 %v303
      %v1195 = vunpack.c.h.b16 %v303
      %v1196 = vunpack.c.l.b16 %v304
      %v1197 = vunpack.c.h.b16 %v304
      %v1198 = vunpack.c.l.b16 %v305
      %v1199 = vunpack.c.h.b16 %v305
      %v1200 = vunpack.c.l.b16 %v306
      %v1201 = vunpack.c.h.b16 %v306
      %v1202 = vunpack.c.l.b16 %v307
      %v1203 = vunpack.c.l.b16 %v308
      %v1204 = vunpack.c.h.b16 %v308
      %v1205 = vunpack.c.l.b16 %v309
      %v1206 = vunpack.c.h.b16 %v309
      %v1207 = vunpack.c.l.b16 %v310
      %v1208 = vunpack.c.h.b16 %v310
      %v1209 = vunpack.c.l.b16 %v311
      %v1210 = vunpack.c.h.b16 %v311
      %v1211 = vunpack.c.l.b16 %v312
      %v1212 = vunpack.c.l.b16 %v313
      %v1213 = vunpack.c.h.b16 %v313
      %v1214 = vunpack.c.l.b16 %v314
      %v1215 = vunpack.c.h.b16 %v314
      %v1216 = vunpack.c.l.b16 %v315
      %v1217 = vunpack.c.h.b16 %v315
      %v1218 = vunpack.c.l.b16 %v316
      %v1219 = vunpack.c.h.b16 %v316
      %v1220 = vunpack.c.l.b16 %v317
      %v1221 = vunpack.c.l.b16 %v318
      %v1222 = vunpack.c.h.b16 %v318
      %v1223 = vunpack.c.l.b16 %v319
      %v1224 = vunpack.c.h.b16 %v319
      %v1225 = vunpack.c.l.b16 %v320
      %v1226 = vunpack.c.h.b16 %v320
      %v1227 = vunpack.c.l.b16 %v321
      %v1228 = vunpack.c.h.b16 %v321
      %v1229 = vunpack.c.l.b16 %v322
      %v1230 = vunpack.c.l.b16 %v323
      %v1231 = vunpack.c.h.b16 %v323
      %v1232 = vunpack.c.l.b16 %v324
      %v1233 = vunpack.c.h.b16 %v324
      %v1234 = vunpack.c.l.b16 %v325
      %v1235 = vunpack.c.h.b16 %v325
      %v1236 = vunpack.c.l.b16 %v326
      %v1237 = vunpack.c.h.b16 %v326
      %v1238 = vunpack.c.l.b16 %v327
      %v1239 = vunpack.c.l.b16 %v328
      %v1240 = vunpack.c.h.b16 %v328
      %v1241 = vunpack.c.l.b16 %v329
      %v1242 = vunpack.c.h.b16 %v329
      %v1243 = vunpack.c.l.b16 %v330
      %v1244 = vunpack.c.h.b16 %v330
      %v1245 = vunpack.c.l.b16 %v331
      %v1246 = vunpack.c.h.b16 %v331
      %v1247 = vunpack.c.l.b16 %v332
      %v1248 = vunpack.c.l.b16 %v333
      %v1249 = vunpack.c.h.b16 %v333
      %v1250 = vunpack.c.l.b16 %v334
      %v1251 = vunpack.c.h.b16 %v334
      %v1252 = vunpack.c.l.b16 %v335
      %v1253 = vunpack.c.h.b16 %v335
      %v1254 = vunpack.c.l.b16 %v336
      %v1255 = vunpack.c.h.b16 %v336
      %v1256 = vunpack.c.l.b16 %v337
      %v1257 = vunpack.c.l.b16 %v338
      %v1258 = vunpack.c.h.b16 %v338
      %v1259 = vunpack.c.l.b16 %v339
      %v1260 = vunpack.c.h.b16 %v339
      %v1261 = vunpack.c.l.b16 %v340
      %v1262 = vunpack.c.h.b16 %v340
      %v1263 = vunpack.c.l.b16 %v341
      %v1264 = vunpack.c.h.b16 %v341
      %v1265 = vunpack.c.l.b16 %v342
      %v1266 = vunpack.c.l.b16 %v343
      %v1267 = vunpack.c.h.b16 %v343
      %v1268 = vunpack.c.l.b16 %v344
      %v1269 = vunpack.c.h.b16 %v344
      %v1270 = vunpack.c.l.b16 %v345
      %v1271 = vunpack.c.h.b16 %v345
      %v1272 = vunpack.c.l.b16 %v346
      %v1273 = vunpack.c.h.b16 %v346
      %v1274 = vunpack.c.l.b16 %v347
      %v1275 = vunpack.c.l.b16 %v348
      %v1276 = vunpack.c.h.b16 %v348
      %v1277 = vunpack.c.l.b16 %v349
      %v1278 = vunpack.c.h.b16 %v349
      %v1279 = vunpack.c.l.b16 %v350
      %v1280 = vunpack.c.h.b16 %v350
      %v1281 = vunpack.c.l.b16 %v351
      %v1282 = vunpack.c.h.b16 %v351
      %v1283 = vunpack.c.l.b16 %v352
      %v1284 = vunpack.c.l.b16 %v353
      %v1285 = vunpack.c.h.b16 %v353
      %v1286 = vunpack.c.l.b16 %v354
      %v1287 = vunpack.c.h.b16 %v354
      %v1288 = vunpack.c.l.b16 %v355
      %v1289 = vunpack.c.h.b16 %v355
      %v1290 = vunpack.c.l.b16 %v356
      %v1291 = vunpack.c.h.b16 %v356
      %v1292 = vunpack.c.l.b16 %v357
      %v1293 = vunpack.c.l.b16 %v358
      %v1294 = vunpack.c.h.b16 %v358
      %v1295 = vunpack.c.l.b16 %v359
      %v1296 = vunpack.c.h.b16 %v359
      %v1297 = vunpack.c.l.b16 %v360
      %v1298 = vunpack.c.h.b16 %v360
      %v1299 = vunpack.c.l.b16 %v361
      %v1300 = vunpack.c.h.b16 %v361
      %v1301 = vunpack.c.l.b16 %v362
      %v1302 = vunpack.c.l.b16 %v363
      %v1303 = vunpack.c.h.b16 %v363
      %v1304 = vunpack.c.l.b16 %v364
      %v1305 = vunpack.c.h.b16 %v364
      %v1306 = vunpack.c.l.b16 %v365
      %v1307 = vunpack.c.h.b16 %v365
      %v1308 = vunpack.c.l.b16 %v366
      %v1309 = vunpack.c.h.b16 %v366
      %v1310 = vunpack.c.l.b16 %v367
      %v1311 = vunpack.c.l.b16 %v368
      %v1312 = vunpack.c.h.b16 %v368
      %v1313 = vunpack.c.l.b16 %v369
      %v1314 = vunpack.c.h.b16 %v369
      %v1315 = vunpack.c.l.b16 %v370
      %v1316 = vunpack.c.h.b16 %v370
      %v1317 = vunpack.c.l.b16 %v371
      %v1318 = vunpack.c.h.b16 %v371
      %v1319 = vunpack.c.l.b16 %v372
      %v1320 = vunpack.c.l.b16 %v373
      %v1321 = vunpack.c.h.b16 %v373
      %v1322 = vunpack.c.l.b16 %v374
      %v1323 = vunpack.c.h.b16 %v374
      %v1324 = vunpack.c.l.b16 %v375
      %v1325 = vunpack.c.h.b16 %v375
      %v1326 = vunpack.c.l.b16 %v376
      %v1327 = vunpack.c.h.b16 %v376
      %v1328 = vunpack.c.l.b16 %v377
      %v1329 = vunpack.c.l.b16 %v378
      %v1330 = vunpack.c.h.b16 %v378
      %v1331 = vunpack.c.l.b16 %v379
      %v1332 = vunpack.c.h.b16 %v379
      %v1333 = vunpack.c.l.b16 %v380
      %v1334 = vunpack.c.h.b16 %v380
      %v1335 = vunpack.c.l.b16 %v381
      %v1336 = vunpack.c.h.b16 %v381
      %v1337 = vunpack.c.l.b16 %v382
      %v1338 = vunpack.c.l.b16 %v383
      %v1339 = vunpack.c.h.b16 %v383
      %v1340 = vunpack.c.l.b16 %v384
      %v1341 = vunpack.c.h.b16 %v384
      %v1342 = vunpack.c.l.b16 %v385
      %v1343 = vunpack.c.h.b16 %v385
      %v1344 = vunpack.c.l.b16 %v386
      %v1345 = vunpack.c.h.b16 %v386
      %v1346 = vunpack.c.l.b16 %v387
      %v1347 = vunpack.c.l.b16 %v388
      %v1348 = vunpack.c.h.b16 %v388
      %v1349 = vunpack.c.l.b16 %v389
      %v1350 = vunpack.c.h.b16 %v389
      %v1351 = vunpack.c.l.b16 %v390
      %v1352 = vunpack.c.h.b16 %v390
      %v1353 = vunpack.c.l.b16 %v391
      %v1354 = vunpack.c.h.b16 %v391
      %v1355 = vunpack.c.l.b16 %v392
      %v1356 = vunpack.c.l.b16 %v393
      %v1357 = vunpack.c.h.b16 %v393
      %v1358 = vunpack.c.l.b16 %v394
      %v1359 = vunpack.c.h.b16 %v394
      %v1360 = vunpack.c.l.b16 %v395
      %v1361 = vunpack.c.h.b16 %v395
      %v1362 = vunpack.c.l.b16 %v396
      %v1363 = vunpack.c.h.b16 %v396
      %v1364 = vunpack.c.l.b16 %v397
      %v1365 = vunpack.c.l.b16 %v398
      %v1366 = vunpack.c.h.b16 %v398
      %v1367 = vunpack.c.l.b16 %v399
      %v1368 = vunpack.c.h.b16 %v399
      %v1369 = vunpack.c.l.b16 %v400
      %v1370 = vunpack.c.h.b16 %v400
      %v1371 = vunpack.c.l.b16 %v401
      %v1372 = vunpack.c.h.b16 %v401
      %v1373 = vunpack.c.l.b16 %v402
      %v1374 = vunpack.c.l.b16 %v403
      %v1375 = vunpack.c.h.b16 %v403
      %v1376 = vunpack.c.l.b16 %v404
      %v1377 = vunpack.c.h.b16 %v404
      %v1378 = vunpack.c.l.b16 %v405
      %v1379 = vunpack.c.h.b16 %v405
      %v1380 = vunpack.c.l.b16 %v406
      %v1381 = vunpack.c.h.b16 %v406
      %v1382 = vunpack.c.l.b16 %v407
      %v1383 = vunpack.c.l.b16 %v408
      %v1384 = vunpack.c.h.b16 %v408
      %v1385 = vunpack.c.l.b16 %v409
      %v1386 = vunpack.c.h.b16 %v409
      %v1387 = vunpack.c.l.b16 %v410
      %v1388 = vunpack.c.h.b16 %v410
      %v1389 = vunpack.c.l.b16 %v411
      %v1390 = vunpack.c.h.b16 %v411
      %v1391 = vunpack.c.l.b16 %v412
      %v1392 = vunpack.c.l.b16 %v413
      %v1393 = vunpack.c.h.b16 %v413
      %v1394 = vunpack.c.l.b16 %v414
      %v1395 = vunpack.c.h.b16 %v414
      %v1396 = vunpack.c.l.b16 %v415
      %v1397 = vunpack.c.h.b16 %v415
      %v1398 = vunpack.c.l.b16 %v416
      %v1399 = vunpack.c.h.b16 %v416
      %v1400 = vunpack.c.l.b16 %v417
      %v1401 = vunpack.c.l.b16 %v418
      %v1402 = vunpack.c.h.b16 %v418
      %v1403 = vunpack.c.l.b16 %v419
      %v1404 = vunpack.c.h.b16 %v419
      %v1405 = vunpack.c.l.b16 %v420
      %v1406 = vunpack.c.h.b16 %v420
      %v1407 = vunpack.c.l.b16 %v421
      %v1408 = vunpack.c.h.b16 %v421
      %v1409 = vunpack.c.l.b16 %v422
      %v1410 = vunpack.c.l.b16 %v423
      %v1411 = vunpack.c.h.b16 %v423
      %v1412 = vunpack.c.l.b16 %v424
      %v1413 = vunpack.c.h.b16 %v424
      %v1414 = vunpack.c.l.b16 %v425
      %v1415 = vunpack.c.h.b16 %v425
      %v1416 = vunpack.c.l.b16 %v426
      %v1417 = vunpack.c.h.b16 %v426
      %v1418 = vunpack.c.l.b16 %v427
      %v1419 = vunpack.c.l.b16 %v428
      %v1420 = vunpack.c.h.b16 %v428
      %v1421 = vunpack.c.l.b16 %v429
      %v1422 = vunpack.c.h.b16 %v429
      %v1423 = vunpack.c.l.b16 %v430
      %v1424 = vunpack.c.h.b16 %v430
      %v1425 = vunpack.c.l.b16 %v431
      %v1426 = vunpack.c.h.b16 %v431
      %v1427 = vunpack.c.l.b16 %v432
      %v1428 = vunpack.c.l.b16 %v433
      %v1429 = vunpack.c.h.b16 %v433
      %v1430 = vunpack.c.l.b16 %v434
      %v1431 = vunpack.c.h.b16 %v434
      %v1432 = vunpack.c.l.b16 %v435
      %v1433 = vunpack.c.h.b16 %v435
      %v1434 = vunpack.c.l.b16 %v436
      %v1435 = vunpack.c.h.b16 %v436
      %v1436 = vunpack.c.l.b16 %v437
      %v1437 = vunpack.c.l.b16 %v438
      %v1438 = vunpack.c.h.b16 %v438
      %v1439 = vunpack.c.l.b16 %v439
      %v1440 = vunpack.c.h.b16 %v439
      %v1441 = vunpack.c.l.b16 %v440
      %v1442 = vunpack.c.h.b16 %v440
      %v1443 = vunpack.c.l.b16 %v441
      %v1444 = vunpack.c.h.b16 %v441
      %v1445 = vunpack.c.l.b16 %v442
      %v1446 = vunpack.c.l.b16 %v443
      %v1447 = vunpack.c.h.b16 %v443
      %v1448 = vunpack.c.l.b16 %v444
      %v1449 = vunpack.c.h.b16 %v444
      %v1450 = vunpack.c.l.b16 %v445
      %v1451 = vunpack.c.h.b16 %v445
      %v1452 = vunpack.c.l.b16 %v446
      %v1453 = vunpack.c.h.b16 %v446
      %v1454 = vunpack.c.l.b16 %v447
      %v1455 = vunpack.c.l.b16 %v448
      %v1456 = vunpack.c.h.b16 %v448
      %v1457 = vunpack.c.l.b16 %v449
      %v1458 = vunpack.c.h.b16 %v449
      %v1459 = vunpack.c.l.b16 %v450
      %v1460 = vunpack.c.h.b16 %v450
      %v1461 = vunpack.c.l.b16 %v451
      %v1462 = vunpack.c.h.b16 %v451
      %v1463 = vunpack.c.l.b16 %v452
      %v1464 = vunpack.c.l.b16 %v453
      %v1465 = vunpack.c.h.b16 %v453
      %v1466 = vunpack.c.l.b16 %v454
      %v1467 = vunpack.c.h.b16 %v454
      %v1468 = vunpack.c.l.b16 %v455
      %v1469 = vunpack.c.h.b16 %v455
      %v1470 = vunpack.c.l.b16 %v456
      %v1471 = vunpack.c.h.b16 %v456
      %v1472 = vunpack.c.l.b16 %v457
      %v1473 = vunpack.c.l.b16 %v458
      %v1474 = vunpack.c.h.b16 %v458
      %v1475 = vunpack.c.l.b16 %v459
      %v1476 = vunpack.c.h.b16 %v459
      %v1477 = vunpack.c.l.b16 %v460
      %v1478 = vunpack.c.h.b16 %v460
      %v1479 = vunpack.c.l.b16 %v461
      %v1480 = vunpack.c.h.b16 %v461
      %v1481 = vunpack.c.l.b16 %v462
      %v1482 = vunpack.c.l.b16 %v463
      %v1483 = vunpack.c.h.b16 %v463
      %v1484 = vunpack.c.l.b16 %v464
      %v1485 = vunpack.c.h.b16 %v464
      %v1486 = vunpack.c.l.b16 %v465
      %v1487 = vunpack.c.h.b16 %v465
      %v1488 = vunpack.c.l.b16 %v466
      %v1489 = vunpack.c.h.b16 %v466
      %v1490 = vunpack.c.l.b16 %v467
      %v1491 = vunpack.c.l.b16 %v468
      %v1492 = vunpack.c.h.b16 %v468
      %v1493 = vunpack.c.l.b16 %v469
      %v1494 = vunpack.c.h.b16 %v469
      %v1495 = vunpack.c.l.b16 %v470
      %v1496 = vunpack.c.h.b16 %v470
      %v1497 = vunpack.c.l.b16 %v471
      %v1498 = vunpack.c.h.b16 %v471
      %v1499 = vunpack.c.l.b16 %v472
      %v1500 = vunpack.c.l.b16 %v473
      %v1501 = vunpack.c.h.b16 %v473
      %v1502 = vunpack.c.l.b16 %v474
      %v1503 = vunpack.c.h.b16 %v474
      %v1504 = vunpack.c.l.b16 %v475
      %v1505 = vunpack.c.h.b16 %v475
      %v1506 = vunpack.c.l.b16 %v476
      %v1507 = vunpack.c.h.b16 %v476
      %v1508 = vunpack.c.l.b16 %v477
      %v1509 = vunpack.c.l.b16 %v478
      %v1510 = vunpack.c.h.b16 %v478
      %v1511 = vunpack.c.l.b16 %v479
      %v1512 = vunpack.c.h.b16 %v479
      %v1513 = vunpack.c.l.b16 %v480
      %v1514 = vunpack.c.h.b16 %v480
      %v1515 = vunpack.c.l.b16 %v481
      %v1516 = vunpack.c.h.b16 %v481
      %v1517 = vunpack.c.l.b16 %v482
      %v1518 = vunpack.c.l.b16 %v483
      %v1519 = vunpack.c.h.b16 %v483
      %v1520 = vunpack.c.l.b16 %v484
      %v1521 = vunpack.c.h.b16 %v484
      %v1522 = vunpack.c.l.b16 %v485
      %v1523 = vunpack.c.h.b16 %v485
      %v1524 = vunpack.c.l.b16 %v486
      %v1525 = vunpack.c.h.b16 %v486
      %v1526 = vunpack.c.l.b16 %v487
      %v1527 = vunpack.c.l.b16 %v488
      %v1528 = vunpack.c.h.b16 %v488
      %v1529 = vunpack.c.l.b16 %v489
      %v1530 = vunpack.c.h.b16 %v489
      %v1531 = vunpack.c.l.b16 %v490
      %v1532 = vunpack.c.h.b16 %v490
      %v1533 = vunpack.c.l.b16 %v491
      %v1534 = vunpack.c.h.b16 %v491
      %v1535 = vunpack.c.l.b16 %v492
      %v1536 = vunpack.c.l.b16 %v493
      %v1537 = vunpack.c.h.b16 %v493
      %v1538 = vunpack.c.l.b16 %v494
      %v1539 = vunpack.c.h.b16 %v494
      %v1540 = vunpack.c.l.b16 %v495
      %v1541 = vunpack.c.h.b16 %v495
      %v1542 = vunpack.c.l.b16 %v496
      %v1543 = vunpack.c.h.b16 %v496
      %v1544 = vunpack.c.l.b16 %v497
      %v1545 = vpack.c.b16 %v978, %v969
      %v1546 = vpack.c.b16 %v979, %v970
      %v1547 = vpack.c.b16 %v980, %v971
      %v1548 = vpack.c.b16 %v981, %v972
      %v1549 = vpack.c.b16 %v982, %v973
      %v1550 = vpack.c.b16 %v983, %v974
      %v1551 = vpack.c.b16 %v984, %v975
      %v1552 = vpack.c.b16 %v985, %v976
      %v1553 = vpack.c.b16 %v986, %v977
      %v1554 = vpack.c.b16 %v996, %v987
      %v1555 = vpack.c.b16 %v997, %v988
      %v1556 = vpack.c.b16 %v998, %v989
      %v1557 = vpack.c.b16 %v999, %v990
      %v1558 = vpack.c.b16 %v1000, %v991
      %v1559 = vpack.c.b16 %v1001, %v992
      %v1560 = vpack.c.b16 %v1002, %v993
      %v1561 = vpack.c.b16 %v1003, %v994
      %v1562 = vpack.c.b16 %v1004, %v995
      %v1563 = vpack.c.b16 %v1014, %v1005
      %v1564 = vpack.c.b16 %v1015, %v1006
      %v1565 = vpack.c.b16 %v1016, %v1007
      %v1566 = vpack.c.b16 %v1017, %v1008
      %v1567 = vpack.c.b16 %v1018, %v1009
      %v1568 = vpack.c.b16 %v1019, %v1010
      %v1569 = vpack.c.b16 %v1020, %v1011
      %v1570 = vpack.c.b16 %v1021, %v1012
      %v1571 = vpack.c.b16 %v1022, %v1013
      %v1572 = vpack.c.b16 %v1032, %v1023
      %v1573 = vpack.c.b16 %v1033, %v1024
      %v1574 = vpack.c.b16 %v1034, %v1025
      %v1575 = vpack.c.b16 %v1035, %v1026
      %v1576 = vpack.c.b16 %v1036, %v1027
      %v1577 = vpack.c.b16 %v1037, %v1028
      %v1578 = vpack.c.b16 %v1038, %v1029
      %v1579 = vpack.c.b16 %v1039, %v1030
      %v1580 = vpack.c.b16 %v1040, %v1031
      %v1581 = vpack.c.b16 %v1050, %v1041
      %v1582 = vpack.c.b16 %v1051, %v1042
      %v1583 = vpack.c.b16 %v1052, %v1043
      %v1584 = vpack.c.b16 %v1053, %v1044
      %v1585 = vpack.c.b16 %v1054, %v1045
      %v1586 = vpack.c.b16 %v1055, %v1046
      %v1587 = vpack.c.b16 %v1056, %v1047
      %v1588 = vpack.c.b16 %v1057, %v1048
      %v1589 = vpack.c.b16 %v1058, %v1049
      %v1590 = vpack.c.b16 %v1068, %v1059
      %v1591 = vpack.c.b16 %v1069, %v1060
      %v1592 = vpack.c.b16 %v1070, %v1061
      %v1593 = vpack.c.b16 %v1071, %v1062
      %v1594 = vpack.c.b16 %v1072, %v1063
      %v1595 = vpack.c.b16 %v1073, %v1064
      %v1596 = vpack.c.b16 %v1074, %v1065
      %v1597 = vpack.c.b16 %v1075, %v1066
      %v1598 = vpack.c.b16 %v1076, %v1067
      %v1599 = vpack.c.b16 %v1086, %v1077
      %v1600 = vpack.c.b16 %v1087, %v1078
      %v1601 = vpack.c.b16 %v1088, %v1079
      %v1602 = vpack.c.b16 %v1089, %v1080
      %v1603 = vpack.c.b16 %v1090, %v1081
      %v1604 = vpack.c.b16 %v1091, %v1082
      %v1605 = vpack.c.b16 %v1092, %v1083
      %v1606 = vpack.c.b16 %v1093, %v1084
      %v1607 = vpack.c.b16 %v1094, %v1085
      %v1608 = vpack.c.b16 %v1104, %v1095
      %v1609 = vpack.c.b16 %v1105, %v1096
      %v1610 = vpack.c.b16 %v1106, %v1097
      %v1611 = vpack.c.b16 %v1107, %v1098
      %v1612 = vpack.c.b16 %v1108, %v1099
      %v1613 = vpack.c.b16 %v1109, %v1100
      %v1614 = vpack.c.b16 %v1110, %v1101
      %v1615 = vpack.c.b16 %v1111, %v1102
      %v1616 = vpack.c.b16 %v1112, %v1103
      %v1617 = vpack.c.b16 %v1122, %v1113
      %v1618 = vpack.c.b16 %v1123, %v1114
      %v1619 = vpack.c.b16 %v1124, %v1115
      %v1620 = vpack.c.b16 %v1125, %v1116
      %v1621 = vpack.c.b16 %v1126, %v1117
      %v1622 = vpack.c.b16 %v1127, %v1118
      %v1623 = vpack.c.b16 %v1128, %v1119
      %v1624 = vpack.c.b16 %v1129, %v1120
      %v1625 = vpack.c.b16 %v1130, %v1121
      %v1626 = vpack.c.b16 %v1140, %v1131
      %v1627 = vpack.c.b16 %v1141, %v1132
      %v1628 = vpack.c.b16 %v1142, %v1133
      %v1629 = vpack.c.b16 %v1143, %v1134
      %v1630 = vpack.c.b16 %v1144, %v1135
      %v1631 = vpack.c.b16 %v1145, %v1136
      %v1632 = vpack.c.b16 %v1146, %v1137
      %v1633 = vpack.c.b16 %v1147, %v1138
      %v1634 = vpack.c.b16 %v1148, %v1139
      %v1635 = vpack.c.b16 %v1158, %v1149
      %v1636 = vpack.c.b16 %v1159, %v1150
      %v1637 = vpack.c.b16 %v1160, %v1151
      %v1638 = vpack.c.b16 %v1161, %v1152
      %v1639 = vpack.c.b16 %v1162, %v1153
      %v1640 = vpack.c.b16 %v1163, %v1154
      %v1641 = vpack.c.b16 %v1164, %v1155
      %v1642 = vpack.c.b16 %v1165, %v1156
      %v1643 = vpack.c.b16 %v1166, %v1157
      %v1644 = vpack.c.b16 %v1176, %v1167
      %v1645 = vpack.c.b16 %v1177, %v1168
      %v1646 = vpack.c.b16 %v1178, %v1169
      %v1647 = vpack.c.b16 %v1179, %v1170
      %v1648 = vpack.c.b16 %v1180, %v1171
      %v1649 = vpack.c.b16 %v1181, %v1172
      %v1650 = vpack.c.b16 %v1182, %v1173
      %v1651 = vpack.c.b16 %v1183, %v1174
      %v1652 = vpack.c.b16 %v1184, %v1175
      %v1653 = vpack.c.b16 %v1194, %v1185
      %v1654 = vpack.c.b16 %v1195, %v1186
      %v1655 = vpack.c.b16 %v1196, %v1187
      %v1656 = vpack.c.b16 %v1197, %v1188
      %v1657 = vpack.c.b16 %v1198, %v1189
      %v1658 = vpack.c.b16 %v1199, %v1190
      %v1659 = vpack.c.b16 %v1200, %v1191
      %v1660 = vpack.c.b16 %v1201, %v1192
      %v1661 = vpack.c.b16 %v1202, %v1193
      %v1662 = vpack.c.b16 %v1212, %v1203
      %v1663 = vpack.c.b16 %v1213, %v1204
      %v1664 = vpack.c.b16 %v1214, %v1205
      %v1665 = vpack.c.b16 %v1215, %v1206
      %v1666 = vpack.c.b16 %v1216, %v1207
      %v1667 = vpack.c.b16 %v1217, %v1208
      %v1668 = vpack.c.b16 %v1218, %v1209
      %v1669 = vpack.c.b16 %v1219, %v1210
      %v1670 = vpack.c.b16 %v1220, %v1211
      %v1671 = vpack.c.b16 %v1230, %v1221
      %v1672 = vpack.c.b16 %v1231, %v1222
      %v1673 = vpack.c.b16 %v1232, %v1223
      %v1674 = vpack.c.b16 %v1233, %v1224
      %v1675 = vpack.c.b16 %v1234, %v1225
      %v1676 = vpack.c.b16 %v1235, %v1226
      %v1677 = vpack.c.b16 %v1236, %v1227
      %v1678 = vpack.c.b16 %v1237, %v1228
      %v1679 = vpack.c.b16 %v1238, %v1229
      %v1680 = vpack.c.b16 %v1248, %v1239
      %v1681 = vpack.c.b16 %v1249, %v1240
      %v1682 = vpack.c.b16 %v1250, %v1241
      %v1683 = vpack.c.b16 %v1251, %v1242
      %v1684 = vpack.c.b16 %v1252, %v1243
      %v1685 = vpack.c.b16 %v1253, %v1244
      %v1686 = vpack.c.b16 %v1254, %v1245
      %v1687 = vpack.c.b16 %v1255, %v1246
      %v1688 = vpack.c.b16 %v1256, %v1247
      %v1689 = vpack.c.b16 %v1266, %v1257
      %v1690 = vpack.c.b16 %v1267, %v1258
      %v1691 = vpack.c.b16 %v1268, %v1259
      %v1692 = vpack.c.b16 %v1269, %v1260
      %v1693 = vpack.c.b16 %v1270, %v1261
      %v1694 = vpack.c.b16 %v1271, %v1262
      %v1695 = vpack.c.b16 %v1272, %v1263
      %v1696 = vpack.c.b16 %v1273, %v1264
      %v1697 = vpack.c.b16 %v1274, %v1265
      %v1698 = vpack.c.b16 %v1284, %v1275
      %v1699 = vpack.c.b16 %v1285, %v1276
      %v1700 = vpack.c.b16 %v1286, %v1277
      %v1701 = vpack.c.b16 %v1287, %v1278
      %v1702 = vpack.c.b16 %v1288, %v1279
      %v1703 = vpack.c.b16 %v1289, %v1280
      %v1704 = vpack.c.b16 %v1290, %v1281
      %v1705 = vpack.c.b16 %v1291, %v1282
      %v1706 = vpack.c.b16 %v1292, %v1283
      %v1707 = vpack.c.b16 %v1302, %v1293
      %v1708 = vpack.c.b16 %v1303, %v1294
      %v1709 = vpack.c.b16 %v1304, %v1295
      %v1710 = vpack.c.b16 %v1305, %v1296
      %v1711 = vpack.c.b16 %v1306, %v1297
      %v1712 = vpack.c.b16 %v1307, %v1298
      %v1713 = vpack.c.b16 %v1308, %v1299
      %v1714 = vpack.c.b16 %v1309, %v1300
      %v1715 = vpack.c.b16 %v1310, %v1301
      %v1716 = vpack.c.b16 %v1320, %v1311
      %v1717 = vpack.c.b16 %v1321, %v1312
      %v1718 = vpack.c.b16 %v1322, %v1313
      %v1719 = vpack.c.b16 %v1323, %v1314
      %v1720 = vpack.c.b16 %v1324, %v1315
      %v1721 = vpack.c.b16 %v1325, %v1316
      %v1722 = vpack.c.b16 %v1326, %v1317
      %v1723 = vpack.c.b16 %v1327, %v1318
      %v1724 = vpack.c.b16 %v1328, %v1319
      %v1725 = vpack.c.b16 %v1338, %v1329
      %v1726 = vpack.c.b16 %v1339, %v1330
      %v1727 = vpack.c.b16 %v1340, %v1331
      %v1728 = vpack.c.b16 %v1341, %v1332
      %v1729 = vpack.c.b16 %v1342, %v1333
      %v1730 = vpack.c.b16 %v1343, %v1334
      %v1731 = vpack.c.b16 %v1344, %v1335
      %v1732 = vpack.c.b16 %v1345, %v1336
      %v1733 = vpack.c.b16 %v1346, %v1337
      %v1734 = vpack.c.b16 %v1356, %v1347
      %v1735 = vpack.c.b16 %v1357, %v1348
      %v1736 = vpack.c.b16 %v1358, %v1349
      %v1737 = vpack.c.b16 %v1359, %v1350
      %v1738 = vpack.c.b16 %v1360, %v1351
      %v1739 = vpack.c.b16 %v1361, %v1352
      %v1740 = vpack.c.b16 %v1362, %v1353
      %v1741 = vpack.c.b16 %v1363, %v1354
      %v1742 = vpack.c.b16 %v1364, %v1355
      %v1743 = vpack.c.b16 %v1374, %v1365
      %v1744 = vpack.c.b16 %v1375, %v1366
      %v1745 = vpack.c.b16 %v1376, %v1367
      %v1746 = vpack.c.b16 %v1377, %v1368
      %v1747 = vpack.c.b16 %v1378, %v1369
      %v1748 = vpack.c.b16 %v1379, %v1370
      %v1749 = vpack.c.b16 %v1380, %v1371
      %v1750 = vpack.c.b16 %v1381, %v1372
      %v1751 = vpack.c.b16 %v1382, %v1373
      %v1752 = vpack.c.b16 %v1392, %v1383
      %v1753 = vpack.c.b16 %v1393, %v1384
      %v1754 = vpack.c.b16 %v1394, %v1385
      %v1755 = vpack.c.b16 %v1395, %v1386
      %v1756 = vpack.c.b16 %v1396, %v1387
      %v1757 = vpack.c.b16 %v1397, %v1388
      %v1758 = vpack.c.b16 %v1398, %v1389
      %v1759 = vpack.c.b16 %v1399, %v1390
      %v1760 = vpack.c.b16 %v1400, %v1391
      %v1761 = vpack.c.b16 %v1410, %v1401
      %v1762 = vpack.c.b16 %v1411, %v1402
      %v1763 = vpack.c.b16 %v1412, %v1403
      %v1764 = vpack.c.b16 %v1413, %v1404
      %v1765 = vpack.c.b16 %v1414, %v1405
      %v1766 = vpack.c.b16 %v1415, %v1406
      %v1767 = vpack.c.b16 %v1416, %v1407
      %v1768 = vpack.c.b16 %v1417, %v1408
      %v1769 = vpack.c.b16 %v1418, %v1409
      %v1770 = vpack.c.b16 %v1428, %v1419
      %v1771 = vpack.c.b16 %v1429, %v1420
      %v1772 = vpack.c.b16 %v1430, %v1421
      %v1773 = vpack.c.b16 %v1431, %v1422
      %v1774 = vpack.c.b16 %v1432, %v1423
      %v1775 = vpack.c.b16 %v1433, %v1424
      %v1776 = vpack.c.b16 %v1434, %v1425
      %v1777 = vpack.c.b16 %v1435, %v1426
      %v1778 = vpack.c.b16 %v1436, %v1427
      %v1779 = vpack.c.b16 %v1446, %v1437
      %v1780 = vpack.c.b16 %v1447, %v1438
      %v1781 = vpack.c.b16 %v1448, %v1439
      %v1782 = vpack.c.b16 %v1449, %v1440
      %v1783 = vpack.c.b16 %v1450, %v1441
      %v1784 = vpack.c.b16 %v1451, %v1442
      %v1785 = vpack.c.b16 %v1452, %v1443
      %v1786 = vpack.c.b16 %v1453, %v1444
      %v1787 = vpack.c.b16 %v1454, %v1445
      %v1788 = vpack.c.b16 %v1464, %v1455
      %v1789 = vpack.c.b16 %v1465, %v1456
      %v1790 = vpack.c.b16 %v1466, %v1457
      %v1791 = vpack.c.b16 %v1467, %v1458
      %v1792 = vpack.c.b16 %v1468, %v1459
      %v1793 = vpack.c.b16 %v1469, %v1460
      %v1794 = vpack.c.b16 %v1470, %v1461
      %v1795 = vpack.c.b16 %v1471, %v1462
      %v1796 = vpack.c.b16 %v1472, %v1463
      %v1797 = vpack.c.b16 %v1482, %v1473
      %v1798 = vpack.c.b16 %v1483, %v1474
      %v1799 = vpack.c.b16 %v1484, %v1475
      %v1800 = vpack.c.b16 %v1485, %v1476
      %v1801 = vpack.c.b16 %v1486, %v1477
      %v1802 = vpack.c.b16 %v1487, %v1478
      %v1803 = vpack.c.b16 %v1488, %v1479
      %v1804 = vpack.c.b16 %v1489, %v1480
      %v1805 = vpack.c.b16 %v1490, %v1481
      %v1806 = vpack.c.b16 %v1500, %v1491
      %v1807 = vpack.c.b16 %v1501, %v1492
      %v1808 = vpack.c.b16 %v1502, %v1493
      %v1809 = vpack.c.b16 %v1503, %v1494
      %v1810 = vpack.c.b16 %v1504, %v1495
      %v1811 = vpack.c.b16 %v1505, %v1496
      %v1812 = vpack.c.b16 %v1506, %v1497
      %v1813 = vpack.c.b16 %v1507, %v1498
      %v1814 = vpack.c.b16 %v1508, %v1499
      %v1815 = vpack.c.b16 %v1518, %v1509
      %v1816 = vpack.c.b16 %v1519, %v1510
      %v1817 = vpack.c.b16 %v1520, %v1511
      %v1818 = vpack.c.b16 %v1521, %v1512
      %v1819 = vpack.c.b16 %v1522, %v1513
      %v1820 = vpack.c.b16 %v1523, %v1514
      %v1821 = vpack.c.b16 %v1524, %v1515
      %v1822 = vpack.c.b16 %v1525, %v1516
      %v1823 = vpack.c.b16 %v1526, %v1517
      %v1824 = vpack.c.b16 %v1536, %v1527
      %v1825 = vpack.c.b16 %v1537, %v1528
      %v1826 = vpack.c.b16 %v1538, %v1529
      %v1827 = vpack.c.b16 %v1539, %v1530
      %v1828 = vpack.c.b16 %v1540, %v1531
      %v1829 = vpack.c.b16 %v1541, %v1532
      %v1830 = vpack.c.b16 %v1542, %v1533
      %v1831 = vpack.c.b16 %v1543, %v1534
      %v1832 = vpack.c.b16 %v1544, %v1535
      %v2265 = vunpack.c.l.b16 %v498
      %v2266 = vunpack.c.l.b16 %v499
      %v2267 = vunpack.c.l.b16 %v500
      %v2268 = vunpack.c.l.b16 %v501
      %v2269 = vunpack.c.l.b16 %v502
      %v2270 = vunpack.c.l.b16 %v503
      %v2271 = vunpack.c.l.b16 %v504
      %v2272 = vunpack.c.l.b16 %v505
      %v2273 = vunpack.c.l.b16 %v506
      %v2274 = vunpack.c.l.b16 %v507
      %v2275 = vunpack.c.l.b16 %v508
      %v2276 = vunpack.c.l.b16 %v509
      %v2277 = vunpack.c.l.b16 %v510
      %v2278 = vunpack.c.l.b16 %v511
      %v2279 = vunpack.c.l.b16 %v512
      %v2280 = vunpack.c.l.b16 %v513
      %v2281 = vunpack.c.l.b16 %v514
      %v2282 = vunpack.c.l.b16 %v515
      %v2283 = vunpack.c.l.b16 %v516
      %v2284 = vunpack.c.l.b16 %v517
      %v2285 = vunpack.c.l.b16 %v518
      %v2286 = vunpack.c.l.b16 %v519
      %v2287 = vunpack.c.l.b16 %v520
      %v2288 = vunpack.c.l.b16 %v521
      %v2289 = vunpack.c.l.b16 %v522
      %v2290 = vunpack.c.l.b16 %v523
      %v2291 = vunpack.c.l.b16 %v524
      %v2292 = vunpack.c.l.b16 %v525
      %v2293 = vunpack.c.l.b16 %v526
      %v2294 = vunpack.c.l.b16 %v527
      %v2295 = vunpack.c.l.b16 %v528
      %v2296 = vunpack.c.l.b16 %v529
      %v2297 = vunpack.c.l.b16 %v530
      %v2298 = vunpack.c.l.b16 %v531
      %v2299 = vunpack.c.l.b16 %v532
      %v2300 = vunpack.c.l.b16 %v533
      %v2301 = vunpack.c.l.b16 %v534
      %v2302 = vunpack.c.l.b16 %v535
      %v2303 = vunpack.c.l.b16 %v536
      %v2304 = vunpack.c.l.b16 %v537
      %v2305 = vunpack.c.l.b16 %v538
      %v2306 = vunpack.c.l.b16 %v539
      %v2307 = vunpack.c.l.b16 %v540
      %v2308 = vunpack.c.l.b16 %v541
      %v2309 = vunpack.c.l.b16 %v542
      %v2310 = vunpack.c.l.b16 %v543
      %v2311 = vunpack.c.l.b16 %v544
      %v2312 = vunpack.c.l.b16 %v545
      %v2313 = vunpack.c.l.b16 %v546
      %v2314 = vunpack.c.l.b16 %v547
      %v2315 = vunpack.c.l.b16 %v548
      %v2316 = vunpack.c.l.b16 %v549
      %v2317 = vunpack.c.l.b16 %v550
      %v2318 = vunpack.c.l.b16 %v551
      %v2319 = vunpack.c.l.b16 %v552
      %v2320 = vunpack.c.l.b16 %v553
      %v2321 = vunpack.c.l.b16 %v554
      %v2322 = vunpack.c.l.b16 %v555
      %v2323 = vunpack.c.l.b16 %v556
      %v2324 = vunpack.c.l.b16 %v557
      %v2325 = vunpack.c.l.b16 %v558
      %v2326 = vunpack.c.l.b16 %v559
      %v2327 = vunpack.c.l.b16 %v560
      %v2328 = vunpack.c.l.b16 %v561
      %v2329 = vunpack.c.l.b16 %v562
      %v2330 = vunpack.c.l.b16 %v563
      %v2331 = vunpack.c.l.b16 %v564
      %v2332 = vunpack.c.l.b16 %v565
      %v2333 = vunpack.c.l.b16 %v566
      %v2334 = vunpack.c.l.b16 %v567
      %v2335 = vunpack.c.l.b16 %v568
      %v2336 = vunpack.c.l.b16 %v569
      %v2337 = vunpack.c.l.b16 %v570
      %v2338 = vunpack.c.l.b16 %v571
      %v2339 = vunpack.c.l.b16 %v572
      %v2340 = vunpack.c.l.b16 %v573
      %v2341 = vunpack.c.l.b16 %v574
      %v2342 = vunpack.c.l.b16 %v575
      %v2343 = vunpack.c.l.b16 %v576
      %v2344 = vunpack.c.l.b16 %v577
      %v2345 = vunpack.c.l.b16 %v578
      %v2346 = vunpack.c.l.b16 %v579
      %v2347 = vunpack.c.l.b16 %v580
      %v2348 = vunpack.c.l.b16 %v581
      %v2349 = vunpack.c.l.b16 %v582
      %v2350 = vunpack.c.l.b16 %v583
      %v2351 = vunpack.c.l.b16 %v584
      %v2352 = vunpack.c.l.b16 %v585
      %v2353 = vunpack.c.l.b16 %v586
      %v2354 = vunpack.c.l.b16 %v587
      %v2355 = vunpack.c.l.b16 %v588
      %v2356 = vunpack.c.l.b16 %v589
      %v2357 = vunpack.c.l.b16 %v590
      %v2358 = vunpack.c.l.b16 %v591
      %v2359 = vunpack.c.l.b16 %v592
      %v2360 = vunpack.c.l.b16 %v593
      %v2361 = vunpack.c.l.b16 %v594
      %v2362 = vunpack.c.l.b16 %v595
      %v2363 = vunpack.c.l.b16 %v596
      %v2364 = vunpack.c.l.b16 %v597
      %v2365 = vunpack.c.l.b16 %v598
      %v2366 = vunpack.c.l.b16 %v599
      %v2367 = vunpack.c.l.b16 %v600
      %v2368 = vunpack.c.l.b16 %v601
      %v2369 = vunpack.c.l.b16 %v602
      %v2370 = vunpack.c.l.b16 %v603
      %v2371 = vunpack.c.l.b16 %v604
      %v2372 = vunpack.c.l.b16 %v605
      %v2373 = vunpack.c.l.b16 %v606
      %v2374 = vunpack.c.l.b16 %v607
      %v2375 = vunpack.c.l.b16 %v608
      %v2376 = vunpack.c.l.b16 %v609
      %v2377 = vunpack.c.l.b16 %v610
      %v2378 = vunpack.c.l.b16 %v611
      %v2379 = vunpack.c.l.b16 %v612
      %v2380 = vunpack.c.l.b16 %v613
      %v2381 = vunpack.c.l.b16 %v614
      %v2382 = vunpack.c.l.b16 %v615
      %v2383 = vunpack.c.l.b16 %v616
      %v2384 = vunpack.c.l.b16 %v617
      %v2385 = vunpack.c.l.b16 %v618
      %v2386 = vunpack.c.l.b16 %v619
      %v2387 = vunpack.c.l.b16 %v620
      %v2388 = vunpack.c.l.b16 %v621
      %v2389 = vunpack.c.l.b16 %v622
      %v2390 = vunpack.c.l.b16 %v623
      %v2391 = vunpack.c.l.b16 %v624
      %v2392 = vunpack.c.l.b16 %v625
      %v2393 = vunpack.c.l.b16 %v626
      %v2394 = vunpack.c.l.b16 %v627
      %v2395 = vunpack.c.l.b16 %v628
      %v2396 = vunpack.c.l.b16 %v629
      %v2397 = vunpack.c.l.b16 %v630
      %v2398 = vunpack.c.l.b16 %v631
      %v2399 = vunpack.c.l.b16 %v632
      %v2400 = vunpack.c.l.b16 %v633
      %v2401 = vunpack.c.l.b16 %v634
      %v2402 = vunpack.c.l.b16 %v635
      %v2403 = vunpack.c.l.b16 %v636
      %v2404 = vunpack.c.l.b16 %v637
      %v2405 = vunpack.c.l.b16 %v638
      %v2406 = vunpack.c.l.b16 %v639
      %v2407 = vunpack.c.l.b16 %v640
      %v2408 = vunpack.c.l.b16 %v641
      %v2409 = vpack.c.b16 %v2266, %v2265
      %v2410 = vpack.c.b16 %v2268, %v2267
      %v2411 = vpack.c.b16 %v2270, %v2269
      %v2412 = vpack.c.b16 %v2272, %v2271
      %v2413 = vpack.c.b16 %v2274, %v2273
      %v2414 = vpack.c.b16 %v2276, %v2275
      %v2415 = vpack.c.b16 %v2278, %v2277
      %v2416 = vpack.c.b16 %v2280, %v2279
      %v2417 = vpack.c.b16 %v2282, %v2281
      %v2418 = vpack.c.b16 %v2284, %v2283
      %v2419 = vpack.c.b16 %v2286, %v2285
      %v2420 = vpack.c.b16 %v2288, %v2287
      %v2421 = vpack.c.b16 %v2290, %v2289
      %v2422 = vpack.c.b16 %v2292, %v2291
      %v2423 = vpack.c.b16 %v2294, %v2293
      %v2424 = vpack.c.b16 %v2296, %v2295
      %v2425 = vpack.c.b16 %v2298, %v2297
      %v2426 = vpack.c.b16 %v2300, %v2299
      %v2427 = vpack.c.b16 %v2302, %v2301
      %v2428 = vpack.c.b16 %v2304, %v2303
      %v2429 = vpack.c.b16 %v2306, %v2305
      %v2430 = vpack.c.b16 %v2308, %v2307
      %v2431 = vpack.c.b16 %v2310, %v2309
      %v2432 = vpack.c.b16 %v2312, %v2311
      %v2433 = vpack.c.b16 %v2314, %v2313
      %v2434 = vpack.c.b16 %v2316, %v2315
      %v2435 = vpack.c.b16 %v2318, %v2317
      %v2436 = vpack.c.b16 %v2320, %v2319
      %v2437 = vpack.c.b16 %v2322, %v2321
      %v2438 = vpack.c.b16 %v2324, %v2323
      %v2439 = vpack.c.b16 %v2326, %v2325
      %v2440 = vpack.c.b16 %v2328, %v2327
      %v2441 = vpack.c.b16 %v2330, %v2329
      %v2442 = vpack.c.b16 %v2332, %v2331
      %v2443 = vpack.c.b16 %v2334, %v2333
      %v2444 = vpack.c.b16 %v2336, %v2335
      %v2445 = vpack.c.b16 %v2338, %v2337
      %v2446 = vpack.c.b16 %v2340, %v2339
      %v2447 = vpack.c.b16 %v2342, %v2341
      %v2448 = vpack.c.b16 %v2344, %v2343
      %v2449 = vpack.c.b16 %v2346, %v2345
      %v2450 = vpack.c.b16 %v2348, %v2347
      %v2451 = vpack.c.b16 %v2350, %v2349
      %v2452 = vpack.c.b16 %v2352, %v2351
      %v2453 = vpack.c.b16 %v2354, %v2353
      %v2454 = vpack.c.b16 %v2356, %v2355
      %v2455 = vpack.c.b16 %v2358, %v2357
      %v2456 = vpack.c.b16 %v2360, %v2359
      %v2457 = vpack.c.b16 %v2362, %v2361
      %v2458 = vpack.c.b16 %v2364, %v2363
      %v2459 = vpack.c.b16 %v2366, %v2365
      %v2460 = vpack.c.b16 %v2368, %v2367
      %v2461 = vpack.c.b16 %v2370, %v2369
      %v2462 = vpack.c.b16 %v2372, %v2371
      %v2463 = vpack.c.b16 %v2374, %v2373
      %v2464 = vpack.c.b16 %v2376, %v2375
      %v2465 = vpack.c.b16 %v2378, %v2377
      %v2466 = vpack.c.b16 %v2380, %v2379
      %v2467 = vpack.c.b16 %v2382, %v2381
      %v2468 = vpack.c.b16 %v2384, %v2383
      %v2469 = vpack.c.b16 %v2386, %v2385
      %v2470 = vpack.c.b16 %v2388, %v2387
      %v2471 = vpack.c.b16 %v2390, %v2389
      %v2472 = vpack.c.b16 %v2392, %v2391
      %v2473 = vpack.c.b16 %v2394, %v2393
      %v2474 = vpack.c.b16 %v2396, %v2395
      %v2475 = vpack.c.b16 %v2398, %v2397
      %v2476 = vpack.c.b16 %v2400, %v2399
      %v2477 = vpack.c.b16 %v2402, %v2401
      %v2478 = vpack.c.b16 %v2404, %v2403
      %v2479 = vpack.c.b16 %v2406, %v2405
      %v2480 = vpack.c.b16 %v2408, %v2407
      %2553 = vmatprep.subr.bf16.mxu0 0
      %2554 = vmatpush1.bf16.msra.mxu0 %v2409
      %2555 = vmatprep.subr.bf16.mxu0 0
      %2556 = vmatpush1.bf16.msra.mxu0 %v2410
      %2557 = vmatprep.subr.bf16.mxu0 0
      %2558 = vmatpush1.bf16.msra.mxu0 %v2411
      %2559 = vmatprep.subr.bf16.mxu0 0
      %2560 = vmatpush1.bf16.msra.mxu0 %v2412
      %2561 = vmatprep.subr.bf16.mxu0 0
      %2562 = vmatpush1.bf16.msra.mxu0 %v2413
      %2563 = vmatprep.subr.bf16.mxu0 0
      %2564 = vmatpush1.bf16.msra.mxu0 %v2414
      %2565 = vmatprep.subr.bf16.mxu0 0
      %2566 = vmatpush1.bf16.msra.mxu0 %v2415
      %2567 = vmatprep.subr.bf16.mxu0 0
      %2568 = vmatpush1.bf16.msra.mxu0 %v2416
      %2569 = vmatprep.subr.bf16.mxu0 0
      %2570 = vmatpush1.bf16.msra.mxu0 %v2417
      %2571 = vmatprep.subr.bf16.mxu0 0
      %2572 = vmatpush1.bf16.msra.mxu0 %v2418
      %2573 = vmatprep.subr.bf16.mxu0 0
      %2574 = vmatpush1.bf16.msra.mxu0 %v2419
      %2575 = vmatprep.subr.bf16.mxu0 0
      %2576 = vmatpush1.bf16.msra.mxu0 %v2420
      %2577 = vmatprep.subr.bf16.mxu0 0
      %2578 = vmatpush1.bf16.msra.mxu0 %v2421
      %2579 = vmatprep.subr.bf16.mxu0 0
      %2580 = vmatpush1.bf16.msra.mxu0 %v2422
      %2581 = vmatprep.subr.bf16.mxu0 0
      %2582 = vmatpush1.bf16.msra.mxu0 %v2423
      %2583 = vmatprep.subr.bf16.mxu0 0
      %2584 = vmatpush1.bf16.msra.mxu0 %v2424
      %2585 = vmatprep.mubr.bf16.mxu0 %v1546
      %2586 = vmatmul.mubr.bf16.gmra.mrb[0].mxu0 %v1545
      %v2587 = vpop.f32.mrb[0].mxu0
      %v2588 = vadd.f32 %v647, %v2587
      %v2589 = vpop.f32.mrb[0].mxu0
      %v2590 = vpop.f32.mrb[0].mxu0
      %v2591 = vadd.f32 %v647, %v2590
      %v2592 = vpop.f32.mrb[0].mxu0
      %2593 = vmatprep.mubr.bf16.mxu0 %v1555
      %2594 = vmatmul.mubr.bf16.gmra.mrb[0].mxu0 %v1554
      %v2595 = vpop.f32.mrb[0].mxu0
      %v2596 = vadd.f32 %v647, %v2595
      %v2597 = vpop.f32.mrb[0].mxu0
      %v2598 = vpop.f32.mrb[0].mxu0
      %v2599 = vadd.f32 %v647, %v2598
      %v2600 = vpop.f32.mrb[0].mxu0
      %2601 = vmatprep.mubr.bf16.mxu0 %v1564
      %2602 = vmatmul.mubr.bf16.gmra.mrb[0].mxu0 %v1563
      %v2603 = vpop.f32.mrb[0].mxu0
      %v2604 = vadd.f32 %v647, %v2603
      %v2605 = vpop.f32.mrb[0].mxu0
      %v2606 = vpop.f32.mrb[0].mxu0
      %v2607 = vadd.f32 %v647, %v2606
      %v2608 = vpop.f32.mrb[0].mxu0
      %2609 = vmatprep.mubr.bf16.mxu0 %v1573
      %2610 = vmatmul.mubr.bf16.gmra.mrb[0].mxu0 %v1572
      %v2611 = vpop.f32.mrb[0].mxu0
      %v2612 = vadd.f32 %v647, %v2611
      %v2613 = vpop.f32.mrb[0].mxu0
      %v2614 = vpop.f32.mrb[0].mxu0
      %v2615 = vadd.f32 %v647, %v2614
      %v2616 = vpop.f32.mrb[0].mxu0
      %2617 = vmatprep.mubr.bf16.mxu0 %v1582
      %2618 = vmatmul.mubr.bf16.gmra.mrb[0].mxu0 %v1581
      %v2619 = vpop.f32.mrb[0].mxu0
      %v2620 = vadd.f32 %v647, %v2619
      %v2621 = vpop.f32.mrb[0].mxu0
      %v2622 = vpop.f32.mrb[0].mxu0
      %v2623 = vadd.f32 %v647, %v2622
      %v2624 = vpop.f32.mrb[0].mxu0
      %2625 = vmatprep.mubr.bf16.mxu0 %v1591
      %2626 = vmatmul.mubr.bf16.gmra.mrb[0].mxu0 %v1590
      %v2627 = vpop.f32.mrb[0].mxu0
      %v2628 = vadd.f32 %v647, %v2627
      %v2629 = vpop.f32.mrb[0].mxu0
      %v2630 = vpop.f32.mrb[0].mxu0
      %v2631 = vadd.f32 %v647, %v2630
      %v2632 = vpop.f32.mrb[0].mxu0
      %2633 = vmatprep.mubr.bf16.mxu0 %v1600
      %2634 = vmatmul.mubr.bf16.gmra.mrb[0].mxu0 %v1599
      %v2635 = vpop.f32.mrb[0].mxu0
      %v2636 = vadd.f32 %v647, %v2635
      %v2637 = vpop.f32.mrb[0].mxu0
      %v2638 = vpop.f32.mrb[0].mxu0
      %v2639 = vadd.f32 %v647, %v2638
      %v2640 = vpop.f32.mrb[0].mxu0
      %2641 = vmatprep.mubr.bf16.mxu0 %v1609
      %2642 = vmatmul.mubr.bf16.gmra.mrb[0].mxu0 %v1608
      %v2643 = vpop.f32.mrb[0].mxu0
      %v2644 = vadd.f32 %v647, %v2643
      %v2645 = vpop.f32.mrb[0].mxu0
      %v2646 = vpop.f32.mrb[0].mxu0
      %v2647 = vadd.f32 %v647, %v2646
      %v2648 = vpop.f32.mrb[0].mxu0
      %2649 = vmatprep.mubr.bf16.mxu0 %v1618
      %2650 = vmatmul.mubr.bf16.gmra.mrb[0].mxu0 %v1617
      %v2651 = vpop.f32.mrb[0].mxu0
      %v2652 = vadd.f32 %v647, %v2651
      %v2653 = vpop.f32.mrb[0].mxu0
      %v2654 = vpop.f32.mrb[0].mxu0
      %v2655 = vadd.f32 %v647, %v2654
      %v2656 = vpop.f32.mrb[0].mxu0
      %2657 = vmatprep.mubr.bf16.mxu0 %v1627
      %2658 = vmatmul.mubr.bf16.gmra.mrb[0].mxu0 %v1626
      %v2659 = vpop.f32.mrb[0].mxu0
      %v2660 = vadd.f32 %v647, %v2659
      %v2661 = vpop.f32.mrb[0].mxu0
      %v2662 = vpop.f32.mrb[0].mxu0
      %v2663 = vadd.f32 %v647, %v2662
      %v2664 = vpop.f32.mrb[0].mxu0
      %2665 = vmatprep.mubr.bf16.mxu0 %v1636
      %2666 = vmatmul.mubr.bf16.gmra.mrb[0].mxu0 %v1635
      %v2667 = vpop.f32.mrb[0].mxu0
      %v2668 = vadd.f32 %v647, %v2667
      %v2669 = vpop.f32.mrb[0].mxu0
      %v2670 = vpop.f32.mrb[0].mxu0
      %v2671 = vadd.f32 %v647, %v2670
      %v2672 = vpop.f32.mrb[0].mxu0
      %2673 = vmatprep.mubr.bf16.mxu0 %v1645
      %2674 = vmatmul.mubr.bf16.gmra.mrb[0].mxu0 %v1644
      %v2675 = vpop.f32.mrb[0].mxu0
      %v2676 = vadd.f32 %v647, %v2675
      %v2677 = vpop.f32.mrb[0].mxu0
      %v2678 = vpop.f32.mrb[0].mxu0
      %v2679 = vadd.f32 %v647, %v2678
      %v2680 = vpop.f32.mrb[0].mxu0
      %2681 = vmatprep.mubr.bf16.mxu0 %v1654
      %2682 = vmatmul.mubr.bf16.gmra.mrb[0].mxu0 %v1653
      %v2683 = vpop.f32.mrb[0].mxu0
      %v2684 = vadd.f32 %v647, %v2683
      %v2685 = vpop.f32.mrb[0].mxu0
      %v2686 = vpop.f32.mrb[0].mxu0
      %v2687 = vadd.f32 %v647, %v2686
      %v2688 = vpop.f32.mrb[0].mxu0
      %2689 = vmatprep.mubr.bf16.mxu0 %v1663
      %2690 = vmatmul.mubr.bf16.gmra.mrb[0].mxu0 %v1662
      %v2691 = vpop.f32.mrb[0].mxu0
      %v2692 = vadd.f32 %v647, %v2691
      %v2693 = vpop.f32.mrb[0].mxu0
      %v2694 = vpop.f32.mrb[0].mxu0
      %v2695 = vadd.f32 %v647, %v2694
      %v2696 = vpop.f32.mrb[0].mxu0
      %2697 = vmatprep.mubr.bf16.mxu0 %v1672
      %2698 = vmatmul.mubr.bf16.gmra.mrb[0].mxu0 %v1671
      %v2699 = vpop.f32.mrb[0].mxu0
      %v2700 = vadd.f32 %v647, %v2699
      %v2701 = vpop.f32.mrb[0].mxu0
      %v2702 = vpop.f32.mrb[0].mxu0
      %v2703 = vadd.f32 %v647, %v2702
      %v2704 = vpop.f32.mrb[0].mxu0
      %2705 = vmatprep.mubr.bf16.mxu0 %v1681
      %2706 = vmatmul.mubr.bf16.gmra.mrb[0].mxu0 %v1680
      %v2707 = vpop.f32.mrb[0].mxu0
      %v2708 = vadd.f32 %v647, %v2707
      %v2709 = vpop.f32.mrb[0].mxu0
      %v2710 = vpop.f32.mrb[0].mxu0
      %v2711 = vadd.f32 %v647, %v2710
      %v2712 = vpop.f32.mrb[0].mxu0
      %2713 = vmatprep.mubr.bf16.mxu0 %v1690
      %2714 = vmatmul.mubr.bf16.gmra.mrb[0].mxu0 %v1689
      %v2715 = vpop.f32.mrb[0].mxu0
      %v2716 = vadd.f32 %v647, %v2715
      %v2717 = vpop.f32.mrb[0].mxu0
      %v2718 = vpop.f32.mrb[0].mxu0
      %v2719 = vadd.f32 %v647, %v2718
      %v2720 = vpop.f32.mrb[0].mxu0
      %2721 = vmatprep.mubr.bf16.mxu0 %v1699
      %2722 = vmatmul.mubr.bf16.gmra.mrb[0].mxu0 %v1698
      %v2723 = vpop.f32.mrb[0].mxu0
      %v2724 = vadd.f32 %v647, %v2723
      %v2725 = vpop.f32.mrb[0].mxu0
      %v2726 = vpop.f32.mrb[0].mxu0
      %v2727 = vadd.f32 %v647, %v2726
      %v2728 = vpop.f32.mrb[0].mxu0
      %2729 = vmatprep.mubr.bf16.mxu0 %v1708
      %2730 = vmatmul.mubr.bf16.gmra.mrb[0].mxu0 %v1707
      %v2731 = vpop.f32.mrb[0].mxu0
      %v2732 = vadd.f32 %v647, %v2731
      %v2733 = vpop.f32.mrb[0].mxu0
      %v2734 = vpop.f32.mrb[0].mxu0
      %v2735 = vadd.f32 %v647, %v2734
      %v2736 = vpop.f32.mrb[0].mxu0
      %2737 = vmatprep.mubr.bf16.mxu0 %v1717
      %2738 = vmatmul.mubr.bf16.gmra.mrb[0].mxu0 %v1716
      %v2739 = vpop.f32.mrb[0].mxu0
      %v2740 = vadd.f32 %v647, %v2739
      %v2741 = vpop.f32.mrb[0].mxu0
      %v2742 = vpop.f32.mrb[0].mxu0
      %v2743 = vadd.f32 %v647, %v2742
      %v2744 = vpop.f32.mrb[0].mxu0
      %2745 = vmatprep.mubr.bf16.mxu0 %v1726
      %2746 = vmatmul.mubr.bf16.gmra.mrb[0].mxu0 %v1725
      %v2747 = vpop.f32.mrb[0].mxu0
      %v2748 = vadd.f32 %v647, %v2747
      %v2749 = vpop.f32.mrb[0].mxu0
      %v2750 = vpop.f32.mrb[0].mxu0
      %v2751 = vadd.f32 %v647, %v2750
      %v2752 = vpop.f32.mrb[0].mxu0
      %2753 = vmatprep.mubr.bf16.mxu0 %v1735
      %2754 = vmatmul.mubr.bf16.gmra.mrb[0].mxu0 %v1734
      %v2755 = vpop.f32.mrb[0].mxu0
      %v2756 = vadd.f32 %v647, %v2755
      %v2757 = vpop.f32.mrb[0].mxu0
      %v2758 = vpop.f32.mrb[0].mxu0
      %v2759 = vadd.f32 %v647, %v2758
      %v2760 = vpop.f32.mrb[0].mxu0
      %2761 = vmatprep.mubr.bf16.mxu0 %v1744
      %2762 = vmatmul.mubr.bf16.gmra.mrb[0].mxu0 %v1743
      %v2763 = vpop.f32.mrb[0].mxu0
      %v2764 = vadd.f32 %v647, %v2763
      %v2765 = vpop.f32.mrb[0].mxu0
      %v2766 = vpop.f32.mrb[0].mxu0
      %v2767 = vadd.f32 %v647, %v2766
      %v2768 = vpop.f32.mrb[0].mxu0
      %2769 = vmatprep.mubr.bf16.mxu0 %v1753
      %2770 = vmatmul.mubr.bf16.gmra.mrb[0].mxu0 %v1752
      %v2771 = vpop.f32.mrb[0].mxu0
      %v2772 = vadd.f32 %v647, %v2771
      %v2773 = vpop.f32.mrb[0].mxu0
      %v2774 = vpop.f32.mrb[0].mxu0
      %v2775 = vadd.f32 %v647, %v2774
      %v2776 = vpop.f32.mrb[0].mxu0
      %2777 = vmatprep.mubr.bf16.mxu0 %v1762
      %2778 = vmatmul.mubr.bf16.gmra.mrb[0].mxu0 %v1761
      %v2779 = vpop.f32.mrb[0].mxu0
      %v2780 = vadd.f32 %v647, %v2779
      %v2781 = vpop.f32.mrb[0].mxu0
      %v2782 = vpop.f32.mrb[0].mxu0
      %v2783 = vadd.f32 %v647, %v2782
      %v2784 = vpop.f32.mrb[0].mxu0
      %2785 = vmatprep.mubr.bf16.mxu0 %v1771
      %2786 = vmatmul.mubr.bf16.gmra.mrb[0].mxu0 %v1770
      %v2787 = vpop.f32.mrb[0].mxu0
      %v2788 = vadd.f32 %v647, %v2787
      %v2789 = vpop.f32.mrb[0].mxu0
      %v2790 = vpop.f32.mrb[0].mxu0
      %v2791 = vadd.f32 %v647, %v2790
      %v2792 = vpop.f32.mrb[0].mxu0
      %2793 = vmatprep.mubr.bf16.mxu0 %v1780
      %2794 = vmatmul.mubr.bf16.gmra.mrb[0].mxu0 %v1779
      %v2795 = vpop.f32.mrb[0].mxu0
      %v2796 = vadd.f32 %v647, %v2795
      %v2797 = vpop.f32.mrb[0].mxu0
      %v2798 = vpop.f32.mrb[0].mxu0
      %v2799 = vadd.f32 %v647, %v2798
      %v2800 = vpop.f32.mrb[0].mxu0
      %2801 = vmatprep.mubr.bf16.mxu0 %v1789
      %2802 = vmatmul.mubr.bf16.gmra.mrb[0].mxu0 %v1788
      %v2803 = vpop.f32.mrb[0].mxu0
      %v2804 = vadd.f32 %v647, %v2803
      %v2805 = vpop.f32.mrb[0].mxu0
      %v2806 = vpop.f32.mrb[0].mxu0
      %v2807 = vadd.f32 %v647, %v2806
      %v2808 = vpop.f32.mrb[0].mxu0
      %2809 = vmatprep.mubr.bf16.mxu0 %v1798
      %2810 = vmatmul.mubr.bf16.gmra.mrb[0].mxu0 %v1797
      %v2811 = vpop.f32.mrb[0].mxu0
      %v2812 = vadd.f32 %v647, %v2811
      %v2813 = vpop.f32.mrb[0].mxu0
      %v2814 = vpop.f32.mrb[0].mxu0
      %v2815 = vadd.f32 %v647, %v2814
      %v2816 = vpop.f32.mrb[0].mxu0
      %2817 = vmatprep.mubr.bf16.mxu0 %v1807
      %2818 = vmatmul.mubr.bf16.gmra.mrb[0].mxu0 %v1806
      %v2819 = vpop.f32.mrb[0].mxu0
      %v2820 = vadd.f32 %v647, %v2819
      %v2821 = vpop.f32.mrb[0].mxu0
      %v2822 = vpop.f32.mrb[0].mxu0
      %v2823 = vadd.f32 %v647, %v2822
      %v2824 = vpop.f32.mrb[0].mxu0
      %2825 = vmatprep.mubr.bf16.mxu0 %v1816
      %2826 = vmatmul.mubr.bf16.gmra.mrb[0].mxu0 %v1815
      %v2827 = vpop.f32.mrb[0].mxu0
      %v2828 = vadd.f32 %v647, %v2827
      %v2829 = vpop.f32.mrb[0].mxu0
      %v2830 = vpop.f32.mrb[0].mxu0
      %v2831 = vadd.f32 %v647, %v2830
      %v2832 = vpop.f32.mrb[0].mxu0
      %2833 = vmatprep.mubr.bf16.mxu0 %v1825
      %2834 = vmatmul.mubr.bf16.gmra.mrb[0].mxu0 %v1824
      %v2835 = vpop.f32.mrb[0].mxu0
      %v2836 = vadd.f32 %v647, %v2835
      %v2837 = vpop.f32.mrb[0].mxu0
      %v2838 = vpop.f32.mrb[0].mxu0
      %v2839 = vadd.f32 %v647, %v2838
      %v2840 = vpop.f32.mrb[0].mxu0
      %2841 = vdwg.mxu0
      %2842 = vmatprep.subr.bf16.mxu0 0
      %2843 = vmatpush1.bf16.msra.mxu0 %v2425
      %2844 = vmatprep.subr.bf16.mxu0 0
      %2845 = vmatpush1.bf16.msra.mxu0 %v2426
      %2846 = vmatprep.subr.bf16.mxu0 0
      %2847 = vmatpush1.bf16.msra.mxu0 %v2427
      %2848 = vmatprep.subr.bf16.mxu0 0
      %2849 = vmatpush1.bf16.msra.mxu0 %v2428
      %2850 = vmatprep.subr.bf16.mxu0 0
      %2851 = vmatpush1.bf16.msra.mxu0 %v2429
      %2852 = vmatprep.subr.bf16.mxu0 0
      %2853 = vmatpush1.bf16.msra.mxu0 %v2430
      %2854 = vmatprep.subr.bf16.mxu0 0
      %2855 = vmatpush1.bf16.msra.mxu0 %v2431
      %2856 = vmatprep.subr.bf16.mxu0 0
      %2857 = vmatpush1.bf16.msra.mxu0 %v2432
      %2858 = vmatprep.subr.bf16.mxu0 0
      %2859 = vmatpush1.bf16.msra.mxu0 %v2433
      %2860 = vmatprep.subr.bf16.mxu0 0
      %2861 = vmatpush1.bf16.msra.mxu0 %v2434
      %2862 = vmatprep.subr.bf16.mxu0 0
      %2863 = vmatpush1.bf16.msra.mxu0 %v2435
      %2864 = vmatprep.subr.bf16.mxu0 0
      %2865 = vmatpush1.bf16.msra.mxu0 %v2436
      %2866 = vmatprep.subr.bf16.mxu0 0
      %2867 = vmatpush1.bf16.msra.mxu0 %v2437
      %2868 = vmatprep.subr.bf16.mxu0 0
      %2869 = vmatpush1.bf16.msra.mxu0 %v2438
      %2870 = vmatprep.subr.bf16.mxu0 0
      %2871 = vmatpush1.bf16.msra.mxu0 %v2439
      %2872 = vmatprep.subr.bf16.mxu0 0
      %2873 = vmatpush1.bf16.msra.mxu0 %v2440
      %2874 = vmatprep.mubr.bf16.mxu0 %v1548
      %2875 = vmatmul.mubr.bf16.gmra.mrb[0].mxu0 %v1547
      %v2876 = vpop.f32.mrb[0].mxu0
      %v2877 = vadd.f32 %v2588, %v2876
      %v2878 = vpop.f32.mrb[0].mxu0
      %v2879 = vpop.f32.mrb[0].mxu0
      %v2880 = vadd.f32 %v2591, %v2879
      %v2881 = vpop.f32.mrb[0].mxu0
      %2882 = vmatprep.mubr.bf16.mxu0 %v1557
      %2883 = vmatmul.mubr.bf16.gmra.mrb[0].mxu0 %v1556
      %v2884 = vpop.f32.mrb[0].mxu0
      %v2885 = vadd.f32 %v2596, %v2884
      %v2886 = vpop.f32.mrb[0].mxu0
      %v2887 = vpop.f32.mrb[0].mxu0
      %v2888 = vadd.f32 %v2599, %v2887
      %v2889 = vpop.f32.mrb[0].mxu0
      %2890 = vmatprep.mubr.bf16.mxu0 %v1566
      %2891 = vmatmul.mubr.bf16.gmra.mrb[0].mxu0 %v1565
      %v2892 = vpop.f32.mrb[0].mxu0
      %v2893 = vadd.f32 %v2604, %v2892
      %v2894 = vpop.f32.mrb[0].mxu0
      %v2895 = vpop.f32.mrb[0].mxu0
      %v2896 = vadd.f32 %v2607, %v2895
      %v2897 = vpop.f32.mrb[0].mxu0
      %2898 = vmatprep.mubr.bf16.mxu0 %v1575
      %2899 = vmatmul.mubr.bf16.gmra.mrb[0].mxu0 %v1574
      %v2900 = vpop.f32.mrb[0].mxu0
      %v2901 = vadd.f32 %v2612, %v2900
      %v2902 = vpop.f32.mrb[0].mxu0
      %v2903 = vpop.f32.mrb[0].mxu0
      %v2904 = vadd.f32 %v2615, %v2903
      %v2905 = vpop.f32.mrb[0].mxu0
      %2906 = vmatprep.mubr.bf16.mxu0 %v1584
      %2907 = vmatmul.mubr.bf16.gmra.mrb[0].mxu0 %v1583
      %v2908 = vpop.f32.mrb[0].mxu0
      %v2909 = vadd.f32 %v2620, %v2908
      %v2910 = vpop.f32.mrb[0].mxu0
      %v2911 = vpop.f32.mrb[0].mxu0
      %v2912 = vadd.f32 %v2623, %v2911
      %v2913 = vpop.f32.mrb[0].mxu0
      %2914 = vmatprep.mubr.bf16.mxu0 %v1593
      %2915 = vmatmul.mubr.bf16.gmra.mrb[0].mxu0 %v1592
      %v2916 = vpop.f32.mrb[0].mxu0
      %v2917 = vadd.f32 %v2628, %v2916
      %v2918 = vpop.f32.mrb[0].mxu0
      %v2919 = vpop.f32.mrb[0].mxu0
      %v2920 = vadd.f32 %v2631, %v2919
      %v2921 = vpop.f32.mrb[0].mxu0
      %2922 = vmatprep.mubr.bf16.mxu0 %v1602
      %2923 = vmatmul.mubr.bf16.gmra.mrb[0].mxu0 %v1601
      %v2924 = vpop.f32.mrb[0].mxu0
      %v2925 = vadd.f32 %v2636, %v2924
      %v2926 = vpop.f32.mrb[0].mxu0
      %v2927 = vpop.f32.mrb[0].mxu0
      %v2928 = vadd.f32 %v2639, %v2927
      %v2929 = vpop.f32.mrb[0].mxu0
      %2930 = vmatprep.mubr.bf16.mxu0 %v1611
      %2931 = vmatmul.mubr.bf16.gmra.mrb[0].mxu0 %v1610
      %v2932 = vpop.f32.mrb[0].mxu0
      %v2933 = vadd.f32 %v2644, %v2932
      %v2934 = vpop.f32.mrb[0].mxu0
      %v2935 = vpop.f32.mrb[0].mxu0
      %v2936 = vadd.f32 %v2647, %v2935
      %v2937 = vpop.f32.mrb[0].mxu0
      %2938 = vmatprep.mubr.bf16.mxu0 %v1620
      %2939 = vmatmul.mubr.bf16.gmra.mrb[0].mxu0 %v1619
      %v2940 = vpop.f32.mrb[0].mxu0
      %v2941 = vadd.f32 %v2652, %v2940
      %v2942 = vpop.f32.mrb[0].mxu0
      %v2943 = vpop.f32.mrb[0].mxu0
      %v2944 = vadd.f32 %v2655, %v2943
      %v2945 = vpop.f32.mrb[0].mxu0
      %2946 = vmatprep.mubr.bf16.mxu0 %v1629
      %2947 = vmatmul.mubr.bf16.gmra.mrb[0].mxu0 %v1628
      %v2948 = vpop.f32.mrb[0].mxu0
      %v2949 = vadd.f32 %v2660, %v2948
      %v2950 = vpop.f32.mrb[0].mxu0
      %v2951 = vpop.f32.mrb[0].mxu0
      %v2952 = vadd.f32 %v2663, %v2951
      %v2953 = vpop.f32.mrb[0].mxu0
      %2954 = vmatprep.mubr.bf16.mxu0 %v1638
      %2955 = vmatmul.mubr.bf16.gmra.mrb[0].mxu0 %v1637
      %v2956 = vpop.f32.mrb[0].mxu0
      %v2957 = vadd.f32 %v2668, %v2956
      %v2958 = vpop.f32.mrb[0].mxu0
      %v2959 = vpop.f32.mrb[0].mxu0
      %v2960 = vadd.f32 %v2671, %v2959
      %v2961 = vpop.f32.mrb[0].mxu0
      %2962 = vmatprep.mubr.bf16.mxu0 %v1647
      %2963 = vmatmul.mubr.bf16.gmra.mrb[0].mxu0 %v1646
      %v2964 = vpop.f32.mrb[0].mxu0
      %v2965 = vadd.f32 %v2676, %v2964
      %v2966 = vpop.f32.mrb[0].mxu0
      %v2967 = vpop.f32.mrb[0].mxu0
      %v2968 = vadd.f32 %v2679, %v2967
      %v2969 = vpop.f32.mrb[0].mxu0
      %2970 = vmatprep.mubr.bf16.mxu0 %v1656
      %2971 = vmatmul.mubr.bf16.gmra.mrb[0].mxu0 %v1655
      %v2972 = vpop.f32.mrb[0].mxu0
      %v2973 = vadd.f32 %v2684, %v2972
      %v2974 = vpop.f32.mrb[0].mxu0
      %v2975 = vpop.f32.mrb[0].mxu0
      %v2976 = vadd.f32 %v2687, %v2975
      %v2977 = vpop.f32.mrb[0].mxu0
      %2978 = vmatprep.mubr.bf16.mxu0 %v1665
      %2979 = vmatmul.mubr.bf16.gmra.mrb[0].mxu0 %v1664
      %v2980 = vpop.f32.mrb[0].mxu0
      %v2981 = vadd.f32 %v2692, %v2980
      %v2982 = vpop.f32.mrb[0].mxu0
      %v2983 = vpop.f32.mrb[0].mxu0
      %v2984 = vadd.f32 %v2695, %v2983
      %v2985 = vpop.f32.mrb[0].mxu0
      %2986 = vmatprep.mubr.bf16.mxu0 %v1674
      %2987 = vmatmul.mubr.bf16.gmra.mrb[0].mxu0 %v1673
      %v2988 = vpop.f32.mrb[0].mxu0
      %v2989 = vadd.f32 %v2700, %v2988
      %v2990 = vpop.f32.mrb[0].mxu0
      %v2991 = vpop.f32.mrb[0].mxu0
      %v2992 = vadd.f32 %v2703, %v2991
      %v2993 = vpop.f32.mrb[0].mxu0
      %2994 = vmatprep.mubr.bf16.mxu0 %v1683
      %2995 = vmatmul.mubr.bf16.gmra.mrb[0].mxu0 %v1682
      %v2996 = vpop.f32.mrb[0].mxu0
      %v2997 = vadd.f32 %v2708, %v2996
      %v2998 = vpop.f32.mrb[0].mxu0
      %v2999 = vpop.f32.mrb[0].mxu0
      %v3000 = vadd.f32 %v2711, %v2999
      %v3001 = vpop.f32.mrb[0].mxu0
      %3002 = vmatprep.mubr.bf16.mxu0 %v1692
      %3003 = vmatmul.mubr.bf16.gmra.mrb[0].mxu0 %v1691
      %v3004 = vpop.f32.mrb[0].mxu0
      %v3005 = vadd.f32 %v2716, %v3004
      %v3006 = vpop.f32.mrb[0].mxu0
      %v3007 = vpop.f32.mrb[0].mxu0
      %v3008 = vadd.f32 %v2719, %v3007
      %v3009 = vpop.f32.mrb[0].mxu0
      %3010 = vmatprep.mubr.bf16.mxu0 %v1701
      %3011 = vmatmul.mubr.bf16.gmra.mrb[0].mxu0 %v1700
      %v3012 = vpop.f32.mrb[0].mxu0
      %v3013 = vadd.f32 %v2724, %v3012
      %v3014 = vpop.f32.mrb[0].mxu0
      %v3015 = vpop.f32.mrb[0].mxu0
      %v3016 = vadd.f32 %v2727, %v3015
      %v3017 = vpop.f32.mrb[0].mxu0
      %3018 = vmatprep.mubr.bf16.mxu0 %v1710
      %3019 = vmatmul.mubr.bf16.gmra.mrb[0].mxu0 %v1709
      %v3020 = vpop.f32.mrb[0].mxu0
      %v3021 = vadd.f32 %v2732, %v3020
      %v3022 = vpop.f32.mrb[0].mxu0
      %v3023 = vpop.f32.mrb[0].mxu0
      %v3024 = vadd.f32 %v2735, %v3023
      %v3025 = vpop.f32.mrb[0].mxu0
      %3026 = vmatprep.mubr.bf16.mxu0 %v1719
      %3027 = vmatmul.mubr.bf16.gmra.mrb[0].mxu0 %v1718
      %v3028 = vpop.f32.mrb[0].mxu0
      %v3029 = vadd.f32 %v2740, %v3028
      %v3030 = vpop.f32.mrb[0].mxu0
      %v3031 = vpop.f32.mrb[0].mxu0
      %v3032 = vadd.f32 %v2743, %v3031
      %v3033 = vpop.f32.mrb[0].mxu0
      %3034 = vmatprep.mubr.bf16.mxu0 %v1728
      %3035 = vmatmul.mubr.bf16.gmra.mrb[0].mxu0 %v1727
      %v3036 = vpop.f32.mrb[0].mxu0
      %v3037 = vadd.f32 %v2748, %v3036
      %v3038 = vpop.f32.mrb[0].mxu0
      %v3039 = vpop.f32.mrb[0].mxu0
      %v3040 = vadd.f32 %v2751, %v3039
      %v3041 = vpop.f32.mrb[0].mxu0
      %3042 = vmatprep.mubr.bf16.mxu0 %v1737
      %3043 = vmatmul.mubr.bf16.gmra.mrb[0].mxu0 %v1736
      %v3044 = vpop.f32.mrb[0].mxu0
      %v3045 = vadd.f32 %v2756, %v3044
      %v3046 = vpop.f32.mrb[0].mxu0
      %v3047 = vpop.f32.mrb[0].mxu0
      %v3048 = vadd.f32 %v2759, %v3047
      %v3049 = vpop.f32.mrb[0].mxu0
      %3050 = vmatprep.mubr.bf16.mxu0 %v1746
      %3051 = vmatmul.mubr.bf16.gmra.mrb[0].mxu0 %v1745
      %v3052 = vpop.f32.mrb[0].mxu0
      %v3053 = vadd.f32 %v2764, %v3052
      %v3054 = vpop.f32.mrb[0].mxu0
      %v3055 = vpop.f32.mrb[0].mxu0
      %v3056 = vadd.f32 %v2767, %v3055
      %v3057 = vpop.f32.mrb[0].mxu0
      %3058 = vmatprep.mubr.bf16.mxu0 %v1755
      %3059 = vmatmul.mubr.bf16.gmra.mrb[0].mxu0 %v1754
      %v3060 = vpop.f32.mrb[0].mxu0
      %v3061 = vadd.f32 %v2772, %v3060
      %v3062 = vpop.f32.mrb[0].mxu0
      %v3063 = vpop.f32.mrb[0].mxu0
      %v3064 = vadd.f32 %v2775, %v3063
      %v3065 = vpop.f32.mrb[0].mxu0
      %3066 = vmatprep.mubr.bf16.mxu0 %v1764
      %3067 = vmatmul.mubr.bf16.gmra.mrb[0].mxu0 %v1763
      %v3068 = vpop.f32.mrb[0].mxu0
      %v3069 = vadd.f32 %v2780, %v3068
      %v3070 = vpop.f32.mrb[0].mxu0
      %v3071 = vpop.f32.mrb[0].mxu0
      %v3072 = vadd.f32 %v2783, %v3071
      %v3073 = vpop.f32.mrb[0].mxu0
      %3074 = vmatprep.mubr.bf16.mxu0 %v1773
      %3075 = vmatmul.mubr.bf16.gmra.mrb[0].mxu0 %v1772
      %v3076 = vpop.f32.mrb[0].mxu0
      %v3077 = vadd.f32 %v2788, %v3076
      %v3078 = vpop.f32.mrb[0].mxu0
      %v3079 = vpop.f32.mrb[0].mxu0
      %v3080 = vadd.f32 %v2791, %v3079
      %v3081 = vpop.f32.mrb[0].mxu0
      %3082 = vmatprep.mubr.bf16.mxu0 %v1782
      %3083 = vmatmul.mubr.bf16.gmra.mrb[0].mxu0 %v1781
      %v3084 = vpop.f32.mrb[0].mxu0
      %v3085 = vadd.f32 %v2796, %v3084
      %v3086 = vpop.f32.mrb[0].mxu0
      %v3087 = vpop.f32.mrb[0].mxu0
      %v3088 = vadd.f32 %v2799, %v3087
      %v3089 = vpop.f32.mrb[0].mxu0
      %3090 = vmatprep.mubr.bf16.mxu0 %v1791
      %3091 = vmatmul.mubr.bf16.gmra.mrb[0].mxu0 %v1790
      %v3092 = vpop.f32.mrb[0].mxu0
      %v3093 = vadd.f32 %v2804, %v3092
      %v3094 = vpop.f32.mrb[0].mxu0
      %v3095 = vpop.f32.mrb[0].mxu0
      %v3096 = vadd.f32 %v2807, %v3095
      %v3097 = vpop.f32.mrb[0].mxu0
      %3098 = vmatprep.mubr.bf16.mxu0 %v1800
      %3099 = vmatmul.mubr.bf16.gmra.mrb[0].mxu0 %v1799
      %v3100 = vpop.f32.mrb[0].mxu0
      %v3101 = vadd.f32 %v2812, %v3100
      %v3102 = vpop.f32.mrb[0].mxu0
      %v3103 = vpop.f32.mrb[0].mxu0
      %v3104 = vadd.f32 %v2815, %v3103
      %v3105 = vpop.f32.mrb[0].mxu0
      %3106 = vmatprep.mubr.bf16.mxu0 %v1809
      %3107 = vmatmul.mubr.bf16.gmra.mrb[0].mxu0 %v1808
      %v3108 = vpop.f32.mrb[0].mxu0
      %v3109 = vadd.f32 %v2820, %v3108
      %v3110 = vpop.f32.mrb[0].mxu0
      %v3111 = vpop.f32.mrb[0].mxu0
      %v3112 = vadd.f32 %v2823, %v3111
      %v3113 = vpop.f32.mrb[0].mxu0
      %3114 = vmatprep.mubr.bf16.mxu0 %v1818
      %3115 = vmatmul.mubr.bf16.gmra.mrb[0].mxu0 %v1817
      %v3116 = vpop.f32.mrb[0].mxu0
      %v3117 = vadd.f32 %v2828, %v3116
      %v3118 = vpop.f32.mrb[0].mxu0
      %v3119 = vpop.f32.mrb[0].mxu0
      %v3120 = vadd.f32 %v2831, %v3119
      %v3121 = vpop.f32.mrb[0].mxu0
      %3122 = vmatprep.mubr.bf16.mxu0 %v1827
      %3123 = vmatmul.mubr.bf16.gmra.mrb[0].mxu0 %v1826
      %v3124 = vpop.f32.mrb[0].mxu0
      %v3125 = vadd.f32 %v2836, %v3124
      %v3126 = vpop.f32.mrb[0].mxu0
      %v3127 = vpop.f32.mrb[0].mxu0
      %v3128 = vadd.f32 %v2839, %v3127
      %v3129 = vpop.f32.mrb[0].mxu0
      %3130 = vdwg.mxu0
      %3131 = vmatprep.subr.bf16.mxu0 0
      %3132 = vmatpush1.bf16.msra.mxu0 %v2441
      %3133 = vmatprep.subr.bf16.mxu0 0
      %3134 = vmatpush1.bf16.msra.mxu0 %v2442
      %3135 = vmatprep.subr.bf16.mxu0 0
      %3136 = vmatpush1.bf16.msra.mxu0 %v2443
      %3137 = vmatprep.subr.bf16.mxu0 0
      %3138 = vmatpush1.bf16.msra.mxu0 %v2444
      %3139 = vmatprep.subr.bf16.mxu0 0
      %3140 = vmatpush1.bf16.msra.mxu0 %v2445
      %3141 = vmatprep.subr.bf16.mxu0 0
      %3142 = vmatpush1.bf16.msra.mxu0 %v2446
      %3143 = vmatprep.subr.bf16.mxu0 0
      %3144 = vmatpush1.bf16.msra.mxu0 %v2447
      %3145 = vmatprep.subr.bf16.mxu0 0
      %3146 = vmatpush1.bf16.msra.mxu0 %v2448
      %3147 = vmatprep.subr.bf16.mxu0 0
      %3148 = vmatpush1.bf16.msra.mxu0 %v2449
      %3149 = vmatprep.subr.bf16.mxu0 0
      %3150 = vmatpush1.bf16.msra.mxu0 %v2450
      %3151 = vmatprep.subr.bf16.mxu0 0
      %3152 = vmatpush1.bf16.msra.mxu0 %v2451
      %3153 = vmatprep.subr.bf16.mxu0 0
      %3154 = vmatpush1.bf16.msra.mxu0 %v2452
      %3155 = vmatprep.subr.bf16.mxu0 0
      %3156 = vmatpush1.bf16.msra.mxu0 %v2453
      %3157 = vmatprep.subr.bf16.mxu0 0
      %3158 = vmatpush1.bf16.msra.mxu0 %v2454
      %3159 = vmatprep.subr.bf16.mxu0 0
      %3160 = vmatpush1.bf16.msra.mxu0 %v2455
      %3161 = vmatprep.subr.bf16.mxu0 0
      %3162 = vmatpush1.bf16.msra.mxu0 %v2456
      %3163 = vmatprep.mubr.bf16.mxu0 %v1550
      %3164 = vmatmul.mubr.bf16.gmra.mrb[0].mxu0 %v1549
      %v3165 = vpop.f32.mrb[0].mxu0
      %v3166 = vadd.f32 %v2877, %v3165
      %v3167 = vpop.f32.mrb[0].mxu0
      %v3168 = vpop.f32.mrb[0].mxu0
      %v3169 = vadd.f32 %v2880, %v3168
      %v3170 = vpop.f32.mrb[0].mxu0
      %3171 = vmatprep.mubr.bf16.mxu0 %v1559
      %3172 = vmatmul.mubr.bf16.gmra.mrb[0].mxu0 %v1558
      %v3173 = vpop.f32.mrb[0].mxu0
      %v3174 = vadd.f32 %v2885, %v3173
      %v3175 = vpop.f32.mrb[0].mxu0
      %v3176 = vpop.f32.mrb[0].mxu0
      %v3177 = vadd.f32 %v2888, %v3176
      %v3178 = vpop.f32.mrb[0].mxu0
      %3179 = vmatprep.mubr.bf16.mxu0 %v1568
      %3180 = vmatmul.mubr.bf16.gmra.mrb[0].mxu0 %v1567
      %v3181 = vpop.f32.mrb[0].mxu0
      %v3182 = vadd.f32 %v2893, %v3181
      %v3183 = vpop.f32.mrb[0].mxu0
      %v3184 = vpop.f32.mrb[0].mxu0
      %v3185 = vadd.f32 %v2896, %v3184
      %v3186 = vpop.f32.mrb[0].mxu0
      %3187 = vmatprep.mubr.bf16.mxu0 %v1577
      %3188 = vmatmul.mubr.bf16.gmra.mrb[0].mxu0 %v1576
      %v3189 = vpop.f32.mrb[0].mxu0
      %v3190 = vadd.f32 %v2901, %v3189
      %v3191 = vpop.f32.mrb[0].mxu0
      %v3192 = vpop.f32.mrb[0].mxu0
      %v3193 = vadd.f32 %v2904, %v3192
      %v3194 = vpop.f32.mrb[0].mxu0
      %3195 = vmatprep.mubr.bf16.mxu0 %v1586
      %3196 = vmatmul.mubr.bf16.gmra.mrb[0].mxu0 %v1585
      %v3197 = vpop.f32.mrb[0].mxu0
      %v3198 = vadd.f32 %v2909, %v3197
      %v3199 = vpop.f32.mrb[0].mxu0
      %v3200 = vpop.f32.mrb[0].mxu0
      %v3201 = vadd.f32 %v2912, %v3200
      %v3202 = vpop.f32.mrb[0].mxu0
      %3203 = vmatprep.mubr.bf16.mxu0 %v1595
      %3204 = vmatmul.mubr.bf16.gmra.mrb[0].mxu0 %v1594
      %v3205 = vpop.f32.mrb[0].mxu0
      %v3206 = vadd.f32 %v2917, %v3205
      %v3207 = vpop.f32.mrb[0].mxu0
      %v3208 = vpop.f32.mrb[0].mxu0
      %v3209 = vadd.f32 %v2920, %v3208
      %v3210 = vpop.f32.mrb[0].mxu0
      %3211 = vmatprep.mubr.bf16.mxu0 %v1604
      %3212 = vmatmul.mubr.bf16.gmra.mrb[0].mxu0 %v1603
      %v3213 = vpop.f32.mrb[0].mxu0
      %v3214 = vadd.f32 %v2925, %v3213
      %v3215 = vpop.f32.mrb[0].mxu0
      %v3216 = vpop.f32.mrb[0].mxu0
      %v3217 = vadd.f32 %v2928, %v3216
      %v3218 = vpop.f32.mrb[0].mxu0
      %3219 = vmatprep.mubr.bf16.mxu0 %v1613
      %3220 = vmatmul.mubr.bf16.gmra.mrb[0].mxu0 %v1612
      %v3221 = vpop.f32.mrb[0].mxu0
      %v3222 = vadd.f32 %v2933, %v3221
      %v3223 = vpop.f32.mrb[0].mxu0
      %v3224 = vpop.f32.mrb[0].mxu0
      %v3225 = vadd.f32 %v2936, %v3224
      %v3226 = vpop.f32.mrb[0].mxu0
      %3227 = vmatprep.mubr.bf16.mxu0 %v1622
      %3228 = vmatmul.mubr.bf16.gmra.mrb[0].mxu0 %v1621
      %v3229 = vpop.f32.mrb[0].mxu0
      %v3230 = vadd.f32 %v2941, %v3229
      %v3231 = vpop.f32.mrb[0].mxu0
      %v3232 = vpop.f32.mrb[0].mxu0
      %v3233 = vadd.f32 %v2944, %v3232
      %v3234 = vpop.f32.mrb[0].mxu0
      %3235 = vmatprep.mubr.bf16.mxu0 %v1631
      %3236 = vmatmul.mubr.bf16.gmra.mrb[0].mxu0 %v1630
      %v3237 = vpop.f32.mrb[0].mxu0
      %v3238 = vadd.f32 %v2949, %v3237
      %v3239 = vpop.f32.mrb[0].mxu0
      %v3240 = vpop.f32.mrb[0].mxu0
      %v3241 = vadd.f32 %v2952, %v3240
      %v3242 = vpop.f32.mrb[0].mxu0
      %3243 = vmatprep.mubr.bf16.mxu0 %v1640
      %3244 = vmatmul.mubr.bf16.gmra.mrb[0].mxu0 %v1639
      %v3245 = vpop.f32.mrb[0].mxu0
      %v3246 = vadd.f32 %v2957, %v3245
      %v3247 = vpop.f32.mrb[0].mxu0
      %v3248 = vpop.f32.mrb[0].mxu0
      %v3249 = vadd.f32 %v2960, %v3248
      %v3250 = vpop.f32.mrb[0].mxu0
      %3251 = vmatprep.mubr.bf16.mxu0 %v1649
      %3252 = vmatmul.mubr.bf16.gmra.mrb[0].mxu0 %v1648
      %v3253 = vpop.f32.mrb[0].mxu0
      %v3254 = vadd.f32 %v2965, %v3253
      %v3255 = vpop.f32.mrb[0].mxu0
      %v3256 = vpop.f32.mrb[0].mxu0
      %v3257 = vadd.f32 %v2968, %v3256
      %v3258 = vpop.f32.mrb[0].mxu0
      %3259 = vmatprep.mubr.bf16.mxu0 %v1658
      %3260 = vmatmul.mubr.bf16.gmra.mrb[0].mxu0 %v1657
      %v3261 = vpop.f32.mrb[0].mxu0
      %v3262 = vadd.f32 %v2973, %v3261
      %v3263 = vpop.f32.mrb[0].mxu0
      %v3264 = vpop.f32.mrb[0].mxu0
      %v3265 = vadd.f32 %v2976, %v3264
      %v3266 = vpop.f32.mrb[0].mxu0
      %3267 = vmatprep.mubr.bf16.mxu0 %v1667
      %3268 = vmatmul.mubr.bf16.gmra.mrb[0].mxu0 %v1666
      %v3269 = vpop.f32.mrb[0].mxu0
      %v3270 = vadd.f32 %v2981, %v3269
      %v3271 = vpop.f32.mrb[0].mxu0
      %v3272 = vpop.f32.mrb[0].mxu0
      %v3273 = vadd.f32 %v2984, %v3272
      %v3274 = vpop.f32.mrb[0].mxu0
      %3275 = vmatprep.mubr.bf16.mxu0 %v1676
      %3276 = vmatmul.mubr.bf16.gmra.mrb[0].mxu0 %v1675
      %v3277 = vpop.f32.mrb[0].mxu0
      %v3278 = vadd.f32 %v2989, %v3277
      %v3279 = vpop.f32.mrb[0].mxu0
      %v3280 = vpop.f32.mrb[0].mxu0
      %v3281 = vadd.f32 %v2992, %v3280
      %v3282 = vpop.f32.mrb[0].mxu0
      %3283 = vmatprep.mubr.bf16.mxu0 %v1685
      %3284 = vmatmul.mubr.bf16.gmra.mrb[0].mxu0 %v1684
      %v3285 = vpop.f32.mrb[0].mxu0
      %v3286 = vadd.f32 %v2997, %v3285
      %v3287 = vpop.f32.mrb[0].mxu0
      %v3288 = vpop.f32.mrb[0].mxu0
      %v3289 = vadd.f32 %v3000, %v3288
      %v3290 = vpop.f32.mrb[0].mxu0
      %3291 = vmatprep.mubr.bf16.mxu0 %v1694
      %3292 = vmatmul.mubr.bf16.gmra.mrb[0].mxu0 %v1693
      %v3293 = vpop.f32.mrb[0].mxu0
      %v3294 = vadd.f32 %v3005, %v3293
      %v3295 = vpop.f32.mrb[0].mxu0
      %v3296 = vpop.f32.mrb[0].mxu0
      %v3297 = vadd.f32 %v3008, %v3296
      %v3298 = vpop.f32.mrb[0].mxu0
      %3299 = vmatprep.mubr.bf16.mxu0 %v1703
      %3300 = vmatmul.mubr.bf16.gmra.mrb[0].mxu0 %v1702
      %v3301 = vpop.f32.mrb[0].mxu0
      %v3302 = vadd.f32 %v3013, %v3301
      %v3303 = vpop.f32.mrb[0].mxu0
      %v3304 = vpop.f32.mrb[0].mxu0
      %v3305 = vadd.f32 %v3016, %v3304
      %v3306 = vpop.f32.mrb[0].mxu0
      %3307 = vmatprep.mubr.bf16.mxu0 %v1712
      %3308 = vmatmul.mubr.bf16.gmra.mrb[0].mxu0 %v1711
      %v3309 = vpop.f32.mrb[0].mxu0
      %v3310 = vadd.f32 %v3021, %v3309
      %v3311 = vpop.f32.mrb[0].mxu0
      %v3312 = vpop.f32.mrb[0].mxu0
      %v3313 = vadd.f32 %v3024, %v3312
      %v3314 = vpop.f32.mrb[0].mxu0
      %3315 = vmatprep.mubr.bf16.mxu0 %v1721
      %3316 = vmatmul.mubr.bf16.gmra.mrb[0].mxu0 %v1720
      %v3317 = vpop.f32.mrb[0].mxu0
      %v3318 = vadd.f32 %v3029, %v3317
      %v3319 = vpop.f32.mrb[0].mxu0
      %v3320 = vpop.f32.mrb[0].mxu0
      %v3321 = vadd.f32 %v3032, %v3320
      %v3322 = vpop.f32.mrb[0].mxu0
      %3323 = vmatprep.mubr.bf16.mxu0 %v1730
      %3324 = vmatmul.mubr.bf16.gmra.mrb[0].mxu0 %v1729
      %v3325 = vpop.f32.mrb[0].mxu0
      %v3326 = vadd.f32 %v3037, %v3325
      %v3327 = vpop.f32.mrb[0].mxu0
      %v3328 = vpop.f32.mrb[0].mxu0
      %v3329 = vadd.f32 %v3040, %v3328
      %v3330 = vpop.f32.mrb[0].mxu0
      %3331 = vmatprep.mubr.bf16.mxu0 %v1739
      %3332 = vmatmul.mubr.bf16.gmra.mrb[0].mxu0 %v1738
      %v3333 = vpop.f32.mrb[0].mxu0
      %v3334 = vadd.f32 %v3045, %v3333
      %v3335 = vpop.f32.mrb[0].mxu0
      %v3336 = vpop.f32.mrb[0].mxu0
      %v3337 = vadd.f32 %v3048, %v3336
      %v3338 = vpop.f32.mrb[0].mxu0
      %3339 = vmatprep.mubr.bf16.mxu0 %v1748
      %3340 = vmatmul.mubr.bf16.gmra.mrb[0].mxu0 %v1747
      %v3341 = vpop.f32.mrb[0].mxu0
      %v3342 = vadd.f32 %v3053, %v3341
      %v3343 = vpop.f32.mrb[0].mxu0
      %v3344 = vpop.f32.mrb[0].mxu0
      %v3345 = vadd.f32 %v3056, %v3344
      %v3346 = vpop.f32.mrb[0].mxu0
      %3347 = vmatprep.mubr.bf16.mxu0 %v1757
      %3348 = vmatmul.mubr.bf16.gmra.mrb[0].mxu0 %v1756
      %v3349 = vpop.f32.mrb[0].mxu0
      %v3350 = vadd.f32 %v3061, %v3349
      %v3351 = vpop.f32.mrb[0].mxu0
      %v3352 = vpop.f32.mrb[0].mxu0
      %v3353 = vadd.f32 %v3064, %v3352
      %v3354 = vpop.f32.mrb[0].mxu0
      %3355 = vmatprep.mubr.bf16.mxu0 %v1766
      %3356 = vmatmul.mubr.bf16.gmra.mrb[0].mxu0 %v1765
      %v3357 = vpop.f32.mrb[0].mxu0
      %v3358 = vadd.f32 %v3069, %v3357
      %v3359 = vpop.f32.mrb[0].mxu0
      %v3360 = vpop.f32.mrb[0].mxu0
      %v3361 = vadd.f32 %v3072, %v3360
      %v3362 = vpop.f32.mrb[0].mxu0
      %3363 = vmatprep.mubr.bf16.mxu0 %v1775
      %3364 = vmatmul.mubr.bf16.gmra.mrb[0].mxu0 %v1774
      %v3365 = vpop.f32.mrb[0].mxu0
      %v3366 = vadd.f32 %v3077, %v3365
      %v3367 = vpop.f32.mrb[0].mxu0
      %v3368 = vpop.f32.mrb[0].mxu0
      %v3369 = vadd.f32 %v3080, %v3368
      %v3370 = vpop.f32.mrb[0].mxu0
      %3371 = vmatprep.mubr.bf16.mxu0 %v1784
      %3372 = vmatmul.mubr.bf16.gmra.mrb[0].mxu0 %v1783
      %v3373 = vpop.f32.mrb[0].mxu0
      %v3374 = vadd.f32 %v3085, %v3373
      %v3375 = vpop.f32.mrb[0].mxu0
      %v3376 = vpop.f32.mrb[0].mxu0
      %v3377 = vadd.f32 %v3088, %v3376
      %v3378 = vpop.f32.mrb[0].mxu0
      %3379 = vmatprep.mubr.bf16.mxu0 %v1793
      %3380 = vmatmul.mubr.bf16.gmra.mrb[0].mxu0 %v1792
      %v3381 = vpop.f32.mrb[0].mxu0
      %v3382 = vadd.f32 %v3093, %v3381
      %v3383 = vpop.f32.mrb[0].mxu0
      %v3384 = vpop.f32.mrb[0].mxu0
      %v3385 = vadd.f32 %v3096, %v3384
      %v3386 = vpop.f32.mrb[0].mxu0
      %3387 = vmatprep.mubr.bf16.mxu0 %v1802
      %3388 = vmatmul.mubr.bf16.gmra.mrb[0].mxu0 %v1801
      %v3389 = vpop.f32.mrb[0].mxu0
      %v3390 = vadd.f32 %v3101, %v3389
      %v3391 = vpop.f32.mrb[0].mxu0
      %v3392 = vpop.f32.mrb[0].mxu0
      %v3393 = vadd.f32 %v3104, %v3392
      %v3394 = vpop.f32.mrb[0].mxu0
      %3395 = vmatprep.mubr.bf16.mxu0 %v1811
      %3396 = vmatmul.mubr.bf16.gmra.mrb[0].mxu0 %v1810
      %v3397 = vpop.f32.mrb[0].mxu0
      %v3398 = vadd.f32 %v3109, %v3397
      %v3399 = vpop.f32.mrb[0].mxu0
      %v3400 = vpop.f32.mrb[0].mxu0
      %v3401 = vadd.f32 %v3112, %v3400
      %v3402 = vpop.f32.mrb[0].mxu0
      %3403 = vmatprep.mubr.bf16.mxu0 %v1820
      %3404 = vmatmul.mubr.bf16.gmra.mrb[0].mxu0 %v1819
      %v3405 = vpop.f32.mrb[0].mxu0
      %v3406 = vadd.f32 %v3117, %v3405
      %v3407 = vpop.f32.mrb[0].mxu0
      %v3408 = vpop.f32.mrb[0].mxu0
      %v3409 = vadd.f32 %v3120, %v3408
      %v3410 = vpop.f32.mrb[0].mxu0
      %3411 = vmatprep.mubr.bf16.mxu0 %v1829
      %3412 = vmatmul.mubr.bf16.gmra.mrb[0].mxu0 %v1828
      %v3413 = vpop.f32.mrb[0].mxu0
      %v3414 = vadd.f32 %v3125, %v3413
      %v3415 = vpop.f32.mrb[0].mxu0
      %v3416 = vpop.f32.mrb[0].mxu0
      %v3417 = vadd.f32 %v3128, %v3416
      %v3418 = vpop.f32.mrb[0].mxu0
      %3419 = vdwg.mxu0
      %3420 = vmatprep.subr.bf16.mxu0 0
      %3421 = vmatpush1.bf16.msra.mxu0 %v2457
      %3422 = vmatprep.subr.bf16.mxu0 0
      %3423 = vmatpush1.bf16.msra.mxu0 %v2458
      %3424 = vmatprep.subr.bf16.mxu0 0
      %3425 = vmatpush1.bf16.msra.mxu0 %v2459
      %3426 = vmatprep.subr.bf16.mxu0 0
      %3427 = vmatpush1.bf16.msra.mxu0 %v2460
      %3428 = vmatprep.subr.bf16.mxu0 0
      %3429 = vmatpush1.bf16.msra.mxu0 %v2461
      %3430 = vmatprep.subr.bf16.mxu0 0
      %3431 = vmatpush1.bf16.msra.mxu0 %v2462
      %3432 = vmatprep.subr.bf16.mxu0 0
      %3433 = vmatpush1.bf16.msra.mxu0 %v2463
      %3434 = vmatprep.subr.bf16.mxu0 0
      %3435 = vmatpush1.bf16.msra.mxu0 %v2464
      %3436 = vmatprep.subr.bf16.mxu0 0
      %3437 = vmatpush1.bf16.msra.mxu0 %v2465
      %3438 = vmatprep.subr.bf16.mxu0 0
      %3439 = vmatpush1.bf16.msra.mxu0 %v2466
      %3440 = vmatprep.subr.bf16.mxu0 0
      %3441 = vmatpush1.bf16.msra.mxu0 %v2467
      %3442 = vmatprep.subr.bf16.mxu0 0
      %3443 = vmatpush1.bf16.msra.mxu0 %v2468
      %3444 = vmatprep.subr.bf16.mxu0 0
      %3445 = vmatpush1.bf16.msra.mxu0 %v2469
      %3446 = vmatprep.subr.bf16.mxu0 0
      %3447 = vmatpush1.bf16.msra.mxu0 %v2470
      %3448 = vmatprep.subr.bf16.mxu0 0
      %3449 = vmatpush1.bf16.msra.mxu0 %v2471
      %3450 = vmatprep.subr.bf16.mxu0 0
      %3451 = vmatpush1.bf16.msra.mxu0 %v2472
      %3452 = vmatprep.mubr.bf16.mxu0 %v1552
      %3453 = vmatmul.mubr.bf16.gmra.mrb[0].mxu0 %v1551
      %v3454 = vpop.f32.mrb[0].mxu0
      %v3455 = vadd.f32 %v3166, %v3454
      %v3456 = vpop.f32.mrb[0].mxu0
      %v3457 = vpop.f32.mrb[0].mxu0
      %v3458 = vadd.f32 %v3169, %v3457
      %v3459 = vpop.f32.mrb[0].mxu0
      %3460 = vmatprep.mubr.bf16.mxu0 %v1561
      %3461 = vmatmul.mubr.bf16.gmra.mrb[0].mxu0 %v1560
      %v3462 = vpop.f32.mrb[0].mxu0
      %v3463 = vadd.f32 %v3174, %v3462
      %v3464 = vpop.f32.mrb[0].mxu0
      %v3465 = vpop.f32.mrb[0].mxu0
      %v3466 = vadd.f32 %v3177, %v3465
      %v3467 = vpop.f32.mrb[0].mxu0
      %3468 = vmatprep.mubr.bf16.mxu0 %v1570
      %3469 = vmatmul.mubr.bf16.gmra.mrb[0].mxu0 %v1569
      %v3470 = vpop.f32.mrb[0].mxu0
      %v3471 = vadd.f32 %v3182, %v3470
      %v3472 = vpop.f32.mrb[0].mxu0
      %v3473 = vpop.f32.mrb[0].mxu0
      %v3474 = vadd.f32 %v3185, %v3473
      %v3475 = vpop.f32.mrb[0].mxu0
      %3476 = vmatprep.mubr.bf16.mxu0 %v1579
      %3477 = vmatmul.mubr.bf16.gmra.mrb[0].mxu0 %v1578
      %v3478 = vpop.f32.mrb[0].mxu0
      %v3479 = vadd.f32 %v3190, %v3478
      %v3480 = vpop.f32.mrb[0].mxu0
      %v3481 = vpop.f32.mrb[0].mxu0
      %v3482 = vadd.f32 %v3193, %v3481
      %v3483 = vpop.f32.mrb[0].mxu0
      %3484 = vmatprep.mubr.bf16.mxu0 %v1588
      %3485 = vmatmul.mubr.bf16.gmra.mrb[0].mxu0 %v1587
      %v3486 = vpop.f32.mrb[0].mxu0
      %v3487 = vadd.f32 %v3198, %v3486
      %v3488 = vpop.f32.mrb[0].mxu0
      %v3489 = vpop.f32.mrb[0].mxu0
      %v3490 = vadd.f32 %v3201, %v3489
      %v3491 = vpop.f32.mrb[0].mxu0
      %3492 = vmatprep.mubr.bf16.mxu0 %v1597
      %3493 = vmatmul.mubr.bf16.gmra.mrb[0].mxu0 %v1596
      %v3494 = vpop.f32.mrb[0].mxu0
      %v3495 = vadd.f32 %v3206, %v3494
      %v3496 = vpop.f32.mrb[0].mxu0
      %v3497 = vpop.f32.mrb[0].mxu0
      %v3498 = vadd.f32 %v3209, %v3497
      %v3499 = vpop.f32.mrb[0].mxu0
      %3500 = vmatprep.mubr.bf16.mxu0 %v1606
      %3501 = vmatmul.mubr.bf16.gmra.mrb[0].mxu0 %v1605
      %v3502 = vpop.f32.mrb[0].mxu0
      %v3503 = vadd.f32 %v3214, %v3502
      %v3504 = vpop.f32.mrb[0].mxu0
      %v3505 = vpop.f32.mrb[0].mxu0
      %v3506 = vadd.f32 %v3217, %v3505
      %v3507 = vpop.f32.mrb[0].mxu0
      %3508 = vmatprep.mubr.bf16.mxu0 %v1615
      %3509 = vmatmul.mubr.bf16.gmra.mrb[0].mxu0 %v1614
      %v3510 = vpop.f32.mrb[0].mxu0
      %v3511 = vadd.f32 %v3222, %v3510
      %v3512 = vpop.f32.mrb[0].mxu0
      %v3513 = vpop.f32.mrb[0].mxu0
      %v3514 = vadd.f32 %v3225, %v3513
      %v3515 = vpop.f32.mrb[0].mxu0
      %3516 = vmatprep.mubr.bf16.mxu0 %v1624
      %3517 = vmatmul.mubr.bf16.gmra.mrb[0].mxu0 %v1623
      %v3518 = vpop.f32.mrb[0].mxu0
      %v3519 = vadd.f32 %v3230, %v3518
      %v3520 = vpop.f32.mrb[0].mxu0
      %v3521 = vpop.f32.mrb[0].mxu0
      %v3522 = vadd.f32 %v3233, %v3521
      %v3523 = vpop.f32.mrb[0].mxu0
      %3524 = vmatprep.mubr.bf16.mxu0 %v1633
      %3525 = vmatmul.mubr.bf16.gmra.mrb[0].mxu0 %v1632
      %v3526 = vpop.f32.mrb[0].mxu0
      %v3527 = vadd.f32 %v3238, %v3526
      %v3528 = vpop.f32.mrb[0].mxu0
      %v3529 = vpop.f32.mrb[0].mxu0
      %v3530 = vadd.f32 %v3241, %v3529
      %v3531 = vpop.f32.mrb[0].mxu0
      %3532 = vmatprep.mubr.bf16.mxu0 %v1642
      %3533 = vmatmul.mubr.bf16.gmra.mrb[0].mxu0 %v1641
      %v3534 = vpop.f32.mrb[0].mxu0
      %v3535 = vadd.f32 %v3246, %v3534
      %v3536 = vpop.f32.mrb[0].mxu0
      %v3537 = vpop.f32.mrb[0].mxu0
      %v3538 = vadd.f32 %v3249, %v3537
      %v3539 = vpop.f32.mrb[0].mxu0
      %3540 = vmatprep.mubr.bf16.mxu0 %v1651
      %3541 = vmatmul.mubr.bf16.gmra.mrb[0].mxu0 %v1650
      %v3542 = vpop.f32.mrb[0].mxu0
      %v3543 = vadd.f32 %v3254, %v3542
      %v3544 = vpop.f32.mrb[0].mxu0
      %v3545 = vpop.f32.mrb[0].mxu0
      %v3546 = vadd.f32 %v3257, %v3545
      %v3547 = vpop.f32.mrb[0].mxu0
      %3548 = vmatprep.mubr.bf16.mxu0 %v1660
      %3549 = vmatmul.mubr.bf16.gmra.mrb[0].mxu0 %v1659
      %v3550 = vpop.f32.mrb[0].mxu0
      %v3551 = vadd.f32 %v3262, %v3550
      %v3552 = vpop.f32.mrb[0].mxu0
      %v3553 = vpop.f32.mrb[0].mxu0
      %v3554 = vadd.f32 %v3265, %v3553
      %v3555 = vpop.f32.mrb[0].mxu0
      %3556 = vmatprep.mubr.bf16.mxu0 %v1669
      %3557 = vmatmul.mubr.bf16.gmra.mrb[0].mxu0 %v1668
      %v3558 = vpop.f32.mrb[0].mxu0
      %v3559 = vadd.f32 %v3270, %v3558
      %v3560 = vpop.f32.mrb[0].mxu0
      %v3561 = vpop.f32.mrb[0].mxu0
      %v3562 = vadd.f32 %v3273, %v3561
      %v3563 = vpop.f32.mrb[0].mxu0
      %3564 = vmatprep.mubr.bf16.mxu0 %v1678
      %3565 = vmatmul.mubr.bf16.gmra.mrb[0].mxu0 %v1677
      %v3566 = vpop.f32.mrb[0].mxu0
      %v3567 = vadd.f32 %v3278, %v3566
      %v3568 = vpop.f32.mrb[0].mxu0
      %v3569 = vpop.f32.mrb[0].mxu0
      %v3570 = vadd.f32 %v3281, %v3569
      %v3571 = vpop.f32.mrb[0].mxu0
      %3572 = vmatprep.mubr.bf16.mxu0 %v1687
      %3573 = vmatmul.mubr.bf16.gmra.mrb[0].mxu0 %v1686
      %v3574 = vpop.f32.mrb[0].mxu0
      %v3575 = vadd.f32 %v3286, %v3574
      %v3576 = vpop.f32.mrb[0].mxu0
      %v3577 = vpop.f32.mrb[0].mxu0
      %v3578 = vadd.f32 %v3289, %v3577
      %v3579 = vpop.f32.mrb[0].mxu0
      %3580 = vmatprep.mubr.bf16.mxu0 %v1696
      %3581 = vmatmul.mubr.bf16.gmra.mrb[0].mxu0 %v1695
      %v3582 = vpop.f32.mrb[0].mxu0
      %v3583 = vadd.f32 %v3294, %v3582
      %v3584 = vpop.f32.mrb[0].mxu0
      %v3585 = vpop.f32.mrb[0].mxu0
      %v3586 = vadd.f32 %v3297, %v3585
      %v3587 = vpop.f32.mrb[0].mxu0
      %3588 = vmatprep.mubr.bf16.mxu0 %v1705
      %3589 = vmatmul.mubr.bf16.gmra.mrb[0].mxu0 %v1704
      %v3590 = vpop.f32.mrb[0].mxu0
      %v3591 = vadd.f32 %v3302, %v3590
      %v3592 = vpop.f32.mrb[0].mxu0
      %v3593 = vpop.f32.mrb[0].mxu0
      %v3594 = vadd.f32 %v3305, %v3593
      %v3595 = vpop.f32.mrb[0].mxu0
      %3596 = vmatprep.mubr.bf16.mxu0 %v1714
      %3597 = vmatmul.mubr.bf16.gmra.mrb[0].mxu0 %v1713
      %v3598 = vpop.f32.mrb[0].mxu0
      %v3599 = vadd.f32 %v3310, %v3598
      %v3600 = vpop.f32.mrb[0].mxu0
      %v3601 = vpop.f32.mrb[0].mxu0
      %v3602 = vadd.f32 %v3313, %v3601
      %v3603 = vpop.f32.mrb[0].mxu0
      %3604 = vmatprep.mubr.bf16.mxu0 %v1723
      %3605 = vmatmul.mubr.bf16.gmra.mrb[0].mxu0 %v1722
      %v3606 = vpop.f32.mrb[0].mxu0
      %v3607 = vadd.f32 %v3318, %v3606
      %v3608 = vpop.f32.mrb[0].mxu0
      %v3609 = vpop.f32.mrb[0].mxu0
      %v3610 = vadd.f32 %v3321, %v3609
      %v3611 = vpop.f32.mrb[0].mxu0
      %3612 = vmatprep.mubr.bf16.mxu0 %v1732
      %3613 = vmatmul.mubr.bf16.gmra.mrb[0].mxu0 %v1731
      %v3614 = vpop.f32.mrb[0].mxu0
      %v3615 = vadd.f32 %v3326, %v3614
      %v3616 = vpop.f32.mrb[0].mxu0
      %v3617 = vpop.f32.mrb[0].mxu0
      %v3618 = vadd.f32 %v3329, %v3617
      %v3619 = vpop.f32.mrb[0].mxu0
      %3620 = vmatprep.mubr.bf16.mxu0 %v1741
      %3621 = vmatmul.mubr.bf16.gmra.mrb[0].mxu0 %v1740
      %v3622 = vpop.f32.mrb[0].mxu0
      %v3623 = vadd.f32 %v3334, %v3622
      %v3624 = vpop.f32.mrb[0].mxu0
      %v3625 = vpop.f32.mrb[0].mxu0
      %v3626 = vadd.f32 %v3337, %v3625
      %v3627 = vpop.f32.mrb[0].mxu0
      %3628 = vmatprep.mubr.bf16.mxu0 %v1750
      %3629 = vmatmul.mubr.bf16.gmra.mrb[0].mxu0 %v1749
      %v3630 = vpop.f32.mrb[0].mxu0
      %v3631 = vadd.f32 %v3342, %v3630
      %v3632 = vpop.f32.mrb[0].mxu0
      %v3633 = vpop.f32.mrb[0].mxu0
      %v3634 = vadd.f32 %v3345, %v3633
      %v3635 = vpop.f32.mrb[0].mxu0
      %3636 = vmatprep.mubr.bf16.mxu0 %v1759
      %3637 = vmatmul.mubr.bf16.gmra.mrb[0].mxu0 %v1758
      %v3638 = vpop.f32.mrb[0].mxu0
      %v3639 = vadd.f32 %v3350, %v3638
      %v3640 = vpop.f32.mrb[0].mxu0
      %v3641 = vpop.f32.mrb[0].mxu0
      %v3642 = vadd.f32 %v3353, %v3641
      %v3643 = vpop.f32.mrb[0].mxu0
      %3644 = vmatprep.mubr.bf16.mxu0 %v1768
      %3645 = vmatmul.mubr.bf16.gmra.mrb[0].mxu0 %v1767
      %v3646 = vpop.f32.mrb[0].mxu0
      %v3647 = vadd.f32 %v3358, %v3646
      %v3648 = vpop.f32.mrb[0].mxu0
      %v3649 = vpop.f32.mrb[0].mxu0
      %v3650 = vadd.f32 %v3361, %v3649
      %v3651 = vpop.f32.mrb[0].mxu0
      %3652 = vmatprep.mubr.bf16.mxu0 %v1777
      %3653 = vmatmul.mubr.bf16.gmra.mrb[0].mxu0 %v1776
      %v3654 = vpop.f32.mrb[0].mxu0
      %v3655 = vadd.f32 %v3366, %v3654
      %v3656 = vpop.f32.mrb[0].mxu0
      %v3657 = vpop.f32.mrb[0].mxu0
      %v3658 = vadd.f32 %v3369, %v3657
      %v3659 = vpop.f32.mrb[0].mxu0
      %3660 = vmatprep.mubr.bf16.mxu0 %v1786
      %3661 = vmatmul.mubr.bf16.gmra.mrb[0].mxu0 %v1785
      %v3662 = vpop.f32.mrb[0].mxu0
      %v3663 = vadd.f32 %v3374, %v3662
      %v3664 = vpop.f32.mrb[0].mxu0
      %v3665 = vpop.f32.mrb[0].mxu0
      %v3666 = vadd.f32 %v3377, %v3665
      %v3667 = vpop.f32.mrb[0].mxu0
      %3668 = vmatprep.mubr.bf16.mxu0 %v1795
      %3669 = vmatmul.mubr.bf16.gmra.mrb[0].mxu0 %v1794
      %v3670 = vpop.f32.mrb[0].mxu0
      %v3671 = vadd.f32 %v3382, %v3670
      %v3672 = vpop.f32.mrb[0].mxu0
      %v3673 = vpop.f32.mrb[0].mxu0
      %v3674 = vadd.f32 %v3385, %v3673
      %v3675 = vpop.f32.mrb[0].mxu0
      %3676 = vmatprep.mubr.bf16.mxu0 %v1804
      %3677 = vmatmul.mubr.bf16.gmra.mrb[0].mxu0 %v1803
      %v3678 = vpop.f32.mrb[0].mxu0
      %v3679 = vadd.f32 %v3390, %v3678
      %v3680 = vpop.f32.mrb[0].mxu0
      %v3681 = vpop.f32.mrb[0].mxu0
      %v3682 = vadd.f32 %v3393, %v3681
      %v3683 = vpop.f32.mrb[0].mxu0
      %3684 = vmatprep.mubr.bf16.mxu0 %v1813
      %3685 = vmatmul.mubr.bf16.gmra.mrb[0].mxu0 %v1812
      %v3686 = vpop.f32.mrb[0].mxu0
      %v3687 = vadd.f32 %v3398, %v3686
      %v3688 = vpop.f32.mrb[0].mxu0
      %v3689 = vpop.f32.mrb[0].mxu0
      %v3690 = vadd.f32 %v3401, %v3689
      %v3691 = vpop.f32.mrb[0].mxu0
      %3692 = vmatprep.mubr.bf16.mxu0 %v1822
      %3693 = vmatmul.mubr.bf16.gmra.mrb[0].mxu0 %v1821
      %v3694 = vpop.f32.mrb[0].mxu0
      %v3695 = vadd.f32 %v3406, %v3694
      %v3696 = vpop.f32.mrb[0].mxu0
      %v3697 = vpop.f32.mrb[0].mxu0
      %v3698 = vadd.f32 %v3409, %v3697
      %v3699 = vpop.f32.mrb[0].mxu0
      %3700 = vmatprep.mubr.bf16.mxu0 %v1831
      %3701 = vmatmul.mubr.bf16.gmra.mrb[0].mxu0 %v1830
      %v3702 = vpop.f32.mrb[0].mxu0
      %v3703 = vadd.f32 %v3414, %v3702
      %v3704 = vpop.f32.mrb[0].mxu0
      %v3705 = vpop.f32.mrb[0].mxu0
      %v3706 = vadd.f32 %v3417, %v3705
      %v3707 = vpop.f32.mrb[0].mxu0
      %3708 = vdwg.mxu0
      %3709 = vmatprep.subr.bf16.mxu0 0
      %3710 = vmatpush1.bf16.msra.mxu0 %v2473
      %3711 = vmatprep.subr.bf16.mxu0 0
      %3712 = vmatpush1.bf16.msra.mxu0 %v2474
      %3713 = vmatprep.subr.bf16.mxu0 0
      %3714 = vmatpush1.bf16.msra.mxu0 %v2475
      %3715 = vmatprep.subr.bf16.mxu0 0
      %3716 = vmatpush1.bf16.msra.mxu0 %v2476
      %3717 = vmatprep.subr.bf16.mxu0 0
      %3718 = vmatpush1.bf16.msra.mxu0 %v2477
      %3719 = vmatprep.subr.bf16.mxu0 0
      %3720 = vmatpush1.bf16.msra.mxu0 %v2478
      %3721 = vmatprep.subr.bf16.mxu0 0
      %3722 = vmatpush1.bf16.msra.mxu0 %v2479
      %3723 = vmatprep.subr.bf16.mxu0 0
      %3724 = vmatpush1.bf16.msra.mxu0 %v2480
      %3725 = vmatprep.subr.bf16.mxu0 0
      %3726 = vmatpush1.bf16.msra.mxu0 0
      %3727 = vmatprep.subr.bf16.mxu0 0
      %3728 = vmatpush1.bf16.msra.mxu0 0
      %3729 = vmatprep.subr.bf16.mxu0 0
      %3730 = vmatpush1.bf16.msra.mxu0 0
      %3731 = vmatprep.subr.bf16.mxu0 0
      %3732 = vmatpush1.bf16.msra.mxu0 0
      %3733 = vmatprep.subr.bf16.mxu0 0
      %3734 = vmatpush1.bf16.msra.mxu0 0
      %3735 = vmatprep.subr.bf16.mxu0 0
      %3736 = vmatpush1.bf16.msra.mxu0 0
      %3737 = vmatprep.subr.bf16.mxu0 0
      %3738 = vmatpush1.bf16.msra.mxu0 0
      %3739 = vmatprep.subr.bf16.mxu0 0
      %3740 = vmatpush1.bf16.msra.mxu0 0
      %3741 = vmatprep.mubr.bf16.mxu0 0
      %3742 = vmatmul.mubr.bf16.gmra.mrb[0].mxu0 %v1553
      %v3743 = vpop.f32.mrb[0].mxu0
      %v3744 = vadd.f32 %v3455, %v3743
      %v3745 = vpop.f32.mrb[0].mxu0
      %v3746 = vpop.f32.mrb[0].mxu0
      %v3747 = vadd.f32 %v3458, %v3746
      %v3748 = vpop.f32.mrb[0].mxu0
      %3749 = vmatprep.mubr.bf16.mxu0 0
      %3750 = vmatmul.mubr.bf16.gmra.mrb[0].mxu0 %v1562
      %v3751 = vpop.f32.mrb[0].mxu0
      %v3752 = vadd.f32 %v3463, %v3751
      %v3753 = vpop.f32.mrb[0].mxu0
      %v3754 = vpop.f32.mrb[0].mxu0
      %v3755 = vadd.f32 %v3466, %v3754
      %v3756 = vpop.f32.mrb[0].mxu0
      %3757 = vmatprep.mubr.bf16.mxu0 0
      %3758 = vmatmul.mubr.bf16.gmra.mrb[0].mxu0 %v1571
      %v3759 = vpop.f32.mrb[0].mxu0
      %v3760 = vadd.f32 %v3471, %v3759
      %v3761 = vpop.f32.mrb[0].mxu0
      %v3762 = vpop.f32.mrb[0].mxu0
      %v3763 = vadd.f32 %v3474, %v3762
      %v3764 = vpop.f32.mrb[0].mxu0
      %3765 = vmatprep.mubr.bf16.mxu0 0
      %3766 = vmatmul.mubr.bf16.gmra.mrb[0].mxu0 %v1580
      %v3767 = vpop.f32.mrb[0].mxu0
      %v3768 = vadd.f32 %v3479, %v3767
      %v3769 = vpop.f32.mrb[0].mxu0
      %v3770 = vpop.f32.mrb[0].mxu0
      %v3771 = vadd.f32 %v3482, %v3770
      %v3772 = vpop.f32.mrb[0].mxu0
      %3773 = vmatprep.mubr.bf16.mxu0 0
      %3774 = vmatmul.mubr.bf16.gmra.mrb[0].mxu0 %v1589
      %v3775 = vpop.f32.mrb[0].mxu0
      %v3776 = vadd.f32 %v3487, %v3775
      %v3777 = vpop.f32.mrb[0].mxu0
      %v3778 = vpop.f32.mrb[0].mxu0
      %v3779 = vadd.f32 %v3490, %v3778
      %v3780 = vpop.f32.mrb[0].mxu0
      %3781 = vmatprep.mubr.bf16.mxu0 0
      %3782 = vmatmul.mubr.bf16.gmra.mrb[0].mxu0 %v1598
      %v3783 = vpop.f32.mrb[0].mxu0
      %v3784 = vadd.f32 %v3495, %v3783
      %v3785 = vpop.f32.mrb[0].mxu0
      %v3786 = vpop.f32.mrb[0].mxu0
      %v3787 = vadd.f32 %v3498, %v3786
      %v3788 = vpop.f32.mrb[0].mxu0
      %3789 = vmatprep.mubr.bf16.mxu0 0
      %3790 = vmatmul.mubr.bf16.gmra.mrb[0].mxu0 %v1607
      %v3791 = vpop.f32.mrb[0].mxu0
      %v3792 = vadd.f32 %v3503, %v3791
      %v3793 = vpop.f32.mrb[0].mxu0
      %v3794 = vpop.f32.mrb[0].mxu0
      %v3795 = vadd.f32 %v3506, %v3794
      %v3796 = vpop.f32.mrb[0].mxu0
      %3797 = vmatprep.mubr.bf16.mxu0 0
      %3798 = vmatmul.mubr.bf16.gmra.mrb[0].mxu0 %v1616
      %v3799 = vpop.f32.mrb[0].mxu0
      %v3800 = vadd.f32 %v3511, %v3799
      %v3801 = vpop.f32.mrb[0].mxu0
      %v3802 = vpop.f32.mrb[0].mxu0
      %v3803 = vadd.f32 %v3514, %v3802
      %v3804 = vpop.f32.mrb[0].mxu0
      %3805 = vmatprep.mubr.bf16.mxu0 0
      %3806 = vmatmul.mubr.bf16.gmra.mrb[0].mxu0 %v1625
      %v3807 = vpop.f32.mrb[0].mxu0
      %v3808 = vadd.f32 %v3519, %v3807
      %v3809 = vpop.f32.mrb[0].mxu0
      %v3810 = vpop.f32.mrb[0].mxu0
      %v3811 = vadd.f32 %v3522, %v3810
      %v3812 = vpop.f32.mrb[0].mxu0
      %3813 = vmatprep.mubr.bf16.mxu0 0
      %3814 = vmatmul.mubr.bf16.gmra.mrb[0].mxu0 %v1634
      %v3815 = vpop.f32.mrb[0].mxu0
      %v3816 = vadd.f32 %v3527, %v3815
      %v3817 = vpop.f32.mrb[0].mxu0
      %v3818 = vpop.f32.mrb[0].mxu0
      %v3819 = vadd.f32 %v3530, %v3818
      %v3820 = vpop.f32.mrb[0].mxu0
      %3821 = vmatprep.mubr.bf16.mxu0 0
      %3822 = vmatmul.mubr.bf16.gmra.mrb[0].mxu0 %v1643
      %v3823 = vpop.f32.mrb[0].mxu0
      %v3824 = vadd.f32 %v3535, %v3823
      %v3825 = vpop.f32.mrb[0].mxu0
      %v3826 = vpop.f32.mrb[0].mxu0
      %v3827 = vadd.f32 %v3538, %v3826
      %v3828 = vpop.f32.mrb[0].mxu0
      %3829 = vmatprep.mubr.bf16.mxu0 0
      %3830 = vmatmul.mubr.bf16.gmra.mrb[0].mxu0 %v1652
      %v3831 = vpop.f32.mrb[0].mxu0
      %v3832 = vadd.f32 %v3543, %v3831
      %v3833 = vpop.f32.mrb[0].mxu0
      %v3834 = vpop.f32.mrb[0].mxu0
      %v3835 = vadd.f32 %v3546, %v3834
      %v3836 = vpop.f32.mrb[0].mxu0
      %3837 = vmatprep.mubr.bf16.mxu0 0
      %3838 = vmatmul.mubr.bf16.gmra.mrb[0].mxu0 %v1661
      %v3839 = vpop.f32.mrb[0].mxu0
      %v3840 = vadd.f32 %v3551, %v3839
      %v3841 = vpop.f32.mrb[0].mxu0
      %v3842 = vpop.f32.mrb[0].mxu0
      %v3843 = vadd.f32 %v3554, %v3842
      %v3844 = vpop.f32.mrb[0].mxu0
      %3845 = vmatprep.mubr.bf16.mxu0 0
      %3846 = vmatmul.mubr.bf16.gmra.mrb[0].mxu0 %v1670
      %v3847 = vpop.f32.mrb[0].mxu0
      %v3848 = vadd.f32 %v3559, %v3847
      %v3849 = vpop.f32.mrb[0].mxu0
      %v3850 = vpop.f32.mrb[0].mxu0
      %v3851 = vadd.f32 %v3562, %v3850
      %v3852 = vpop.f32.mrb[0].mxu0
      %3853 = vmatprep.mubr.bf16.mxu0 0
      %3854 = vmatmul.mubr.bf16.gmra.mrb[0].mxu0 %v1679
      %v3855 = vpop.f32.mrb[0].mxu0
      %v3856 = vadd.f32 %v3567, %v3855
      %v3857 = vpop.f32.mrb[0].mxu0
      %v3858 = vpop.f32.mrb[0].mxu0
      %v3859 = vadd.f32 %v3570, %v3858
      %v3860 = vpop.f32.mrb[0].mxu0
      %3861 = vmatprep.mubr.bf16.mxu0 0
      %3862 = vmatmul.mubr.bf16.gmra.mrb[0].mxu0 %v1688
      %v3863 = vpop.f32.mrb[0].mxu0
      %v3864 = vadd.f32 %v3575, %v3863
      %v3865 = vpop.f32.mrb[0].mxu0
      %v3866 = vpop.f32.mrb[0].mxu0
      %v3867 = vadd.f32 %v3578, %v3866
      %v3868 = vpop.f32.mrb[0].mxu0
      %3869 = vmatprep.mubr.bf16.mxu0 0
      %3870 = vmatmul.mubr.bf16.gmra.mrb[0].mxu0 %v1697
      %v3871 = vpop.f32.mrb[0].mxu0
      %v3872 = vadd.f32 %v3583, %v3871
      %v3873 = vpop.f32.mrb[0].mxu0
      %v3874 = vpop.f32.mrb[0].mxu0
      %v3875 = vadd.f32 %v3586, %v3874
      %v3876 = vpop.f32.mrb[0].mxu0
      %3877 = vmatprep.mubr.bf16.mxu0 0
      %3878 = vmatmul.mubr.bf16.gmra.mrb[0].mxu0 %v1706
      %v3879 = vpop.f32.mrb[0].mxu0
      %v3880 = vadd.f32 %v3591, %v3879
      %v3881 = vpop.f32.mrb[0].mxu0
      %v3882 = vpop.f32.mrb[0].mxu0
      %v3883 = vadd.f32 %v3594, %v3882
      %v3884 = vpop.f32.mrb[0].mxu0
      %3885 = vmatprep.mubr.bf16.mxu0 0
      %3886 = vmatmul.mubr.bf16.gmra.mrb[0].mxu0 %v1715
      %v3887 = vpop.f32.mrb[0].mxu0
      %v3888 = vadd.f32 %v3599, %v3887
      %v3889 = vpop.f32.mrb[0].mxu0
      %v3890 = vpop.f32.mrb[0].mxu0
      %v3891 = vadd.f32 %v3602, %v3890
      %v3892 = vpop.f32.mrb[0].mxu0
      %3893 = vmatprep.mubr.bf16.mxu0 0
      %3894 = vmatmul.mubr.bf16.gmra.mrb[0].mxu0 %v1724
      %v3895 = vpop.f32.mrb[0].mxu0
      %v3896 = vadd.f32 %v3607, %v3895
      %v3897 = vpop.f32.mrb[0].mxu0
      %v3898 = vpop.f32.mrb[0].mxu0
      %v3899 = vadd.f32 %v3610, %v3898
      %v3900 = vpop.f32.mrb[0].mxu0
      %3901 = vmatprep.mubr.bf16.mxu0 0
      %3902 = vmatmul.mubr.bf16.gmra.mrb[0].mxu0 %v1733
      %v3903 = vpop.f32.mrb[0].mxu0
      %v3904 = vadd.f32 %v3615, %v3903
      %v3905 = vpop.f32.mrb[0].mxu0
      %v3906 = vpop.f32.mrb[0].mxu0
      %v3907 = vadd.f32 %v3618, %v3906
      %v3908 = vpop.f32.mrb[0].mxu0
      %3909 = vmatprep.mubr.bf16.mxu0 0
      %3910 = vmatmul.mubr.bf16.gmra.mrb[0].mxu0 %v1742
      %v3911 = vpop.f32.mrb[0].mxu0
      %v3912 = vadd.f32 %v3623, %v3911
      %v3913 = vpop.f32.mrb[0].mxu0
      %v3914 = vpop.f32.mrb[0].mxu0
      %v3915 = vadd.f32 %v3626, %v3914
      %v3916 = vpop.f32.mrb[0].mxu0
      %3917 = vmatprep.mubr.bf16.mxu0 0
      %3918 = vmatmul.mubr.bf16.gmra.mrb[0].mxu0 %v1751
      %v3919 = vpop.f32.mrb[0].mxu0
      %v3920 = vadd.f32 %v3631, %v3919
      %v3921 = vpop.f32.mrb[0].mxu0
      %v3922 = vpop.f32.mrb[0].mxu0
      %v3923 = vadd.f32 %v3634, %v3922
      %v3924 = vpop.f32.mrb[0].mxu0
      %3925 = vmatprep.mubr.bf16.mxu0 0
      %3926 = vmatmul.mubr.bf16.gmra.mrb[0].mxu0 %v1760
      %v3927 = vpop.f32.mrb[0].mxu0
      %v3928 = vadd.f32 %v3639, %v3927
      %v3929 = vpop.f32.mrb[0].mxu0
      %v3930 = vpop.f32.mrb[0].mxu0
      %v3931 = vadd.f32 %v3642, %v3930
      %v3932 = vpop.f32.mrb[0].mxu0
      %3933 = vmatprep.mubr.bf16.mxu0 0
      %3934 = vmatmul.mubr.bf16.gmra.mrb[0].mxu0 %v1769
      %v3935 = vpop.f32.mrb[0].mxu0
      %v3936 = vadd.f32 %v3647, %v3935
      %v3937 = vpop.f32.mrb[0].mxu0
      %v3938 = vpop.f32.mrb[0].mxu0
      %v3939 = vadd.f32 %v3650, %v3938
      %v3940 = vpop.f32.mrb[0].mxu0
      %3941 = vmatprep.mubr.bf16.mxu0 0
      %3942 = vmatmul.mubr.bf16.gmra.mrb[0].mxu0 %v1778
      %v3943 = vpop.f32.mrb[0].mxu0
      %v3944 = vadd.f32 %v3655, %v3943
      %v3945 = vpop.f32.mrb[0].mxu0
      %v3946 = vpop.f32.mrb[0].mxu0
      %v3947 = vadd.f32 %v3658, %v3946
      %v3948 = vpop.f32.mrb[0].mxu0
      %3949 = vmatprep.mubr.bf16.mxu0 0
      %3950 = vmatmul.mubr.bf16.gmra.mrb[0].mxu0 %v1787
      %v3951 = vpop.f32.mrb[0].mxu0
      %v3952 = vadd.f32 %v3663, %v3951
      %v3953 = vpop.f32.mrb[0].mxu0
      %v3954 = vpop.f32.mrb[0].mxu0
      %v3955 = vadd.f32 %v3666, %v3954
      %v3956 = vpop.f32.mrb[0].mxu0
      %3957 = vmatprep.mubr.bf16.mxu0 0
      %3958 = vmatmul.mubr.bf16.gmra.mrb[0].mxu0 %v1796
      %v3959 = vpop.f32.mrb[0].mxu0
      %v3960 = vadd.f32 %v3671, %v3959
      %v3961 = vpop.f32.mrb[0].mxu0
      %v3962 = vpop.f32.mrb[0].mxu0
      %v3963 = vadd.f32 %v3674, %v3962
      %v3964 = vpop.f32.mrb[0].mxu0
      %3965 = vmatprep.mubr.bf16.mxu0 0
      %3966 = vmatmul.mubr.bf16.gmra.mrb[0].mxu0 %v1805
      %v3967 = vpop.f32.mrb[0].mxu0
      %v3968 = vadd.f32 %v3679, %v3967
      %v3969 = vpop.f32.mrb[0].mxu0
      %v3970 = vpop.f32.mrb[0].mxu0
      %v3971 = vadd.f32 %v3682, %v3970
      %v3972 = vpop.f32.mrb[0].mxu0
      %3973 = vmatprep.mubr.bf16.mxu0 0
      %3974 = vmatmul.mubr.bf16.gmra.mrb[0].mxu0 %v1814
      %v3975 = vpop.f32.mrb[0].mxu0
      %v3976 = vadd.f32 %v3687, %v3975
      %v3977 = vpop.f32.mrb[0].mxu0
      %v3978 = vpop.f32.mrb[0].mxu0
      %v3979 = vadd.f32 %v3690, %v3978
      %v3980 = vpop.f32.mrb[0].mxu0
      %3981 = vmatprep.mubr.bf16.mxu0 0
      %3982 = vmatmul.mubr.bf16.gmra.mrb[0].mxu0 %v1823
      %v3983 = vpop.f32.mrb[0].mxu0
      %v3984 = vadd.f32 %v3695, %v3983
      %v3985 = vpop.f32.mrb[0].mxu0
      %v3986 = vpop.f32.mrb[0].mxu0
      %v3987 = vadd.f32 %v3698, %v3986
      %v3988 = vpop.f32.mrb[0].mxu0
      %3989 = vmatprep.mubr.bf16.mxu0 0
      %3990 = vmatmul.mubr.bf16.gmra.mrb[0].mxu0 %v1832
      %v3991 = vpop.f32.mrb[0].mxu0
      %v3992 = vadd.f32 %v3703, %v3991
      %v3993 = vpop.f32.mrb[0].mxu0
      %v3994 = vpop.f32.mrb[0].mxu0
      %v3995 = vadd.f32 %v3706, %v3994
      %v3996 = vpop.f32.mrb[0].mxu0
      %3997 = vdwg.mxu0
      %3998 = vst [vmem:[%s175] sm:$0xff] %v3744
      %3999 = vst [vmem:[%s175 + $0x8] sm:$0xff] %v3747
      %4000 = vst [vmem:[%s175 + $0x10] sm:$0xff] %v3752
      %4001 = vst [vmem:[%s175 + $0x18] sm:$0xff] %v3755
      %4002 = vst [vmem:[%s175 + $0x20] sm:$0xff] %v3760
      %4003 = vst [vmem:[%s175 + $0x28] sm:$0xff] %v3763
      %4004 = vst [vmem:[%s175 + $0x30] sm:$0xff] %v3768
      %4005 = vst [vmem:[%s175 + $0x38] sm:$0xff] %v3771
      %4006 = vst [vmem:[%s175 + $0x40] sm:$0xff] %v3776
      %4007 = vst [vmem:[%s175 + $0x48] sm:$0xff] %v3779
      %4008 = vst [vmem:[%s175 + $0x50] sm:$0xff] %v3784
      %4009 = vst [vmem:[%s175 + $0x58] sm:$0xff] %v3787
      %4010 = vst [vmem:[%s175 + $0x60] sm:$0xff] %v3792
      %4011 = vst [vmem:[%s175 + $0x68] sm:$0xff] %v3795
      %4012 = vst [vmem:[%s175 + $0x70] sm:$0xff] %v3800
      %4013 = vst [vmem:[%s175 + $0x78] sm:$0xff] %v3803
      %4014 = vst [vmem:[%s175 + $0x80] sm:$0xff] %v3808
      %4015 = vst [vmem:[%s175 + $0x88] sm:$0xff] %v3811
      %4016 = vst [vmem:[%s175 + $0x90] sm:$0xff] %v3816
      %4017 = vst [vmem:[%s175 + $0x98] sm:$0xff] %v3819
      %4018 = vst [vmem:[%s175 + $0xa0] sm:$0xff] %v3824
      %4019 = vst [vmem:[%s175 + $0xa8] sm:$0xff] %v3827
      %4020 = vst [vmem:[%s175 + $0xb0] sm:$0xff] %v3832
      %4021 = vst [vmem:[%s175 + $0xb8] sm:$0xff] %v3835
      %4022 = vst [vmem:[%s175 + $0xc0] sm:$0xff] %v3840
      %4023 = vst [vmem:[%s175 + $0xc8] sm:$0xff] %v3843
      %4024 = vst [vmem:[%s175 + $0xd0] sm:$0xff] %v3848
      %4025 = vst [vmem:[%s175 + $0xd8] sm:$0xff] %v3851
      %4026 = vst [vmem:[%s175 + $0xe0] sm:$0xff] %v3856
      %4027 = vst [vmem:[%s175 + $0xe8] sm:$0xff] %v3859
      %4028 = vst [vmem:[%s175 + $0xf0] sm:$0xff] %v3864
      %4029 = vst [vmem:[%s175 + $0xf8] sm:$0xff] %v3867
      %4030 = vst [vmem:[%s175 + $0x100] sm:$0xff] %v3872
      %4031 = vst [vmem:[%s175 + $0x108] sm:$0xff] %v3875
      %4032 = vst [vmem:[%s175 + $0x110] sm:$0xff] %v3880
      %4033 = vst [vmem:[%s175 + $0x118] sm:$0xff] %v3883
      %4034 = vst [vmem:[%s175 + $0x120] sm:$0xff] %v3888
      %4035 = vst [vmem:[%s175 + $0x128] sm:$0xff] %v3891
      %4036 = vst [vmem:[%s175 + $0x130] sm:$0xff] %v3896
      %4037 = vst [vmem:[%s175 + $0x138] sm:$0xff] %v3899
      %4038 = vst [vmem:[%s175 + $0x140] sm:$0xff] %v3904
      %4039 = vst [vmem:[%s175 + $0x148] sm:$0xff] %v3907
      %4040 = vst [vmem:[%s175 + $0x150] sm:$0xff] %v3912
      %4041 = vst [vmem:[%s175 + $0x158] sm:$0xff] %v3915
      %4042 = vst [vmem:[%s175 + $0x160] sm:$0xff] %v3920
      %4043 = vst [vmem:[%s175 + $0x168] sm:$0xff] %v3923
      %4044 = vst [vmem:[%s175 + $0x170] sm:$0xff] %v3928
      %4045 = vst [vmem:[%s175 + $0x178] sm:$0xff] %v3931
      %4046 = vst [vmem:[%s175 + $0x180] sm:$0xff] %v3936
      %4047 = vst [vmem:[%s175 + $0x188] sm:$0xff] %v3939
      %4048 = vst [vmem:[%s175 + $0x190] sm:$0xff] %v3944
      %4049 = vst [vmem:[%s175 + $0x198] sm:$0xff] %v3947
      %4050 = vst [vmem:[%s175 + $0x1a0] sm:$0xff] %v3952
      %4051 = vst [vmem:[%s175 + $0x1a8] sm:$0xff] %v3955
      %4052 = vst [vmem:[%s175 + $0x1b0] sm:$0xff] %v3960
      %4053 = vst [vmem:[%s175 + $0x1b8] sm:$0xff] %v3963
      %4054 = vst [vmem:[%s175 + $0x1c0] sm:$0xff] %v3968
      %4055 = vst [vmem:[%s175 + $0x1c8] sm:$0xff] %v3971
      %4056 = vst [vmem:[%s175 + $0x1d0] sm:$0xff] %v3976
      %4057 = vst [vmem:[%s175 + $0x1d8] sm:$0xff] %v3979
      %4058 = vst [vmem:[%s175 + $0x1e0] sm:$0xff] %v3984
      %4059 = vst [vmem:[%s175 + $0x1e8] sm:$0xff] %v3987
      %4060 = vst [vmem:[%s175 + $0x1f0] sm:$0xff] %v3992
      %4061 = vst [vmem:[%s175 + $0x1f8] sm:$0xff] %v3995
      %s4062 = smul.u32 64, %s14
      %p4063 = scmp.lt.s32.totalorder %s4062, 255
      %s4064 = scalar_select %p4063, %s4062, 255
      %s4065 = smul.addr %s4064, 8
      %s4066 = scalar_lea.vmem %s3, %s4065
      // Predicated region
      $region33: #{_lambda_.12} parent=31 // pred_check
        %p4067 = pneg %p100
      $region34: #{_lambda_.12} parent=31 // pred_check_branch
        %4069 = sbr.rel (%p4067) target = $region36
      $region35: #{_lambda_.12} parent=31 // pred_region
        %s4070 = smul.u32 64, %s14
      $region36: #{_lambda_.12} parent=31 // pred_fallthru
        _
    $region32: #{_lambda_.12} parent=5 // pred_fallthru
      _
    %p4071 = scmp.le.s32.totalorder 2, %s9
    // Predicated region
    $region37: #{_lambda_.12} parent=5 // pred_check
      %p4072 = pneg %p4071
    $region38: #{_lambda_.12} parent=5 // pred_check_branch
      %4074 = sbr.rel (%p4072) target = $region40
    $region39: #{_lambda_.12} parent=5 // pred_region
      %s4075 = ssub.s32 %s9, 2
      // Predicated region
      $region41: #{_lambda_.12} parent=39 // pred_check
        %p4076 = pneg %p106
      $region42: #{_lambda_.12} parent=39 // pred_check_branch
        %4078 = sbr.rel (%p4076) target = $region44
      $region43: #{_lambda_.12} parent=39 // pred_region
        %s4079 = smul.u32 64, %s15
        %p4080 = scmp.lt.s32.totalorder %s4079, 255
        %s4081 = scalar_select %p4080, %s4079, 255
        %s4082 = smul.addr %s4081, 8
        %s4083 = scalar_lea.vmem %s3, %s4082
      $region44: #{_lambda_.12} parent=39 // pred_fallthru
        _
    $region40: #{_lambda_.12} parent=5 // pred_fallthru
      _
  $region6: #{_lambda_.12} parent=0 // loop_footer
    %s13 = sadd.s32 1, %s9
  $region7: #{_lambda_.12} parent=0 // loop_footer_branch
    %8 = sbr.rel target = $region3
  $region8: #{_lambda_.12} parent=0 // loop_exit
    _

</llo_original>
